<compile_context>
chip_gen: v5e
topology: v5e:2x2
jax: 0.10.0
libtpu: 0.0.40
codegen_flags: <defaults>
</compile_context>

<pallas_src>
import jax
import jax.numpy as jnp
from jax.experimental import pallas as pl
from jax.experimental.pallas import tpu as pltpu

_TB = 8      # images per grid step (multiple of 8 sublanes)
_XL = 1280   # flattened padded image length: 32*32 grid + slack for the
             # largest filter-tap shift (4*32 + 4 = 132), rounded up to 128


# ----------------------------------------------------------------------------
# Fused LeNet5 kernel: one grid step == one batch tile of _TB images
# ----------------------------------------------------------------------------
def _lenet5_kernel(x_ref, a1_ref, b1_ref, w2_ref, b2_ref, pool1_ref, poolfc_ref,
                   fc1b_ref, fc2w_ref, fc2b_ref, fc3w_ref, fc3b_ref,
                   o_ref, x_taps, p1_scr, p2_taps, c2t):
    f32 = jnp.float32
    tb = x_ref.shape[0]

    # --- conv1 (5x5, pad=2) + bias + ReLU ------------------------------------
    # Stack the 25 shifted slices of the zero-padded 32-stride image grid in
    # a scratch, then one matmul with the tap-blocked weights (K = 25*tb).
    for k in range(25):
        shift = (k // 5) * 32 + (k % 5)
        x_taps[pl.ds(k * tb, tb), :] = x_ref[:, pl.ds(shift, 1024)]
    c1 = jnp.maximum(
        jnp.dot(a1_ref[...], x_taps[...], preferred_element_type=f32)
        + b1_ref[...], 0.0)                                      # (6*tb, 1024)

    # --- pool1: 2x2/2 average via one constant (1024, 256) matmul ------------
    # Output columns are a 14-stride 14x14 grid (196 valid of 256 lanes).
    p1_scr[...] = jnp.dot(c1, pool1_ref[...], preferred_element_type=f32)

    # --- conv2 (5x5, valid, 6->16) + bias + ReLU ------------------------------
    # Stack the 25 shifted slices of the pooled grid (all 6 input channels are
    # already along sublanes of p1_scr), then one matmul (K = 25*6*tb = 1200).
    for k in range(25):
        shift = (k // 5) * 14 + (k % 5)
        p2_taps[pl.ds(k * 6 * tb, 6 * tb), :] = p1_scr[:, pl.ds(shift, 140)]
    c2 = jnp.maximum(
        jnp.dot(w2_ref[...], p2_taps[...], preferred_element_type=f32)
        + b2_ref[...], 0.0)                                      # (16*tb, 140)

    # --- pool2 + NCHW flatten + fc1 (folded), as ONE matmul -------------------
    # Gather the 16 per-channel (tb, 140) blocks of c2 along lanes.
    for co in range(16):
        c2t[:, pl.ds(co * 140, 140)] = c2[co * tb:(co + 1) * tb, :]
    h = jnp.maximum(
        jnp.dot(c2t[...], poolfc_ref[...], preferred_element_type=f32)
        + fc1b_ref[...], 0.0)                                    # (tb, 120)

    # --- fc2 + ReLU, fc3 (output padded to 128 lanes) -------------------------
    h = jnp.maximum(
        jnp.dot(h, fc2w_ref[...], preferred_element_type=f32) + fc2b_ref[...],
        0.0)
    o_ref[...] = (jnp.dot(h, fc3w_ref[...], preferred_element_type=f32)
                  + fc3b_ref[...])


# ----------------------------------------------------------------------------
# One-time parameter preparation (outside the forward)
# ----------------------------------------------------------------------------
def prepare_params(params, tb=_TB):
    """GEMM layouts: tap/cin-merged batch-blocked conv weights, constant
    pooling matrices, pool2 + NCHW flatten folded into fc1, fc transposes,
    fc3 zero-padded to 128 output lanes."""
    f32 = jnp.float32
    eye = jnp.eye(tb, dtype=f32)

    # conv1 (6,1,5,5) -> tap-merged batch-blocked weight (6*tb, 25*tb).
    w1 = params["conv1_w"].astype(f32).reshape(6, 25)
    a1 = jnp.concatenate([jnp.kron(w1[:, k:k + 1], eye) for k in range(25)],
                         axis=1)                                 # (6*tb, 25*tb)
    b1 = jnp.repeat(params["conv1_b"].astype(f32), tb).reshape(6 * tb, 1)

    # conv2 (16,6,5,5) -> (tap, cin)-merged batch-blocked weight
    # (16*tb, 25*6*tb); block order matches the kernel's p2_taps stacking.
    w2 = params["conv2_w"].astype(f32)
    blocks = []
    for k in range(25):
        for cin in range(6):
            blocks.append(jnp.kron(w2[:, cin, k // 5, k % 5][:, None], eye))
    w2m = jnp.concatenate(blocks, axis=1)                        # (16*tb, 1200)
    b2 = jnp.repeat(params["conv2_b"].astype(f32), tb).reshape(16 * tb, 1)

    # pool1 matrix: padded 32-stride 32x32 grid -> 14-stride 14x14 grid.
    p = jnp.arange(1024)
    py, px = p // 32, p % 32
    q = jnp.arange(256)
    qy, qx = q // 14, q % 14
    pool1 = (((py[:, None] // 2) == qy[None, :])
             & ((px[:, None] // 2) == qx[None, :])
             & (py[:, None] < 28) & (px[:, None] < 28)
             & (q[None, :] < 196)).astype(f32) * 0.25

    # pool2 (+ torch's NCHW flatten) folded into fc1, flattened over channels:
    # poolfc[co*140 + r, :] = (pool2_matrix @ fc1_w.T[co*25:(co+1)*25, :])[r, :]
    r = jnp.arange(140)
    ry, rx = r // 14, r % 14
    s = jnp.arange(25)
    sy, sx = s // 5, s % 5
    pool2 = (((ry[:, None] // 2) == sy[None, :])
             & ((rx[:, None] // 2) == sx[None, :])
             & (ry[:, None] < 10) & (rx[:, None] < 10)).astype(f32) * 0.25
    fc1_wt = params["fc1_w"].astype(f32).T                       # (400, 120)
    poolfc = jnp.concatenate(
        [jnp.dot(pool2, fc1_wt[co * 25:(co + 1) * 25, :]) for co in range(16)],
        axis=0)                                                  # (2240, 120)

    # fc3 zero-padded to 128 output lanes (lane-dense output store).
    fc3_w = jnp.zeros((84, 128), f32).at[:, :10].set(
        params["fc3_w"].astype(f32).T)
    fc3_b = jnp.zeros((1, 128), f32).at[:, :10].set(
        params["fc3_b"].astype(f32).reshape(1, 10))

    return {
        "a1": a1, "b1": b1, "w2": w2m, "b2": b2,
        "pool1": pool1, "poolfc": poolfc,
        "fc1_b": params["fc1_b"].astype(f32).reshape(1, 120),
        "fc2_w": params["fc2_w"].astype(f32).T,                  # (120, 84)
        "fc2_b": params["fc2_b"].astype(f32).reshape(1, 84),
        "fc3_w": fc3_w,                                          # (84, 128)
        "fc3_b": fc3_b,                                          # (1, 128)
    }


# ----------------------------------------------------------------------------
# Forward pass wrapper
# ----------------------------------------------------------------------------
def lenet5_forward(x_nchw, prep):
    """LeNet5 forward: x (N, 1, 28, 28) float32 -> (N, 10) float32 logits."""
    n = x_nchw.shape[0]
    n_pad = ((n + _TB - 1) // _TB) * _TB

    # Zero-pad: batch -> tile multiple, spatial 28x28 -> 32x32 (this IS the
    # conv1 padding=2), flatten rows (stride 32) and add lane slack for the
    # shifted-slice conv reads.  This is the only XLA glue before the kernel.
    x = x_nchw.astype(jnp.float32).reshape(n, 28, 28)
    x = jnp.pad(x, ((0, n_pad - n), (2, 2), (2, 2)))
    x = x.reshape(n_pad, 32 * 32)
    x = jnp.pad(x, ((0, 0), (0, _XL - 32 * 32)))

    n_tiles = n_pad // _TB
    flops_per_tile = 2 * (6 * _TB * 25 * _TB * 1024      # conv1
                          + 6 * _TB * 1024 * 256         # pool1
                          + 16 * _TB * 25 * 6 * _TB * 140  # conv2
                          + _TB * 2240 * 120             # pool2 + fc1
                          + _TB * 120 * 84               # fc2
                          + _TB * 84 * 128)              # fc3
    weight_bytes = sum(int(v.size) * 4 for v in prep.values())
    cost = pl.CostEstimate(
        flops=n_tiles * flops_per_tile,
        transcendentals=0,
        bytes_accessed=int(x.size) * 4 + weight_bytes + n_pad * 128 * 4)

    cm2 = lambda i: (0, 0)
    out = pl.pallas_call(
        _lenet5_kernel,
        out_shape=jax.ShapeDtypeStruct((n_pad, 128), jnp.float32),
        grid=(n_tiles,),
        in_specs=[
            pl.BlockSpec((_TB, _XL), lambda i: (i, 0)),           # images
            pl.BlockSpec((6 * _TB, 25 * _TB), cm2),               # conv1 weight
            pl.BlockSpec((6 * _TB, 1), cm2),                      # conv1 bias
            pl.BlockSpec((16 * _TB, 25 * 6 * _TB), cm2),          # conv2 weight
            pl.BlockSpec((16 * _TB, 1), cm2),                     # conv2 bias
            pl.BlockSpec((1024, 256), cm2),                       # pool1 matrix
            pl.BlockSpec((16 * 140, 120), cm2),                   # pool2 + fc1 w
            pl.BlockSpec((1, 120), cm2),                          # fc1 bias
            pl.BlockSpec((120, 84), cm2),                         # fc2 weight
            pl.BlockSpec((1, 84), cm2),                           # fc2 bias
            pl.BlockSpec((84, 128), cm2),                         # fc3 weight (padded)
            pl.BlockSpec((1, 128), cm2),                          # fc3 bias (padded)
        ],
        out_specs=pl.BlockSpec((_TB, 128), lambda i: (i, 0)),
        scratch_shapes=[
            pltpu.VMEM((25 * _TB, 1024), jnp.float32),            # conv1 taps
            pltpu.VMEM((6 * _TB, 256), jnp.float32),              # pool1 output
            pltpu.VMEM((25 * 6 * _TB, 140), jnp.float32),         # conv2 taps
            pltpu.VMEM((_TB, 16 * 140), jnp.float32),             # fc1 gather
        ],
        compiler_params=pltpu.CompilerParams(
            dimension_semantics=("parallel",),
            vmem_limit_bytes=32 * 1024 * 1024),
        cost_estimate=cost,
    )(x, prep["a1"], prep["b1"], prep["w2"], prep["b2"], prep["pool1"],
      prep["poolfc"], prep["fc1_b"], prep["fc2_w"], prep["fc2_b"],
      prep["fc3_w"], prep["fc3_b"])
    return out[:n, :10]


# ----------------------------------------------------------------------------
# Synthetic parameters + plain-JAX reference (for self-check only)
# ----------------------------------------------------------------------------
def init_lenet5_params(key):
    """Deterministic synthetic parameters with exact LeNet5 shapes."""
    keys = jax.random.split(key, 10)

    def unif(k, shape, fan_in):
        bound = 1.0 / jnp.sqrt(fan_in)
        return jax.random.uniform(k, shape, jnp.float32, -bound, bound)

    return {
        "conv1_w": unif(keys[0], (6, 1, 5, 5), 1 * 5 * 5),
        "conv1_b": unif(keys[1], (6,), 1 * 5 * 5),
        "conv2_w": unif(keys[2], (16, 6, 5, 5), 6 * 5 * 5),
        "conv2_b": unif(keys[3], (16,), 6 * 5 * 5),
        "fc1_w": unif(keys[4], (120, 400), 400),
        "fc1_b": unif(keys[5], (120,), 400),
        "fc2_w": unif(keys[6], (84, 120), 120),
        "fc2_b": unif(keys[7], (84,), 120),
        "fc3_w": unif(keys[8], (10, 84), 84),
        "fc3_b": unif(keys[9], (10,), 84),
    }


def _avgpool_ref(y):
    n, c, h, w = y.shape
    return y.reshape(n, c, h // 2, 2, w // 2, 2).mean(axis=(3, 5))


def lenet5_reference(x_nchw, params):
    """Plain-JAX LeNet5 forward, used only to validate the Pallas kernel."""
    hp = jax.lax.Precision.HIGHEST
    y = jax.lax.conv_general_dilated(
        x_nchw.astype(jnp.float32), params["conv1_w"], (1, 1), ((2, 2), (2, 2)),
        dimension_numbers=("NCHW", "OIHW", "NCHW"), precision=hp)
    y = jnp.maximum(y + params["conv1_b"].reshape(1, 6, 1, 1), 0.0)
    y = _avgpool_ref(y)
    y = jax.lax.conv_general_dilated(
        y, params["conv2_w"], (1, 1), ((0, 0), (0, 0)),
        dimension_numbers=("NCHW", "OIHW", "NCHW"), precision=hp)
    y = jnp.maximum(y + params["conv2_b"].reshape(1, 16, 1, 1), 0.0)
    y = _avgpool_ref(y)
    y = y.reshape(y.shape[0], -1)
    y = jnp.maximum(jnp.dot(y, params["fc1_w"].T, precision=hp) + params["fc1_b"], 0.0)
    y = jnp.maximum(jnp.dot(y, params["fc2_w"].T, precision=hp) + params["fc2_b"], 0.0)
    return jnp.dot(y, params["fc3_w"].T, precision=hp) + params["fc3_b"]


if __name__ == "__main__":
    key = jax.random.PRNGKey(0)
    k_param, k_input = jax.random.split(key)

    params = init_lenet5_params(k_param)
    # MNIST-shaped input: LeNet5's fc1 (16*5*5 -> 120) requires 28x28 spatial.
    x = jax.random.normal(k_input, (2, 1, 28, 28), dtype=jnp.float32)

    prep = prepare_params(params)          # one-time weight prep, outside forward
    fwd = jax.jit(lenet5_forward)
    logits = fwd(x, prep)
    jax.block_until_ready(logits)

    assert logits.shape == (2, 10), logits.shape
    assert logits.dtype == jnp.float32

    # Self-check the fused kernel against a plain-JAX reference of the module.
    ref = lenet5_reference(x, params)
    err = float(jnp.max(jnp.abs(logits - ref)))
    assert err < 3e-3, f"kernel/reference mismatch: max abs err={err:.2e}"

    print("KERNEL_OK")
</pallas_src>

<mosaic_0001>
module attributes {stable_mosaic.version = 11 : i64} {
  func.func @_lenet5_kernel(%arg0: i32, %arg1: memref<8x1280xf32, #tpu.memory_space<vmem>>, %arg2: memref<48x200xf32, #tpu.memory_space<vmem>>, %arg3: memref<48x1xf32, #tpu.memory_space<vmem>>, %arg4: memref<128x1200xf32, #tpu.memory_space<vmem>>, %arg5: memref<128x1xf32, #tpu.memory_space<vmem>>, %arg6: memref<1024x256xf32, #tpu.memory_space<vmem>>, %arg7: memref<2240x120xf32, #tpu.memory_space<vmem>>, %arg8: memref<1x120xf32, #tpu.memory_space<vmem>>, %arg9: memref<120x84xf32, #tpu.memory_space<vmem>>, %arg10: memref<1x84xf32, #tpu.memory_space<vmem>>, %arg11: memref<84x128xf32, #tpu.memory_space<vmem>>, %arg12: memref<1x128xf32, #tpu.memory_space<vmem>>, %arg13: memref<8x128xf32, #tpu.memory_space<vmem>>, %arg14: memref<200x1024xf32, #tpu.memory_space<vmem>>, %arg15: memref<48x256xf32, #tpu.memory_space<vmem>>, %arg16: memref<1200x140xf32, #tpu.memory_space<vmem>>, %arg17: memref<8x2240xf32, #tpu.memory_space<vmem>>) attributes {dimension_semantics = [#tpu.dimension_semantics<parallel>], iteration_bounds = array<i64: 1>, scalar_prefetch = 0 : i64, scratch_operands = 4 : i64, tpu.core_type = #tpu.core_type<tc>, window_params = [{transform_indices = @transform_0, window_bounds = array<i64: 8, 1280>}, {pipeline_mode = #tpu.pipeline_mode<synchronous>, transform_indices = @transform_1, window_bounds = array<i64: 48, 200>}, {pipeline_mode = #tpu.pipeline_mode<synchronous>, transform_indices = @transform_2, window_bounds = array<i64: 48, 1>}, {pipeline_mode = #tpu.pipeline_mode<synchronous>, transform_indices = @transform_3, window_bounds = array<i64: 128, 1200>}, {pipeline_mode = #tpu.pipeline_mode<synchronous>, transform_indices = @transform_4, window_bounds = array<i64: 128, 1>}, {pipeline_mode = #tpu.pipeline_mode<synchronous>, transform_indices = @transform_5, window_bounds = array<i64: 1024, 256>}, {pipeline_mode = #tpu.pipeline_mode<synchronous>, transform_indices = @transform_6, window_bounds = array<i64: 2240, 120>}, {pipeline_mode = #tpu.pipeline_mode<synchronous>, transform_indices = @transform_7, window_bounds = array<i64: 1, 120>}, {pipeline_mode = #tpu.pipeline_mode<synchronous>, transform_indices = @transform_8, window_bounds = array<i64: 120, 84>}, {pipeline_mode = #tpu.pipeline_mode<synchronous>, transform_indices = @transform_9, window_bounds = array<i64: 1, 84>}, {pipeline_mode = #tpu.pipeline_mode<synchronous>, transform_indices = @transform_10, window_bounds = array<i64: 84, 128>}, {pipeline_mode = #tpu.pipeline_mode<synchronous>, transform_indices = @transform_11, window_bounds = array<i64: 1, 128>}, {transform_indices = @transform_12, window_bounds = array<i64: 8, 128>}]} {
    %c0 = arith.constant 0 : index
    %c0_0 = arith.constant 0 : index
    %0 = vector.load %arg1[%c0, %c0_0] : memref<8x1280xf32, #tpu.memory_space<vmem>>, vector<8x1024xf32>
    %c0_1 = arith.constant 0 : index
    %c0_2 = arith.constant 0 : index
    %1 = vector.load %arg14[%c0_1, %c0_2] : memref<200x1024xf32, #tpu.memory_space<vmem>>, vector<8x1024xf32>
    tpu.vector_store %arg14[%c0_1, %c0_2], %0 {strides = array<i32>} : memref<200x1024xf32, #tpu.memory_space<vmem>>, vector<8x1024xf32>,
    %c0_3 = arith.constant 0 : index
    %c1 = arith.constant 1 : index
    %2 = vector.load %arg1[%c0_3, %c1] : memref<8x1280xf32, #tpu.memory_space<vmem>>, vector<8x1024xf32>
    %c8 = arith.constant 8 : index
    %c0_4 = arith.constant 0 : index
    %3 = vector.load %arg14[%c8, %c0_4] : memref<200x1024xf32, #tpu.memory_space<vmem>>, vector<8x1024xf32>
    tpu.vector_store %arg14[%c8, %c0_4], %2 {strides = array<i32>} : memref<200x1024xf32, #tpu.memory_space<vmem>>, vector<8x1024xf32>,
    %c0_5 = arith.constant 0 : index
    %c2 = arith.constant 2 : index
    %4 = vector.load %arg1[%c0_5, %c2] : memref<8x1280xf32, #tpu.memory_space<vmem>>, vector<8x1024xf32>
    %c16 = arith.constant 16 : index
    %c0_6 = arith.constant 0 : index
    %5 = vector.load %arg14[%c16, %c0_6] : memref<200x1024xf32, #tpu.memory_space<vmem>>, vector<8x1024xf32>
    tpu.vector_store %arg14[%c16, %c0_6], %4 {strides = array<i32>} : memref<200x1024xf32, #tpu.memory_space<vmem>>, vector<8x1024xf32>,
    %c0_7 = arith.constant 0 : index
    %c3 = arith.constant 3 : index
    %6 = vector.load %arg1[%c0_7, %c3] : memref<8x1280xf32, #tpu.memory_space<vmem>>, vector<8x1024xf32>
    %c24 = arith.constant 24 : index
    %c0_8 = arith.constant 0 : index
    %7 = vector.load %arg14[%c24, %c0_8] : memref<200x1024xf32, #tpu.memory_space<vmem>>, vector<8x1024xf32>
    tpu.vector_store %arg14[%c24, %c0_8], %6 {strides = array<i32>} : memref<200x1024xf32, #tpu.memory_space<vmem>>, vector<8x1024xf32>,
    %c0_9 = arith.constant 0 : index
    %c4 = arith.constant 4 : index
    %8 = vector.load %arg1[%c0_9, %c4] : memref<8x1280xf32, #tpu.memory_space<vmem>>, vector<8x1024xf32>
    %c32 = arith.constant 32 : index
    %c0_10 = arith.constant 0 : index
    %9 = vector.load %arg14[%c32, %c0_10] : memref<200x1024xf32, #tpu.memory_space<vmem>>, vector<8x1024xf32>
    tpu.vector_store %arg14[%c32, %c0_10], %8 {strides = array<i32>} : memref<200x1024xf32, #tpu.memory_space<vmem>>, vector<8x1024xf32>,
    %c0_11 = arith.constant 0 : index
    %c32_12 = arith.constant 32 : index
    %10 = vector.load %arg1[%c0_11, %c32_12] : memref<8x1280xf32, #tpu.memory_space<vmem>>, vector<8x1024xf32>
    %c40 = arith.constant 40 : index
    %c0_13 = arith.constant 0 : index
    %11 = vector.load %arg14[%c40, %c0_13] : memref<200x1024xf32, #tpu.memory_space<vmem>>, vector<8x1024xf32>
    tpu.vector_store %arg14[%c40, %c0_13], %10 {strides = array<i32>} : memref<200x1024xf32, #tpu.memory_space<vmem>>, vector<8x1024xf32>,
    %c0_14 = arith.constant 0 : index
    %c33 = arith.constant 33 : index
    %12 = vector.load %arg1[%c0_14, %c33] : memref<8x1280xf32, #tpu.memory_space<vmem>>, vector<8x1024xf32>
    %c48 = arith.constant 48 : index
    %c0_15 = arith.constant 0 : index
    %13 = vector.load %arg14[%c48, %c0_15] : memref<200x1024xf32, #tpu.memory_space<vmem>>, vector<8x1024xf32>
    tpu.vector_store %arg14[%c48, %c0_15], %12 {strides = array<i32>} : memref<200x1024xf32, #tpu.memory_space<vmem>>, vector<8x1024xf32>,
    %c0_16 = arith.constant 0 : index
    %c34 = arith.constant 34 : index
    %14 = vector.load %arg1[%c0_16, %c34] : memref<8x1280xf32, #tpu.memory_space<vmem>>, vector<8x1024xf32>
    %c56 = arith.constant 56 : index
    %c0_17 = arith.constant 0 : index
    %15 = vector.load %arg14[%c56, %c0_17] : memref<200x1024xf32, #tpu.memory_space<vmem>>, vector<8x1024xf32>
    tpu.vector_store %arg14[%c56, %c0_17], %14 {strides = array<i32>} : memref<200x1024xf32, #tpu.memory_space<vmem>>, vector<8x1024xf32>,
    %c0_18 = arith.constant 0 : index
    %c35 = arith.constant 35 : index
    %16 = vector.load %arg1[%c0_18, %c35] : memref<8x1280xf32, #tpu.memory_space<vmem>>, vector<8x1024xf32>
    %c64 = arith.constant 64 : index
    %c0_19 = arith.constant 0 : index
    %17 = vector.load %arg14[%c64, %c0_19] : memref<200x1024xf32, #tpu.memory_space<vmem>>, vector<8x1024xf32>
    tpu.vector_store %arg14[%c64, %c0_19], %16 {strides = array<i32>} : memref<200x1024xf32, #tpu.memory_space<vmem>>, vector<8x1024xf32>,
    %c0_20 = arith.constant 0 : index
    %c36 = arith.constant 36 : index
    %18 = vector.load %arg1[%c0_20, %c36] : memref<8x1280xf32, #tpu.memory_space<vmem>>, vector<8x1024xf32>
    %c72 = arith.constant 72 : index
    %c0_21 = arith.constant 0 : index
    %19 = vector.load %arg14[%c72, %c0_21] : memref<200x1024xf32, #tpu.memory_space<vmem>>, vector<8x1024xf32>
    tpu.vector_store %arg14[%c72, %c0_21], %18 {strides = array<i32>} : memref<200x1024xf32, #tpu.memory_space<vmem>>, vector<8x1024xf32>,
    %c0_22 = arith.constant 0 : index
    %c64_23 = arith.constant 64 : index
    %20 = vector.load %arg1[%c0_22, %c64_23] : memref<8x1280xf32, #tpu.memory_space<vmem>>, vector<8x1024xf32>
    %c80 = arith.constant 80 : index
    %c0_24 = arith.constant 0 : index
    %21 = vector.load %arg14[%c80, %c0_24] : memref<200x1024xf32, #tpu.memory_space<vmem>>, vector<8x1024xf32>
    tpu.vector_store %arg14[%c80, %c0_24], %20 {strides = array<i32>} : memref<200x1024xf32, #tpu.memory_space<vmem>>, vector<8x1024xf32>,
    %c0_25 = arith.constant 0 : index
    %c65 = arith.constant 65 : index
    %22 = vector.load %arg1[%c0_25, %c65] : memref<8x1280xf32, #tpu.memory_space<vmem>>, vector<8x1024xf32>
    %c88 = arith.constant 88 : index
    %c0_26 = arith.constant 0 : index
    %23 = vector.load %arg14[%c88, %c0_26] : memref<200x1024xf32, #tpu.memory_space<vmem>>, vector<8x1024xf32>
    tpu.vector_store %arg14[%c88, %c0_26], %22 {strides = array<i32>} : memref<200x1024xf32, #tpu.memory_space<vmem>>, vector<8x1024xf32>,
    %c0_27 = arith.constant 0 : index
    %c66 = arith.constant 66 : index
    %24 = vector.load %arg1[%c0_27, %c66] : memref<8x1280xf32, #tpu.memory_space<vmem>>, vector<8x1024xf32>
    %c96 = arith.constant 96 : index
    %c0_28 = arith.constant 0 : index
    %25 = vector.load %arg14[%c96, %c0_28] : memref<200x1024xf32, #tpu.memory_space<vmem>>, vector<8x1024xf32>
    tpu.vector_store %arg14[%c96, %c0_28], %24 {strides = array<i32>} : memref<200x1024xf32, #tpu.memory_space<vmem>>, vector<8x1024xf32>,
    %c0_29 = arith.constant 0 : index
    %c67 = arith.constant 67 : index
    %26 = vector.load %arg1[%c0_29, %c67] : memref<8x1280xf32, #tpu.memory_space<vmem>>, vector<8x1024xf32>
    %c104 = arith.constant 104 : index
    %c0_30 = arith.constant 0 : index
    %27 = vector.load %arg14[%c104, %c0_30] : memref<200x1024xf32, #tpu.memory_space<vmem>>, vector<8x1024xf32>
    tpu.vector_store %arg14[%c104, %c0_30], %26 {strides = array<i32>} : memref<200x1024xf32, #tpu.memory_space<vmem>>, vector<8x1024xf32>,
    %c0_31 = arith.constant 0 : index
    %c68 = arith.constant 68 : index
    %28 = vector.load %arg1[%c0_31, %c68] : memref<8x1280xf32, #tpu.memory_space<vmem>>, vector<8x1024xf32>
    %c112 = arith.constant 112 : index
    %c0_32 = arith.constant 0 : index
    %29 = vector.load %arg14[%c112, %c0_32] : memref<200x1024xf32, #tpu.memory_space<vmem>>, vector<8x1024xf32>
    tpu.vector_store %arg14[%c112, %c0_32], %28 {strides = array<i32>} : memref<200x1024xf32, #tpu.memory_space<vmem>>, vector<8x1024xf32>,
    %c0_33 = arith.constant 0 : index
    %c96_34 = arith.constant 96 : index
    %30 = vector.load %arg1[%c0_33, %c96_34] : memref<8x1280xf32, #tpu.memory_space<vmem>>, vector<8x1024xf32>
    %c120 = arith.constant 120 : index
    %c0_35 = arith.constant 0 : index
    %31 = vector.load %arg14[%c120, %c0_35] : memref<200x1024xf32, #tpu.memory_space<vmem>>, vector<8x1024xf32>
    tpu.vector_store %arg14[%c120, %c0_35], %30 {strides = array<i32>} : memref<200x1024xf32, #tpu.memory_space<vmem>>, vector<8x1024xf32>,
    %c0_36 = arith.constant 0 : index
    %c97 = arith.constant 97 : index
    %32 = vector.load %arg1[%c0_36, %c97] : memref<8x1280xf32, #tpu.memory_space<vmem>>, vector<8x1024xf32>
    %c128 = arith.constant 128 : index
    %c0_37 = arith.constant 0 : index
    %33 = vector.load %arg14[%c128, %c0_37] : memref<200x1024xf32, #tpu.memory_space<vmem>>, vector<8x1024xf32>
    tpu.vector_store %arg14[%c128, %c0_37], %32 {strides = array<i32>} : memref<200x1024xf32, #tpu.memory_space<vmem>>, vector<8x1024xf32>,
    %c0_38 = arith.constant 0 : index
    %c98 = arith.constant 98 : index
    %34 = vector.load %arg1[%c0_38, %c98] : memref<8x1280xf32, #tpu.memory_space<vmem>>, vector<8x1024xf32>
    %c136 = arith.constant 136 : index
    %c0_39 = arith.constant 0 : index
    %35 = vector.load %arg14[%c136, %c0_39] : memref<200x1024xf32, #tpu.memory_space<vmem>>, vector<8x1024xf32>
    tpu.vector_store %arg14[%c136, %c0_39], %34 {strides = array<i32>} : memref<200x1024xf32, #tpu.memory_space<vmem>>, vector<8x1024xf32>,
    %c0_40 = arith.constant 0 : index
    %c99 = arith.constant 99 : index
    %36 = vector.load %arg1[%c0_40, %c99] : memref<8x1280xf32, #tpu.memory_space<vmem>>, vector<8x1024xf32>
    %c144 = arith.constant 144 : index
    %c0_41 = arith.constant 0 : index
    %37 = vector.load %arg14[%c144, %c0_41] : memref<200x1024xf32, #tpu.memory_space<vmem>>, vector<8x1024xf32>
    tpu.vector_store %arg14[%c144, %c0_41], %36 {strides = array<i32>} : memref<200x1024xf32, #tpu.memory_space<vmem>>, vector<8x1024xf32>,
    %c0_42 = arith.constant 0 : index
    %c100 = arith.constant 100 : index
    %38 = vector.load %arg1[%c0_42, %c100] : memref<8x1280xf32, #tpu.memory_space<vmem>>, vector<8x1024xf32>
    %c152 = arith.constant 152 : index
    %c0_43 = arith.constant 0 : index
    %39 = vector.load %arg14[%c152, %c0_43] : memref<200x1024xf32, #tpu.memory_space<vmem>>, vector<8x1024xf32>
    tpu.vector_store %arg14[%c152, %c0_43], %38 {strides = array<i32>} : memref<200x1024xf32, #tpu.memory_space<vmem>>, vector<8x1024xf32>,
    %c0_44 = arith.constant 0 : index
    %c128_45 = arith.constant 128 : index
    %40 = vector.load %arg1[%c0_44, %c128_45] : memref<8x1280xf32, #tpu.memory_space<vmem>>, vector<8x1024xf32>
    %c160 = arith.constant 160 : index
    %c0_46 = arith.constant 0 : index
    %41 = vector.load %arg14[%c160, %c0_46] : memref<200x1024xf32, #tpu.memory_space<vmem>>, vector<8x1024xf32>
    tpu.vector_store %arg14[%c160, %c0_46], %40 {strides = array<i32>} : memref<200x1024xf32, #tpu.memory_space<vmem>>, vector<8x1024xf32>,
    %c0_47 = arith.constant 0 : index
    %c129 = arith.constant 129 : index
    %42 = vector.load %arg1[%c0_47, %c129] : memref<8x1280xf32, #tpu.memory_space<vmem>>, vector<8x1024xf32>
    %c168 = arith.constant 168 : index
    %c0_48 = arith.constant 0 : index
    %43 = vector.load %arg14[%c168, %c0_48] : memref<200x1024xf32, #tpu.memory_space<vmem>>, vector<8x1024xf32>
    tpu.vector_store %arg14[%c168, %c0_48], %42 {strides = array<i32>} : memref<200x1024xf32, #tpu.memory_space<vmem>>, vector<8x1024xf32>,
    %c0_49 = arith.constant 0 : index
    %c130 = arith.constant 130 : index
    %44 = vector.load %arg1[%c0_49, %c130] : memref<8x1280xf32, #tpu.memory_space<vmem>>, vector<8x1024xf32>
    %c176 = arith.constant 176 : index
    %c0_50 = arith.constant 0 : index
    %45 = vector.load %arg14[%c176, %c0_50] : memref<200x1024xf32, #tpu.memory_space<vmem>>, vector<8x1024xf32>
    tpu.vector_store %arg14[%c176, %c0_50], %44 {strides = array<i32>} : memref<200x1024xf32, #tpu.memory_space<vmem>>, vector<8x1024xf32>,
    %c0_51 = arith.constant 0 : index
    %c131 = arith.constant 131 : index
    %46 = vector.load %arg1[%c0_51, %c131] : memref<8x1280xf32, #tpu.memory_space<vmem>>, vector<8x1024xf32>
    %c184 = arith.constant 184 : index
    %c0_52 = arith.constant 0 : index
    %47 = vector.load %arg14[%c184, %c0_52] : memref<200x1024xf32, #tpu.memory_space<vmem>>, vector<8x1024xf32>
    tpu.vector_store %arg14[%c184, %c0_52], %46 {strides = array<i32>} : memref<200x1024xf32, #tpu.memory_space<vmem>>, vector<8x1024xf32>,
    %c0_53 = arith.constant 0 : index
    %c132 = arith.constant 132 : index
    %48 = vector.load %arg1[%c0_53, %c132] : memref<8x1280xf32, #tpu.memory_space<vmem>>, vector<8x1024xf32>
    %c192 = arith.constant 192 : index
    %c0_54 = arith.constant 0 : index
    %49 = vector.load %arg14[%c192, %c0_54] : memref<200x1024xf32, #tpu.memory_space<vmem>>, vector<8x1024xf32>
    tpu.vector_store %arg14[%c192, %c0_54], %48 {strides = array<i32>} : memref<200x1024xf32, #tpu.memory_space<vmem>>, vector<8x1024xf32>,
    %c0_55 = arith.constant 0 : index
    %c0_56 = arith.constant 0 : index
    %50 = vector.load %arg2[%c0_55, %c0_56] : memref<48x200xf32, #tpu.memory_space<vmem>>, vector<48x200xf32>
    %c0_57 = arith.constant 0 : index
    %c0_58 = arith.constant 0 : index
    %51 = vector.load %arg14[%c0_57, %c0_58] : memref<200x1024xf32, #tpu.memory_space<vmem>>, vector<200x1024xf32>
    %cst = arith.constant dense<0.000000e+00> : vector<48x1024xf32>
    %52 = tpu.matmul %50, %51, %cst {dimension_numbers = #tpu.dot_dimension_numbers<[1], [0], [0], [1], [0, 0, 1, 1], [], []>} : vector<48x200xf32>, vector<200x1024xf32>, vector<48x1024xf32> -> vector<48x1024xf32>
    %c0_59 = arith.constant 0 : index
    %c0_60 = arith.constant 0 : index
    %53 = vector.load %arg3[%c0_59, %c0_60] : memref<48x1xf32, #tpu.memory_space<vmem>>, vector<48x1xf32>
    %54 = vector.broadcast %53 : vector<48x1xf32> to vector<48x1024xf32>
    %55 = arith.addf %52, %54 : vector<48x1024xf32>
    %cst_61 = arith.constant 0.000000e+00 : f32
    %56 = vector.broadcast %cst_61 : f32 to vector<48x1024xf32>
    %57 = arith.maximumf %55, %56 : vector<48x1024xf32>
    %c0_62 = arith.constant 0 : index
    %c0_63 = arith.constant 0 : index
    %58 = vector.load %arg6[%c0_62, %c0_63] : memref<1024x256xf32, #tpu.memory_space<vmem>>, vector<1024x256xf32>
    %cst_64 = arith.constant dense<0.000000e+00> : vector<48x256xf32>
    %59 = tpu.matmul %57, %58, %cst_64 {dimension_numbers = #tpu.dot_dimension_numbers<[1], [0], [0], [1], [0, 0, 1, 1], [], []>} : vector<48x1024xf32>, vector<1024x256xf32>, vector<48x256xf32> -> vector<48x256xf32>
    %c0_65 = arith.constant 0 : index
    %c0_66 = arith.constant 0 : index
    %60 = vector.load %arg15[%c0_65, %c0_66] : memref<48x256xf32, #tpu.memory_space<vmem>>, vector<48x256xf32>
    tpu.vector_store %arg15[%c0_65, %c0_66], %59 {strides = array<i32>} : memref<48x256xf32, #tpu.memory_space<vmem>>, vector<48x256xf32>,
    %c0_67 = arith.constant 0 : index
    %c0_68 = arith.constant 0 : index
    %61 = vector.load %arg15[%c0_67, %c0_68] : memref<48x256xf32, #tpu.memory_space<vmem>>, vector<48x140xf32>
    %c0_69 = arith.constant 0 : index
    %c0_70 = arith.constant 0 : index
    %62 = vector.load %arg16[%c0_69, %c0_70] : memref<1200x140xf32, #tpu.memory_space<vmem>>, vector<48x140xf32>
    tpu.vector_store %arg16[%c0_69, %c0_70], %61 {strides = array<i32>} : memref<1200x140xf32, #tpu.memory_space<vmem>>, vector<48x140xf32>,
    %c0_71 = arith.constant 0 : index
    %c1_72 = arith.constant 1 : index
    %63 = vector.load %arg15[%c0_71, %c1_72] : memref<48x256xf32, #tpu.memory_space<vmem>>, vector<48x140xf32>
    %c48_73 = arith.constant 48 : index
    %c0_74 = arith.constant 0 : index
    %64 = vector.load %arg16[%c48_73, %c0_74] : memref<1200x140xf32, #tpu.memory_space<vmem>>, vector<48x140xf32>
    tpu.vector_store %arg16[%c48_73, %c0_74], %63 {strides = array<i32>} : memref<1200x140xf32, #tpu.memory_space<vmem>>, vector<48x140xf32>,
    %c0_75 = arith.constant 0 : index
    %c2_76 = arith.constant 2 : index
    %65 = vector.load %arg15[%c0_75, %c2_76] : memref<48x256xf32, #tpu.memory_space<vmem>>, vector<48x140xf32>
    %c96_77 = arith.constant 96 : index
    %c0_78 = arith.constant 0 : index
    %66 = vector.load %arg16[%c96_77, %c0_78] : memref<1200x140xf32, #tpu.memory_space<vmem>>, vector<48x140xf32>
    tpu.vector_store %arg16[%c96_77, %c0_78], %65 {strides = array<i32>} : memref<1200x140xf32, #tpu.memory_space<vmem>>, vector<48x140xf32>,
    %c0_79 = arith.constant 0 : index
    %c3_80 = arith.constant 3 : index
    %67 = vector.load %arg15[%c0_79, %c3_80] : memref<48x256xf32, #tpu.memory_space<vmem>>, vector<48x140xf32>
    %c144_81 = arith.constant 144 : index
    %c0_82 = arith.constant 0 : index
    %68 = vector.load %arg16[%c144_81, %c0_82] : memref<1200x140xf32, #tpu.memory_space<vmem>>, vector<48x140xf32>
    tpu.vector_store %arg16[%c144_81, %c0_82], %67 {strides = array<i32>} : memref<1200x140xf32, #tpu.memory_space<vmem>>, vector<48x140xf32>,
    %c0_83 = arith.constant 0 : index
    %c4_84 = arith.constant 4 : index
    %69 = vector.load %arg15[%c0_83, %c4_84] : memref<48x256xf32, #tpu.memory_space<vmem>>, vector<48x140xf32>
    %c192_85 = arith.constant 192 : index
    %c0_86 = arith.constant 0 : index
    %70 = vector.load %arg16[%c192_85, %c0_86] : memref<1200x140xf32, #tpu.memory_space<vmem>>, vector<48x140xf32>
    tpu.vector_store %arg16[%c192_85, %c0_86], %69 {strides = array<i32>} : memref<1200x140xf32, #tpu.memory_space<vmem>>, vector<48x140xf32>,
    %c0_87 = arith.constant 0 : index
    %c14 = arith.constant 14 : index
    %71 = vector.load %arg15[%c0_87, %c14] : memref<48x256xf32, #tpu.memory_space<vmem>>, vector<48x140xf32>
    %c240 = arith.constant 240 : index
    %c0_88 = arith.constant 0 : index
    %72 = vector.load %arg16[%c240, %c0_88] : memref<1200x140xf32, #tpu.memory_space<vmem>>, vector<48x140xf32>
    tpu.vector_store %arg16[%c240, %c0_88], %71 {strides = array<i32>} : memref<1200x140xf32, #tpu.memory_space<vmem>>, vector<48x140xf32>,
    %c0_89 = arith.constant 0 : index
    %c15 = arith.constant 15 : index
    %73 = vector.load %arg15[%c0_89, %c15] : memref<48x256xf32, #tpu.memory_space<vmem>>, vector<48x140xf32>
    %c288 = arith.constant 288 : index
    %c0_90 = arith.constant 0 : index
    %74 = vector.load %arg16[%c288, %c0_90] : memref<1200x140xf32, #tpu.memory_space<vmem>>, vector<48x140xf32>
    tpu.vector_store %arg16[%c288, %c0_90], %73 {strides = array<i32>} : memref<1200x140xf32, #tpu.memory_space<vmem>>, vector<48x140xf32>,
    %c0_91 = arith.constant 0 : index
    %c16_92 = arith.constant 16 : index
    %75 = vector.load %arg15[%c0_91, %c16_92] : memref<48x256xf32, #tpu.memory_space<vmem>>, vector<48x140xf32>
    %c336 = arith.constant 336 : index
    %c0_93 = arith.constant 0 : index
    %76 = vector.load %arg16[%c336, %c0_93] : memref<1200x140xf32, #tpu.memory_space<vmem>>, vector<48x140xf32>
    tpu.vector_store %arg16[%c336, %c0_93], %75 {strides = array<i32>} : memref<1200x140xf32, #tpu.memory_space<vmem>>, vector<48x140xf32>,
    %c0_94 = arith.constant 0 : index
    %c17 = arith.constant 17 : index
    %77 = vector.load %arg15[%c0_94, %c17] : memref<48x256xf32, #tpu.memory_space<vmem>>, vector<48x140xf32>
    %c384 = arith.constant 384 : index
    %c0_95 = arith.constant 0 : index
    %78 = vector.load %arg16[%c384, %c0_95] : memref<1200x140xf32, #tpu.memory_space<vmem>>, vector<48x140xf32>
    tpu.vector_store %arg16[%c384, %c0_95], %77 {strides = array<i32>} : memref<1200x140xf32, #tpu.memory_space<vmem>>, vector<48x140xf32>,
    %c0_96 = arith.constant 0 : index
    %c18 = arith.constant 18 : index
    %79 = vector.load %arg15[%c0_96, %c18] : memref<48x256xf32, #tpu.memory_space<vmem>>, vector<48x140xf32>
    %c432 = arith.constant 432 : index
    %c0_97 = arith.constant 0 : index
    %80 = vector.load %arg16[%c432, %c0_97] : memref<1200x140xf32, #tpu.memory_space<vmem>>, vector<48x140xf32>
    tpu.vector_store %arg16[%c432, %c0_97], %79 {strides = array<i32>} : memref<1200x140xf32, #tpu.memory_space<vmem>>, vector<48x140xf32>,
    %c0_98 = arith.constant 0 : index
    %c28 = arith.constant 28 : index
    %81 = vector.load %arg15[%c0_98, %c28] : memref<48x256xf32, #tpu.memory_space<vmem>>, vector<48x140xf32>
    %c480 = arith.constant 480 : index
    %c0_99 = arith.constant 0 : index
    %82 = vector.load %arg16[%c480, %c0_99] : memref<1200x140xf32, #tpu.memory_space<vmem>>, vector<48x140xf32>
    tpu.vector_store %arg16[%c480, %c0_99], %81 {strides = array<i32>} : memref<1200x140xf32, #tpu.memory_space<vmem>>, vector<48x140xf32>,
    %c0_100 = arith.constant 0 : index
    %c29 = arith.constant 29 : index
    %83 = vector.load %arg15[%c0_100, %c29] : memref<48x256xf32, #tpu.memory_space<vmem>>, vector<48x140xf32>
    %c528 = arith.constant 528 : index
    %c0_101 = arith.constant 0 : index
    %84 = vector.load %arg16[%c528, %c0_101] : memref<1200x140xf32, #tpu.memory_space<vmem>>, vector<48x140xf32>
    tpu.vector_store %arg16[%c528, %c0_101], %83 {strides = array<i32>} : memref<1200x140xf32, #tpu.memory_space<vmem>>, vector<48x140xf32>,
    %c0_102 = arith.constant 0 : index
    %c30 = arith.constant 30 : index
    %85 = vector.load %arg15[%c0_102, %c30] : memref<48x256xf32, #tpu.memory_space<vmem>>, vector<48x140xf32>
    %c576 = arith.constant 576 : index
    %c0_103 = arith.constant 0 : index
    %86 = vector.load %arg16[%c576, %c0_103] : memref<1200x140xf32, #tpu.memory_space<vmem>>, vector<48x140xf32>
    tpu.vector_store %arg16[%c576, %c0_103], %85 {strides = array<i32>} : memref<1200x140xf32, #tpu.memory_space<vmem>>, vector<48x140xf32>,
    %c0_104 = arith.constant 0 : index
    %c31 = arith.constant 31 : index
    %87 = vector.load %arg15[%c0_104, %c31] : memref<48x256xf32, #tpu.memory_space<vmem>>, vector<48x140xf32>
    %c624 = arith.constant 624 : index
    %c0_105 = arith.constant 0 : index
    %88 = vector.load %arg16[%c624, %c0_105] : memref<1200x140xf32, #tpu.memory_space<vmem>>, vector<48x140xf32>
    tpu.vector_store %arg16[%c624, %c0_105], %87 {strides = array<i32>} : memref<1200x140xf32, #tpu.memory_space<vmem>>, vector<48x140xf32>,
    %c0_106 = arith.constant 0 : index
    %c32_107 = arith.constant 32 : index
    %89 = vector.load %arg15[%c0_106, %c32_107] : memref<48x256xf32, #tpu.memory_space<vmem>>, vector<48x140xf32>
    %c672 = arith.constant 672 : index
    %c0_108 = arith.constant 0 : index
    %90 = vector.load %arg16[%c672, %c0_108] : memref<1200x140xf32, #tpu.memory_space<vmem>>, vector<48x140xf32>
    tpu.vector_store %arg16[%c672, %c0_108], %89 {strides = array<i32>} : memref<1200x140xf32, #tpu.memory_space<vmem>>, vector<48x140xf32>,
    %c0_109 = arith.constant 0 : index
    %c42 = arith.constant 42 : index
    %91 = vector.load %arg15[%c0_109, %c42] : memref<48x256xf32, #tpu.memory_space<vmem>>, vector<48x140xf32>
    %c720 = arith.constant 720 : index
    %c0_110 = arith.constant 0 : index
    %92 = vector.load %arg16[%c720, %c0_110] : memref<1200x140xf32, #tpu.memory_space<vmem>>, vector<48x140xf32>
    tpu.vector_store %arg16[%c720, %c0_110], %91 {strides = array<i32>} : memref<1200x140xf32, #tpu.memory_space<vmem>>, vector<48x140xf32>,
    %c0_111 = arith.constant 0 : index
    %c43 = arith.constant 43 : index
    %93 = vector.load %arg15[%c0_111, %c43] : memref<48x256xf32, #tpu.memory_space<vmem>>, vector<48x140xf32>
    %c768 = arith.constant 768 : index
    %c0_112 = arith.constant 0 : index
    %94 = vector.load %arg16[%c768, %c0_112] : memref<1200x140xf32, #tpu.memory_space<vmem>>, vector<48x140xf32>
    tpu.vector_store %arg16[%c768, %c0_112], %93 {strides = array<i32>} : memref<1200x140xf32, #tpu.memory_space<vmem>>, vector<48x140xf32>,
    %c0_113 = arith.constant 0 : index
    %c44 = arith.constant 44 : index
    %95 = vector.load %arg15[%c0_113, %c44] : memref<48x256xf32, #tpu.memory_space<vmem>>, vector<48x140xf32>
    %c816 = arith.constant 816 : index
    %c0_114 = arith.constant 0 : index
    %96 = vector.load %arg16[%c816, %c0_114] : memref<1200x140xf32, #tpu.memory_space<vmem>>, vector<48x140xf32>
    tpu.vector_store %arg16[%c816, %c0_114], %95 {strides = array<i32>} : memref<1200x140xf32, #tpu.memory_space<vmem>>, vector<48x140xf32>,
    %c0_115 = arith.constant 0 : index
    %c45 = arith.constant 45 : index
    %97 = vector.load %arg15[%c0_115, %c45] : memref<48x256xf32, #tpu.memory_space<vmem>>, vector<48x140xf32>
    %c864 = arith.constant 864 : index
    %c0_116 = arith.constant 0 : index
    %98 = vector.load %arg16[%c864, %c0_116] : memref<1200x140xf32, #tpu.memory_space<vmem>>, vector<48x140xf32>
    tpu.vector_store %arg16[%c864, %c0_116], %97 {strides = array<i32>} : memref<1200x140xf32, #tpu.memory_space<vmem>>, vector<48x140xf32>,
    %c0_117 = arith.constant 0 : index
    %c46 = arith.constant 46 : index
    %99 = vector.load %arg15[%c0_117, %c46] : memref<48x256xf32, #tpu.memory_space<vmem>>, vector<48x140xf32>
    %c912 = arith.constant 912 : index
    %c0_118 = arith.constant 0 : index
    %100 = vector.load %arg16[%c912, %c0_118] : memref<1200x140xf32, #tpu.memory_space<vmem>>, vector<48x140xf32>
    tpu.vector_store %arg16[%c912, %c0_118], %99 {strides = array<i32>} : memref<1200x140xf32, #tpu.memory_space<vmem>>, vector<48x140xf32>,
    %c0_119 = arith.constant 0 : index
    %c56_120 = arith.constant 56 : index
    %101 = vector.load %arg15[%c0_119, %c56_120] : memref<48x256xf32, #tpu.memory_space<vmem>>, vector<48x140xf32>
    %c960 = arith.constant 960 : index
    %c0_121 = arith.constant 0 : index
    %102 = vector.load %arg16[%c960, %c0_121] : memref<1200x140xf32, #tpu.memory_space<vmem>>, vector<48x140xf32>
    tpu.vector_store %arg16[%c960, %c0_121], %101 {strides = array<i32>} : memref<1200x140xf32, #tpu.memory_space<vmem>>, vector<48x140xf32>,
    %c0_122 = arith.constant 0 : index
    %c57 = arith.constant 57 : index
    %103 = vector.load %arg15[%c0_122, %c57] : memref<48x256xf32, #tpu.memory_space<vmem>>, vector<48x140xf32>
    %c1008 = arith.constant 1008 : index
    %c0_123 = arith.constant 0 : index
    %104 = vector.load %arg16[%c1008, %c0_123] : memref<1200x140xf32, #tpu.memory_space<vmem>>, vector<48x140xf32>
    tpu.vector_store %arg16[%c1008, %c0_123], %103 {strides = array<i32>} : memref<1200x140xf32, #tpu.memory_space<vmem>>, vector<48x140xf32>,
    %c0_124 = arith.constant 0 : index
    %c58 = arith.constant 58 : index
    %105 = vector.load %arg15[%c0_124, %c58] : memref<48x256xf32, #tpu.memory_space<vmem>>, vector<48x140xf32>
    %c1056 = arith.constant 1056 : index
    %c0_125 = arith.constant 0 : index
    %106 = vector.load %arg16[%c1056, %c0_125] : memref<1200x140xf32, #tpu.memory_space<vmem>>, vector<48x140xf32>
    tpu.vector_store %arg16[%c1056, %c0_125], %105 {strides = array<i32>} : memref<1200x140xf32, #tpu.memory_space<vmem>>, vector<48x140xf32>,
    %c0_126 = arith.constant 0 : index
    %c59 = arith.constant 59 : index
    %107 = vector.load %arg15[%c0_126, %c59] : memref<48x256xf32, #tpu.memory_space<vmem>>, vector<48x140xf32>
    %c1104 = arith.constant 1104 : index
    %c0_127 = arith.constant 0 : index
    %108 = vector.load %arg16[%c1104, %c0_127] : memref<1200x140xf32, #tpu.memory_space<vmem>>, vector<48x140xf32>
    tpu.vector_store %arg16[%c1104, %c0_127], %107 {strides = array<i32>} : memref<1200x140xf32, #tpu.memory_space<vmem>>, vector<48x140xf32>,
    %c0_128 = arith.constant 0 : index
    %c60 = arith.constant 60 : index
    %109 = vector.load %arg15[%c0_128, %c60] : memref<48x256xf32, #tpu.memory_space<vmem>>, vector<48x140xf32>
    %c1152 = arith.constant 1152 : index
    %c0_129 = arith.constant 0 : index
    %110 = vector.load %arg16[%c1152, %c0_129] : memref<1200x140xf32, #tpu.memory_space<vmem>>, vector<48x140xf32>
    tpu.vector_store %arg16[%c1152, %c0_129], %109 {strides = array<i32>} : memref<1200x140xf32, #tpu.memory_space<vmem>>, vector<48x140xf32>,
    %c0_130 = arith.constant 0 : index
    %c0_131 = arith.constant 0 : index
    %111 = vector.load %arg4[%c0_130, %c0_131] : memref<128x1200xf32, #tpu.memory_space<vmem>>, vector<128x1200xf32>
    %c0_132 = arith.constant 0 : index
    %c0_133 = arith.constant 0 : index
    %112 = vector.load %arg16[%c0_132, %c0_133] : memref<1200x140xf32, #tpu.memory_space<vmem>>, vector<1200x140xf32>
    %cst_134 = arith.constant dense<0.000000e+00> : vector<128x140xf32>
    %113 = tpu.matmul %111, %112, %cst_134 {dimension_numbers = #tpu.dot_dimension_numbers<[1], [0], [0], [1], [0, 0, 1, 1], [], []>} : vector<128x1200xf32>, vector<1200x140xf32>, vector<128x140xf32> -> vector<128x140xf32>
    %c0_135 = arith.constant 0 : index
    %c0_136 = arith.constant 0 : index
    %114 = vector.load %arg5[%c0_135, %c0_136] : memref<128x1xf32, #tpu.memory_space<vmem>>, vector<128x1xf32>
    %115 = vector.broadcast %114 : vector<128x1xf32> to vector<128x140xf32>
    %116 = arith.addf %113, %115 : vector<128x140xf32>
    %cst_137 = arith.constant 0.000000e+00 : f32
    %117 = vector.broadcast %cst_137 : f32 to vector<128x140xf32>
    %118 = arith.maximumf %116, %117 : vector<128x140xf32>
    %119 = vector.extract_strided_slice %118 {offsets = [0, 0], sizes = [8, 140], strides = [1, 1]} : vector<128x140xf32> to vector<8x140xf32>
    %c0_138 = arith.constant 0 : index
    %c0_139 = arith.constant 0 : index
    %120 = vector.load %arg17[%c0_138, %c0_139] : memref<8x2240xf32, #tpu.memory_space<vmem>>, vector<8x140xf32>
    tpu.vector_store %arg17[%c0_138, %c0_139], %119 {strides = array<i32>} : memref<8x2240xf32, #tpu.memory_space<vmem>>, vector<8x140xf32>,
    %121 = vector.extract_strided_slice %118 {offsets = [8, 0], sizes = [8, 140], strides = [1, 1]} : vector<128x140xf32> to vector<8x140xf32>
    %c0_140 = arith.constant 0 : index
    %c140 = arith.constant 140 : index
    %122 = vector.load %arg17[%c0_140, %c140] : memref<8x2240xf32, #tpu.memory_space<vmem>>, vector<8x140xf32>
    tpu.vector_store %arg17[%c0_140, %c140], %121 {strides = array<i32>} : memref<8x2240xf32, #tpu.memory_space<vmem>>, vector<8x140xf32>,
    %123 = vector.extract_strided_slice %118 {offsets = [16, 0], sizes = [8, 140], strides = [1, 1]} : vector<128x140xf32> to vector<8x140xf32>
    %c0_141 = arith.constant 0 : index
    %c280 = arith.constant 280 : index
    %124 = vector.load %arg17[%c0_141, %c280] : memref<8x2240xf32, #tpu.memory_space<vmem>>, vector<8x140xf32>
    tpu.vector_store %arg17[%c0_141, %c280], %123 {strides = array<i32>} : memref<8x2240xf32, #tpu.memory_space<vmem>>, vector<8x140xf32>,
    %125 = vector.extract_strided_slice %118 {offsets = [24, 0], sizes = [8, 140], strides = [1, 1]} : vector<128x140xf32> to vector<8x140xf32>
    %c0_142 = arith.constant 0 : index
    %c420 = arith.constant 420 : index
    %126 = vector.load %arg17[%c0_142, %c420] : memref<8x2240xf32, #tpu.memory_space<vmem>>, vector<8x140xf32>
    tpu.vector_store %arg17[%c0_142, %c420], %125 {strides = array<i32>} : memref<8x2240xf32, #tpu.memory_space<vmem>>, vector<8x140xf32>,
    %127 = vector.extract_strided_slice %118 {offsets = [32, 0], sizes = [8, 140], strides = [1, 1]} : vector<128x140xf32> to vector<8x140xf32>
    %c0_143 = arith.constant 0 : index
    %c560 = arith.constant 560 : index
    %128 = vector.load %arg17[%c0_143, %c560] : memref<8x2240xf32, #tpu.memory_space<vmem>>, vector<8x140xf32>
    tpu.vector_store %arg17[%c0_143, %c560], %127 {strides = array<i32>} : memref<8x2240xf32, #tpu.memory_space<vmem>>, vector<8x140xf32>,
    %129 = vector.extract_strided_slice %118 {offsets = [40, 0], sizes = [8, 140], strides = [1, 1]} : vector<128x140xf32> to vector<8x140xf32>
    %c0_144 = arith.constant 0 : index
    %c700 = arith.constant 700 : index
    %130 = vector.load %arg17[%c0_144, %c700] : memref<8x2240xf32, #tpu.memory_space<vmem>>, vector<8x140xf32>
    tpu.vector_store %arg17[%c0_144, %c700], %129 {strides = array<i32>} : memref<8x2240xf32, #tpu.memory_space<vmem>>, vector<8x140xf32>,
    %131 = vector.extract_strided_slice %118 {offsets = [48, 0], sizes = [8, 140], strides = [1, 1]} : vector<128x140xf32> to vector<8x140xf32>
    %c0_145 = arith.constant 0 : index
    %c840 = arith.constant 840 : index
    %132 = vector.load %arg17[%c0_145, %c840] : memref<8x2240xf32, #tpu.memory_space<vmem>>, vector<8x140xf32>
    tpu.vector_store %arg17[%c0_145, %c840], %131 {strides = array<i32>} : memref<8x2240xf32, #tpu.memory_space<vmem>>, vector<8x140xf32>,
    %133 = vector.extract_strided_slice %118 {offsets = [56, 0], sizes = [8, 140], strides = [1, 1]} : vector<128x140xf32> to vector<8x140xf32>
    %c0_146 = arith.constant 0 : index
    %c980 = arith.constant 980 : index
    %134 = vector.load %arg17[%c0_146, %c980] : memref<8x2240xf32, #tpu.memory_space<vmem>>, vector<8x140xf32>
    tpu.vector_store %arg17[%c0_146, %c980], %133 {strides = array<i32>} : memref<8x2240xf32, #tpu.memory_space<vmem>>, vector<8x140xf32>,
    %135 = vector.extract_strided_slice %118 {offsets = [64, 0], sizes = [8, 140], strides = [1, 1]} : vector<128x140xf32> to vector<8x140xf32>
    %c0_147 = arith.constant 0 : index
    %c1120 = arith.constant 1120 : index
    %136 = vector.load %arg17[%c0_147, %c1120] : memref<8x2240xf32, #tpu.memory_space<vmem>>, vector<8x140xf32>
    tpu.vector_store %arg17[%c0_147, %c1120], %135 {strides = array<i32>} : memref<8x2240xf32, #tpu.memory_space<vmem>>, vector<8x140xf32>,
    %137 = vector.extract_strided_slice %118 {offsets = [72, 0], sizes = [8, 140], strides = [1, 1]} : vector<128x140xf32> to vector<8x140xf32>
    %c0_148 = arith.constant 0 : index
    %c1260 = arith.constant 1260 : index
    %138 = vector.load %arg17[%c0_148, %c1260] : memref<8x2240xf32, #tpu.memory_space<vmem>>, vector<8x140xf32>
    tpu.vector_store %arg17[%c0_148, %c1260], %137 {strides = array<i32>} : memref<8x2240xf32, #tpu.memory_space<vmem>>, vector<8x140xf32>,
    %139 = vector.extract_strided_slice %118 {offsets = [80, 0], sizes = [8, 140], strides = [1, 1]} : vector<128x140xf32> to vector<8x140xf32>
    %c0_149 = arith.constant 0 : index
    %c1400 = arith.constant 1400 : index
    %140 = vector.load %arg17[%c0_149, %c1400] : memref<8x2240xf32, #tpu.memory_space<vmem>>, vector<8x140xf32>
    tpu.vector_store %arg17[%c0_149, %c1400], %139 {strides = array<i32>} : memref<8x2240xf32, #tpu.memory_space<vmem>>, vector<8x140xf32>,
    %141 = vector.extract_strided_slice %118 {offsets = [88, 0], sizes = [8, 140], strides = [1, 1]} : vector<128x140xf32> to vector<8x140xf32>
    %c0_150 = arith.constant 0 : index
    %c1540 = arith.constant 1540 : index
    %142 = vector.load %arg17[%c0_150, %c1540] : memref<8x2240xf32, #tpu.memory_space<vmem>>, vector<8x140xf32>
    tpu.vector_store %arg17[%c0_150, %c1540], %141 {strides = array<i32>} : memref<8x2240xf32, #tpu.memory_space<vmem>>, vector<8x140xf32>,
    %143 = vector.extract_strided_slice %118 {offsets = [96, 0], sizes = [8, 140], strides = [1, 1]} : vector<128x140xf32> to vector<8x140xf32>
    %c0_151 = arith.constant 0 : index
    %c1680 = arith.constant 1680 : index
    %144 = vector.load %arg17[%c0_151, %c1680] : memref<8x2240xf32, #tpu.memory_space<vmem>>, vector<8x140xf32>
    tpu.vector_store %arg17[%c0_151, %c1680], %143 {strides = array<i32>} : memref<8x2240xf32, #tpu.memory_space<vmem>>, vector<8x140xf32>,
    %145 = vector.extract_strided_slice %118 {offsets = [104, 0], sizes = [8, 140], strides = [1, 1]} : vector<128x140xf32> to vector<8x140xf32>
    %c0_152 = arith.constant 0 : index
    %c1820 = arith.constant 1820 : index
    %146 = vector.load %arg17[%c0_152, %c1820] : memref<8x2240xf32, #tpu.memory_space<vmem>>, vector<8x140xf32>
    tpu.vector_store %arg17[%c0_152, %c1820], %145 {strides = array<i32>} : memref<8x2240xf32, #tpu.memory_space<vmem>>, vector<8x140xf32>,
    %147 = vector.extract_strided_slice %118 {offsets = [112, 0], sizes = [8, 140], strides = [1, 1]} : vector<128x140xf32> to vector<8x140xf32>
    %c0_153 = arith.constant 0 : index
    %c1960 = arith.constant 1960 : index
    %148 = vector.load %arg17[%c0_153, %c1960] : memref<8x2240xf32, #tpu.memory_space<vmem>>, vector<8x140xf32>
    tpu.vector_store %arg17[%c0_153, %c1960], %147 {strides = array<i32>} : memref<8x2240xf32, #tpu.memory_space<vmem>>, vector<8x140xf32>,
    %149 = vector.extract_strided_slice %118 {offsets = [120, 0], sizes = [8, 140], strides = [1, 1]} : vector<128x140xf32> to vector<8x140xf32>
    %c0_154 = arith.constant 0 : index
    %c2100 = arith.constant 2100 : index
    %150 = vector.load %arg17[%c0_154, %c2100] : memref<8x2240xf32, #tpu.memory_space<vmem>>, vector<8x140xf32>
    tpu.vector_store %arg17[%c0_154, %c2100], %149 {strides = array<i32>} : memref<8x2240xf32, #tpu.memory_space<vmem>>, vector<8x140xf32>,
    %c0_155 = arith.constant 0 : index
    %c0_156 = arith.constant 0 : index
    %151 = vector.load %arg17[%c0_155, %c0_156] : memref<8x2240xf32, #tpu.memory_space<vmem>>, vector<8x2240xf32>
    %c0_157 = arith.constant 0 : index
    %c0_158 = arith.constant 0 : index
    %152 = vector.load %arg7[%c0_157, %c0_158] : memref<2240x120xf32, #tpu.memory_space<vmem>>, vector<2240x120xf32>
    %cst_159 = arith.constant dense<0.000000e+00> : vector<8x120xf32>
    %153 = tpu.matmul %151, %152, %cst_159 {dimension_numbers = #tpu.dot_dimension_numbers<[1], [0], [0], [1], [0, 0, 1, 1], [], []>} : vector<8x2240xf32>, vector<2240x120xf32>, vector<8x120xf32> -> vector<8x120xf32>
    %c0_160 = arith.constant 0 : index
    %c0_161 = arith.constant 0 : index
    %154 = vector.load %arg8[%c0_160, %c0_161] : memref<1x120xf32, #tpu.memory_space<vmem>>, vector<1x120xf32>
    %155 = vector.broadcast %154 : vector<1x120xf32> to vector<8x120xf32>
    %156 = arith.addf %153, %155 : vector<8x120xf32>
    %cst_162 = arith.constant 0.000000e+00 : f32
    %157 = vector.broadcast %cst_162 : f32 to vector<8x120xf32>
    %158 = arith.maximumf %156, %157 : vector<8x120xf32>
    %c0_163 = arith.constant 0 : index
    %c0_164 = arith.constant 0 : index
    %159 = vector.load %arg9[%c0_163, %c0_164] : memref<120x84xf32, #tpu.memory_space<vmem>>, vector<120x84xf32>
    %cst_165 = arith.constant dense<0.000000e+00> : vector<8x84xf32>
    %160 = tpu.matmul %158, %159, %cst_165 {dimension_numbers = #tpu.dot_dimension_numbers<[1], [0], [0], [1], [0, 0, 1, 1], [], []>} : vector<8x120xf32>, vector<120x84xf32>, vector<8x84xf32> -> vector<8x84xf32>
    %c0_166 = arith.constant 0 : index
    %c0_167 = arith.constant 0 : index
    %161 = vector.load %arg10[%c0_166, %c0_167] : memref<1x84xf32, #tpu.memory_space<vmem>>, vector<1x84xf32>
    %162 = vector.broadcast %161 : vector<1x84xf32> to vector<8x84xf32>
    %163 = arith.addf %160, %162 : vector<8x84xf32>
    %cst_168 = arith.constant 0.000000e+00 : f32
    %164 = vector.broadcast %cst_168 : f32 to vector<8x84xf32>
    %165 = arith.maximumf %163, %164 : vector<8x84xf32>
    %c0_169 = arith.constant 0 : index
    %c0_170 = arith.constant 0 : index
    %166 = vector.load %arg11[%c0_169, %c0_170] : memref<84x128xf32, #tpu.memory_space<vmem>>, vector<84x128xf32>
    %cst_171 = arith.constant dense<0.000000e+00> : vector<8x128xf32>
    %167 = tpu.matmul %165, %166, %cst_171 {dimension_numbers = #tpu.dot_dimension_numbers<[1], [0], [0], [1], [0, 0, 1, 1], [], []>} : vector<8x84xf32>, vector<84x128xf32>, vector<8x128xf32> -> vector<8x128xf32>
    %c0_172 = arith.constant 0 : index
    %c0_173 = arith.constant 0 : index
    %168 = vector.load %arg12[%c0_172, %c0_173] : memref<1x128xf32, #tpu.memory_space<vmem>>, vector<1x128xf32>
    %169 = vector.broadcast %168 : vector<1x128xf32> to vector<8x128xf32>
    %170 = arith.addf %167, %169 : vector<8x128xf32>
    %c0_174 = arith.constant 0 : index
    %c0_175 = arith.constant 0 : index
    %171 = vector.load %arg13[%c0_174, %c0_175] : memref<8x128xf32, #tpu.memory_space<vmem>>, vector<8x128xf32>
    tpu.vector_store %arg13[%c0_174, %c0_175], %170 {strides = array<i32>} : memref<8x128xf32, #tpu.memory_space<vmem>>, vector<8x128xf32>,
    return
  }
  func.func @transform_0(%arg0: i32) -> (i32, i32) {
    %c0_i32 = arith.constant 0 : i32
    %c0_i32_0 = arith.constant 0 : i32
    return %arg0, %c0_i32 : i32, i32
  }
  func.func @transform_1(%arg0: i32) -> (i32, i32) {
    %c0_i32 = arith.constant 0 : i32
    %c0_i32_0 = arith.constant 0 : i32
    %c0_i32_1 = arith.constant 0 : i32
    return %c0_i32, %c0_i32_0 : i32, i32
  }
  func.func @transform_2(%arg0: i32) -> (i32, i32) {
    %c0_i32 = arith.constant 0 : i32
    %c0_i32_0 = arith.constant 0 : i32
    %c0_i32_1 = arith.constant 0 : i32
    return %c0_i32, %c0_i32_0 : i32, i32
  }
  func.func @transform_3(%arg0: i32) -> (i32, i32) {
    %c0_i32 = arith.constant 0 : i32
    %c0_i32_0 = arith.constant 0 : i32
    %c0_i32_1 = arith.constant 0 : i32
    return %c0_i32, %c0_i32_0 : i32, i32
  }
  func.func @transform_4(%arg0: i32) -> (i32, i32) {
    %c0_i32 = arith.constant 0 : i32
    %c0_i32_0 = arith.constant 0 : i32
    %c0_i32_1 = arith.constant 0 : i32
    return %c0_i32, %c0_i32_0 : i32, i32
  }
  func.func @transform_5(%arg0: i32) -> (i32, i32) {
    %c0_i32 = arith.constant 0 : i32
    %c0_i32_0 = arith.constant 0 : i32
    %c0_i32_1 = arith.constant 0 : i32
    return %c0_i32, %c0_i32_0 : i32, i32
  }
  func.func @transform_6(%arg0: i32) -> (i32, i32) {
    %c0_i32 = arith.constant 0 : i32
    %c0_i32_0 = arith.constant 0 : i32
    %c0_i32_1 = arith.constant 0 : i32
    return %c0_i32, %c0_i32_0 : i32, i32
  }
  func.func @transform_7(%arg0: i32) -> (i32, i32) {
    %c0_i32 = arith.constant 0 : i32
    %c0_i32_0 = arith.constant 0 : i32
    %c0_i32_1 = arith.constant 0 : i32
    return %c0_i32, %c0_i32_0 : i32, i32
  }
  func.func @transform_8(%arg0: i32) -> (i32, i32) {
    %c0_i32 = arith.constant 0 : i32
    %c0_i32_0 = arith.constant 0 : i32
    %c0_i32_1 = arith.constant 0 : i32
    return %c0_i32, %c0_i32_0 : i32, i32
  }
  func.func @transform_9(%arg0: i32) -> (i32, i32) {
    %c0_i32 = arith.constant 0 : i32
    %c0_i32_0 = arith.constant 0 : i32
    %c0_i32_1 = arith.constant 0 : i32
    return %c0_i32, %c0_i32_0 : i32, i32
  }
  func.func @transform_10(%arg0: i32) -> (i32, i32) {
    %c0_i32 = arith.constant 0 : i32
    %c0_i32_0 = arith.constant 0 : i32
    %c0_i32_1 = arith.constant 0 : i32
    return %c0_i32, %c0_i32_0 : i32, i32
  }
  func.func @transform_11(%arg0: i32) -> (i32, i32) {
    %c0_i32 = arith.constant 0 : i32
    %c0_i32_0 = arith.constant 0 : i32
    %c0_i32_1 = arith.constant 0 : i32
    return %c0_i32, %c0_i32_0 : i32, i32
  }
  func.func @transform_12(%arg0: i32) -> (i32, i32) {
    %c0_i32 = arith.constant 0 : i32
    %c0_i32_0 = arith.constant 0 : i32
    return %arg0, %c0_i32 : i32, i32
  }
}

</mosaic_0001>

<llo_original>
// kernel: lenet5_forward.1
$region0: #{lenet5_forward.1}
  #allocation0 [shape = 'u32[]', space=smem, size = 0x4, offset = 0x4, fixed_abs, tag = 'smem constant byte address 0x4 - core index']
  #allocation1 [shape = 'u32[72,128]{1,0:T(1,128)}', space=vmem, size = 0x9000, scoped, tag = 'internal scratch']
  #allocation2 [shape = 'f32[200,1024]{1,0:T(8,128)}', space=vmem, size = 0xc8000, scoped, tag = 'scratch operand']
  #allocation3 [shape = 'f32[48,256]{1,0:T(8,128)}', space=vmem, size = 0xc000, scoped, tag = 'scratch operand']
  #allocation4 [shape = 'f32[1200,140]{1,0:T(8,128)}', space=vmem, size = 0x12c000, scoped, tag = 'scratch operand']
  #allocation5 [shape = 'f32[8,2240]{1,0:T(8,128)}', space=vmem, size = 0x12000, scoped, tag = 'scratch operand']
  %s0 = inlined_call_operand.vmem [shape: f32[8,1280], index: 0, kind: input, shape index: {}]
  %s1 = inlined_call_operand.vmem [shape: f32[48,200], index: 1, kind: input, shape index: {}]
  %s2 = inlined_call_operand.vmem [shape: f32[48,1], index: 2, kind: input, shape index: {}]
  %s3 = inlined_call_operand.vmem [shape: f32[128,1200], index: 3, kind: input, shape index: {}]
  %s4 = inlined_call_operand.vmem [shape: f32[128,1], index: 4, kind: input, shape index: {}]
  %s5 = inlined_call_operand.vmem [shape: f32[1024,256], index: 5, kind: input, shape index: {}]
  %s6 = inlined_call_operand.vmem [shape: f32[2240,120], index: 6, kind: input, shape index: {}]
  %s7 = inlined_call_operand.vmem [shape: f32[1,120], index: 7, kind: input, shape index: {}]
  %s8 = inlined_call_operand.vmem [shape: f32[120,84], index: 8, kind: input, shape index: {}]
  %s9 = inlined_call_operand.vmem [shape: f32[1,84], index: 9, kind: input, shape index: {}]
  %s10 = inlined_call_operand.vmem [shape: f32[84,128], index: 10, kind: input, shape index: {}]
  %s11 = inlined_call_operand.vmem [shape: f32[1,128], index: 11, kind: input, shape index: {}]
  %s12 = inlined_call_operand.vmem [shape: f32[8,128], index: 12, kind: output, shape index: {}]
  %s13 = sld [smem:[#allocation0]]
  $region58: #{lenet5_forward.1} parent=0
    _
  %s15 = ssub.s32 1, %s13
  %s16 = scalar_select 0, %s15, %s13
  // Predicated region
  $region2: #{lenet5_forward.1} parent=0 // pred_check
    _
  $region3: #{lenet5_forward.1} parent=0 // pred_check_branch
    %18 = sbr.rel (0) target = $region5
  $region4: #{lenet5_forward.1} parent=0 // pred_region
    _
  $region5: #{lenet5_forward.1} parent=0 // pred_fallthru
    _
  // Predicated region
  $region6: #{lenet5_forward.1} parent=0 // pred_check
    _
  $region7: #{lenet5_forward.1} parent=0 // pred_check_branch
    %20 = sbr.rel (0) target = $region9
  $region8: #{lenet5_forward.1} parent=0 // pred_region
    _
  $region9: #{lenet5_forward.1} parent=0 // pred_fallthru
    _
  // Predicated region
  $region10: #{lenet5_forward.1} parent=0 // pred_check
    _
  $region11: #{lenet5_forward.1} parent=0 // pred_check_branch
    %22 = sbr.rel (0) target = $region13
  $region12: #{lenet5_forward.1} parent=0 // pred_region
    _
  $region13: #{lenet5_forward.1} parent=0 // pred_fallthru
    _
  // Predicated region
  $region14: #{lenet5_forward.1} parent=0 // pred_check
    _
  $region15: #{lenet5_forward.1} parent=0 // pred_check_branch
    %24 = sbr.rel (0) target = $region17
  $region16: #{lenet5_forward.1} parent=0 // pred_region
    _
  $region17: #{lenet5_forward.1} parent=0 // pred_fallthru
    _
  // Predicated region
  $region18: #{lenet5_forward.1} parent=0 // pred_check
    _
  $region19: #{lenet5_forward.1} parent=0 // pred_check_branch
    %26 = sbr.rel (0) target = $region21
  $region20: #{lenet5_forward.1} parent=0 // pred_region
    _
  $region21: #{lenet5_forward.1} parent=0 // pred_fallthru
    _
  // Predicated region
  $region22: #{lenet5_forward.1} parent=0 // pred_check
    _
  $region23: #{lenet5_forward.1} parent=0 // pred_check_branch
    %28 = sbr.rel (0) target = $region25
  $region24: #{lenet5_forward.1} parent=0 // pred_region
    _
  $region25: #{lenet5_forward.1} parent=0 // pred_fallthru
    _
  // Predicated region
  $region26: #{lenet5_forward.1} parent=0 // pred_check
    _
  $region27: #{lenet5_forward.1} parent=0 // pred_check_branch
    %30 = sbr.rel (0) target = $region29
  $region28: #{lenet5_forward.1} parent=0 // pred_region
    _
  $region29: #{lenet5_forward.1} parent=0 // pred_fallthru
    _
  // Predicated region
  $region30: #{lenet5_forward.1} parent=0 // pred_check
    _
  $region31: #{lenet5_forward.1} parent=0 // pred_check_branch
    %32 = sbr.rel (0) target = $region33
  $region32: #{lenet5_forward.1} parent=0 // pred_region
    _
  $region33: #{lenet5_forward.1} parent=0 // pred_fallthru
    _
  // Predicated region
  $region34: #{lenet5_forward.1} parent=0 // pred_check
    _
  $region35: #{lenet5_forward.1} parent=0 // pred_check_branch
    %34 = sbr.rel (0) target = $region37
  $region36: #{lenet5_forward.1} parent=0 // pred_region
    _
  $region37: #{lenet5_forward.1} parent=0 // pred_fallthru
    _
  // Predicated region
  $region38: #{lenet5_forward.1} parent=0 // pred_check
    _
  $region39: #{lenet5_forward.1} parent=0 // pred_check_branch
    %36 = sbr.rel (0) target = $region41
  $region40: #{lenet5_forward.1} parent=0 // pred_region
    _
  $region41: #{lenet5_forward.1} parent=0 // pred_fallthru
    _
  // Predicated region
  $region42: #{lenet5_forward.1} parent=0 // pred_check
    _
  $region43: #{lenet5_forward.1} parent=0 // pred_check_branch
    %38 = sbr.rel (0) target = $region45
  $region44: #{lenet5_forward.1} parent=0 // pred_region
    _
  $region45: #{lenet5_forward.1} parent=0 // pred_fallthru
    _
  // Predicated region
  $region46: #{lenet5_forward.1} parent=0 // pred_check
    _
  $region47: #{lenet5_forward.1} parent=0 // pred_check_branch
    %40 = sbr.rel (0) target = $region49
  $region48: #{lenet5_forward.1} parent=0 // pred_region
    _
  $region49: #{lenet5_forward.1} parent=0 // pred_fallthru
    _
  %v41 = vld [vmem:[%s0] sm:$0xff]
  %v42 = vld [vmem:[%s0 + $0x8] sm:$0xff]
  %v43 = vld [vmem:[%s0 + $0x10] sm:$0xff]
  %v44 = vld [vmem:[%s0 + $0x18] sm:$0xff]
  %v45 = vld [vmem:[%s0 + $0x20] sm:$0xff]
  %v46 = vld [vmem:[%s0 + $0x28] sm:$0xff]
  %v47 = vld [vmem:[%s0 + $0x30] sm:$0xff]
  %v48 = vld [vmem:[%s0 + $0x38] sm:$0xff]
  %49 = vst [vmem:[#allocation2] sm:$0xff] %v41
  %50 = vst [vmem:[#allocation2 + $0x8] sm:$0xff] %v42
  %51 = vst [vmem:[#allocation2 + $0x10] sm:$0xff] %v43
  %52 = vst [vmem:[#allocation2 + $0x18] sm:$0xff] %v44
  %53 = vst [vmem:[#allocation2 + $0x20] sm:$0xff] %v45
  %54 = vst [vmem:[#allocation2 + $0x28] sm:$0xff] %v46
  %55 = vst [vmem:[#allocation2 + $0x30] sm:$0xff] %v47
  %56 = vst [vmem:[#allocation2 + $0x38] sm:$0xff] %v48
  %v57 = vld [vmem:[%s0] sm:$0xff]
  %v58 = vld [vmem:[%s0 + $0x8] sm:$0xff]
  %v59 = vld [vmem:[%s0 + $0x10] sm:$0xff]
  %v60 = vld [vmem:[%s0 + $0x18] sm:$0xff]
  %v61 = vld [vmem:[%s0 + $0x20] sm:$0xff]
  %v62 = vld [vmem:[%s0 + $0x28] sm:$0xff]
  %v63 = vld [vmem:[%s0 + $0x30] sm:$0xff]
  %v64 = vld [vmem:[%s0 + $0x38] sm:$0xff]
  %v65 = vld [vmem:[%s0 + $0x40] sm:$0xff]
  %75 = vrot.lane.b32.xlu0 %v57, 127
  %v76 = vpop.permute.xlu0 %75
  %77 = vrot.lane.b32.xlu0 %v58, 127
  %v78 = vpop.permute.xlu0 %77
  %79 = vrot.lane.b32.xlu0 %v59, 127
  %v80 = vpop.permute.xlu0 %79
  %81 = vrot.lane.b32.xlu0 %v60, 127
  %v82 = vpop.permute.xlu0 %81
  %83 = vrot.lane.b32.xlu0 %v61, 127
  %v84 = vpop.permute.xlu0 %83
  %85 = vrot.lane.b32.xlu0 %v62, 127
  %v86 = vpop.permute.xlu0 %85
  %87 = vrot.lane.b32.xlu0 %v63, 127
  %v88 = vpop.permute.xlu0 %87
  %89 = vrot.lane.b32.xlu0 %v64, 127
  %v90 = vpop.permute.xlu0 %89
  %91 = vrot.lane.b32.xlu0 %v65, 127
  %v92 = vpop.permute.xlu0 %91
  %vm93 = vcmask 1039360
  %v94 = vsel %vm93, %v76, %v78
  %v95 = vsel %vm93, %v78, %v80
  %v96 = vsel %vm93, %v80, %v82
  %v97 = vsel %vm93, %v82, %v84
  %v98 = vsel %vm93, %v84, %v86
  %v99 = vsel %vm93, %v86, %v88
  %v100 = vsel %vm93, %v88, %v90
  %v101 = vsel %vm93, %v90, %v92
  %110 = vst [vmem:[#allocation2 + $0x40] sm:$0xff] %v94
  %111 = vst [vmem:[#allocation2 + $0x48] sm:$0xff] %v95
  %112 = vst [vmem:[#allocation2 + $0x50] sm:$0xff] %v96
  %113 = vst [vmem:[#allocation2 + $0x58] sm:$0xff] %v97
  %114 = vst [vmem:[#allocation2 + $0x60] sm:$0xff] %v98
  %115 = vst [vmem:[#allocation2 + $0x68] sm:$0xff] %v99
  %116 = vst [vmem:[#allocation2 + $0x70] sm:$0xff] %v100
  %117 = vst [vmem:[#allocation2 + $0x78] sm:$0xff] %v101
  %v118 = vld [vmem:[%s0] sm:$0xff]
  %v119 = vld [vmem:[%s0 + $0x8] sm:$0xff]
  %v120 = vld [vmem:[%s0 + $0x10] sm:$0xff]
  %v121 = vld [vmem:[%s0 + $0x18] sm:$0xff]
  %v122 = vld [vmem:[%s0 + $0x20] sm:$0xff]
  %v123 = vld [vmem:[%s0 + $0x28] sm:$0xff]
  %v124 = vld [vmem:[%s0 + $0x30] sm:$0xff]
  %v125 = vld [vmem:[%s0 + $0x38] sm:$0xff]
  %v126 = vld [vmem:[%s0 + $0x40] sm:$0xff]
  %136 = vrot.lane.b32.xlu0 %v118, 126
  %v137 = vpop.permute.xlu0 %136
  %138 = vrot.lane.b32.xlu0 %v119, 126
  %v139 = vpop.permute.xlu0 %138
  %140 = vrot.lane.b32.xlu0 %v120, 126
  %v141 = vpop.permute.xlu0 %140
  %142 = vrot.lane.b32.xlu0 %v121, 126
  %v143 = vpop.permute.xlu0 %142
  %144 = vrot.lane.b32.xlu0 %v122, 126
  %v145 = vpop.permute.xlu0 %144
  %146 = vrot.lane.b32.xlu0 %v123, 126
  %v147 = vpop.permute.xlu0 %146
  %148 = vrot.lane.b32.xlu0 %v124, 126
  %v149 = vpop.permute.xlu0 %148
  %150 = vrot.lane.b32.xlu0 %v125, 126
  %v151 = vpop.permute.xlu0 %150
  %152 = vrot.lane.b32.xlu0 %v126, 126
  %v153 = vpop.permute.xlu0 %152
  %vm154 = vcmask 1031168
  %v155 = vsel %vm154, %v137, %v139
  %v156 = vsel %vm154, %v139, %v141
  %v157 = vsel %vm154, %v141, %v143
  %v158 = vsel %vm154, %v143, %v145
  %v159 = vsel %vm154, %v145, %v147
  %v160 = vsel %vm154, %v147, %v149
  %v161 = vsel %vm154, %v149, %v151
  %v162 = vsel %vm154, %v151, %v153
  %171 = vst [vmem:[#allocation2 + $0x80] sm:$0xff] %v155
  %172 = vst [vmem:[#allocation2 + $0x88] sm:$0xff] %v156
  %173 = vst [vmem:[#allocation2 + $0x90] sm:$0xff] %v157
  %174 = vst [vmem:[#allocation2 + $0x98] sm:$0xff] %v158
  %175 = vst [vmem:[#allocation2 + $0xa0] sm:$0xff] %v159
  %176 = vst [vmem:[#allocation2 + $0xa8] sm:$0xff] %v160
  %177 = vst [vmem:[#allocation2 + $0xb0] sm:$0xff] %v161
  %178 = vst [vmem:[#allocation2 + $0xb8] sm:$0xff] %v162
  %v179 = vld [vmem:[%s0] sm:$0xff]
  %v180 = vld [vmem:[%s0 + $0x8] sm:$0xff]
  %v181 = vld [vmem:[%s0 + $0x10] sm:$0xff]
  %v182 = vld [vmem:[%s0 + $0x18] sm:$0xff]
  %v183 = vld [vmem:[%s0 + $0x20] sm:$0xff]
  %v184 = vld [vmem:[%s0 + $0x28] sm:$0xff]
  %v185 = vld [vmem:[%s0 + $0x30] sm:$0xff]
  %v186 = vld [vmem:[%s0 + $0x38] sm:$0xff]
  %v187 = vld [vmem:[%s0 + $0x40] sm:$0xff]
  %197 = vrot.lane.b32.xlu0 %v179, 125
  %v198 = vpop.permute.xlu0 %197
  %199 = vrot.lane.b32.xlu0 %v180, 125
  %v200 = vpop.permute.xlu0 %199
  %201 = vrot.lane.b32.xlu0 %v181, 125
  %v202 = vpop.permute.xlu0 %201
  %203 = vrot.lane.b32.xlu0 %v182, 125
  %v204 = vpop.permute.xlu0 %203
  %205 = vrot.lane.b32.xlu0 %v183, 125
  %v206 = vpop.permute.xlu0 %205
  %207 = vrot.lane.b32.xlu0 %v184, 125
  %v208 = vpop.permute.xlu0 %207
  %209 = vrot.lane.b32.xlu0 %v185, 125
  %v210 = vpop.permute.xlu0 %209
  %211 = vrot.lane.b32.xlu0 %v186, 125
  %v212 = vpop.permute.xlu0 %211
  %213 = vrot.lane.b32.xlu0 %v187, 125
  %v214 = vpop.permute.xlu0 %213
  %vm215 = vcmask 1022976
  %v216 = vsel %vm215, %v198, %v200
  %v217 = vsel %vm215, %v200, %v202
  %v218 = vsel %vm215, %v202, %v204
  %v219 = vsel %vm215, %v204, %v206
  %v220 = vsel %vm215, %v206, %v208
  %v221 = vsel %vm215, %v208, %v210
  %v222 = vsel %vm215, %v210, %v212
  %v223 = vsel %vm215, %v212, %v214
  %232 = vst [vmem:[#allocation2 + $0xc0] sm:$0xff] %v216
  %233 = vst [vmem:[#allocation2 + $0xc8] sm:$0xff] %v217
  %234 = vst [vmem:[#allocation2 + $0xd0] sm:$0xff] %v218
  %235 = vst [vmem:[#allocation2 + $0xd8] sm:$0xff] %v219
  %236 = vst [vmem:[#allocation2 + $0xe0] sm:$0xff] %v220
  %237 = vst [vmem:[#allocation2 + $0xe8] sm:$0xff] %v221
  %238 = vst [vmem:[#allocation2 + $0xf0] sm:$0xff] %v222
  %239 = vst [vmem:[#allocation2 + $0xf8] sm:$0xff] %v223
  %v240 = vld [vmem:[%s0] sm:$0xff]
  %v241 = vld [vmem:[%s0 + $0x8] sm:$0xff]
  %v242 = vld [vmem:[%s0 + $0x10] sm:$0xff]
  %v243 = vld [vmem:[%s0 + $0x18] sm:$0xff]
  %v244 = vld [vmem:[%s0 + $0x20] sm:$0xff]
  %v245 = vld [vmem:[%s0 + $0x28] sm:$0xff]
  %v246 = vld [vmem:[%s0 + $0x30] sm:$0xff]
  %v247 = vld [vmem:[%s0 + $0x38] sm:$0xff]
  %v248 = vld [vmem:[%s0 + $0x40] sm:$0xff]
  %258 = vrot.lane.b32.xlu0 %v240, 124
  %v259 = vpop.permute.xlu0 %258
  %260 = vrot.lane.b32.xlu0 %v241, 124
  %v261 = vpop.permute.xlu0 %260
  %262 = vrot.lane.b32.xlu0 %v242, 124
  %v263 = vpop.permute.xlu0 %262
  %264 = vrot.lane.b32.xlu0 %v243, 124
  %v265 = vpop.permute.xlu0 %264
  %266 = vrot.lane.b32.xlu0 %v244, 124
  %v267 = vpop.permute.xlu0 %266
  %268 = vrot.lane.b32.xlu0 %v245, 124
  %v269 = vpop.permute.xlu0 %268
  %270 = vrot.lane.b32.xlu0 %v246, 124
  %v271 = vpop.permute.xlu0 %270
  %272 = vrot.lane.b32.xlu0 %v247, 124
  %v273 = vpop.permute.xlu0 %272
  %274 = vrot.lane.b32.xlu0 %v248, 124
  %v275 = vpop.permute.xlu0 %274
  %vm276 = vcmask 1014784
  %v277 = vsel %vm276, %v259, %v261
  %v278 = vsel %vm276, %v261, %v263
  %v279 = vsel %vm276, %v263, %v265
  %v280 = vsel %vm276, %v265, %v267
  %v281 = vsel %vm276, %v267, %v269
  %v282 = vsel %vm276, %v269, %v271
  %v283 = vsel %vm276, %v271, %v273
  %v284 = vsel %vm276, %v273, %v275
  %293 = vst [vmem:[#allocation2 + $0x100] sm:$0xff] %v277
  %294 = vst [vmem:[#allocation2 + $0x108] sm:$0xff] %v278
  %295 = vst [vmem:[#allocation2 + $0x110] sm:$0xff] %v279
  %296 = vst [vmem:[#allocation2 + $0x118] sm:$0xff] %v280
  %297 = vst [vmem:[#allocation2 + $0x120] sm:$0xff] %v281
  %298 = vst [vmem:[#allocation2 + $0x128] sm:$0xff] %v282
  %299 = vst [vmem:[#allocation2 + $0x130] sm:$0xff] %v283
  %300 = vst [vmem:[#allocation2 + $0x138] sm:$0xff] %v284
  %v301 = vld [vmem:[%s0] sm:$0xff]
  %v302 = vld [vmem:[%s0 + $0x8] sm:$0xff]
  %v303 = vld [vmem:[%s0 + $0x10] sm:$0xff]
  %v304 = vld [vmem:[%s0 + $0x18] sm:$0xff]
  %v305 = vld [vmem:[%s0 + $0x20] sm:$0xff]
  %v306 = vld [vmem:[%s0 + $0x28] sm:$0xff]
  %v307 = vld [vmem:[%s0 + $0x30] sm:$0xff]
  %v308 = vld [vmem:[%s0 + $0x38] sm:$0xff]
  %v309 = vld [vmem:[%s0 + $0x40] sm:$0xff]
  %319 = vrot.lane.b32.xlu0 %v301, 96
  %v320 = vpop.permute.xlu0 %319
  %321 = vrot.lane.b32.xlu0 %v302, 96
  %v322 = vpop.permute.xlu0 %321
  %323 = vrot.lane.b32.xlu0 %v303, 96
  %v324 = vpop.permute.xlu0 %323
  %325 = vrot.lane.b32.xlu0 %v304, 96
  %v326 = vpop.permute.xlu0 %325
  %327 = vrot.lane.b32.xlu0 %v305, 96
  %v328 = vpop.permute.xlu0 %327
  %329 = vrot.lane.b32.xlu0 %v306, 96
  %v330 = vpop.permute.xlu0 %329
  %331 = vrot.lane.b32.xlu0 %v307, 96
  %v332 = vpop.permute.xlu0 %331
  %333 = vrot.lane.b32.xlu0 %v308, 96
  %v334 = vpop.permute.xlu0 %333
  %335 = vrot.lane.b32.xlu0 %v309, 96
  %v336 = vpop.permute.xlu0 %335
  %vm337 = vcmask 785408
  %v338 = vsel %vm337, %v320, %v322
  %v339 = vsel %vm337, %v322, %v324
  %v340 = vsel %vm337, %v324, %v326
  %v341 = vsel %vm337, %v326, %v328
  %v342 = vsel %vm337, %v328, %v330
  %v343 = vsel %vm337, %v330, %v332
  %v344 = vsel %vm337, %v332, %v334
  %v345 = vsel %vm337, %v334, %v336
  %354 = vst [vmem:[#allocation2 + $0x140] sm:$0xff] %v338
  %355 = vst [vmem:[#allocation2 + $0x148] sm:$0xff] %v339
  %356 = vst [vmem:[#allocation2 + $0x150] sm:$0xff] %v340
  %357 = vst [vmem:[#allocation2 + $0x158] sm:$0xff] %v341
  %358 = vst [vmem:[#allocation2 + $0x160] sm:$0xff] %v342
  %359 = vst [vmem:[#allocation2 + $0x168] sm:$0xff] %v343
  %360 = vst [vmem:[#allocation2 + $0x170] sm:$0xff] %v344
  %361 = vst [vmem:[#allocation2 + $0x178] sm:$0xff] %v345
  %v362 = vld [vmem:[%s0] sm:$0xff]
  %v363 = vld [vmem:[%s0 + $0x8] sm:$0xff]
  %v364 = vld [vmem:[%s0 + $0x10] sm:$0xff]
  %v365 = vld [vmem:[%s0 + $0x18] sm:$0xff]
  %v366 = vld [vmem:[%s0 + $0x20] sm:$0xff]
  %v367 = vld [vmem:[%s0 + $0x28] sm:$0xff]
  %v368 = vld [vmem:[%s0 + $0x30] sm:$0xff]
  %v369 = vld [vmem:[%s0 + $0x38] sm:$0xff]
  %v370 = vld [vmem:[%s0 + $0x40] sm:$0xff]
  %380 = vrot.lane.b32.xlu0 %v362, 95
  %v381 = vpop.permute.xlu0 %380
  %382 = vrot.lane.b32.xlu0 %v363, 95
  %v383 = vpop.permute.xlu0 %382
  %384 = vrot.lane.b32.xlu0 %v364, 95
  %v385 = vpop.permute.xlu0 %384
  %386 = vrot.lane.b32.xlu0 %v365, 95
  %v387 = vpop.permute.xlu0 %386
  %388 = vrot.lane.b32.xlu0 %v366, 95
  %v389 = vpop.permute.xlu0 %388
  %390 = vrot.lane.b32.xlu0 %v367, 95
  %v391 = vpop.permute.xlu0 %390
  %392 = vrot.lane.b32.xlu0 %v368, 95
  %v393 = vpop.permute.xlu0 %392
  %394 = vrot.lane.b32.xlu0 %v369, 95
  %v395 = vpop.permute.xlu0 %394
  %396 = vrot.lane.b32.xlu0 %v370, 95
  %v397 = vpop.permute.xlu0 %396
  %vm398 = vcmask 777216
  %v399 = vsel %vm398, %v381, %v383
  %v400 = vsel %vm398, %v383, %v385
  %v401 = vsel %vm398, %v385, %v387
  %v402 = vsel %vm398, %v387, %v389
  %v403 = vsel %vm398, %v389, %v391
  %v404 = vsel %vm398, %v391, %v393
  %v405 = vsel %vm398, %v393, %v395
  %v406 = vsel %vm398, %v395, %v397
  %415 = vst [vmem:[#allocation2 + $0x180] sm:$0xff] %v399
  %416 = vst [vmem:[#allocation2 + $0x188] sm:$0xff] %v400
  %417 = vst [vmem:[#allocation2 + $0x190] sm:$0xff] %v401
  %418 = vst [vmem:[#allocation2 + $0x198] sm:$0xff] %v402
  %419 = vst [vmem:[#allocation2 + $0x1a0] sm:$0xff] %v403
  %420 = vst [vmem:[#allocation2 + $0x1a8] sm:$0xff] %v404
  %421 = vst [vmem:[#allocation2 + $0x1b0] sm:$0xff] %v405
  %422 = vst [vmem:[#allocation2 + $0x1b8] sm:$0xff] %v406
  %v423 = vld [vmem:[%s0] sm:$0xff]
  %v424 = vld [vmem:[%s0 + $0x8] sm:$0xff]
  %v425 = vld [vmem:[%s0 + $0x10] sm:$0xff]
  %v426 = vld [vmem:[%s0 + $0x18] sm:$0xff]
  %v427 = vld [vmem:[%s0 + $0x20] sm:$0xff]
  %v428 = vld [vmem:[%s0 + $0x28] sm:$0xff]
  %v429 = vld [vmem:[%s0 + $0x30] sm:$0xff]
  %v430 = vld [vmem:[%s0 + $0x38] sm:$0xff]
  %v431 = vld [vmem:[%s0 + $0x40] sm:$0xff]
  %441 = vrot.lane.b32.xlu0 %v423, 94
  %v442 = vpop.permute.xlu0 %441
  %443 = vrot.lane.b32.xlu0 %v424, 94
  %v444 = vpop.permute.xlu0 %443
  %445 = vrot.lane.b32.xlu0 %v425, 94
  %v446 = vpop.permute.xlu0 %445
  %447 = vrot.lane.b32.xlu0 %v426, 94
  %v448 = vpop.permute.xlu0 %447
  %449 = vrot.lane.b32.xlu0 %v427, 94
  %v450 = vpop.permute.xlu0 %449
  %451 = vrot.lane.b32.xlu0 %v428, 94
  %v452 = vpop.permute.xlu0 %451
  %453 = vrot.lane.b32.xlu0 %v429, 94
  %v454 = vpop.permute.xlu0 %453
  %455 = vrot.lane.b32.xlu0 %v430, 94
  %v456 = vpop.permute.xlu0 %455
  %457 = vrot.lane.b32.xlu0 %v431, 94
  %v458 = vpop.permute.xlu0 %457
  %vm459 = vcmask 769024
  %v460 = vsel %vm459, %v442, %v444
  %v461 = vsel %vm459, %v444, %v446
  %v462 = vsel %vm459, %v446, %v448
  %v463 = vsel %vm459, %v448, %v450
  %v464 = vsel %vm459, %v450, %v452
  %v465 = vsel %vm459, %v452, %v454
  %v466 = vsel %vm459, %v454, %v456
  %v467 = vsel %vm459, %v456, %v458
  %476 = vst [vmem:[#allocation2 + $0x1c0] sm:$0xff] %v460
  %477 = vst [vmem:[#allocation2 + $0x1c8] sm:$0xff] %v461
  %478 = vst [vmem:[#allocation2 + $0x1d0] sm:$0xff] %v462
  %479 = vst [vmem:[#allocation2 + $0x1d8] sm:$0xff] %v463
  %480 = vst [vmem:[#allocation2 + $0x1e0] sm:$0xff] %v464
  %481 = vst [vmem:[#allocation2 + $0x1e8] sm:$0xff] %v465
  %482 = vst [vmem:[#allocation2 + $0x1f0] sm:$0xff] %v466
  %483 = vst [vmem:[#allocation2 + $0x1f8] sm:$0xff] %v467
  %v484 = vld [vmem:[%s0] sm:$0xff]
  %v485 = vld [vmem:[%s0 + $0x8] sm:$0xff]
  %v486 = vld [vmem:[%s0 + $0x10] sm:$0xff]
  %v487 = vld [vmem:[%s0 + $0x18] sm:$0xff]
  %v488 = vld [vmem:[%s0 + $0x20] sm:$0xff]
  %v489 = vld [vmem:[%s0 + $0x28] sm:$0xff]
  %v490 = vld [vmem:[%s0 + $0x30] sm:$0xff]
  %v491 = vld [vmem:[%s0 + $0x38] sm:$0xff]
  %v492 = vld [vmem:[%s0 + $0x40] sm:$0xff]
  %502 = vrot.lane.b32.xlu0 %v484, 93
  %v503 = vpop.permute.xlu0 %502
  %504 = vrot.lane.b32.xlu0 %v485, 93
  %v505 = vpop.permute.xlu0 %504
  %506 = vrot.lane.b32.xlu0 %v486, 93
  %v507 = vpop.permute.xlu0 %506
  %508 = vrot.lane.b32.xlu0 %v487, 93
  %v509 = vpop.permute.xlu0 %508
  %510 = vrot.lane.b32.xlu0 %v488, 93
  %v511 = vpop.permute.xlu0 %510
  %512 = vrot.lane.b32.xlu0 %v489, 93
  %v513 = vpop.permute.xlu0 %512
  %514 = vrot.lane.b32.xlu0 %v490, 93
  %v515 = vpop.permute.xlu0 %514
  %516 = vrot.lane.b32.xlu0 %v491, 93
  %v517 = vpop.permute.xlu0 %516
  %518 = vrot.lane.b32.xlu0 %v492, 93
  %v519 = vpop.permute.xlu0 %518
  %vm520 = vcmask 760832
  %v521 = vsel %vm520, %v503, %v505
  %v522 = vsel %vm520, %v505, %v507
  %v523 = vsel %vm520, %v507, %v509
  %v524 = vsel %vm520, %v509, %v511
  %v525 = vsel %vm520, %v511, %v513
  %v526 = vsel %vm520, %v513, %v515
  %v527 = vsel %vm520, %v515, %v517
  %v528 = vsel %vm520, %v517, %v519
  %537 = vst [vmem:[#allocation2 + $0x200] sm:$0xff] %v521
  %538 = vst [vmem:[#allocation2 + $0x208] sm:$0xff] %v522
  %539 = vst [vmem:[#allocation2 + $0x210] sm:$0xff] %v523
  %540 = vst [vmem:[#allocation2 + $0x218] sm:$0xff] %v524
  %541 = vst [vmem:[#allocation2 + $0x220] sm:$0xff] %v525
  %542 = vst [vmem:[#allocation2 + $0x228] sm:$0xff] %v526
  %543 = vst [vmem:[#allocation2 + $0x230] sm:$0xff] %v527
  %544 = vst [vmem:[#allocation2 + $0x238] sm:$0xff] %v528
  %v545 = vld [vmem:[%s0] sm:$0xff]
  %v546 = vld [vmem:[%s0 + $0x8] sm:$0xff]
  %v547 = vld [vmem:[%s0 + $0x10] sm:$0xff]
  %v548 = vld [vmem:[%s0 + $0x18] sm:$0xff]
  %v549 = vld [vmem:[%s0 + $0x20] sm:$0xff]
  %v550 = vld [vmem:[%s0 + $0x28] sm:$0xff]
  %v551 = vld [vmem:[%s0 + $0x30] sm:$0xff]
  %v552 = vld [vmem:[%s0 + $0x38] sm:$0xff]
  %v553 = vld [vmem:[%s0 + $0x40] sm:$0xff]
  %563 = vrot.lane.b32.xlu0 %v545, 92
  %v564 = vpop.permute.xlu0 %563
  %565 = vrot.lane.b32.xlu0 %v546, 92
  %v566 = vpop.permute.xlu0 %565
  %567 = vrot.lane.b32.xlu0 %v547, 92
  %v568 = vpop.permute.xlu0 %567
  %569 = vrot.lane.b32.xlu0 %v548, 92
  %v570 = vpop.permute.xlu0 %569
  %571 = vrot.lane.b32.xlu0 %v549, 92
  %v572 = vpop.permute.xlu0 %571
  %573 = vrot.lane.b32.xlu0 %v550, 92
  %v574 = vpop.permute.xlu0 %573
  %575 = vrot.lane.b32.xlu0 %v551, 92
  %v576 = vpop.permute.xlu0 %575
  %577 = vrot.lane.b32.xlu0 %v552, 92
  %v578 = vpop.permute.xlu0 %577
  %579 = vrot.lane.b32.xlu0 %v553, 92
  %v580 = vpop.permute.xlu0 %579
  %vm581 = vcmask 752640
  %v582 = vsel %vm581, %v564, %v566
  %v583 = vsel %vm581, %v566, %v568
  %v584 = vsel %vm581, %v568, %v570
  %v585 = vsel %vm581, %v570, %v572
  %v586 = vsel %vm581, %v572, %v574
  %v587 = vsel %vm581, %v574, %v576
  %v588 = vsel %vm581, %v576, %v578
  %v589 = vsel %vm581, %v578, %v580
  %598 = vst [vmem:[#allocation2 + $0x240] sm:$0xff] %v582
  %599 = vst [vmem:[#allocation2 + $0x248] sm:$0xff] %v583
  %600 = vst [vmem:[#allocation2 + $0x250] sm:$0xff] %v584
  %601 = vst [vmem:[#allocation2 + $0x258] sm:$0xff] %v585
  %602 = vst [vmem:[#allocation2 + $0x260] sm:$0xff] %v586
  %603 = vst [vmem:[#allocation2 + $0x268] sm:$0xff] %v587
  %604 = vst [vmem:[#allocation2 + $0x270] sm:$0xff] %v588
  %605 = vst [vmem:[#allocation2 + $0x278] sm:$0xff] %v589
  %v606 = vld [vmem:[%s0] sm:$0xff]
  %v607 = vld [vmem:[%s0 + $0x8] sm:$0xff]
  %v608 = vld [vmem:[%s0 + $0x10] sm:$0xff]
  %v609 = vld [vmem:[%s0 + $0x18] sm:$0xff]
  %v610 = vld [vmem:[%s0 + $0x20] sm:$0xff]
  %v611 = vld [vmem:[%s0 + $0x28] sm:$0xff]
  %v612 = vld [vmem:[%s0 + $0x30] sm:$0xff]
  %v613 = vld [vmem:[%s0 + $0x38] sm:$0xff]
  %v614 = vld [vmem:[%s0 + $0x40] sm:$0xff]
  %624 = vrot.lane.b32.xlu0 %v606, 64
  %v625 = vpop.permute.xlu0 %624
  %626 = vrot.lane.b32.xlu0 %v607, 64
  %v627 = vpop.permute.xlu0 %626
  %628 = vrot.lane.b32.xlu0 %v608, 64
  %v629 = vpop.permute.xlu0 %628
  %630 = vrot.lane.b32.xlu0 %v609, 64
  %v631 = vpop.permute.xlu0 %630
  %632 = vrot.lane.b32.xlu0 %v610, 64
  %v633 = vpop.permute.xlu0 %632
  %634 = vrot.lane.b32.xlu0 %v611, 64
  %v635 = vpop.permute.xlu0 %634
  %636 = vrot.lane.b32.xlu0 %v612, 64
  %v637 = vpop.permute.xlu0 %636
  %638 = vrot.lane.b32.xlu0 %v613, 64
  %v639 = vpop.permute.xlu0 %638
  %640 = vrot.lane.b32.xlu0 %v614, 64
  %v641 = vpop.permute.xlu0 %640
  %vm642 = vcmask 523264
  %v643 = vsel %vm642, %v625, %v627
  %v644 = vsel %vm642, %v627, %v629
  %v645 = vsel %vm642, %v629, %v631
  %v646 = vsel %vm642, %v631, %v633
  %v647 = vsel %vm642, %v633, %v635
  %v648 = vsel %vm642, %v635, %v637
  %v649 = vsel %vm642, %v637, %v639
  %v650 = vsel %vm642, %v639, %v641
  %659 = vst [vmem:[#allocation2 + $0x280] sm:$0xff] %v643
  %660 = vst [vmem:[#allocation2 + $0x288] sm:$0xff] %v644
  %661 = vst [vmem:[#allocation2 + $0x290] sm:$0xff] %v645
  %662 = vst [vmem:[#allocation2 + $0x298] sm:$0xff] %v646
  %663 = vst [vmem:[#allocation2 + $0x2a0] sm:$0xff] %v647
  %664 = vst [vmem:[#allocation2 + $0x2a8] sm:$0xff] %v648
  %665 = vst [vmem:[#allocation2 + $0x2b0] sm:$0xff] %v649
  %666 = vst [vmem:[#allocation2 + $0x2b8] sm:$0xff] %v650
  %v667 = vld [vmem:[%s0] sm:$0xff]
  %v668 = vld [vmem:[%s0 + $0x8] sm:$0xff]
  %v669 = vld [vmem:[%s0 + $0x10] sm:$0xff]
  %v670 = vld [vmem:[%s0 + $0x18] sm:$0xff]
  %v671 = vld [vmem:[%s0 + $0x20] sm:$0xff]
  %v672 = vld [vmem:[%s0 + $0x28] sm:$0xff]
  %v673 = vld [vmem:[%s0 + $0x30] sm:$0xff]
  %v674 = vld [vmem:[%s0 + $0x38] sm:$0xff]
  %v675 = vld [vmem:[%s0 + $0x40] sm:$0xff]
  %685 = vrot.lane.b32.xlu0 %v667, 63
  %v686 = vpop.permute.xlu0 %685
  %687 = vrot.lane.b32.xlu0 %v668, 63
  %v688 = vpop.permute.xlu0 %687
  %689 = vrot.lane.b32.xlu0 %v669, 63
  %v690 = vpop.permute.xlu0 %689
  %691 = vrot.lane.b32.xlu0 %v670, 63
  %v692 = vpop.permute.xlu0 %691
  %693 = vrot.lane.b32.xlu0 %v671, 63
  %v694 = vpop.permute.xlu0 %693
  %695 = vrot.lane.b32.xlu0 %v672, 63
  %v696 = vpop.permute.xlu0 %695
  %697 = vrot.lane.b32.xlu0 %v673, 63
  %v698 = vpop.permute.xlu0 %697
  %699 = vrot.lane.b32.xlu0 %v674, 63
  %v700 = vpop.permute.xlu0 %699
  %701 = vrot.lane.b32.xlu0 %v675, 63
  %v702 = vpop.permute.xlu0 %701
  %vm703 = vcmask 515072
  %v704 = vsel %vm703, %v686, %v688
  %v705 = vsel %vm703, %v688, %v690
  %v706 = vsel %vm703, %v690, %v692
  %v707 = vsel %vm703, %v692, %v694
  %v708 = vsel %vm703, %v694, %v696
  %v709 = vsel %vm703, %v696, %v698
  %v710 = vsel %vm703, %v698, %v700
  %v711 = vsel %vm703, %v700, %v702
  %720 = vst [vmem:[#allocation2 + $0x2c0] sm:$0xff] %v704
  %721 = vst [vmem:[#allocation2 + $0x2c8] sm:$0xff] %v705
  %722 = vst [vmem:[#allocation2 + $0x2d0] sm:$0xff] %v706
  %723 = vst [vmem:[#allocation2 + $0x2d8] sm:$0xff] %v707
  %724 = vst [vmem:[#allocation2 + $0x2e0] sm:$0xff] %v708
  %725 = vst [vmem:[#allocation2 + $0x2e8] sm:$0xff] %v709
  %726 = vst [vmem:[#allocation2 + $0x2f0] sm:$0xff] %v710
  %727 = vst [vmem:[#allocation2 + $0x2f8] sm:$0xff] %v711
  %v728 = vld [vmem:[%s0] sm:$0xff]
  %v729 = vld [vmem:[%s0 + $0x8] sm:$0xff]
  %v730 = vld [vmem:[%s0 + $0x10] sm:$0xff]
  %v731 = vld [vmem:[%s0 + $0x18] sm:$0xff]
  %v732 = vld [vmem:[%s0 + $0x20] sm:$0xff]
  %v733 = vld [vmem:[%s0 + $0x28] sm:$0xff]
  %v734 = vld [vmem:[%s0 + $0x30] sm:$0xff]
  %v735 = vld [vmem:[%s0 + $0x38] sm:$0xff]
  %v736 = vld [vmem:[%s0 + $0x40] sm:$0xff]
  %746 = vrot.lane.b32.xlu0 %v728, 62
  %v747 = vpop.permute.xlu0 %746
  %748 = vrot.lane.b32.xlu0 %v729, 62
  %v749 = vpop.permute.xlu0 %748
  %750 = vrot.lane.b32.xlu0 %v730, 62
  %v751 = vpop.permute.xlu0 %750
  %752 = vrot.lane.b32.xlu0 %v731, 62
  %v753 = vpop.permute.xlu0 %752
  %754 = vrot.lane.b32.xlu0 %v732, 62
  %v755 = vpop.permute.xlu0 %754
  %756 = vrot.lane.b32.xlu0 %v733, 62
  %v757 = vpop.permute.xlu0 %756
  %758 = vrot.lane.b32.xlu0 %v734, 62
  %v759 = vpop.permute.xlu0 %758
  %760 = vrot.lane.b32.xlu0 %v735, 62
  %v761 = vpop.permute.xlu0 %760
  %762 = vrot.lane.b32.xlu0 %v736, 62
  %v763 = vpop.permute.xlu0 %762
  %vm764 = vcmask 506880
  %v765 = vsel %vm764, %v747, %v749
  %v766 = vsel %vm764, %v749, %v751
  %v767 = vsel %vm764, %v751, %v753
  %v768 = vsel %vm764, %v753, %v755
  %v769 = vsel %vm764, %v755, %v757
  %v770 = vsel %vm764, %v757, %v759
  %v771 = vsel %vm764, %v759, %v761
  %v772 = vsel %vm764, %v761, %v763
  %781 = vst [vmem:[#allocation2 + $0x300] sm:$0xff] %v765
  %782 = vst [vmem:[#allocation2 + $0x308] sm:$0xff] %v766
  %783 = vst [vmem:[#allocation2 + $0x310] sm:$0xff] %v767
  %784 = vst [vmem:[#allocation2 + $0x318] sm:$0xff] %v768
  %785 = vst [vmem:[#allocation2 + $0x320] sm:$0xff] %v769
  %786 = vst [vmem:[#allocation2 + $0x328] sm:$0xff] %v770
  %787 = vst [vmem:[#allocation2 + $0x330] sm:$0xff] %v771
  %788 = vst [vmem:[#allocation2 + $0x338] sm:$0xff] %v772
  %v789 = vld [vmem:[%s0] sm:$0xff]
  %v790 = vld [vmem:[%s0 + $0x8] sm:$0xff]
  %v791 = vld [vmem:[%s0 + $0x10] sm:$0xff]
  %v792 = vld [vmem:[%s0 + $0x18] sm:$0xff]
  %v793 = vld [vmem:[%s0 + $0x20] sm:$0xff]
  %v794 = vld [vmem:[%s0 + $0x28] sm:$0xff]
  %v795 = vld [vmem:[%s0 + $0x30] sm:$0xff]
  %v796 = vld [vmem:[%s0 + $0x38] sm:$0xff]
  %v797 = vld [vmem:[%s0 + $0x40] sm:$0xff]
  %807 = vrot.lane.b32.xlu0 %v789, 61
  %v808 = vpop.permute.xlu0 %807
  %809 = vrot.lane.b32.xlu0 %v790, 61
  %v810 = vpop.permute.xlu0 %809
  %811 = vrot.lane.b32.xlu0 %v791, 61
  %v812 = vpop.permute.xlu0 %811
  %813 = vrot.lane.b32.xlu0 %v792, 61
  %v814 = vpop.permute.xlu0 %813
  %815 = vrot.lane.b32.xlu0 %v793, 61
  %v816 = vpop.permute.xlu0 %815
  %817 = vrot.lane.b32.xlu0 %v794, 61
  %v818 = vpop.permute.xlu0 %817
  %819 = vrot.lane.b32.xlu0 %v795, 61
  %v820 = vpop.permute.xlu0 %819
  %821 = vrot.lane.b32.xlu0 %v796, 61
  %v822 = vpop.permute.xlu0 %821
  %823 = vrot.lane.b32.xlu0 %v797, 61
  %v824 = vpop.permute.xlu0 %823
  %vm825 = vcmask 498688
  %v826 = vsel %vm825, %v808, %v810
  %v827 = vsel %vm825, %v810, %v812
  %v828 = vsel %vm825, %v812, %v814
  %v829 = vsel %vm825, %v814, %v816
  %v830 = vsel %vm825, %v816, %v818
  %v831 = vsel %vm825, %v818, %v820
  %v832 = vsel %vm825, %v820, %v822
  %v833 = vsel %vm825, %v822, %v824
  %842 = vst [vmem:[#allocation2 + $0x340] sm:$0xff] %v826
  %843 = vst [vmem:[#allocation2 + $0x348] sm:$0xff] %v827
  %844 = vst [vmem:[#allocation2 + $0x350] sm:$0xff] %v828
  %845 = vst [vmem:[#allocation2 + $0x358] sm:$0xff] %v829
  %846 = vst [vmem:[#allocation2 + $0x360] sm:$0xff] %v830
  %847 = vst [vmem:[#allocation2 + $0x368] sm:$0xff] %v831
  %848 = vst [vmem:[#allocation2 + $0x370] sm:$0xff] %v832
  %849 = vst [vmem:[#allocation2 + $0x378] sm:$0xff] %v833
  %v850 = vld [vmem:[%s0] sm:$0xff]
  %v851 = vld [vmem:[%s0 + $0x8] sm:$0xff]
  %v852 = vld [vmem:[%s0 + $0x10] sm:$0xff]
  %v853 = vld [vmem:[%s0 + $0x18] sm:$0xff]
  %v854 = vld [vmem:[%s0 + $0x20] sm:$0xff]
  %v855 = vld [vmem:[%s0 + $0x28] sm:$0xff]
  %v856 = vld [vmem:[%s0 + $0x30] sm:$0xff]
  %v857 = vld [vmem:[%s0 + $0x38] sm:$0xff]
  %v858 = vld [vmem:[%s0 + $0x40] sm:$0xff]
  %868 = vrot.lane.b32.xlu0 %v850, 60
  %v869 = vpop.permute.xlu0 %868
  %870 = vrot.lane.b32.xlu0 %v851, 60
  %v871 = vpop.permute.xlu0 %870
  %872 = vrot.lane.b32.xlu0 %v852, 60
  %v873 = vpop.permute.xlu0 %872
  %874 = vrot.lane.b32.xlu0 %v853, 60
  %v875 = vpop.permute.xlu0 %874
  %876 = vrot.lane.b32.xlu0 %v854, 60
  %v877 = vpop.permute.xlu0 %876
  %878 = vrot.lane.b32.xlu0 %v855, 60
  %v879 = vpop.permute.xlu0 %878
  %880 = vrot.lane.b32.xlu0 %v856, 60
  %v881 = vpop.permute.xlu0 %880
  %882 = vrot.lane.b32.xlu0 %v857, 60
  %v883 = vpop.permute.xlu0 %882
  %884 = vrot.lane.b32.xlu0 %v858, 60
  %v885 = vpop.permute.xlu0 %884
  %vm886 = vcmask 490496
  %v887 = vsel %vm886, %v869, %v871
  %v888 = vsel %vm886, %v871, %v873
  %v889 = vsel %vm886, %v873, %v875
  %v890 = vsel %vm886, %v875, %v877
  %v891 = vsel %vm886, %v877, %v879
  %v892 = vsel %vm886, %v879, %v881
  %v893 = vsel %vm886, %v881, %v883
  %v894 = vsel %vm886, %v883, %v885
  %903 = vst [vmem:[#allocation2 + $0x380] sm:$0xff] %v887
  %904 = vst [vmem:[#allocation2 + $0x388] sm:$0xff] %v888
  %905 = vst [vmem:[#allocation2 + $0x390] sm:$0xff] %v889
  %906 = vst [vmem:[#allocation2 + $0x398] sm:$0xff] %v890
  %907 = vst [vmem:[#allocation2 + $0x3a0] sm:$0xff] %v891
  %908 = vst [vmem:[#allocation2 + $0x3a8] sm:$0xff] %v892
  %909 = vst [vmem:[#allocation2 + $0x3b0] sm:$0xff] %v893
  %910 = vst [vmem:[#allocation2 + $0x3b8] sm:$0xff] %v894
  %v911 = vld [vmem:[%s0] sm:$0xff]
  %v912 = vld [vmem:[%s0 + $0x8] sm:$0xff]
  %v913 = vld [vmem:[%s0 + $0x10] sm:$0xff]
  %v914 = vld [vmem:[%s0 + $0x18] sm:$0xff]
  %v915 = vld [vmem:[%s0 + $0x20] sm:$0xff]
  %v916 = vld [vmem:[%s0 + $0x28] sm:$0xff]
  %v917 = vld [vmem:[%s0 + $0x30] sm:$0xff]
  %v918 = vld [vmem:[%s0 + $0x38] sm:$0xff]
  %v919 = vld [vmem:[%s0 + $0x40] sm:$0xff]
  %929 = vrot.lane.b32.xlu0 %v911, 32
  %v930 = vpop.permute.xlu0 %929
  %931 = vrot.lane.b32.xlu0 %v912, 32
  %v932 = vpop.permute.xlu0 %931
  %933 = vrot.lane.b32.xlu0 %v913, 32
  %v934 = vpop.permute.xlu0 %933
  %935 = vrot.lane.b32.xlu0 %v914, 32
  %v936 = vpop.permute.xlu0 %935
  %937 = vrot.lane.b32.xlu0 %v915, 32
  %v938 = vpop.permute.xlu0 %937
  %939 = vrot.lane.b32.xlu0 %v916, 32
  %v940 = vpop.permute.xlu0 %939
  %941 = vrot.lane.b32.xlu0 %v917, 32
  %v942 = vpop.permute.xlu0 %941
  %943 = vrot.lane.b32.xlu0 %v918, 32
  %v944 = vpop.permute.xlu0 %943
  %945 = vrot.lane.b32.xlu0 %v919, 32
  %v946 = vpop.permute.xlu0 %945
  %vm947 = vcmask 261120
  %v948 = vsel %vm947, %v930, %v932
  %v949 = vsel %vm947, %v932, %v934
  %v950 = vsel %vm947, %v934, %v936
  %v951 = vsel %vm947, %v936, %v938
  %v952 = vsel %vm947, %v938, %v940
  %v953 = vsel %vm947, %v940, %v942
  %v954 = vsel %vm947, %v942, %v944
  %v955 = vsel %vm947, %v944, %v946
  %964 = vst [vmem:[#allocation2 + $0x3c0] sm:$0xff] %v948
  %965 = vst [vmem:[#allocation2 + $0x3c8] sm:$0xff] %v949
  %966 = vst [vmem:[#allocation2 + $0x3d0] sm:$0xff] %v950
  %967 = vst [vmem:[#allocation2 + $0x3d8] sm:$0xff] %v951
  %968 = vst [vmem:[#allocation2 + $0x3e0] sm:$0xff] %v952
  %969 = vst [vmem:[#allocation2 + $0x3e8] sm:$0xff] %v953
  %970 = vst [vmem:[#allocation2 + $0x3f0] sm:$0xff] %v954
  %971 = vst [vmem:[#allocation2 + $0x3f8] sm:$0xff] %v955
  %v972 = vld [vmem:[%s0] sm:$0xff]
  %v973 = vld [vmem:[%s0 + $0x8] sm:$0xff]
  %v974 = vld [vmem:[%s0 + $0x10] sm:$0xff]
  %v975 = vld [vmem:[%s0 + $0x18] sm:$0xff]
  %v976 = vld [vmem:[%s0 + $0x20] sm:$0xff]
  %v977 = vld [vmem:[%s0 + $0x28] sm:$0xff]
  %v978 = vld [vmem:[%s0 + $0x30] sm:$0xff]
  %v979 = vld [vmem:[%s0 + $0x38] sm:$0xff]
  %v980 = vld [vmem:[%s0 + $0x40] sm:$0xff]
  %990 = vrot.lane.b32.xlu0 %v972, 31
  %v991 = vpop.permute.xlu0 %990
  %992 = vrot.lane.b32.xlu0 %v973, 31
  %v993 = vpop.permute.xlu0 %992
  %994 = vrot.lane.b32.xlu0 %v974, 31
  %v995 = vpop.permute.xlu0 %994
  %996 = vrot.lane.b32.xlu0 %v975, 31
  %v997 = vpop.permute.xlu0 %996
  %998 = vrot.lane.b32.xlu0 %v976, 31
  %v999 = vpop.permute.xlu0 %998
  %1000 = vrot.lane.b32.xlu0 %v977, 31
  %v1001 = vpop.permute.xlu0 %1000
  %1002 = vrot.lane.b32.xlu0 %v978, 31
  %v1003 = vpop.permute.xlu0 %1002
  %1004 = vrot.lane.b32.xlu0 %v979, 31
  %v1005 = vpop.permute.xlu0 %1004
  %1006 = vrot.lane.b32.xlu0 %v980, 31
  %v1007 = vpop.permute.xlu0 %1006
  %vm1008 = vcmask 252928
  %v1009 = vsel %vm1008, %v991, %v993
  %v1010 = vsel %vm1008, %v993, %v995
  %v1011 = vsel %vm1008, %v995, %v997
  %v1012 = vsel %vm1008, %v997, %v999
  %v1013 = vsel %vm1008, %v999, %v1001
  %v1014 = vsel %vm1008, %v1001, %v1003
  %v1015 = vsel %vm1008, %v1003, %v1005
  %v1016 = vsel %vm1008, %v1005, %v1007
  %1025 = vst [vmem:[#allocation2 + $0x400] sm:$0xff] %v1009
  %1026 = vst [vmem:[#allocation2 + $0x408] sm:$0xff] %v1010
  %1027 = vst [vmem:[#allocation2 + $0x410] sm:$0xff] %v1011
  %1028 = vst [vmem:[#allocation2 + $0x418] sm:$0xff] %v1012
  %1029 = vst [vmem:[#allocation2 + $0x420] sm:$0xff] %v1013
  %1030 = vst [vmem:[#allocation2 + $0x428] sm:$0xff] %v1014
  %1031 = vst [vmem:[#allocation2 + $0x430] sm:$0xff] %v1015
  %1032 = vst [vmem:[#allocation2 + $0x438] sm:$0xff] %v1016
  %v1033 = vld [vmem:[%s0] sm:$0xff]
  %v1034 = vld [vmem:[%s0 + $0x8] sm:$0xff]
  %v1035 = vld [vmem:[%s0 + $0x10] sm:$0xff]
  %v1036 = vld [vmem:[%s0 + $0x18] sm:$0xff]
  %v1037 = vld [vmem:[%s0 + $0x20] sm:$0xff]
  %v1038 = vld [vmem:[%s0 + $0x28] sm:$0xff]
  %v1039 = vld [vmem:[%s0 + $0x30] sm:$0xff]
  %v1040 = vld [vmem:[%s0 + $0x38] sm:$0xff]
  %v1041 = vld [vmem:[%s0 + $0x40] sm:$0xff]
  %1051 = vrot.lane.b32.xlu0 %v1033, 30
  %v1052 = vpop.permute.xlu0 %1051
  %1053 = vrot.lane.b32.xlu0 %v1034, 30
  %v1054 = vpop.permute.xlu0 %1053
  %1055 = vrot.lane.b32.xlu0 %v1035, 30
  %v1056 = vpop.permute.xlu0 %1055
  %1057 = vrot.lane.b32.xlu0 %v1036, 30
  %v1058 = vpop.permute.xlu0 %1057
  %1059 = vrot.lane.b32.xlu0 %v1037, 30
  %v1060 = vpop.permute.xlu0 %1059
  %1061 = vrot.lane.b32.xlu0 %v1038, 30
  %v1062 = vpop.permute.xlu0 %1061
  %1063 = vrot.lane.b32.xlu0 %v1039, 30
  %v1064 = vpop.permute.xlu0 %1063
  %1065 = vrot.lane.b32.xlu0 %v1040, 30
  %v1066 = vpop.permute.xlu0 %1065
  %1067 = vrot.lane.b32.xlu0 %v1041, 30
  %v1068 = vpop.permute.xlu0 %1067
  %vm1069 = vcmask 244736
  %v1070 = vsel %vm1069, %v1052, %v1054
  %v1071 = vsel %vm1069, %v1054, %v1056
  %v1072 = vsel %vm1069, %v1056, %v1058
  %v1073 = vsel %vm1069, %v1058, %v1060
  %v1074 = vsel %vm1069, %v1060, %v1062
  %v1075 = vsel %vm1069, %v1062, %v1064
  %v1076 = vsel %vm1069, %v1064, %v1066
  %v1077 = vsel %vm1069, %v1066, %v1068
  %1086 = vst [vmem:[#allocation2 + $0x440] sm:$0xff] %v1070
  %1087 = vst [vmem:[#allocation2 + $0x448] sm:$0xff] %v1071
  %1088 = vst [vmem:[#allocation2 + $0x450] sm:$0xff] %v1072
  %1089 = vst [vmem:[#allocation2 + $0x458] sm:$0xff] %v1073
  %1090 = vst [vmem:[#allocation2 + $0x460] sm:$0xff] %v1074
  %1091 = vst [vmem:[#allocation2 + $0x468] sm:$0xff] %v1075
  %1092 = vst [vmem:[#allocation2 + $0x470] sm:$0xff] %v1076
  %1093 = vst [vmem:[#allocation2 + $0x478] sm:$0xff] %v1077
  %v1094 = vld [vmem:[%s0] sm:$0xff]
  %v1095 = vld [vmem:[%s0 + $0x8] sm:$0xff]
  %v1096 = vld [vmem:[%s0 + $0x10] sm:$0xff]
  %v1097 = vld [vmem:[%s0 + $0x18] sm:$0xff]
  %v1098 = vld [vmem:[%s0 + $0x20] sm:$0xff]
  %v1099 = vld [vmem:[%s0 + $0x28] sm:$0xff]
  %v1100 = vld [vmem:[%s0 + $0x30] sm:$0xff]
  %v1101 = vld [vmem:[%s0 + $0x38] sm:$0xff]
  %v1102 = vld [vmem:[%s0 + $0x40] sm:$0xff]
  %1112 = vrot.lane.b32.xlu0 %v1094, 29
  %v1113 = vpop.permute.xlu0 %1112
  %1114 = vrot.lane.b32.xlu0 %v1095, 29
  %v1115 = vpop.permute.xlu0 %1114
  %1116 = vrot.lane.b32.xlu0 %v1096, 29
  %v1117 = vpop.permute.xlu0 %1116
  %1118 = vrot.lane.b32.xlu0 %v1097, 29
  %v1119 = vpop.permute.xlu0 %1118
  %1120 = vrot.lane.b32.xlu0 %v1098, 29
  %v1121 = vpop.permute.xlu0 %1120
  %1122 = vrot.lane.b32.xlu0 %v1099, 29
  %v1123 = vpop.permute.xlu0 %1122
  %1124 = vrot.lane.b32.xlu0 %v1100, 29
  %v1125 = vpop.permute.xlu0 %1124
  %1126 = vrot.lane.b32.xlu0 %v1101, 29
  %v1127 = vpop.permute.xlu0 %1126
  %1128 = vrot.lane.b32.xlu0 %v1102, 29
  %v1129 = vpop.permute.xlu0 %1128
  %vm1130 = vcmask 236544
  %v1131 = vsel %vm1130, %v1113, %v1115
  %v1132 = vsel %vm1130, %v1115, %v1117
  %v1133 = vsel %vm1130, %v1117, %v1119
  %v1134 = vsel %vm1130, %v1119, %v1121
  %v1135 = vsel %vm1130, %v1121, %v1123
  %v1136 = vsel %vm1130, %v1123, %v1125
  %v1137 = vsel %vm1130, %v1125, %v1127
  %v1138 = vsel %vm1130, %v1127, %v1129
  %1147 = vst [vmem:[#allocation2 + $0x480] sm:$0xff] %v1131
  %1148 = vst [vmem:[#allocation2 + $0x488] sm:$0xff] %v1132
  %1149 = vst [vmem:[#allocation2 + $0x490] sm:$0xff] %v1133
  %1150 = vst [vmem:[#allocation2 + $0x498] sm:$0xff] %v1134
  %1151 = vst [vmem:[#allocation2 + $0x4a0] sm:$0xff] %v1135
  %1152 = vst [vmem:[#allocation2 + $0x4a8] sm:$0xff] %v1136
  %1153 = vst [vmem:[#allocation2 + $0x4b0] sm:$0xff] %v1137
  %1154 = vst [vmem:[#allocation2 + $0x4b8] sm:$0xff] %v1138
  %v1155 = vld [vmem:[%s0] sm:$0xff]
  %v1156 = vld [vmem:[%s0 + $0x8] sm:$0xff]
  %v1157 = vld [vmem:[%s0 + $0x10] sm:$0xff]
  %v1158 = vld [vmem:[%s0 + $0x18] sm:$0xff]
  %v1159 = vld [vmem:[%s0 + $0x20] sm:$0xff]
  %v1160 = vld [vmem:[%s0 + $0x28] sm:$0xff]
  %v1161 = vld [vmem:[%s0 + $0x30] sm:$0xff]
  %v1162 = vld [vmem:[%s0 + $0x38] sm:$0xff]
  %v1163 = vld [vmem:[%s0 + $0x40] sm:$0xff]
  %1173 = vrot.lane.b32.xlu0 %v1155, 28
  %v1174 = vpop.permute.xlu0 %1173
  %1175 = vrot.lane.b32.xlu0 %v1156, 28
  %v1176 = vpop.permute.xlu0 %1175
  %1177 = vrot.lane.b32.xlu0 %v1157, 28
  %v1178 = vpop.permute.xlu0 %1177
  %1179 = vrot.lane.b32.xlu0 %v1158, 28
  %v1180 = vpop.permute.xlu0 %1179
  %1181 = vrot.lane.b32.xlu0 %v1159, 28
  %v1182 = vpop.permute.xlu0 %1181
  %1183 = vrot.lane.b32.xlu0 %v1160, 28
  %v1184 = vpop.permute.xlu0 %1183
  %1185 = vrot.lane.b32.xlu0 %v1161, 28
  %v1186 = vpop.permute.xlu0 %1185
  %1187 = vrot.lane.b32.xlu0 %v1162, 28
  %v1188 = vpop.permute.xlu0 %1187
  %1189 = vrot.lane.b32.xlu0 %v1163, 28
  %v1190 = vpop.permute.xlu0 %1189
  %vm1191 = vcmask 228352
  %v1192 = vsel %vm1191, %v1174, %v1176
  %v1193 = vsel %vm1191, %v1176, %v1178
  %v1194 = vsel %vm1191, %v1178, %v1180
  %v1195 = vsel %vm1191, %v1180, %v1182
  %v1196 = vsel %vm1191, %v1182, %v1184
  %v1197 = vsel %vm1191, %v1184, %v1186
  %v1198 = vsel %vm1191, %v1186, %v1188
  %v1199 = vsel %vm1191, %v1188, %v1190
  %1208 = vst [vmem:[#allocation2 + $0x4c0] sm:$0xff] %v1192
  %1209 = vst [vmem:[#allocation2 + $0x4c8] sm:$0xff] %v1193
  %1210 = vst [vmem:[#allocation2 + $0x4d0] sm:$0xff] %v1194
  %1211 = vst [vmem:[#allocation2 + $0x4d8] sm:$0xff] %v1195
  %1212 = vst [vmem:[#allocation2 + $0x4e0] sm:$0xff] %v1196
  %1213 = vst [vmem:[#allocation2 + $0x4e8] sm:$0xff] %v1197
  %1214 = vst [vmem:[#allocation2 + $0x4f0] sm:$0xff] %v1198
  %1215 = vst [vmem:[#allocation2 + $0x4f8] sm:$0xff] %v1199
  %v1216 = vld [vmem:[%s0 + $0x8] sm:$0xff]
  %v1217 = vld [vmem:[%s0 + $0x10] sm:$0xff]
  %v1218 = vld [vmem:[%s0 + $0x18] sm:$0xff]
  %v1219 = vld [vmem:[%s0 + $0x20] sm:$0xff]
  %v1220 = vld [vmem:[%s0 + $0x28] sm:$0xff]
  %v1221 = vld [vmem:[%s0 + $0x30] sm:$0xff]
  %v1222 = vld [vmem:[%s0 + $0x38] sm:$0xff]
  %v1223 = vld [vmem:[%s0 + $0x40] sm:$0xff]
  %1224 = vst [vmem:[#allocation2 + $0x500] sm:$0xff] %v1216
  %1225 = vst [vmem:[#allocation2 + $0x508] sm:$0xff] %v1217
  %1226 = vst [vmem:[#allocation2 + $0x510] sm:$0xff] %v1218
  %1227 = vst [vmem:[#allocation2 + $0x518] sm:$0xff] %v1219
  %1228 = vst [vmem:[#allocation2 + $0x520] sm:$0xff] %v1220
  %1229 = vst [vmem:[#allocation2 + $0x528] sm:$0xff] %v1221
  %1230 = vst [vmem:[#allocation2 + $0x530] sm:$0xff] %v1222
  %1231 = vst [vmem:[#allocation2 + $0x538] sm:$0xff] %v1223
  %v1232 = vld [vmem:[%s0 + $0x8] sm:$0xff]
  %v1233 = vld [vmem:[%s0 + $0x10] sm:$0xff]
  %v1234 = vld [vmem:[%s0 + $0x18] sm:$0xff]
  %v1235 = vld [vmem:[%s0 + $0x20] sm:$0xff]
  %v1236 = vld [vmem:[%s0 + $0x28] sm:$0xff]
  %v1237 = vld [vmem:[%s0 + $0x30] sm:$0xff]
  %v1238 = vld [vmem:[%s0 + $0x38] sm:$0xff]
  %v1239 = vld [vmem:[%s0 + $0x40] sm:$0xff]
  %v1240 = vld [vmem:[%s0 + $0x48] sm:$0xff]
  %1250 = vrot.lane.b32.xlu0 %v1232, 127
  %v1251 = vpop.permute.xlu0 %1250
  %1252 = vrot.lane.b32.xlu0 %v1233, 127
  %v1253 = vpop.permute.xlu0 %1252
  %1254 = vrot.lane.b32.xlu0 %v1234, 127
  %v1255 = vpop.permute.xlu0 %1254
  %1256 = vrot.lane.b32.xlu0 %v1235, 127
  %v1257 = vpop.permute.xlu0 %1256
  %1258 = vrot.lane.b32.xlu0 %v1236, 127
  %v1259 = vpop.permute.xlu0 %1258
  %1260 = vrot.lane.b32.xlu0 %v1237, 127
  %v1261 = vpop.permute.xlu0 %1260
  %1262 = vrot.lane.b32.xlu0 %v1238, 127
  %v1263 = vpop.permute.xlu0 %1262
  %1264 = vrot.lane.b32.xlu0 %v1239, 127
  %v1265 = vpop.permute.xlu0 %1264
  %1266 = vrot.lane.b32.xlu0 %v1240, 127
  %v1267 = vpop.permute.xlu0 %1266
  %v1268 = vsel %vm93, %v1251, %v1253
  %v1269 = vsel %vm93, %v1253, %v1255
  %v1270 = vsel %vm93, %v1255, %v1257
  %v1271 = vsel %vm93, %v1257, %v1259
  %v1272 = vsel %vm93, %v1259, %v1261
  %v1273 = vsel %vm93, %v1261, %v1263
  %v1274 = vsel %vm93, %v1263, %v1265
  %v1275 = vsel %vm93, %v1265, %v1267
  %1284 = vst [vmem:[#allocation2 + $0x540] sm:$0xff] %v1268
  %1285 = vst [vmem:[#allocation2 + $0x548] sm:$0xff] %v1269
  %1286 = vst [vmem:[#allocation2 + $0x550] sm:$0xff] %v1270
  %1287 = vst [vmem:[#allocation2 + $0x558] sm:$0xff] %v1271
  %1288 = vst [vmem:[#allocation2 + $0x560] sm:$0xff] %v1272
  %1289 = vst [vmem:[#allocation2 + $0x568] sm:$0xff] %v1273
  %1290 = vst [vmem:[#allocation2 + $0x570] sm:$0xff] %v1274
  %1291 = vst [vmem:[#allocation2 + $0x578] sm:$0xff] %v1275
  %v1292 = vld [vmem:[%s0 + $0x8] sm:$0xff]
  %v1293 = vld [vmem:[%s0 + $0x10] sm:$0xff]
  %v1294 = vld [vmem:[%s0 + $0x18] sm:$0xff]
  %v1295 = vld [vmem:[%s0 + $0x20] sm:$0xff]
  %v1296 = vld [vmem:[%s0 + $0x28] sm:$0xff]
  %v1297 = vld [vmem:[%s0 + $0x30] sm:$0xff]
  %v1298 = vld [vmem:[%s0 + $0x38] sm:$0xff]
  %v1299 = vld [vmem:[%s0 + $0x40] sm:$0xff]
  %v1300 = vld [vmem:[%s0 + $0x48] sm:$0xff]
  %1310 = vrot.lane.b32.xlu0 %v1292, 126
  %v1311 = vpop.permute.xlu0 %1310
  %1312 = vrot.lane.b32.xlu0 %v1293, 126
  %v1313 = vpop.permute.xlu0 %1312
  %1314 = vrot.lane.b32.xlu0 %v1294, 126
  %v1315 = vpop.permute.xlu0 %1314
  %1316 = vrot.lane.b32.xlu0 %v1295, 126
  %v1317 = vpop.permute.xlu0 %1316
  %1318 = vrot.lane.b32.xlu0 %v1296, 126
  %v1319 = vpop.permute.xlu0 %1318
  %1320 = vrot.lane.b32.xlu0 %v1297, 126
  %v1321 = vpop.permute.xlu0 %1320
  %1322 = vrot.lane.b32.xlu0 %v1298, 126
  %v1323 = vpop.permute.xlu0 %1322
  %1324 = vrot.lane.b32.xlu0 %v1299, 126
  %v1325 = vpop.permute.xlu0 %1324
  %1326 = vrot.lane.b32.xlu0 %v1300, 126
  %v1327 = vpop.permute.xlu0 %1326
  %v1328 = vsel %vm154, %v1311, %v1313
  %v1329 = vsel %vm154, %v1313, %v1315
  %v1330 = vsel %vm154, %v1315, %v1317
  %v1331 = vsel %vm154, %v1317, %v1319
  %v1332 = vsel %vm154, %v1319, %v1321
  %v1333 = vsel %vm154, %v1321, %v1323
  %v1334 = vsel %vm154, %v1323, %v1325
  %v1335 = vsel %vm154, %v1325, %v1327
  %1344 = vst [vmem:[#allocation2 + $0x580] sm:$0xff] %v1328
  %1345 = vst [vmem:[#allocation2 + $0x588] sm:$0xff] %v1329
  %1346 = vst [vmem:[#allocation2 + $0x590] sm:$0xff] %v1330
  %1347 = vst [vmem:[#allocation2 + $0x598] sm:$0xff] %v1331
  %1348 = vst [vmem:[#allocation2 + $0x5a0] sm:$0xff] %v1332
  %1349 = vst [vmem:[#allocation2 + $0x5a8] sm:$0xff] %v1333
  %1350 = vst [vmem:[#allocation2 + $0x5b0] sm:$0xff] %v1334
  %1351 = vst [vmem:[#allocation2 + $0x5b8] sm:$0xff] %v1335
  %v1352 = vld [vmem:[%s0 + $0x8] sm:$0xff]
  %v1353 = vld [vmem:[%s0 + $0x10] sm:$0xff]
  %v1354 = vld [vmem:[%s0 + $0x18] sm:$0xff]
  %v1355 = vld [vmem:[%s0 + $0x20] sm:$0xff]
  %v1356 = vld [vmem:[%s0 + $0x28] sm:$0xff]
  %v1357 = vld [vmem:[%s0 + $0x30] sm:$0xff]
  %v1358 = vld [vmem:[%s0 + $0x38] sm:$0xff]
  %v1359 = vld [vmem:[%s0 + $0x40] sm:$0xff]
  %v1360 = vld [vmem:[%s0 + $0x48] sm:$0xff]
  %1370 = vrot.lane.b32.xlu0 %v1352, 125
  %v1371 = vpop.permute.xlu0 %1370
  %1372 = vrot.lane.b32.xlu0 %v1353, 125
  %v1373 = vpop.permute.xlu0 %1372
  %1374 = vrot.lane.b32.xlu0 %v1354, 125
  %v1375 = vpop.permute.xlu0 %1374
  %1376 = vrot.lane.b32.xlu0 %v1355, 125
  %v1377 = vpop.permute.xlu0 %1376
  %1378 = vrot.lane.b32.xlu0 %v1356, 125
  %v1379 = vpop.permute.xlu0 %1378
  %1380 = vrot.lane.b32.xlu0 %v1357, 125
  %v1381 = vpop.permute.xlu0 %1380
  %1382 = vrot.lane.b32.xlu0 %v1358, 125
  %v1383 = vpop.permute.xlu0 %1382
  %1384 = vrot.lane.b32.xlu0 %v1359, 125
  %v1385 = vpop.permute.xlu0 %1384
  %1386 = vrot.lane.b32.xlu0 %v1360, 125
  %v1387 = vpop.permute.xlu0 %1386
  %v1388 = vsel %vm215, %v1371, %v1373
  %v1389 = vsel %vm215, %v1373, %v1375
  %v1390 = vsel %vm215, %v1375, %v1377
  %v1391 = vsel %vm215, %v1377, %v1379
  %v1392 = vsel %vm215, %v1379, %v1381
  %v1393 = vsel %vm215, %v1381, %v1383
  %v1394 = vsel %vm215, %v1383, %v1385
  %v1395 = vsel %vm215, %v1385, %v1387
  %1404 = vst [vmem:[#allocation2 + $0x5c0] sm:$0xff] %v1388
  %1405 = vst [vmem:[#allocation2 + $0x5c8] sm:$0xff] %v1389
  %1406 = vst [vmem:[#allocation2 + $0x5d0] sm:$0xff] %v1390
  %1407 = vst [vmem:[#allocation2 + $0x5d8] sm:$0xff] %v1391
  %1408 = vst [vmem:[#allocation2 + $0x5e0] sm:$0xff] %v1392
  %1409 = vst [vmem:[#allocation2 + $0x5e8] sm:$0xff] %v1393
  %1410 = vst [vmem:[#allocation2 + $0x5f0] sm:$0xff] %v1394
  %1411 = vst [vmem:[#allocation2 + $0x5f8] sm:$0xff] %v1395
  %v1412 = vld [vmem:[%s0 + $0x8] sm:$0xff]
  %v1413 = vld [vmem:[%s0 + $0x10] sm:$0xff]
  %v1414 = vld [vmem:[%s0 + $0x18] sm:$0xff]
  %v1415 = vld [vmem:[%s0 + $0x20] sm:$0xff]
  %v1416 = vld [vmem:[%s0 + $0x28] sm:$0xff]
  %v1417 = vld [vmem:[%s0 + $0x30] sm:$0xff]
  %v1418 = vld [vmem:[%s0 + $0x38] sm:$0xff]
  %v1419 = vld [vmem:[%s0 + $0x40] sm:$0xff]
  %v1420 = vld [vmem:[%s0 + $0x48] sm:$0xff]
  %1430 = vrot.lane.b32.xlu0 %v1412, 124
  %v1431 = vpop.permute.xlu0 %1430
  %1432 = vrot.lane.b32.xlu0 %v1413, 124
  %v1433 = vpop.permute.xlu0 %1432
  %1434 = vrot.lane.b32.xlu0 %v1414, 124
  %v1435 = vpop.permute.xlu0 %1434
  %1436 = vrot.lane.b32.xlu0 %v1415, 124
  %v1437 = vpop.permute.xlu0 %1436
  %1438 = vrot.lane.b32.xlu0 %v1416, 124
  %v1439 = vpop.permute.xlu0 %1438
  %1440 = vrot.lane.b32.xlu0 %v1417, 124
  %v1441 = vpop.permute.xlu0 %1440
  %1442 = vrot.lane.b32.xlu0 %v1418, 124
  %v1443 = vpop.permute.xlu0 %1442
  %1444 = vrot.lane.b32.xlu0 %v1419, 124
  %v1445 = vpop.permute.xlu0 %1444
  %1446 = vrot.lane.b32.xlu0 %v1420, 124
  %v1447 = vpop.permute.xlu0 %1446
  %v1448 = vsel %vm276, %v1431, %v1433
  %v1449 = vsel %vm276, %v1433, %v1435
  %v1450 = vsel %vm276, %v1435, %v1437
  %v1451 = vsel %vm276, %v1437, %v1439
  %v1452 = vsel %vm276, %v1439, %v1441
  %v1453 = vsel %vm276, %v1441, %v1443
  %v1454 = vsel %vm276, %v1443, %v1445
  %v1455 = vsel %vm276, %v1445, %v1447
  %1464 = vst [vmem:[#allocation2 + $0x600] sm:$0xff] %v1448
  %1465 = vst [vmem:[#allocation2 + $0x608] sm:$0xff] %v1449
  %1466 = vst [vmem:[#allocation2 + $0x610] sm:$0xff] %v1450
  %1467 = vst [vmem:[#allocation2 + $0x618] sm:$0xff] %v1451
  %1468 = vst [vmem:[#allocation2 + $0x620] sm:$0xff] %v1452
  %1469 = vst [vmem:[#allocation2 + $0x628] sm:$0xff] %v1453
  %1470 = vst [vmem:[#allocation2 + $0x630] sm:$0xff] %v1454
  %1471 = vst [vmem:[#allocation2 + $0x638] sm:$0xff] %v1455
  %v1472 = vld [vmem:[%s1] sm:$0xff]
  %v1473 = vld [vmem:[%s1 + $0x8] sm:$0xff]
  %v1474 = vld [vmem:[%s1 + $0x10] sm:$0xff]
  %v1475 = vld [vmem:[%s1 + $0x18] sm:$0xff]
  %v1476 = vld [vmem:[%s1 + $0x20] sm:$0xff]
  %v1477 = vld [vmem:[%s1 + $0x28] sm:$0xff]
  %v1478 = vld [vmem:[%s1 + $0x30] sm:$0xff]
  %v1479 = vld [vmem:[%s1 + $0x38] sm:$0xff]
  %v1480 = vld [vmem:[%s1 + $0x40] sm:$0xff]
  %v1481 = vld [vmem:[%s1 + $0x48] sm:$0xff]
  %v1482 = vld [vmem:[%s1 + $0x50] sm:$0xff]
  %v1483 = vld [vmem:[%s1 + $0x58] sm:$0xff]
  %v1484 = vld [vmem:[#allocation2] sm:$0xff]
  %v1485 = vld [vmem:[#allocation2 + $0x8] sm:$0xff]
  %v1486 = vld [vmem:[#allocation2 + $0x10] sm:$0xff]
  %v1487 = vld [vmem:[#allocation2 + $0x18] sm:$0xff]
  %v1488 = vld [vmem:[#allocation2 + $0x20] sm:$0xff]
  %v1489 = vld [vmem:[#allocation2 + $0x28] sm:$0xff]
  %v1490 = vld [vmem:[#allocation2 + $0x30] sm:$0xff]
  %v1491 = vld [vmem:[#allocation2 + $0x38] sm:$0xff]
  %v1492 = vld [vmem:[#allocation2 + $0x40] sm:$0xff]
  %v1493 = vld [vmem:[#allocation2 + $0x48] sm:$0xff]
  %v1494 = vld [vmem:[#allocation2 + $0x50] sm:$0xff]
  %v1495 = vld [vmem:[#allocation2 + $0x58] sm:$0xff]
  %v1496 = vld [vmem:[#allocation2 + $0x60] sm:$0xff]
  %v1497 = vld [vmem:[#allocation2 + $0x68] sm:$0xff]
  %v1498 = vld [vmem:[#allocation2 + $0x70] sm:$0xff]
  %v1499 = vld [vmem:[#allocation2 + $0x78] sm:$0xff]
  %v1500 = vld [vmem:[#allocation2 + $0x80] sm:$0xff]
  %v1501 = vld [vmem:[#allocation2 + $0x88] sm:$0xff]
  %v1502 = vld [vmem:[#allocation2 + $0x90] sm:$0xff]
  %v1503 = vld [vmem:[#allocation2 + $0x98] sm:$0xff]
  %v1504 = vld [vmem:[#allocation2 + $0xa0] sm:$0xff]
  %v1505 = vld [vmem:[#allocation2 + $0xa8] sm:$0xff]
  %v1506 = vld [vmem:[#allocation2 + $0xb0] sm:$0xff]
  %v1507 = vld [vmem:[#allocation2 + $0xb8] sm:$0xff]
  %v1508 = vld [vmem:[#allocation2 + $0xc0] sm:$0xff]
  %v1509 = vld [vmem:[#allocation2 + $0xc8] sm:$0xff]
  %v1510 = vld [vmem:[#allocation2 + $0xd0] sm:$0xff]
  %v1511 = vld [vmem:[#allocation2 + $0xd8] sm:$0xff]
  %v1512 = vld [vmem:[#allocation2 + $0xe0] sm:$0xff]
  %v1513 = vld [vmem:[#allocation2 + $0xe8] sm:$0xff]
  %v1514 = vld [vmem:[#allocation2 + $0xf0] sm:$0xff]
  %v1515 = vld [vmem:[#allocation2 + $0xf8] sm:$0xff]
  %v1516 = vld [vmem:[#allocation2 + $0x100] sm:$0xff]
  %v1517 = vld [vmem:[#allocation2 + $0x108] sm:$0xff]
  %v1518 = vld [vmem:[#allocation2 + $0x110] sm:$0xff]
  %v1519 = vld [vmem:[#allocation2 + $0x118] sm:$0xff]
  %v1520 = vld [vmem:[#allocation2 + $0x120] sm:$0xff]
  %v1521 = vld [vmem:[#allocation2 + $0x128] sm:$0xff]
  %v1522 = vld [vmem:[#allocation2 + $0x130] sm:$0xff]
  %v1523 = vld [vmem:[#allocation2 + $0x138] sm:$0xff]
  %v1524 = vld [vmem:[#allocation2 + $0x140] sm:$0xff]
  %v1525 = vld [vmem:[#allocation2 + $0x148] sm:$0xff]
  %v1526 = vld [vmem:[#allocation2 + $0x150] sm:$0xff]
  %v1527 = vld [vmem:[#allocation2 + $0x158] sm:$0xff]
  %v1528 = vld [vmem:[#allocation2 + $0x160] sm:$0xff]
  %v1529 = vld [vmem:[#allocation2 + $0x168] sm:$0xff]
  %v1530 = vld [vmem:[#allocation2 + $0x170] sm:$0xff]
  %v1531 = vld [vmem:[#allocation2 + $0x178] sm:$0xff]
  %v1532 = vld [vmem:[#allocation2 + $0x180] sm:$0xff]
  %v1533 = vld [vmem:[#allocation2 + $0x188] sm:$0xff]
  %v1534 = vld [vmem:[#allocation2 + $0x190] sm:$0xff]
  %v1535 = vld [vmem:[#allocation2 + $0x198] sm:$0xff]
  %v1536 = vld [vmem:[#allocation2 + $0x1a0] sm:$0xff]
  %v1537 = vld [vmem:[#allocation2 + $0x1a8] sm:$0xff]
  %v1538 = vld [vmem:[#allocation2 + $0x1b0] sm:$0xff]
  %v1539 = vld [vmem:[#allocation2 + $0x1b8] sm:$0xff]
  %v1540 = vld [vmem:[#allocation2 + $0x1c0] sm:$0xff]
  %v1541 = vld [vmem:[#allocation2 + $0x1c8] sm:$0xff]
  %v1542 = vld [vmem:[#allocation2 + $0x1d0] sm:$0xff]
  %v1543 = vld [vmem:[#allocation2 + $0x1d8] sm:$0xff]
  %v1544 = vld [vmem:[#allocation2 + $0x1e0] sm:$0xff]
  %v1545 = vld [vmem:[#allocation2 + $0x1e8] sm:$0xff]
  %v1546 = vld [vmem:[#allocation2 + $0x1f0] sm:$0xff]
  %v1547 = vld [vmem:[#allocation2 + $0x1f8] sm:$0xff]
  %v1548 = vld [vmem:[#allocation2 + $0x200] sm:$0xff]
  %v1549 = vld [vmem:[#allocation2 + $0x208] sm:$0xff]
  %v1550 = vld [vmem:[#allocation2 + $0x210] sm:$0xff]
  %v1551 = vld [vmem:[#allocation2 + $0x218] sm:$0xff]
  %v1552 = vld [vmem:[#allocation2 + $0x220] sm:$0xff]
  %v1553 = vld [vmem:[#allocation2 + $0x228] sm:$0xff]
  %v1554 = vld [vmem:[#allocation2 + $0x230] sm:$0xff]
  %v1555 = vld [vmem:[#allocation2 + $0x238] sm:$0xff]
  %v1556 = vld [vmem:[#allocation2 + $0x240] sm:$0xff]
  %v1557 = vld [vmem:[#allocation2 + $0x248] sm:$0xff]
  %v1558 = vld [vmem:[#allocation2 + $0x250] sm:$0xff]
  %v1559 = vld [vmem:[#allocation2 + $0x258] sm:$0xff]
  %v1560 = vld [vmem:[#allocation2 + $0x260] sm:$0xff]
  %v1561 = vld [vmem:[#allocation2 + $0x268] sm:$0xff]
  %v1562 = vld [vmem:[#allocation2 + $0x270] sm:$0xff]
  %v1563 = vld [vmem:[#allocation2 + $0x278] sm:$0xff]
  %v1564 = vld [vmem:[#allocation2 + $0x280] sm:$0xff]
  %v1565 = vld [vmem:[#allocation2 + $0x288] sm:$0xff]
  %v1566 = vld [vmem:[#allocation2 + $0x290] sm:$0xff]
  %v1567 = vld [vmem:[#allocation2 + $0x298] sm:$0xff]
  %v1568 = vld [vmem:[#allocation2 + $0x2a0] sm:$0xff]
  %v1569 = vld [vmem:[#allocation2 + $0x2a8] sm:$0xff]
  %v1570 = vld [vmem:[#allocation2 + $0x2b0] sm:$0xff]
  %v1571 = vld [vmem:[#allocation2 + $0x2b8] sm:$0xff]
  %v1572 = vld [vmem:[#allocation2 + $0x2c0] sm:$0xff]
  %v1573 = vld [vmem:[#allocation2 + $0x2c8] sm:$0xff]
  %v1574 = vld [vmem:[#allocation2 + $0x2d0] sm:$0xff]
  %v1575 = vld [vmem:[#allocation2 + $0x2d8] sm:$0xff]
  %v1576 = vld [vmem:[#allocation2 + $0x2e0] sm:$0xff]
  %v1577 = vld [vmem:[#allocation2 + $0x2e8] sm:$0xff]
  %v1578 = vld [vmem:[#allocation2 + $0x2f0] sm:$0xff]
  %v1579 = vld [vmem:[#allocation2 + $0x2f8] sm:$0xff]
  %v1580 = vld [vmem:[#allocation2 + $0x300] sm:$0xff]
  %v1581 = vld [vmem:[#allocation2 + $0x308] sm:$0xff]
  %v1582 = vld [vmem:[#allocation2 + $0x310] sm:$0xff]
  %v1583 = vld [vmem:[#allocation2 + $0x318] sm:$0xff]
  %v1584 = vld [vmem:[#allocation2 + $0x320] sm:$0xff]
  %v1585 = vld [vmem:[#allocation2 + $0x328] sm:$0xff]
  %v1586 = vld [vmem:[#allocation2 + $0x330] sm:$0xff]
  %v1587 = vld [vmem:[#allocation2 + $0x338] sm:$0xff]
  %v1588 = vld [vmem:[#allocation2 + $0x340] sm:$0xff]
  %v1589 = vld [vmem:[#allocation2 + $0x348] sm:$0xff]
  %v1590 = vld [vmem:[#allocation2 + $0x350] sm:$0xff]
  %v1591 = vld [vmem:[#allocation2 + $0x358] sm:$0xff]
  %v1592 = vld [vmem:[#allocation2 + $0x360] sm:$0xff]
  %v1593 = vld [vmem:[#allocation2 + $0x368] sm:$0xff]
  %v1594 = vld [vmem:[#allocation2 + $0x370] sm:$0xff]
  %v1595 = vld [vmem:[#allocation2 + $0x378] sm:$0xff]
  %v1596 = vld [vmem:[#allocation2 + $0x380] sm:$0xff]
  %v1597 = vld [vmem:[#allocation2 + $0x388] sm:$0xff]
  %v1598 = vld [vmem:[#allocation2 + $0x390] sm:$0xff]
  %v1599 = vld [vmem:[#allocation2 + $0x398] sm:$0xff]
  %v1600 = vld [vmem:[#allocation2 + $0x3a0] sm:$0xff]
  %v1601 = vld [vmem:[#allocation2 + $0x3a8] sm:$0xff]
  %v1602 = vld [vmem:[#allocation2 + $0x3b0] sm:$0xff]
  %v1603 = vld [vmem:[#allocation2 + $0x3b8] sm:$0xff]
  %v1604 = vld [vmem:[#allocation2 + $0x3c0] sm:$0xff]
  %v1605 = vld [vmem:[#allocation2 + $0x3c8] sm:$0xff]
  %v1606 = vld [vmem:[#allocation2 + $0x3d0] sm:$0xff]
  %v1607 = vld [vmem:[#allocation2 + $0x3d8] sm:$0xff]
  %v1608 = vld [vmem:[#allocation2 + $0x3e0] sm:$0xff]
  %v1609 = vld [vmem:[#allocation2 + $0x3e8] sm:$0xff]
  %v1610 = vld [vmem:[#allocation2 + $0x3f0] sm:$0xff]
  %v1611 = vld [vmem:[#allocation2 + $0x3f8] sm:$0xff]
  %v1612 = vld [vmem:[#allocation2 + $0x400] sm:$0xff]
  %v1613 = vld [vmem:[#allocation2 + $0x408] sm:$0xff]
  %v1614 = vld [vmem:[#allocation2 + $0x410] sm:$0xff]
  %v1615 = vld [vmem:[#allocation2 + $0x418] sm:$0xff]
  %v1616 = vld [vmem:[#allocation2 + $0x420] sm:$0xff]
  %v1617 = vld [vmem:[#allocation2 + $0x428] sm:$0xff]
  %v1618 = vld [vmem:[#allocation2 + $0x430] sm:$0xff]
  %v1619 = vld [vmem:[#allocation2 + $0x438] sm:$0xff]
  %v1620 = vld [vmem:[#allocation2 + $0x440] sm:$0xff]
  %v1621 = vld [vmem:[#allocation2 + $0x448] sm:$0xff]
  %v1622 = vld [vmem:[#allocation2 + $0x450] sm:$0xff]
  %v1623 = vld [vmem:[#allocation2 + $0x458] sm:$0xff]
  %v1624 = vld [vmem:[#allocation2 + $0x460] sm:$0xff]
  %v1625 = vld [vmem:[#allocation2 + $0x468] sm:$0xff]
  %v1626 = vld [vmem:[#allocation2 + $0x470] sm:$0xff]
  %v1627 = vld [vmem:[#allocation2 + $0x478] sm:$0xff]
  %v1628 = vld [vmem:[#allocation2 + $0x480] sm:$0xff]
  %v1629 = vld [vmem:[#allocation2 + $0x488] sm:$0xff]
  %v1630 = vld [vmem:[#allocation2 + $0x490] sm:$0xff]
  %v1631 = vld [vmem:[#allocation2 + $0x498] sm:$0xff]
  %v1632 = vld [vmem:[#allocation2 + $0x4a0] sm:$0xff]
  %v1633 = vld [vmem:[#allocation2 + $0x4a8] sm:$0xff]
  %v1634 = vld [vmem:[#allocation2 + $0x4b0] sm:$0xff]
  %v1635 = vld [vmem:[#allocation2 + $0x4b8] sm:$0xff]
  %v1636 = vld [vmem:[#allocation2 + $0x4c0] sm:$0xff]
  %v1637 = vld [vmem:[#allocation2 + $0x4c8] sm:$0xff]
  %v1638 = vld [vmem:[#allocation2 + $0x4d0] sm:$0xff]
  %v1639 = vld [vmem:[#allocation2 + $0x4d8] sm:$0xff]
  %v1640 = vld [vmem:[#allocation2 + $0x4e0] sm:$0xff]
  %v1641 = vld [vmem:[#allocation2 + $0x4e8] sm:$0xff]
  %v1642 = vld [vmem:[#allocation2 + $0x4f0] sm:$0xff]
  %v1643 = vld [vmem:[#allocation2 + $0x4f8] sm:$0xff]
  %v1644 = vld [vmem:[#allocation2 + $0x500] sm:$0xff]
  %v1645 = vld [vmem:[#allocation2 + $0x508] sm:$0xff]
  %v1646 = vld [vmem:[#allocation2 + $0x510] sm:$0xff]
  %v1647 = vld [vmem:[#allocation2 + $0x518] sm:$0xff]
  %v1648 = vld [vmem:[#allocation2 + $0x520] sm:$0xff]
  %v1649 = vld [vmem:[#allocation2 + $0x528] sm:$0xff]
  %v1650 = vld [vmem:[#allocation2 + $0x530] sm:$0xff]
  %v1651 = vld [vmem:[#allocation2 + $0x538] sm:$0xff]
  %v1652 = vld [vmem:[#allocation2 + $0x540] sm:$0xff]
  %v1653 = vld [vmem:[#allocation2 + $0x548] sm:$0xff]
  %v1654 = vld [vmem:[#allocation2 + $0x550] sm:$0xff]
  %v1655 = vld [vmem:[#allocation2 + $0x558] sm:$0xff]
  %v1656 = vld [vmem:[#allocation2 + $0x560] sm:$0xff]
  %v1657 = vld [vmem:[#allocation2 + $0x568] sm:$0xff]
  %v1658 = vld [vmem:[#allocation2 + $0x570] sm:$0xff]
  %v1659 = vld [vmem:[#allocation2 + $0x578] sm:$0xff]
  %v1660 = vld [vmem:[#allocation2 + $0x580] sm:$0xff]
  %v1661 = vld [vmem:[#allocation2 + $0x588] sm:$0xff]
  %v1662 = vld [vmem:[#allocation2 + $0x590] sm:$0xff]
  %v1663 = vld [vmem:[#allocation2 + $0x598] sm:$0xff]
  %v1664 = vld [vmem:[#allocation2 + $0x5a0] sm:$0xff]
  %v1665 = vld [vmem:[#allocation2 + $0x5a8] sm:$0xff]
  %v1666 = vld [vmem:[#allocation2 + $0x5b0] sm:$0xff]
  %v1667 = vld [vmem:[#allocation2 + $0x5b8] sm:$0xff]
  %v1668 = vld [vmem:[#allocation2 + $0x5c0] sm:$0xff]
  %v1669 = vld [vmem:[#allocation2 + $0x5c8] sm:$0xff]
  %v1670 = vld [vmem:[#allocation2 + $0x5d0] sm:$0xff]
  %v1671 = vld [vmem:[#allocation2 + $0x5d8] sm:$0xff]
  %v1672 = vld [vmem:[#allocation2 + $0x5e0] sm:$0xff]
  %v1673 = vld [vmem:[#allocation2 + $0x5e8] sm:$0xff]
  %v1674 = vld [vmem:[#allocation2 + $0x5f0] sm:$0xff]
  %v1675 = vld [vmem:[#allocation2 + $0x5f8] sm:$0xff]
  %v1676 = vld [vmem:[#allocation2 + $0x600] sm:$0xff]
  %v1677 = vld [vmem:[#allocation2 + $0x608] sm:$0xff]
  %v1678 = vld [vmem:[#allocation2 + $0x610] sm:$0xff]
  %v1679 = vld [vmem:[#allocation2 + $0x618] sm:$0xff]
  %v1680 = vld [vmem:[#allocation2 + $0x620] sm:$0xff]
  %v1681 = vld [vmem:[#allocation2 + $0x628] sm:$0xff]
  %v1682 = vld [vmem:[#allocation2 + $0x630] sm:$0xff]
  %v1683 = vld [vmem:[#allocation2 + $0x638] sm:$0xff]
  %v1684 = vld [vmem:[%s2] sm:$0xff]
  %v1685 = vld [vmem:[%s2 + $0x8] sm:$0xff]
  %v1686 = vld [vmem:[%s2 + $0x10] sm:$0xff]
  %v1687 = vld [vmem:[%s2 + $0x18] sm:$0xff]
  %v1688 = vld [vmem:[%s2 + $0x20] sm:$0xff]
  %v1689 = vld [vmem:[%s2 + $0x28] sm:$0xff]
  %1691 = vset.pattern.permute.xlu0 0
  %1692 = vperm.xlu0 %1691, %v1684
  %v1693 = vpop.permute.xlu0 %1692
  %1696 = vset.pattern.permute.xlu0 0
  %1697 = vperm.xlu0 %1696, %v1685
  %v1698 = vpop.permute.xlu0 %1697
  %1701 = vset.pattern.permute.xlu0 0
  %1702 = vperm.xlu0 %1701, %v1686
  %v1703 = vpop.permute.xlu0 %1702
  %1706 = vset.pattern.permute.xlu0 0
  %1707 = vperm.xlu0 %1706, %v1687
  %v1708 = vpop.permute.xlu0 %1707
  %1711 = vset.pattern.permute.xlu0 0
  %1712 = vperm.xlu0 %1711, %v1688
  %v1713 = vpop.permute.xlu0 %1712
  %1716 = vset.pattern.permute.xlu0 0
  %1717 = vperm.xlu0 %1716, %v1689
  %v1718 = vpop.permute.xlu0 %1717
  %vm1720 = vcmask 588800
  %v1722 = vsel %vm1720, %v1473, 0
  %v1725 = vsel %vm1720, %v1475, 0
  %v1728 = vsel %vm1720, %v1477, 0
  %v1731 = vsel %vm1720, %v1479, 0
  %v1734 = vsel %vm1720, %v1481, 0
  %v1737 = vsel %vm1720, %v1483, 0
  %1739 = vmatpush.msra.mxu0 %v1604
  %1740 = vmatpush.msra.mxu0 %v1596
  %1741 = vmatpush.msra.mxu0 %v1588
  %1742 = vmatpush.msra.mxu0 %v1580
  %1743 = vmatpush.msra.mxu0 %v1572
  %1744 = vmatpush.msra.mxu0 %v1564
  %1745 = vmatpush.msra.mxu0 %v1556
  %1746 = vmatpush.msra.mxu0 %v1548
  %1747 = vmatpush.msra.mxu0 %v1540
  %1748 = vmatpush.msra.mxu0 %v1532
  %1749 = vmatpush.msra.mxu0 %v1524
  %1750 = vmatpush.msra.mxu0 %v1516
  %1751 = vmatpush.msra.mxu0 %v1508
  %1752 = vmatpush.msra.mxu0 %v1500
  %1753 = vmatpush.msra.mxu0 %v1492
  %1754 = vmatpush.msra.mxu0 %v1484
  %1755 = vmatmul.f32.gmra.mxu0 %v1472
  %v1756 = vpop.f32.mrf.mxu0
  %v1757 = vadd.f32 %v1693, %v1756
  %1758 = vmatmul.f32.gmra.mxu0 %v1474
  %v1759 = vpop.f32.mrf.mxu0
  %v1760 = vadd.f32 %v1698, %v1759
  %1761 = vmatmul.f32.gmra.mxu0 %v1476
  %v1762 = vpop.f32.mrf.mxu0
  %v1763 = vadd.f32 %v1703, %v1762
  %1764 = vmatmul.f32.gmra.mxu0 %v1478
  %v1765 = vpop.f32.mrf.mxu0
  %v1766 = vadd.f32 %v1708, %v1765
  %1767 = vmatmul.f32.gmra.mxu0 %v1480
  %v1768 = vpop.f32.mrf.mxu0
  %v1769 = vadd.f32 %v1713, %v1768
  %1770 = vmatmul.f32.gmra.mxu0 %v1482
  %v1771 = vpop.f32.mrf.mxu0
  %v1772 = vadd.f32 %v1718, %v1771
  %1773 = vdwg.mxu0
  %1774 = vmatpush.msra.mxu0 0.0
  %1775 = vmatpush.msra.mxu0 0.0
  %1776 = vmatpush.msra.mxu0 0.0
  %1777 = vmatpush.msra.mxu0 0.0
  %1778 = vmatpush.msra.mxu0 0.0
  %1779 = vmatpush.msra.mxu0 0.0
  %1780 = vmatpush.msra.mxu0 0.0
  %1781 = vmatpush.msra.mxu0 %v1676
  %1782 = vmatpush.msra.mxu0 %v1668
  %1783 = vmatpush.msra.mxu0 %v1660
  %1784 = vmatpush.msra.mxu0 %v1652
  %1785 = vmatpush.msra.mxu0 %v1644
  %1786 = vmatpush.msra.mxu0 %v1636
  %1787 = vmatpush.msra.mxu0 %v1628
  %1788 = vmatpush.msra.mxu0 %v1620
  %1789 = vmatpush.msra.mxu0 %v1612
  %1790 = vmatmul.f32.gmra.mxu0 %v1722
  %v1791 = vpop.f32.mrf.mxu0
  %v1792 = vadd.f32 %v1757, %v1791
  %1793 = vmatmul.f32.gmra.mxu0 %v1725
  %v1794 = vpop.f32.mrf.mxu0
  %v1795 = vadd.f32 %v1760, %v1794
  %1796 = vmatmul.f32.gmra.mxu0 %v1728
  %v1797 = vpop.f32.mrf.mxu0
  %v1798 = vadd.f32 %v1763, %v1797
  %1799 = vmatmul.f32.gmra.mxu0 %v1731
  %v1800 = vpop.f32.mrf.mxu0
  %v1801 = vadd.f32 %v1766, %v1800
  %1802 = vmatmul.f32.gmra.mxu0 %v1734
  %v1803 = vpop.f32.mrf.mxu0
  %v1804 = vadd.f32 %v1769, %v1803
  %1805 = vmatmul.f32.gmra.mxu0 %v1737
  %v1806 = vpop.f32.mrf.mxu0
  %v1807 = vadd.f32 %v1772, %v1806
  %1808 = vdwg.mxu0
  %1809 = vmatpush.msra.mxu0 %v1605
  %1810 = vmatpush.msra.mxu0 %v1597
  %1811 = vmatpush.msra.mxu0 %v1589
  %1812 = vmatpush.msra.mxu0 %v1581
  %1813 = vmatpush.msra.mxu0 %v1573
  %1814 = vmatpush.msra.mxu0 %v1565
  %1815 = vmatpush.msra.mxu0 %v1557
  %1816 = vmatpush.msra.mxu0 %v1549
  %1817 = vmatpush.msra.mxu0 %v1541
  %1818 = vmatpush.msra.mxu0 %v1533
  %1819 = vmatpush.msra.mxu0 %v1525
  %1820 = vmatpush.msra.mxu0 %v1517
  %1821 = vmatpush.msra.mxu0 %v1509
  %1822 = vmatpush.msra.mxu0 %v1501
  %1823 = vmatpush.msra.mxu0 %v1493
  %1824 = vmatpush.msra.mxu0 %v1485
  %1825 = vmatmul.f32.gmra.mxu0 %v1472
  %v1826 = vpop.f32.mrf.mxu0
  %v1827 = vadd.f32 %v1693, %v1826
  %1828 = vmatmul.f32.gmra.mxu0 %v1474
  %v1829 = vpop.f32.mrf.mxu0
  %v1830 = vadd.f32 %v1698, %v1829
  %1831 = vmatmul.f32.gmra.mxu0 %v1476
  %v1832 = vpop.f32.mrf.mxu0
  %v1833 = vadd.f32 %v1703, %v1832
  %1834 = vmatmul.f32.gmra.mxu0 %v1478
  %v1835 = vpop.f32.mrf.mxu0
  %v1836 = vadd.f32 %v1708, %v1835
  %1837 = vmatmul.f32.gmra.mxu0 %v1480
  %v1838 = vpop.f32.mrf.mxu0
  %v1839 = vadd.f32 %v1713, %v1838
  %1840 = vmatmul.f32.gmra.mxu0 %v1482
  %v1841 = vpop.f32.mrf.mxu0
  %v1842 = vadd.f32 %v1718, %v1841
  %1843 = vdwg.mxu0
  %1844 = vmatpush.msra.mxu0 0.0
  %1845 = vmatpush.msra.mxu0 0.0
  %1846 = vmatpush.msra.mxu0 0.0
  %1847 = vmatpush.msra.mxu0 0.0
  %1848 = vmatpush.msra.mxu0 0.0
  %1849 = vmatpush.msra.mxu0 0.0
  %1850 = vmatpush.msra.mxu0 0.0
  %1851 = vmatpush.msra.mxu0 %v1677
  %1852 = vmatpush.msra.mxu0 %v1669
  %1853 = vmatpush.msra.mxu0 %v1661
  %1854 = vmatpush.msra.mxu0 %v1653
  %1855 = vmatpush.msra.mxu0 %v1645
  %1856 = vmatpush.msra.mxu0 %v1637
  %1857 = vmatpush.msra.mxu0 %v1629
  %1858 = vmatpush.msra.mxu0 %v1621
  %1859 = vmatpush.msra.mxu0 %v1613
  %1860 = vmatmul.f32.gmra.mxu0 %v1722
  %v1861 = vpop.f32.mrf.mxu0
  %v1862 = vadd.f32 %v1827, %v1861
  %1863 = vmatmul.f32.gmra.mxu0 %v1725
  %v1864 = vpop.f32.mrf.mxu0
  %v1865 = vadd.f32 %v1830, %v1864
  %1866 = vmatmul.f32.gmra.mxu0 %v1728
  %v1867 = vpop.f32.mrf.mxu0
  %v1868 = vadd.f32 %v1833, %v1867
  %1869 = vmatmul.f32.gmra.mxu0 %v1731
  %v1870 = vpop.f32.mrf.mxu0
  %v1871 = vadd.f32 %v1836, %v1870
  %1872 = vmatmul.f32.gmra.mxu0 %v1734
  %v1873 = vpop.f32.mrf.mxu0
  %v1874 = vadd.f32 %v1839, %v1873
  %1875 = vmatmul.f32.gmra.mxu0 %v1737
  %v1876 = vpop.f32.mrf.mxu0
  %v1877 = vadd.f32 %v1842, %v1876
  %1878 = vdwg.mxu0
  %1879 = vmatpush.msra.mxu0 %v1606
  %1880 = vmatpush.msra.mxu0 %v1598
  %1881 = vmatpush.msra.mxu0 %v1590
  %1882 = vmatpush.msra.mxu0 %v1582
  %1883 = vmatpush.msra.mxu0 %v1574
  %1884 = vmatpush.msra.mxu0 %v1566
  %1885 = vmatpush.msra.mxu0 %v1558
  %1886 = vmatpush.msra.mxu0 %v1550
  %1887 = vmatpush.msra.mxu0 %v1542
  %1888 = vmatpush.msra.mxu0 %v1534
  %1889 = vmatpush.msra.mxu0 %v1526
  %1890 = vmatpush.msra.mxu0 %v1518
  %1891 = vmatpush.msra.mxu0 %v1510
  %1892 = vmatpush.msra.mxu0 %v1502
  %1893 = vmatpush.msra.mxu0 %v1494
  %1894 = vmatpush.msra.mxu0 %v1486
  %1895 = vmatmul.f32.gmra.mxu0 %v1472
  %v1896 = vpop.f32.mrf.mxu0
  %v1897 = vadd.f32 %v1693, %v1896
  %1898 = vmatmul.f32.gmra.mxu0 %v1474
  %v1899 = vpop.f32.mrf.mxu0
  %v1900 = vadd.f32 %v1698, %v1899
  %1901 = vmatmul.f32.gmra.mxu0 %v1476
  %v1902 = vpop.f32.mrf.mxu0
  %v1903 = vadd.f32 %v1703, %v1902
  %1904 = vmatmul.f32.gmra.mxu0 %v1478
  %v1905 = vpop.f32.mrf.mxu0
  %v1906 = vadd.f32 %v1708, %v1905
  %1907 = vmatmul.f32.gmra.mxu0 %v1480
  %v1908 = vpop.f32.mrf.mxu0
  %v1909 = vadd.f32 %v1713, %v1908
  %1910 = vmatmul.f32.gmra.mxu0 %v1482
  %v1911 = vpop.f32.mrf.mxu0
  %v1912 = vadd.f32 %v1718, %v1911
  %1913 = vdwg.mxu0
  %1914 = vmatpush.msra.mxu0 0.0
  %1915 = vmatpush.msra.mxu0 0.0
  %1916 = vmatpush.msra.mxu0 0.0
  %1917 = vmatpush.msra.mxu0 0.0
  %1918 = vmatpush.msra.mxu0 0.0
  %1919 = vmatpush.msra.mxu0 0.0
  %1920 = vmatpush.msra.mxu0 0.0
  %1921 = vmatpush.msra.mxu0 %v1678
  %1922 = vmatpush.msra.mxu0 %v1670
  %1923 = vmatpush.msra.mxu0 %v1662
  %1924 = vmatpush.msra.mxu0 %v1654
  %1925 = vmatpush.msra.mxu0 %v1646
  %1926 = vmatpush.msra.mxu0 %v1638
  %1927 = vmatpush.msra.mxu0 %v1630
  %1928 = vmatpush.msra.mxu0 %v1622
  %1929 = vmatpush.msra.mxu0 %v1614
  %1930 = vmatmul.f32.gmra.mxu0 %v1722
  %v1931 = vpop.f32.mrf.mxu0
  %v1932 = vadd.f32 %v1897, %v1931
  %1933 = vmatmul.f32.gmra.mxu0 %v1725
  %v1934 = vpop.f32.mrf.mxu0
  %v1935 = vadd.f32 %v1900, %v1934
  %1936 = vmatmul.f32.gmra.mxu0 %v1728
  %v1937 = vpop.f32.mrf.mxu0
  %v1938 = vadd.f32 %v1903, %v1937
  %1939 = vmatmul.f32.gmra.mxu0 %v1731
  %v1940 = vpop.f32.mrf.mxu0
  %v1941 = vadd.f32 %v1906, %v1940
  %1942 = vmatmul.f32.gmra.mxu0 %v1734
  %v1943 = vpop.f32.mrf.mxu0
  %v1944 = vadd.f32 %v1909, %v1943
  %1945 = vmatmul.f32.gmra.mxu0 %v1737
  %v1946 = vpop.f32.mrf.mxu0
  %v1947 = vadd.f32 %v1912, %v1946
  %1948 = vdwg.mxu0
  %1949 = vmatpush.msra.mxu0 %v1607
  %1950 = vmatpush.msra.mxu0 %v1599
  %1951 = vmatpush.msra.mxu0 %v1591
  %1952 = vmatpush.msra.mxu0 %v1583
  %1953 = vmatpush.msra.mxu0 %v1575
  %1954 = vmatpush.msra.mxu0 %v1567
  %1955 = vmatpush.msra.mxu0 %v1559
  %1956 = vmatpush.msra.mxu0 %v1551
  %1957 = vmatpush.msra.mxu0 %v1543
  %1958 = vmatpush.msra.mxu0 %v1535
  %1959 = vmatpush.msra.mxu0 %v1527
  %1960 = vmatpush.msra.mxu0 %v1519
  %1961 = vmatpush.msra.mxu0 %v1511
  %1962 = vmatpush.msra.mxu0 %v1503
  %1963 = vmatpush.msra.mxu0 %v1495
  %1964 = vmatpush.msra.mxu0 %v1487
  %1965 = vmatmul.f32.gmra.mxu0 %v1472
  %v1966 = vpop.f32.mrf.mxu0
  %v1967 = vadd.f32 %v1693, %v1966
  %1968 = vmatmul.f32.gmra.mxu0 %v1474
  %v1969 = vpop.f32.mrf.mxu0
  %v1970 = vadd.f32 %v1698, %v1969
  %1971 = vmatmul.f32.gmra.mxu0 %v1476
  %v1972 = vpop.f32.mrf.mxu0
  %v1973 = vadd.f32 %v1703, %v1972
  %1974 = vmatmul.f32.gmra.mxu0 %v1478
  %v1975 = vpop.f32.mrf.mxu0
  %v1976 = vadd.f32 %v1708, %v1975
  %1977 = vmatmul.f32.gmra.mxu0 %v1480
  %v1978 = vpop.f32.mrf.mxu0
  %v1979 = vadd.f32 %v1713, %v1978
  %1980 = vmatmul.f32.gmra.mxu0 %v1482
  %v1981 = vpop.f32.mrf.mxu0
  %v1982 = vadd.f32 %v1718, %v1981
  %1983 = vdwg.mxu0
  %1984 = vmatpush.msra.mxu0 0.0
  %1985 = vmatpush.msra.mxu0 0.0
  %1986 = vmatpush.msra.mxu0 0.0
  %1987 = vmatpush.msra.mxu0 0.0
  %1988 = vmatpush.msra.mxu0 0.0
  %1989 = vmatpush.msra.mxu0 0.0
  %1990 = vmatpush.msra.mxu0 0.0
  %1991 = vmatpush.msra.mxu0 %v1679
  %1992 = vmatpush.msra.mxu0 %v1671
  %1993 = vmatpush.msra.mxu0 %v1663
  %1994 = vmatpush.msra.mxu0 %v1655
  %1995 = vmatpush.msra.mxu0 %v1647
  %1996 = vmatpush.msra.mxu0 %v1639
  %1997 = vmatpush.msra.mxu0 %v1631
  %1998 = vmatpush.msra.mxu0 %v1623
  %1999 = vmatpush.msra.mxu0 %v1615
  %2000 = vmatmul.f32.gmra.mxu0 %v1722
  %v2001 = vpop.f32.mrf.mxu0
  %v2002 = vadd.f32 %v1967, %v2001
  %2003 = vmatmul.f32.gmra.mxu0 %v1725
  %v2004 = vpop.f32.mrf.mxu0
  %v2005 = vadd.f32 %v1970, %v2004
  %2006 = vmatmul.f32.gmra.mxu0 %v1728
  %v2007 = vpop.f32.mrf.mxu0
  %v2008 = vadd.f32 %v1973, %v2007
  %2009 = vmatmul.f32.gmra.mxu0 %v1731
  %v2010 = vpop.f32.mrf.mxu0
  %v2011 = vadd.f32 %v1976, %v2010
  %2012 = vmatmul.f32.gmra.mxu0 %v1734
  %v2013 = vpop.f32.mrf.mxu0
  %v2014 = vadd.f32 %v1979, %v2013
  %2015 = vmatmul.f32.gmra.mxu0 %v1737
  %v2016 = vpop.f32.mrf.mxu0
  %v2017 = vadd.f32 %v1982, %v2016
  %2018 = vdwg.mxu0
  %2019 = vmatpush.msra.mxu0 %v1608
  %2020 = vmatpush.msra.mxu0 %v1600
  %2021 = vmatpush.msra.mxu0 %v1592
  %2022 = vmatpush.msra.mxu0 %v1584
  %2023 = vmatpush.msra.mxu0 %v1576
  %2024 = vmatpush.msra.mxu0 %v1568
  %2025 = vmatpush.msra.mxu0 %v1560
  %2026 = vmatpush.msra.mxu0 %v1552
  %2027 = vmatpush.msra.mxu0 %v1544
  %2028 = vmatpush.msra.mxu0 %v1536
  %2029 = vmatpush.msra.mxu0 %v1528
  %2030 = vmatpush.msra.mxu0 %v1520
  %2031 = vmatpush.msra.mxu0 %v1512
  %2032 = vmatpush.msra.mxu0 %v1504
  %2033 = vmatpush.msra.mxu0 %v1496
  %2034 = vmatpush.msra.mxu0 %v1488
  %2035 = vmatmul.f32.gmra.mxu0 %v1472
  %v2036 = vpop.f32.mrf.mxu0
  %v2037 = vadd.f32 %v1693, %v2036
  %2038 = vmatmul.f32.gmra.mxu0 %v1474
  %v2039 = vpop.f32.mrf.mxu0
  %v2040 = vadd.f32 %v1698, %v2039
  %2041 = vmatmul.f32.gmra.mxu0 %v1476
  %v2042 = vpop.f32.mrf.mxu0
  %v2043 = vadd.f32 %v1703, %v2042
  %2044 = vmatmul.f32.gmra.mxu0 %v1478
  %v2045 = vpop.f32.mrf.mxu0
  %v2046 = vadd.f32 %v1708, %v2045
  %2047 = vmatmul.f32.gmra.mxu0 %v1480
  %v2048 = vpop.f32.mrf.mxu0
  %v2049 = vadd.f32 %v1713, %v2048
  %2050 = vmatmul.f32.gmra.mxu0 %v1482
  %v2051 = vpop.f32.mrf.mxu0
  %v2052 = vadd.f32 %v1718, %v2051
  %2053 = vdwg.mxu0
  %2054 = vmatpush.msra.mxu0 0.0
  %2055 = vmatpush.msra.mxu0 0.0
  %2056 = vmatpush.msra.mxu0 0.0
  %2057 = vmatpush.msra.mxu0 0.0
  %2058 = vmatpush.msra.mxu0 0.0
  %2059 = vmatpush.msra.mxu0 0.0
  %2060 = vmatpush.msra.mxu0 0.0
  %2061 = vmatpush.msra.mxu0 %v1680
  %2062 = vmatpush.msra.mxu0 %v1672
  %2063 = vmatpush.msra.mxu0 %v1664
  %2064 = vmatpush.msra.mxu0 %v1656
  %2065 = vmatpush.msra.mxu0 %v1648
  %2066 = vmatpush.msra.mxu0 %v1640
  %2067 = vmatpush.msra.mxu0 %v1632
  %2068 = vmatpush.msra.mxu0 %v1624
  %2069 = vmatpush.msra.mxu0 %v1616
  %2070 = vmatmul.f32.gmra.mxu0 %v1722
  %v2071 = vpop.f32.mrf.mxu0
  %v2072 = vadd.f32 %v2037, %v2071
  %2073 = vmatmul.f32.gmra.mxu0 %v1725
  %v2074 = vpop.f32.mrf.mxu0
  %v2075 = vadd.f32 %v2040, %v2074
  %2076 = vmatmul.f32.gmra.mxu0 %v1728
  %v2077 = vpop.f32.mrf.mxu0
  %v2078 = vadd.f32 %v2043, %v2077
  %2079 = vmatmul.f32.gmra.mxu0 %v1731
  %v2080 = vpop.f32.mrf.mxu0
  %v2081 = vadd.f32 %v2046, %v2080
  %2082 = vmatmul.f32.gmra.mxu0 %v1734
  %v2083 = vpop.f32.mrf.mxu0
  %v2084 = vadd.f32 %v2049, %v2083
  %2085 = vmatmul.f32.gmra.mxu0 %v1737
  %v2086 = vpop.f32.mrf.mxu0
  %v2087 = vadd.f32 %v2052, %v2086
  %2088 = vdwg.mxu0
  %2089 = vmatpush.msra.mxu0 %v1609
  %2090 = vmatpush.msra.mxu0 %v1601
  %2091 = vmatpush.msra.mxu0 %v1593
  %2092 = vmatpush.msra.mxu0 %v1585
  %2093 = vmatpush.msra.mxu0 %v1577
  %2094 = vmatpush.msra.mxu0 %v1569
  %2095 = vmatpush.msra.mxu0 %v1561
  %2096 = vmatpush.msra.mxu0 %v1553
  %2097 = vmatpush.msra.mxu0 %v1545
  %2098 = vmatpush.msra.mxu0 %v1537
  %2099 = vmatpush.msra.mxu0 %v1529
  %2100 = vmatpush.msra.mxu0 %v1521
  %2101 = vmatpush.msra.mxu0 %v1513
  %2102 = vmatpush.msra.mxu0 %v1505
  %2103 = vmatpush.msra.mxu0 %v1497
  %2104 = vmatpush.msra.mxu0 %v1489
  %2105 = vmatmul.f32.gmra.mxu0 %v1472
  %v2106 = vpop.f32.mrf.mxu0
  %v2107 = vadd.f32 %v1693, %v2106
  %2108 = vmatmul.f32.gmra.mxu0 %v1474
  %v2109 = vpop.f32.mrf.mxu0
  %v2110 = vadd.f32 %v1698, %v2109
  %2111 = vmatmul.f32.gmra.mxu0 %v1476
  %v2112 = vpop.f32.mrf.mxu0
  %v2113 = vadd.f32 %v1703, %v2112
  %2114 = vmatmul.f32.gmra.mxu0 %v1478
  %v2115 = vpop.f32.mrf.mxu0
  %v2116 = vadd.f32 %v1708, %v2115
  %2117 = vmatmul.f32.gmra.mxu0 %v1480
  %v2118 = vpop.f32.mrf.mxu0
  %v2119 = vadd.f32 %v1713, %v2118
  %2120 = vmatmul.f32.gmra.mxu0 %v1482
  %v2121 = vpop.f32.mrf.mxu0
  %v2122 = vadd.f32 %v1718, %v2121
  %2123 = vdwg.mxu0
  %2124 = vmatpush.msra.mxu0 0.0
  %2125 = vmatpush.msra.mxu0 0.0
  %2126 = vmatpush.msra.mxu0 0.0
  %2127 = vmatpush.msra.mxu0 0.0
  %2128 = vmatpush.msra.mxu0 0.0
  %2129 = vmatpush.msra.mxu0 0.0
  %2130 = vmatpush.msra.mxu0 0.0
  %2131 = vmatpush.msra.mxu0 %v1681
  %2132 = vmatpush.msra.mxu0 %v1673
  %2133 = vmatpush.msra.mxu0 %v1665
  %2134 = vmatpush.msra.mxu0 %v1657
  %2135 = vmatpush.msra.mxu0 %v1649
  %2136 = vmatpush.msra.mxu0 %v1641
  %2137 = vmatpush.msra.mxu0 %v1633
  %2138 = vmatpush.msra.mxu0 %v1625
  %2139 = vmatpush.msra.mxu0 %v1617
  %2140 = vmatmul.f32.gmra.mxu0 %v1722
  %v2141 = vpop.f32.mrf.mxu0
  %v2142 = vadd.f32 %v2107, %v2141
  %2143 = vmatmul.f32.gmra.mxu0 %v1725
  %v2144 = vpop.f32.mrf.mxu0
  %v2145 = vadd.f32 %v2110, %v2144
  %2146 = vmatmul.f32.gmra.mxu0 %v1728
  %v2147 = vpop.f32.mrf.mxu0
  %v2148 = vadd.f32 %v2113, %v2147
  %2149 = vmatmul.f32.gmra.mxu0 %v1731
  %v2150 = vpop.f32.mrf.mxu0
  %v2151 = vadd.f32 %v2116, %v2150
  %2152 = vmatmul.f32.gmra.mxu0 %v1734
  %v2153 = vpop.f32.mrf.mxu0
  %v2154 = vadd.f32 %v2119, %v2153
  %2155 = vmatmul.f32.gmra.mxu0 %v1737
  %v2156 = vpop.f32.mrf.mxu0
  %v2157 = vadd.f32 %v2122, %v2156
  %2158 = vdwg.mxu0
  %2159 = vmatpush.msra.mxu0 %v1610
  %2160 = vmatpush.msra.mxu0 %v1602
  %2161 = vmatpush.msra.mxu0 %v1594
  %2162 = vmatpush.msra.mxu0 %v1586
  %2163 = vmatpush.msra.mxu0 %v1578
  %2164 = vmatpush.msra.mxu0 %v1570
  %2165 = vmatpush.msra.mxu0 %v1562
  %2166 = vmatpush.msra.mxu0 %v1554
  %2167 = vmatpush.msra.mxu0 %v1546
  %2168 = vmatpush.msra.mxu0 %v1538
  %2169 = vmatpush.msra.mxu0 %v1530
  %2170 = vmatpush.msra.mxu0 %v1522
  %2171 = vmatpush.msra.mxu0 %v1514
  %2172 = vmatpush.msra.mxu0 %v1506
  %2173 = vmatpush.msra.mxu0 %v1498
  %2174 = vmatpush.msra.mxu0 %v1490
  %2175 = vmatmul.f32.gmra.mxu0 %v1472
  %v2176 = vpop.f32.mrf.mxu0
  %v2177 = vadd.f32 %v1693, %v2176
  %2178 = vmatmul.f32.gmra.mxu0 %v1474
  %v2179 = vpop.f32.mrf.mxu0
  %v2180 = vadd.f32 %v1698, %v2179
  %2181 = vmatmul.f32.gmra.mxu0 %v1476
  %v2182 = vpop.f32.mrf.mxu0
  %v2183 = vadd.f32 %v1703, %v2182
  %2184 = vmatmul.f32.gmra.mxu0 %v1478
  %v2185 = vpop.f32.mrf.mxu0
  %v2186 = vadd.f32 %v1708, %v2185
  %2187 = vmatmul.f32.gmra.mxu0 %v1480
  %v2188 = vpop.f32.mrf.mxu0
  %v2189 = vadd.f32 %v1713, %v2188
  %2190 = vmatmul.f32.gmra.mxu0 %v1482
  %v2191 = vpop.f32.mrf.mxu0
  %v2192 = vadd.f32 %v1718, %v2191
  %2193 = vdwg.mxu0
  %2194 = vmatpush.msra.mxu0 0.0
  %2195 = vmatpush.msra.mxu0 0.0
  %2196 = vmatpush.msra.mxu0 0.0
  %2197 = vmatpush.msra.mxu0 0.0
  %2198 = vmatpush.msra.mxu0 0.0
  %2199 = vmatpush.msra.mxu0 0.0
  %2200 = vmatpush.msra.mxu0 0.0
  %2201 = vmatpush.msra.mxu0 %v1682
  %2202 = vmatpush.msra.mxu0 %v1674
  %2203 = vmatpush.msra.mxu0 %v1666
  %2204 = vmatpush.msra.mxu0 %v1658
  %2205 = vmatpush.msra.mxu0 %v1650
  %2206 = vmatpush.msra.mxu0 %v1642
  %2207 = vmatpush.msra.mxu0 %v1634
  %2208 = vmatpush.msra.mxu0 %v1626
  %2209 = vmatpush.msra.mxu0 %v1618
  %2210 = vmatmul.f32.gmra.mxu0 %v1722
  %v2211 = vpop.f32.mrf.mxu0
  %v2212 = vadd.f32 %v2177, %v2211
  %2213 = vmatmul.f32.gmra.mxu0 %v1725
  %v2214 = vpop.f32.mrf.mxu0
  %v2215 = vadd.f32 %v2180, %v2214
  %2216 = vmatmul.f32.gmra.mxu0 %v1728
  %v2217 = vpop.f32.mrf.mxu0
  %v2218 = vadd.f32 %v2183, %v2217
  %2219 = vmatmul.f32.gmra.mxu0 %v1731
  %v2220 = vpop.f32.mrf.mxu0
  %v2221 = vadd.f32 %v2186, %v2220
  %2222 = vmatmul.f32.gmra.mxu0 %v1734
  %v2223 = vpop.f32.mrf.mxu0
  %v2224 = vadd.f32 %v2189, %v2223
  %2225 = vmatmul.f32.gmra.mxu0 %v1737
  %v2226 = vpop.f32.mrf.mxu0
  %v2227 = vadd.f32 %v2192, %v2226
  %2228 = vdwg.mxu0
  %2229 = vmatpush.msra.mxu0 %v1611
  %2230 = vmatpush.msra.mxu0 %v1603
  %2231 = vmatpush.msra.mxu0 %v1595
  %2232 = vmatpush.msra.mxu0 %v1587
  %2233 = vmatpush.msra.mxu0 %v1579
  %2234 = vmatpush.msra.mxu0 %v1571
  %2235 = vmatpush.msra.mxu0 %v1563
  %2236 = vmatpush.msra.mxu0 %v1555
  %2237 = vmatpush.msra.mxu0 %v1547
  %2238 = vmatpush.msra.mxu0 %v1539
  %2239 = vmatpush.msra.mxu0 %v1531
  %2240 = vmatpush.msra.mxu0 %v1523
  %2241 = vmatpush.msra.mxu0 %v1515
  %2242 = vmatpush.msra.mxu0 %v1507
  %2243 = vmatpush.msra.mxu0 %v1499
  %2244 = vmatpush.msra.mxu0 %v1491
  %2245 = vmatmul.f32.gmra.mxu0 %v1472
  %v2246 = vpop.f32.mrf.mxu0
  %v2247 = vadd.f32 %v1693, %v2246
  %2248 = vmatmul.f32.gmra.mxu0 %v1474
  %v2249 = vpop.f32.mrf.mxu0
  %v2250 = vadd.f32 %v1698, %v2249
  %2251 = vmatmul.f32.gmra.mxu0 %v1476
  %v2252 = vpop.f32.mrf.mxu0
  %v2253 = vadd.f32 %v1703, %v2252
  %2254 = vmatmul.f32.gmra.mxu0 %v1478
  %v2255 = vpop.f32.mrf.mxu0
  %v2256 = vadd.f32 %v1708, %v2255
  %2257 = vmatmul.f32.gmra.mxu0 %v1480
  %v2258 = vpop.f32.mrf.mxu0
  %v2259 = vadd.f32 %v1713, %v2258
  %2260 = vmatmul.f32.gmra.mxu0 %v1482
  %v2261 = vpop.f32.mrf.mxu0
  %v2262 = vadd.f32 %v1718, %v2261
  %2263 = vdwg.mxu0
  %2264 = vmatpush.msra.mxu0 0.0
  %2265 = vmatpush.msra.mxu0 0.0
  %2266 = vmatpush.msra.mxu0 0.0
  %2267 = vmatpush.msra.mxu0 0.0
  %2268 = vmatpush.msra.mxu0 0.0
  %2269 = vmatpush.msra.mxu0 0.0
  %2270 = vmatpush.msra.mxu0 0.0
  %2271 = vmatpush.msra.mxu0 %v1683
  %2272 = vmatpush.msra.mxu0 %v1675
  %2273 = vmatpush.msra.mxu0 %v1667
  %2274 = vmatpush.msra.mxu0 %v1659
  %2275 = vmatpush.msra.mxu0 %v1651
  %2276 = vmatpush.msra.mxu0 %v1643
  %2277 = vmatpush.msra.mxu0 %v1635
  %2278 = vmatpush.msra.mxu0 %v1627
  %2279 = vmatpush.msra.mxu0 %v1619
  %2280 = vmatmul.f32.gmra.mxu0 %v1722
  %v2281 = vpop.f32.mrf.mxu0
  %v2282 = vadd.f32 %v2247, %v2281
  %2283 = vmatmul.f32.gmra.mxu0 %v1725
  %v2284 = vpop.f32.mrf.mxu0
  %v2285 = vadd.f32 %v2250, %v2284
  %2286 = vmatmul.f32.gmra.mxu0 %v1728
  %v2287 = vpop.f32.mrf.mxu0
  %v2288 = vadd.f32 %v2253, %v2287
  %2289 = vmatmul.f32.gmra.mxu0 %v1731
  %v2290 = vpop.f32.mrf.mxu0
  %v2291 = vadd.f32 %v2256, %v2290
  %2292 = vmatmul.f32.gmra.mxu0 %v1734
  %v2293 = vpop.f32.mrf.mxu0
  %v2294 = vadd.f32 %v2259, %v2293
  %2295 = vmatmul.f32.gmra.mxu0 %v1737
  %v2296 = vpop.f32.mrf.mxu0
  %v2297 = vadd.f32 %v2262, %v2296
  %2298 = vdwg.mxu0
  %v2299 = vmax.f32 %v1792, 0.0
  %v2300 = vmax.f32 %v1862, 0.0
  %v2301 = vmax.f32 %v1932, 0.0
  %v2302 = vmax.f32 %v2002, 0.0
  %v2303 = vmax.f32 %v2072, 0.0
  %v2304 = vmax.f32 %v2142, 0.0
  %v2305 = vmax.f32 %v2212, 0.0
  %v2306 = vmax.f32 %v2282, 0.0
  %v2307 = vmax.f32 %v1795, 0.0
  %v2308 = vmax.f32 %v1865, 0.0
  %v2309 = vmax.f32 %v1935, 0.0
  %v2310 = vmax.f32 %v2005, 0.0
  %v2311 = vmax.f32 %v2075, 0.0
  %v2312 = vmax.f32 %v2145, 0.0
  %v2313 = vmax.f32 %v2215, 0.0
  %v2314 = vmax.f32 %v2285, 0.0
  %v2315 = vmax.f32 %v1798, 0.0
  %v2316 = vmax.f32 %v1868, 0.0
  %v2317 = vmax.f32 %v1938, 0.0
  %v2318 = vmax.f32 %v2008, 0.0
  %v2319 = vmax.f32 %v2078, 0.0
  %v2320 = vmax.f32 %v2148, 0.0
  %v2321 = vmax.f32 %v2218, 0.0
  %v2322 = vmax.f32 %v2288, 0.0
  %v2323 = vmax.f32 %v1801, 0.0
  %v2324 = vmax.f32 %v1871, 0.0
  %v2325 = vmax.f32 %v1941, 0.0
  %v2326 = vmax.f32 %v2011, 0.0
  %v2327 = vmax.f32 %v2081, 0.0
  %v2328 = vmax.f32 %v2151, 0.0
  %v2329 = vmax.f32 %v2221, 0.0
  %v2330 = vmax.f32 %v2291, 0.0
  %v2331 = vmax.f32 %v1804, 0.0
  %v2332 = vmax.f32 %v1874, 0.0
  %v2333 = vmax.f32 %v1944, 0.0
  %v2334 = vmax.f32 %v2014, 0.0
  %v2335 = vmax.f32 %v2084, 0.0
  %v2336 = vmax.f32 %v2154, 0.0
  %v2337 = vmax.f32 %v2224, 0.0
  %v2338 = vmax.f32 %v2294, 0.0
  %v2339 = vmax.f32 %v1807, 0.0
  %v2340 = vmax.f32 %v1877, 0.0
  %v2341 = vmax.f32 %v1947, 0.0
  %v2342 = vmax.f32 %v2017, 0.0
  %v2343 = vmax.f32 %v2087, 0.0
  %v2344 = vmax.f32 %v2157, 0.0
  %v2345 = vmax.f32 %v2227, 0.0
  %v2346 = vmax.f32 %v2297, 0.0
  %v2347 = vld [vmem:[%s5] sm:$0xff]
  %v2348 = vld [vmem:[%s5 + $0x8] sm:$0xff]
  %v2349 = vld [vmem:[%s5 + $0x10] sm:$0xff]
  %v2350 = vld [vmem:[%s5 + $0x18] sm:$0xff]
  %v2351 = vld [vmem:[%s5 + $0x20] sm:$0xff]
  %v2352 = vld [vmem:[%s5 + $0x28] sm:$0xff]
  %v2353 = vld [vmem:[%s5 + $0x30] sm:$0xff]
  %v2354 = vld [vmem:[%s5 + $0x38] sm:$0xff]
  %v2355 = vld [vmem:[%s5 + $0x40] sm:$0xff]
  %v2356 = vld [vmem:[%s5 + $0x48] sm:$0xff]
  %v2357 = vld [vmem:[%s5 + $0x50] sm:$0xff]
  %v2358 = vld [vmem:[%s5 + $0x58] sm:$0xff]
  %v2359 = vld [vmem:[%s5 + $0x60] sm:$0xff]
  %v2360 = vld [vmem:[%s5 + $0x68] sm:$0xff]
  %v2361 = vld [vmem:[%s5 + $0x70] sm:$0xff]
  %v2362 = vld [vmem:[%s5 + $0x78] sm:$0xff]
  %v2363 = vld [vmem:[%s5 + $0x80] sm:$0xff]
  %v2364 = vld [vmem:[%s5 + $0x88] sm:$0xff]
  %v2365 = vld [vmem:[%s5 + $0x90] sm:$0xff]
  %v2366 = vld [vmem:[%s5 + $0x98] sm:$0xff]
  %v2367 = vld [vmem:[%s5 + $0xa0] sm:$0xff]
  %v2368 = vld [vmem:[%s5 + $0xa8] sm:$0xff]
  %v2369 = vld [vmem:[%s5 + $0xb0] sm:$0xff]
  %v2370 = vld [vmem:[%s5 + $0xb8] sm:$0xff]
  %v2371 = vld [vmem:[%s5 + $0xc0] sm:$0xff]
  %v2372 = vld [vmem:[%s5 + $0xc8] sm:$0xff]
  %v2373 = vld [vmem:[%s5 + $0xd0] sm:$0xff]
  %v2374 = vld [vmem:[%s5 + $0xd8] sm:$0xff]
  %v2375 = vld [vmem:[%s5 + $0xe0] sm:$0xff]
  %v2376 = vld [vmem:[%s5 + $0xe8] sm:$0xff]
  %v2377 = vld [vmem:[%s5 + $0xf0] sm:$0xff]
  %v2378 = vld [vmem:[%s5 + $0xf8] sm:$0xff]
  %v2379 = vld [vmem:[%s5 + $0x100] sm:$0xff]
  %v2380 = vld [vmem:[%s5 + $0x108] sm:$0xff]
  %v2381 = vld [vmem:[%s5 + $0x110] sm:$0xff]
  %v2382 = vld [vmem:[%s5 + $0x118] sm:$0xff]
  %v2383 = vld [vmem:[%s5 + $0x120] sm:$0xff]
  %v2384 = vld [vmem:[%s5 + $0x128] sm:$0xff]
  %v2385 = vld [vmem:[%s5 + $0x130] sm:$0xff]
  %v2386 = vld [vmem:[%s5 + $0x138] sm:$0xff]
  %v2387 = vld [vmem:[%s5 + $0x140] sm:$0xff]
  %v2388 = vld [vmem:[%s5 + $0x148] sm:$0xff]
  %v2389 = vld [vmem:[%s5 + $0x150] sm:$0xff]
  %v2390 = vld [vmem:[%s5 + $0x158] sm:$0xff]
  %v2391 = vld [vmem:[%s5 + $0x160] sm:$0xff]
  %v2392 = vld [vmem:[%s5 + $0x168] sm:$0xff]
  %v2393 = vld [vmem:[%s5 + $0x170] sm:$0xff]
  %v2394 = vld [vmem:[%s5 + $0x178] sm:$0xff]
  %v2395 = vld [vmem:[%s5 + $0x180] sm:$0xff]
  %v2396 = vld [vmem:[%s5 + $0x188] sm:$0xff]
  %v2397 = vld [vmem:[%s5 + $0x190] sm:$0xff]
  %v2398 = vld [vmem:[%s5 + $0x198] sm:$0xff]
  %v2399 = vld [vmem:[%s5 + $0x1a0] sm:$0xff]
  %v2400 = vld [vmem:[%s5 + $0x1a8] sm:$0xff]
  %v2401 = vld [vmem:[%s5 + $0x1b0] sm:$0xff]
  %v2402 = vld [vmem:[%s5 + $0x1b8] sm:$0xff]
  %v2403 = vld [vmem:[%s5 + $0x1c0] sm:$0xff]
  %v2404 = vld [vmem:[%s5 + $0x1c8] sm:$0xff]
  %v2405 = vld [vmem:[%s5 + $0x1d0] sm:$0xff]
  %v2406 = vld [vmem:[%s5 + $0x1d8] sm:$0xff]
  %v2407 = vld [vmem:[%s5 + $0x1e0] sm:$0xff]
  %v2408 = vld [vmem:[%s5 + $0x1e8] sm:$0xff]
  %v2409 = vld [vmem:[%s5 + $0x1f0] sm:$0xff]
  %v2410 = vld [vmem:[%s5 + $0x1f8] sm:$0xff]
  %v2411 = vld [vmem:[%s5 + $0x200] sm:$0xff]
  %v2412 = vld [vmem:[%s5 + $0x208] sm:$0xff]
  %v2413 = vld [vmem:[%s5 + $0x210] sm:$0xff]
  %v2414 = vld [vmem:[%s5 + $0x218] sm:$0xff]
  %v2415 = vld [vmem:[%s5 + $0x220] sm:$0xff]
  %v2416 = vld [vmem:[%s5 + $0x228] sm:$0xff]
  %v2417 = vld [vmem:[%s5 + $0x230] sm:$0xff]
  %v2418 = vld [vmem:[%s5 + $0x238] sm:$0xff]
  %v2419 = vld [vmem:[%s5 + $0x240] sm:$0xff]
  %v2420 = vld [vmem:[%s5 + $0x248] sm:$0xff]
  %v2421 = vld [vmem:[%s5 + $0x250] sm:$0xff]
  %v2422 = vld [vmem:[%s5 + $0x258] sm:$0xff]
  %v2423 = vld [vmem:[%s5 + $0x260] sm:$0xff]
  %v2424 = vld [vmem:[%s5 + $0x268] sm:$0xff]
  %v2425 = vld [vmem:[%s5 + $0x270] sm:$0xff]
  %v2426 = vld [vmem:[%s5 + $0x278] sm:$0xff]
  %v2427 = vld [vmem:[%s5 + $0x280] sm:$0xff]
  %v2428 = vld [vmem:[%s5 + $0x288] sm:$0xff]
  %v2429 = vld [vmem:[%s5 + $0x290] sm:$0xff]
  %v2430 = vld [vmem:[%s5 + $0x298] sm:$0xff]
  %v2431 = vld [vmem:[%s5 + $0x2a0] sm:$0xff]
  %v2432 = vld [vmem:[%s5 + $0x2a8] sm:$0xff]
  %v2433 = vld [vmem:[%s5 + $0x2b0] sm:$0xff]
  %v2434 = vld [vmem:[%s5 + $0x2b8] sm:$0xff]
  %v2435 = vld [vmem:[%s5 + $0x2c0] sm:$0xff]
  %v2436 = vld [vmem:[%s5 + $0x2c8] sm:$0xff]
  %v2437 = vld [vmem:[%s5 + $0x2d0] sm:$0xff]
  %v2438 = vld [vmem:[%s5 + $0x2d8] sm:$0xff]
  %v2439 = vld [vmem:[%s5 + $0x2e0] sm:$0xff]
  %v2440 = vld [vmem:[%s5 + $0x2e8] sm:$0xff]
  %v2441 = vld [vmem:[%s5 + $0x2f0] sm:$0xff]
  %v2442 = vld [vmem:[%s5 + $0x2f8] sm:$0xff]
  %v2443 = vld [vmem:[%s5 + $0x300] sm:$0xff]
  %v2444 = vld [vmem:[%s5 + $0x308] sm:$0xff]
  %v2445 = vld [vmem:[%s5 + $0x310] sm:$0xff]
  %v2446 = vld [vmem:[%s5 + $0x318] sm:$0xff]
  %v2447 = vld [vmem:[%s5 + $0x320] sm:$0xff]
  %v2448 = vld [vmem:[%s5 + $0x328] sm:$0xff]
  %v2449 = vld [vmem:[%s5 + $0x330] sm:$0xff]
  %v2450 = vld [vmem:[%s5 + $0x338] sm:$0xff]
  %v2451 = vld [vmem:[%s5 + $0x340] sm:$0xff]
  %v2452 = vld [vmem:[%s5 + $0x348] sm:$0xff]
  %v2453 = vld [vmem:[%s5 + $0x350] sm:$0xff]
  %v2454 = vld [vmem:[%s5 + $0x358] sm:$0xff]
  %v2455 = vld [vmem:[%s5 + $0x360] sm:$0xff]
  %v2456 = vld [vmem:[%s5 + $0x368] sm:$0xff]
  %v2457 = vld [vmem:[%s5 + $0x370] sm:$0xff]
  %v2458 = vld [vmem:[%s5 + $0x378] sm:$0xff]
  %v2459 = vld [vmem:[%s5 + $0x380] sm:$0xff]
  %v2460 = vld [vmem:[%s5 + $0x388] sm:$0xff]
  %v2461 = vld [vmem:[%s5 + $0x390] sm:$0xff]
  %v2462 = vld [vmem:[%s5 + $0x398] sm:$0xff]
  %v2463 = vld [vmem:[%s5 + $0x3a0] sm:$0xff]
  %v2464 = vld [vmem:[%s5 + $0x3a8] sm:$0xff]
  %v2465 = vld [vmem:[%s5 + $0x3b0] sm:$0xff]
  %v2466 = vld [vmem:[%s5 + $0x3b8] sm:$0xff]
  %v2467 = vld [vmem:[%s5 + $0x3c0] sm:$0xff]
  %v2468 = vld [vmem:[%s5 + $0x3c8] sm:$0xff]
  %v2469 = vld [vmem:[%s5 + $0x3d0] sm:$0xff]
  %v2470 = vld [vmem:[%s5 + $0x3d8] sm:$0xff]
  %v2471 = vld [vmem:[%s5 + $0x3e0] sm:$0xff]
  %v2472 = vld [vmem:[%s5 + $0x3e8] sm:$0xff]
  %v2473 = vld [vmem:[%s5 + $0x3f0] sm:$0xff]
  %v2474 = vld [vmem:[%s5 + $0x3f8] sm:$0xff]
  %v2475 = vld [vmem:[%s5 + $0x400] sm:$0xff]
  %v2476 = vld [vmem:[%s5 + $0x408] sm:$0xff]
  %v2477 = vld [vmem:[%s5 + $0x410] sm:$0xff]
  %v2478 = vld [vmem:[%s5 + $0x418] sm:$0xff]
  %v2479 = vld [vmem:[%s5 + $0x420] sm:$0xff]
  %v2480 = vld [vmem:[%s5 + $0x428] sm:$0xff]
  %v2481 = vld [vmem:[%s5 + $0x430] sm:$0xff]
  %v2482 = vld [vmem:[%s5 + $0x438] sm:$0xff]
  %v2483 = vld [vmem:[%s5 + $0x440] sm:$0xff]
  %v2484 = vld [vmem:[%s5 + $0x448] sm:$0xff]
  %v2485 = vld [vmem:[%s5 + $0x450] sm:$0xff]
  %v2486 = vld [vmem:[%s5 + $0x458] sm:$0xff]
  %v2487 = vld [vmem:[%s5 + $0x460] sm:$0xff]
  %v2488 = vld [vmem:[%s5 + $0x468] sm:$0xff]
  %v2489 = vld [vmem:[%s5 + $0x470] sm:$0xff]
  %v2490 = vld [vmem:[%s5 + $0x478] sm:$0xff]
  %v2491 = vld [vmem:[%s5 + $0x480] sm:$0xff]
  %v2492 = vld [vmem:[%s5 + $0x488] sm:$0xff]
  %v2493 = vld [vmem:[%s5 + $0x490] sm:$0xff]
  %v2494 = vld [vmem:[%s5 + $0x498] sm:$0xff]
  %v2495 = vld [vmem:[%s5 + $0x4a0] sm:$0xff]
  %v2496 = vld [vmem:[%s5 + $0x4a8] sm:$0xff]
  %v2497 = vld [vmem:[%s5 + $0x4b0] sm:$0xff]
  %v2498 = vld [vmem:[%s5 + $0x4b8] sm:$0xff]
  %v2499 = vld [vmem:[%s5 + $0x4c0] sm:$0xff]
  %v2500 = vld [vmem:[%s5 + $0x4c8] sm:$0xff]
  %v2501 = vld [vmem:[%s5 + $0x4d0] sm:$0xff]
  %v2502 = vld [vmem:[%s5 + $0x4d8] sm:$0xff]
  %v2503 = vld [vmem:[%s5 + $0x4e0] sm:$0xff]
  %v2504 = vld [vmem:[%s5 + $0x4e8] sm:$0xff]
  %v2505 = vld [vmem:[%s5 + $0x4f0] sm:$0xff]
  %v2506 = vld [vmem:[%s5 + $0x4f8] sm:$0xff]
  %v2507 = vld [vmem:[%s5 + $0x500] sm:$0xff]
  %v2508 = vld [vmem:[%s5 + $0x508] sm:$0xff]
  %v2509 = vld [vmem:[%s5 + $0x510] sm:$0xff]
  %v2510 = vld [vmem:[%s5 + $0x518] sm:$0xff]
  %v2511 = vld [vmem:[%s5 + $0x520] sm:$0xff]
  %v2512 = vld [vmem:[%s5 + $0x528] sm:$0xff]
  %v2513 = vld [vmem:[%s5 + $0x530] sm:$0xff]
  %v2514 = vld [vmem:[%s5 + $0x538] sm:$0xff]
  %v2515 = vld [vmem:[%s5 + $0x540] sm:$0xff]
  %v2516 = vld [vmem:[%s5 + $0x548] sm:$0xff]
  %v2517 = vld [vmem:[%s5 + $0x550] sm:$0xff]
  %v2518 = vld [vmem:[%s5 + $0x558] sm:$0xff]
  %v2519 = vld [vmem:[%s5 + $0x560] sm:$0xff]
  %v2520 = vld [vmem:[%s5 + $0x568] sm:$0xff]
  %v2521 = vld [vmem:[%s5 + $0x570] sm:$0xff]
  %v2522 = vld [vmem:[%s5 + $0x578] sm:$0xff]
  %v2523 = vld [vmem:[%s5 + $0x580] sm:$0xff]
  %v2524 = vld [vmem:[%s5 + $0x588] sm:$0xff]
  %v2525 = vld [vmem:[%s5 + $0x590] sm:$0xff]
  %v2526 = vld [vmem:[%s5 + $0x598] sm:$0xff]
  %v2527 = vld [vmem:[%s5 + $0x5a0] sm:$0xff]
  %v2528 = vld [vmem:[%s5 + $0x5a8] sm:$0xff]
  %v2529 = vld [vmem:[%s5 + $0x5b0] sm:$0xff]
  %v2530 = vld [vmem:[%s5 + $0x5b8] sm:$0xff]
  %v2531 = vld [vmem:[%s5 + $0x5c0] sm:$0xff]
  %v2532 = vld [vmem:[%s5 + $0x5c8] sm:$0xff]
  %v2533 = vld [vmem:[%s5 + $0x5d0] sm:$0xff]
  %v2534 = vld [vmem:[%s5 + $0x5d8] sm:$0xff]
  %v2535 = vld [vmem:[%s5 + $0x5e0] sm:$0xff]
  %v2536 = vld [vmem:[%s5 + $0x5e8] sm:$0xff]
  %v2537 = vld [vmem:[%s5 + $0x5f0] sm:$0xff]
  %v2538 = vld [vmem:[%s5 + $0x5f8] sm:$0xff]
  %v2539 = vld [vmem:[%s5 + $0x600] sm:$0xff]
  %v2540 = vld [vmem:[%s5 + $0x608] sm:$0xff]
  %v2541 = vld [vmem:[%s5 + $0x610] sm:$0xff]
  %v2542 = vld [vmem:[%s5 + $0x618] sm:$0xff]
  %v2543 = vld [vmem:[%s5 + $0x620] sm:$0xff]
  %v2544 = vld [vmem:[%s5 + $0x628] sm:$0xff]
  %v2545 = vld [vmem:[%s5 + $0x630] sm:$0xff]
  %v2546 = vld [vmem:[%s5 + $0x638] sm:$0xff]
  %v2547 = vld [vmem:[%s5 + $0x640] sm:$0xff]
  %v2548 = vld [vmem:[%s5 + $0x648] sm:$0xff]
  %v2549 = vld [vmem:[%s5 + $0x650] sm:$0xff]
  %v2550 = vld [vmem:[%s5 + $0x658] sm:$0xff]
  %v2551 = vld [vmem:[%s5 + $0x660] sm:$0xff]
  %v2552 = vld [vmem:[%s5 + $0x668] sm:$0xff]
  %v2553 = vld [vmem:[%s5 + $0x670] sm:$0xff]
  %v2554 = vld [vmem:[%s5 + $0x678] sm:$0xff]
  %v2555 = vld [vmem:[%s5 + $0x680] sm:$0xff]
  %v2556 = vld [vmem:[%s5 + $0x688] sm:$0xff]
  %v2557 = vld [vmem:[%s5 + $0x690] sm:$0xff]
  %v2558 = vld [vmem:[%s5 + $0x698] sm:$0xff]
  %v2559 = vld [vmem:[%s5 + $0x6a0] sm:$0xff]
  %v2560 = vld [vmem:[%s5 + $0x6a8] sm:$0xff]
  %v2561 = vld [vmem:[%s5 + $0x6b0] sm:$0xff]
  %v2562 = vld [vmem:[%s5 + $0x6b8] sm:$0xff]
  %v2563 = vld [vmem:[%s5 + $0x6c0] sm:$0xff]
  %v2564 = vld [vmem:[%s5 + $0x6c8] sm:$0xff]
  %v2565 = vld [vmem:[%s5 + $0x6d0] sm:$0xff]
  %v2566 = vld [vmem:[%s5 + $0x6d8] sm:$0xff]
  %v2567 = vld [vmem:[%s5 + $0x6e0] sm:$0xff]
  %v2568 = vld [vmem:[%s5 + $0x6e8] sm:$0xff]
  %v2569 = vld [vmem:[%s5 + $0x6f0] sm:$0xff]
  %v2570 = vld [vmem:[%s5 + $0x6f8] sm:$0xff]
  %v2571 = vld [vmem:[%s5 + $0x700] sm:$0xff]
  %v2572 = vld [vmem:[%s5 + $0x708] sm:$0xff]
  %v2573 = vld [vmem:[%s5 + $0x710] sm:$0xff]
  %v2574 = vld [vmem:[%s5 + $0x718] sm:$0xff]
  %v2575 = vld [vmem:[%s5 + $0x720] sm:$0xff]
  %v2576 = vld [vmem:[%s5 + $0x728] sm:$0xff]
  %v2577 = vld [vmem:[%s5 + $0x730] sm:$0xff]
  %v2578 = vld [vmem:[%s5 + $0x738] sm:$0xff]
  %v2579 = vld [vmem:[%s5 + $0x740] sm:$0xff]
  %v2580 = vld [vmem:[%s5 + $0x748] sm:$0xff]
  %v2581 = vld [vmem:[%s5 + $0x750] sm:$0xff]
  %v2582 = vld [vmem:[%s5 + $0x758] sm:$0xff]
  %v2583 = vld [vmem:[%s5 + $0x760] sm:$0xff]
  %v2584 = vld [vmem:[%s5 + $0x768] sm:$0xff]
  %v2585 = vld [vmem:[%s5 + $0x770] sm:$0xff]
  %v2586 = vld [vmem:[%s5 + $0x778] sm:$0xff]
  %v2587 = vld [vmem:[%s5 + $0x780] sm:$0xff]
  %v2588 = vld [vmem:[%s5 + $0x788] sm:$0xff]
  %v2589 = vld [vmem:[%s5 + $0x790] sm:$0xff]
  %v2590 = vld [vmem:[%s5 + $0x798] sm:$0xff]
  %v2591 = vld [vmem:[%s5 + $0x7a0] sm:$0xff]
  %v2592 = vld [vmem:[%s5 + $0x7a8] sm:$0xff]
  %v2593 = vld [vmem:[%s5 + $0x7b0] sm:$0xff]
  %v2594 = vld [vmem:[%s5 + $0x7b8] sm:$0xff]
  %v2595 = vld [vmem:[%s5 + $0x7c0] sm:$0xff]
  %v2596 = vld [vmem:[%s5 + $0x7c8] sm:$0xff]
  %v2597 = vld [vmem:[%s5 + $0x7d0] sm:$0xff]
  %v2598 = vld [vmem:[%s5 + $0x7d8] sm:$0xff]
  %v2599 = vld [vmem:[%s5 + $0x7e0] sm:$0xff]
  %v2600 = vld [vmem:[%s5 + $0x7e8] sm:$0xff]
  %v2601 = vld [vmem:[%s5 + $0x7f0] sm:$0xff]
  %v2602 = vld [vmem:[%s5 + $0x7f8] sm:$0xff]
  %2603 = vmatpush.msra.mxu0 %v2377
  %2604 = vmatpush.msra.mxu0 %v2375
  %2605 = vmatpush.msra.mxu0 %v2373
  %2606 = vmatpush.msra.mxu0 %v2371
  %2607 = vmatpush.msra.mxu0 %v2369
  %2608 = vmatpush.msra.mxu0 %v2367
  %2609 = vmatpush.msra.mxu0 %v2365
  %2610 = vmatpush.msra.mxu0 %v2363
  %2611 = vmatpush.msra.mxu0 %v2361
  %2612 = vmatpush.msra.mxu0 %v2359
  %2613 = vmatpush.msra.mxu0 %v2357
  %2614 = vmatpush.msra.mxu0 %v2355
  %2615 = vmatpush.msra.mxu0 %v2353
  %2616 = vmatpush.msra.mxu0 %v2351
  %2617 = vmatpush.msra.mxu0 %v2349
  %2618 = vmatpush.msra.mxu0 %v2347
  %2619 = vmatmul.f32.gmra.mxu0 %v2299
  %v2620 = vpop.f32.mrf.mxu0
  %v2621 = vadd.f32 0.0, %v2620
  %2622 = vmatmul.f32.gmra.mxu0 %v2307
  %v2623 = vpop.f32.mrf.mxu0
  %v2624 = vadd.f32 0.0, %v2623
  %2625 = vmatmul.f32.gmra.mxu0 %v2315
  %v2626 = vpop.f32.mrf.mxu0
  %v2627 = vadd.f32 0.0, %v2626
  %2628 = vmatmul.f32.gmra.mxu0 %v2323
  %v2629 = vpop.f32.mrf.mxu0
  %v2630 = vadd.f32 0.0, %v2629
  %2631 = vmatmul.f32.gmra.mxu0 %v2331
  %v2632 = vpop.f32.mrf.mxu0
  %v2633 = vadd.f32 0.0, %v2632
  %2634 = vmatmul.f32.gmra.mxu0 %v2339
  %v2635 = vpop.f32.mrf.mxu0
  %v2636 = vadd.f32 0.0, %v2635
  %2637 = vdwg.mxu0
  %2638 = vmatpush.msra.mxu0 %v2409
  %2639 = vmatpush.msra.mxu0 %v2407
  %2640 = vmatpush.msra.mxu0 %v2405
  %2641 = vmatpush.msra.mxu0 %v2403
  %2642 = vmatpush.msra.mxu0 %v2401
  %2643 = vmatpush.msra.mxu0 %v2399
  %2644 = vmatpush.msra.mxu0 %v2397
  %2645 = vmatpush.msra.mxu0 %v2395
  %2646 = vmatpush.msra.mxu0 %v2393
  %2647 = vmatpush.msra.mxu0 %v2391
  %2648 = vmatpush.msra.mxu0 %v2389
  %2649 = vmatpush.msra.mxu0 %v2387
  %2650 = vmatpush.msra.mxu0 %v2385
  %2651 = vmatpush.msra.mxu0 %v2383
  %2652 = vmatpush.msra.mxu0 %v2381
  %2653 = vmatpush.msra.mxu0 %v2379
  %2654 = vmatmul.f32.gmra.mxu0 %v2300
  %v2655 = vpop.f32.mrf.mxu0
  %v2656 = vadd.f32 %v2621, %v2655
  %2657 = vmatmul.f32.gmra.mxu0 %v2308
  %v2658 = vpop.f32.mrf.mxu0
  %v2659 = vadd.f32 %v2624, %v2658
  %2660 = vmatmul.f32.gmra.mxu0 %v2316
  %v2661 = vpop.f32.mrf.mxu0
  %v2662 = vadd.f32 %v2627, %v2661
  %2663 = vmatmul.f32.gmra.mxu0 %v2324
  %v2664 = vpop.f32.mrf.mxu0
  %v2665 = vadd.f32 %v2630, %v2664
  %2666 = vmatmul.f32.gmra.mxu0 %v2332
  %v2667 = vpop.f32.mrf.mxu0
  %v2668 = vadd.f32 %v2633, %v2667
  %2669 = vmatmul.f32.gmra.mxu0 %v2340
  %v2670 = vpop.f32.mrf.mxu0
  %v2671 = vadd.f32 %v2636, %v2670
  %2672 = vdwg.mxu0
  %2673 = vmatpush.msra.mxu0 %v2441
  %2674 = vmatpush.msra.mxu0 %v2439
  %2675 = vmatpush.msra.mxu0 %v2437
  %2676 = vmatpush.msra.mxu0 %v2435
  %2677 = vmatpush.msra.mxu0 %v2433
  %2678 = vmatpush.msra.mxu0 %v2431
  %2679 = vmatpush.msra.mxu0 %v2429
  %2680 = vmatpush.msra.mxu0 %v2427
  %2681 = vmatpush.msra.mxu0 %v2425
  %2682 = vmatpush.msra.mxu0 %v2423
  %2683 = vmatpush.msra.mxu0 %v2421
  %2684 = vmatpush.msra.mxu0 %v2419
  %2685 = vmatpush.msra.mxu0 %v2417
  %2686 = vmatpush.msra.mxu0 %v2415
  %2687 = vmatpush.msra.mxu0 %v2413
  %2688 = vmatpush.msra.mxu0 %v2411
  %2689 = vmatmul.f32.gmra.mxu0 %v2301
  %v2690 = vpop.f32.mrf.mxu0
  %v2691 = vadd.f32 %v2656, %v2690
  %2692 = vmatmul.f32.gmra.mxu0 %v2309
  %v2693 = vpop.f32.mrf.mxu0
  %v2694 = vadd.f32 %v2659, %v2693
  %2695 = vmatmul.f32.gmra.mxu0 %v2317
  %v2696 = vpop.f32.mrf.mxu0
  %v2697 = vadd.f32 %v2662, %v2696
  %2698 = vmatmul.f32.gmra.mxu0 %v2325
  %v2699 = vpop.f32.mrf.mxu0
  %v2700 = vadd.f32 %v2665, %v2699
  %2701 = vmatmul.f32.gmra.mxu0 %v2333
  %v2702 = vpop.f32.mrf.mxu0
  %v2703 = vadd.f32 %v2668, %v2702
  %2704 = vmatmul.f32.gmra.mxu0 %v2341
  %v2705 = vpop.f32.mrf.mxu0
  %v2706 = vadd.f32 %v2671, %v2705
  %2707 = vdwg.mxu0
  %2708 = vmatpush.msra.mxu0 %v2473
  %2709 = vmatpush.msra.mxu0 %v2471
  %2710 = vmatpush.msra.mxu0 %v2469
  %2711 = vmatpush.msra.mxu0 %v2467
  %2712 = vmatpush.msra.mxu0 %v2465
  %2713 = vmatpush.msra.mxu0 %v2463
  %2714 = vmatpush.msra.mxu0 %v2461
  %2715 = vmatpush.msra.mxu0 %v2459
  %2716 = vmatpush.msra.mxu0 %v2457
  %2717 = vmatpush.msra.mxu0 %v2455
  %2718 = vmatpush.msra.mxu0 %v2453
  %2719 = vmatpush.msra.mxu0 %v2451
  %2720 = vmatpush.msra.mxu0 %v2449
  %2721 = vmatpush.msra.mxu0 %v2447
  %2722 = vmatpush.msra.mxu0 %v2445
  %2723 = vmatpush.msra.mxu0 %v2443
  %2724 = vmatmul.f32.gmra.mxu0 %v2302
  %v2725 = vpop.f32.mrf.mxu0
  %v2726 = vadd.f32 %v2691, %v2725
  %2727 = vmatmul.f32.gmra.mxu0 %v2310
  %v2728 = vpop.f32.mrf.mxu0
  %v2729 = vadd.f32 %v2694, %v2728
  %2730 = vmatmul.f32.gmra.mxu0 %v2318
  %v2731 = vpop.f32.mrf.mxu0
  %v2732 = vadd.f32 %v2697, %v2731
  %2733 = vmatmul.f32.gmra.mxu0 %v2326
  %v2734 = vpop.f32.mrf.mxu0
  %v2735 = vadd.f32 %v2700, %v2734
  %2736 = vmatmul.f32.gmra.mxu0 %v2334
  %v2737 = vpop.f32.mrf.mxu0
  %v2738 = vadd.f32 %v2703, %v2737
  %2739 = vmatmul.f32.gmra.mxu0 %v2342
  %v2740 = vpop.f32.mrf.mxu0
  %v2741 = vadd.f32 %v2706, %v2740
  %2742 = vdwg.mxu0
  %2743 = vmatpush.msra.mxu0 %v2505
  %2744 = vmatpush.msra.mxu0 %v2503
  %2745 = vmatpush.msra.mxu0 %v2501
  %2746 = vmatpush.msra.mxu0 %v2499
  %2747 = vmatpush.msra.mxu0 %v2497
  %2748 = vmatpush.msra.mxu0 %v2495
  %2749 = vmatpush.msra.mxu0 %v2493
  %2750 = vmatpush.msra.mxu0 %v2491
  %2751 = vmatpush.msra.mxu0 %v2489
  %2752 = vmatpush.msra.mxu0 %v2487
  %2753 = vmatpush.msra.mxu0 %v2485
  %2754 = vmatpush.msra.mxu0 %v2483
  %2755 = vmatpush.msra.mxu0 %v2481
  %2756 = vmatpush.msra.mxu0 %v2479
  %2757 = vmatpush.msra.mxu0 %v2477
  %2758 = vmatpush.msra.mxu0 %v2475
  %2759 = vmatmul.f32.gmra.mxu0 %v2303
  %v2760 = vpop.f32.mrf.mxu0
  %v2761 = vadd.f32 %v2726, %v2760
  %2762 = vmatmul.f32.gmra.mxu0 %v2311
  %v2763 = vpop.f32.mrf.mxu0
  %v2764 = vadd.f32 %v2729, %v2763
  %2765 = vmatmul.f32.gmra.mxu0 %v2319
  %v2766 = vpop.f32.mrf.mxu0
  %v2767 = vadd.f32 %v2732, %v2766
  %2768 = vmatmul.f32.gmra.mxu0 %v2327
  %v2769 = vpop.f32.mrf.mxu0
  %v2770 = vadd.f32 %v2735, %v2769
  %2771 = vmatmul.f32.gmra.mxu0 %v2335
  %v2772 = vpop.f32.mrf.mxu0
  %v2773 = vadd.f32 %v2738, %v2772
  %2774 = vmatmul.f32.gmra.mxu0 %v2343
  %v2775 = vpop.f32.mrf.mxu0
  %v2776 = vadd.f32 %v2741, %v2775
  %2777 = vdwg.mxu0
  %2778 = vmatpush.msra.mxu0 %v2537
  %2779 = vmatpush.msra.mxu0 %v2535
  %2780 = vmatpush.msra.mxu0 %v2533
  %2781 = vmatpush.msra.mxu0 %v2531
  %2782 = vmatpush.msra.mxu0 %v2529
  %2783 = vmatpush.msra.mxu0 %v2527
  %2784 = vmatpush.msra.mxu0 %v2525
  %2785 = vmatpush.msra.mxu0 %v2523
  %2786 = vmatpush.msra.mxu0 %v2521
  %2787 = vmatpush.msra.mxu0 %v2519
  %2788 = vmatpush.msra.mxu0 %v2517
  %2789 = vmatpush.msra.mxu0 %v2515
  %2790 = vmatpush.msra.mxu0 %v2513
  %2791 = vmatpush.msra.mxu0 %v2511
  %2792 = vmatpush.msra.mxu0 %v2509
  %2793 = vmatpush.msra.mxu0 %v2507
  %2794 = vmatmul.f32.gmra.mxu0 %v2304
  %v2795 = vpop.f32.mrf.mxu0
  %v2796 = vadd.f32 %v2761, %v2795
  %2797 = vmatmul.f32.gmra.mxu0 %v2312
  %v2798 = vpop.f32.mrf.mxu0
  %v2799 = vadd.f32 %v2764, %v2798
  %2800 = vmatmul.f32.gmra.mxu0 %v2320
  %v2801 = vpop.f32.mrf.mxu0
  %v2802 = vadd.f32 %v2767, %v2801
  %2803 = vmatmul.f32.gmra.mxu0 %v2328
  %v2804 = vpop.f32.mrf.mxu0
  %v2805 = vadd.f32 %v2770, %v2804
  %2806 = vmatmul.f32.gmra.mxu0 %v2336
  %v2807 = vpop.f32.mrf.mxu0
  %v2808 = vadd.f32 %v2773, %v2807
  %2809 = vmatmul.f32.gmra.mxu0 %v2344
  %v2810 = vpop.f32.mrf.mxu0
  %v2811 = vadd.f32 %v2776, %v2810
  %2812 = vdwg.mxu0
  %2813 = vmatpush.msra.mxu0 %v2569
  %2814 = vmatpush.msra.mxu0 %v2567
  %2815 = vmatpush.msra.mxu0 %v2565
  %2816 = vmatpush.msra.mxu0 %v2563
  %2817 = vmatpush.msra.mxu0 %v2561
  %2818 = vmatpush.msra.mxu0 %v2559
  %2819 = vmatpush.msra.mxu0 %v2557
  %2820 = vmatpush.msra.mxu0 %v2555
  %2821 = vmatpush.msra.mxu0 %v2553
  %2822 = vmatpush.msra.mxu0 %v2551
  %2823 = vmatpush.msra.mxu0 %v2549
  %2824 = vmatpush.msra.mxu0 %v2547
  %2825 = vmatpush.msra.mxu0 %v2545
  %2826 = vmatpush.msra.mxu0 %v2543
  %2827 = vmatpush.msra.mxu0 %v2541
  %2828 = vmatpush.msra.mxu0 %v2539
  %2829 = vmatmul.f32.gmra.mxu0 %v2305
  %v2830 = vpop.f32.mrf.mxu0
  %v2831 = vadd.f32 %v2796, %v2830
  %2832 = vmatmul.f32.gmra.mxu0 %v2313
  %v2833 = vpop.f32.mrf.mxu0
  %v2834 = vadd.f32 %v2799, %v2833
  %2835 = vmatmul.f32.gmra.mxu0 %v2321
  %v2836 = vpop.f32.mrf.mxu0
  %v2837 = vadd.f32 %v2802, %v2836
  %2838 = vmatmul.f32.gmra.mxu0 %v2329
  %v2839 = vpop.f32.mrf.mxu0
  %v2840 = vadd.f32 %v2805, %v2839
  %2841 = vmatmul.f32.gmra.mxu0 %v2337
  %v2842 = vpop.f32.mrf.mxu0
  %v2843 = vadd.f32 %v2808, %v2842
  %2844 = vmatmul.f32.gmra.mxu0 %v2345
  %v2845 = vpop.f32.mrf.mxu0
  %v2846 = vadd.f32 %v2811, %v2845
  %2847 = vdwg.mxu0
  %2848 = vmatpush.msra.mxu0 %v2601
  %2849 = vmatpush.msra.mxu0 %v2599
  %2850 = vmatpush.msra.mxu0 %v2597
  %2851 = vmatpush.msra.mxu0 %v2595
  %2852 = vmatpush.msra.mxu0 %v2593
  %2853 = vmatpush.msra.mxu0 %v2591
  %2854 = vmatpush.msra.mxu0 %v2589
  %2855 = vmatpush.msra.mxu0 %v2587
  %2856 = vmatpush.msra.mxu0 %v2585
  %2857 = vmatpush.msra.mxu0 %v2583
  %2858 = vmatpush.msra.mxu0 %v2581
  %2859 = vmatpush.msra.mxu0 %v2579
  %2860 = vmatpush.msra.mxu0 %v2577
  %2861 = vmatpush.msra.mxu0 %v2575
  %2862 = vmatpush.msra.mxu0 %v2573
  %2863 = vmatpush.msra.mxu0 %v2571
  %2864 = vmatmul.f32.gmra.mxu0 %v2306
  %v2865 = vpop.f32.mrf.mxu0
  %v2866 = vadd.f32 %v2831, %v2865
  %2867 = vmatmul.f32.gmra.mxu0 %v2314
  %v2868 = vpop.f32.mrf.mxu0
  %v2869 = vadd.f32 %v2834, %v2868
  %2870 = vmatmul.f32.gmra.mxu0 %v2322
  %v2871 = vpop.f32.mrf.mxu0
  %v2872 = vadd.f32 %v2837, %v2871
  %2873 = vmatmul.f32.gmra.mxu0 %v2330
  %v2874 = vpop.f32.mrf.mxu0
  %v2875 = vadd.f32 %v2840, %v2874
  %2876 = vmatmul.f32.gmra.mxu0 %v2338
  %v2877 = vpop.f32.mrf.mxu0
  %v2878 = vadd.f32 %v2843, %v2877
  %2879 = vmatmul.f32.gmra.mxu0 %v2346
  %v2880 = vpop.f32.mrf.mxu0
  %v2881 = vadd.f32 %v2846, %v2880
  %2882 = vdwg.mxu0
  %2883 = vmatpush.msra.mxu0 %v2378
  %2884 = vmatpush.msra.mxu0 %v2376
  %2885 = vmatpush.msra.mxu0 %v2374
  %2886 = vmatpush.msra.mxu0 %v2372
  %2887 = vmatpush.msra.mxu0 %v2370
  %2888 = vmatpush.msra.mxu0 %v2368
  %2889 = vmatpush.msra.mxu0 %v2366
  %2890 = vmatpush.msra.mxu0 %v2364
  %2891 = vmatpush.msra.mxu0 %v2362
  %2892 = vmatpush.msra.mxu0 %v2360
  %2893 = vmatpush.msra.mxu0 %v2358
  %2894 = vmatpush.msra.mxu0 %v2356
  %2895 = vmatpush.msra.mxu0 %v2354
  %2896 = vmatpush.msra.mxu0 %v2352
  %2897 = vmatpush.msra.mxu0 %v2350
  %2898 = vmatpush.msra.mxu0 %v2348
  %2899 = vmatmul.f32.gmra.mxu0 %v2299
  %v2900 = vpop.f32.mrf.mxu0
  %v2901 = vadd.f32 0.0, %v2900
  %2902 = vmatmul.f32.gmra.mxu0 %v2307
  %v2903 = vpop.f32.mrf.mxu0
  %v2904 = vadd.f32 0.0, %v2903
  %2905 = vmatmul.f32.gmra.mxu0 %v2315
  %v2906 = vpop.f32.mrf.mxu0
  %v2907 = vadd.f32 0.0, %v2906
  %2908 = vmatmul.f32.gmra.mxu0 %v2323
  %v2909 = vpop.f32.mrf.mxu0
  %v2910 = vadd.f32 0.0, %v2909
  %2911 = vmatmul.f32.gmra.mxu0 %v2331
  %v2912 = vpop.f32.mrf.mxu0
  %v2913 = vadd.f32 0.0, %v2912
  %2914 = vmatmul.f32.gmra.mxu0 %v2339
  %v2915 = vpop.f32.mrf.mxu0
  %v2916 = vadd.f32 0.0, %v2915
  %2917 = vdwg.mxu0
  %2918 = vmatpush.msra.mxu0 %v2410
  %2919 = vmatpush.msra.mxu0 %v2408
  %2920 = vmatpush.msra.mxu0 %v2406
  %2921 = vmatpush.msra.mxu0 %v2404
  %2922 = vmatpush.msra.mxu0 %v2402
  %2923 = vmatpush.msra.mxu0 %v2400
  %2924 = vmatpush.msra.mxu0 %v2398
  %2925 = vmatpush.msra.mxu0 %v2396
  %2926 = vmatpush.msra.mxu0 %v2394
  %2927 = vmatpush.msra.mxu0 %v2392
  %2928 = vmatpush.msra.mxu0 %v2390
  %2929 = vmatpush.msra.mxu0 %v2388
  %2930 = vmatpush.msra.mxu0 %v2386
  %2931 = vmatpush.msra.mxu0 %v2384
  %2932 = vmatpush.msra.mxu0 %v2382
  %2933 = vmatpush.msra.mxu0 %v2380
  %2934 = vmatmul.f32.gmra.mxu0 %v2300
  %v2935 = vpop.f32.mrf.mxu0
  %v2936 = vadd.f32 %v2901, %v2935
  %2937 = vmatmul.f32.gmra.mxu0 %v2308
  %v2938 = vpop.f32.mrf.mxu0
  %v2939 = vadd.f32 %v2904, %v2938
  %2940 = vmatmul.f32.gmra.mxu0 %v2316
  %v2941 = vpop.f32.mrf.mxu0
  %v2942 = vadd.f32 %v2907, %v2941
  %2943 = vmatmul.f32.gmra.mxu0 %v2324
  %v2944 = vpop.f32.mrf.mxu0
  %v2945 = vadd.f32 %v2910, %v2944
  %2946 = vmatmul.f32.gmra.mxu0 %v2332
  %v2947 = vpop.f32.mrf.mxu0
  %v2948 = vadd.f32 %v2913, %v2947
  %2949 = vmatmul.f32.gmra.mxu0 %v2340
  %v2950 = vpop.f32.mrf.mxu0
  %v2951 = vadd.f32 %v2916, %v2950
  %2952 = vdwg.mxu0
  %2953 = vmatpush.msra.mxu0 %v2442
  %2954 = vmatpush.msra.mxu0 %v2440
  %2955 = vmatpush.msra.mxu0 %v2438
  %2956 = vmatpush.msra.mxu0 %v2436
  %2957 = vmatpush.msra.mxu0 %v2434
  %2958 = vmatpush.msra.mxu0 %v2432
  %2959 = vmatpush.msra.mxu0 %v2430
  %2960 = vmatpush.msra.mxu0 %v2428
  %2961 = vmatpush.msra.mxu0 %v2426
  %2962 = vmatpush.msra.mxu0 %v2424
  %2963 = vmatpush.msra.mxu0 %v2422
  %2964 = vmatpush.msra.mxu0 %v2420
  %2965 = vmatpush.msra.mxu0 %v2418
  %2966 = vmatpush.msra.mxu0 %v2416
  %2967 = vmatpush.msra.mxu0 %v2414
  %2968 = vmatpush.msra.mxu0 %v2412
  %2969 = vmatmul.f32.gmra.mxu0 %v2301
  %v2970 = vpop.f32.mrf.mxu0
  %v2971 = vadd.f32 %v2936, %v2970
  %2972 = vmatmul.f32.gmra.mxu0 %v2309
  %v2973 = vpop.f32.mrf.mxu0
  %v2974 = vadd.f32 %v2939, %v2973
  %2975 = vmatmul.f32.gmra.mxu0 %v2317
  %v2976 = vpop.f32.mrf.mxu0
  %v2977 = vadd.f32 %v2942, %v2976
  %2978 = vmatmul.f32.gmra.mxu0 %v2325
  %v2979 = vpop.f32.mrf.mxu0
  %v2980 = vadd.f32 %v2945, %v2979
  %2981 = vmatmul.f32.gmra.mxu0 %v2333
  %v2982 = vpop.f32.mrf.mxu0
  %v2983 = vadd.f32 %v2948, %v2982
  %2984 = vmatmul.f32.gmra.mxu0 %v2341
  %v2985 = vpop.f32.mrf.mxu0
  %v2986 = vadd.f32 %v2951, %v2985
  %2987 = vdwg.mxu0
  %2988 = vmatpush.msra.mxu0 %v2474
  %2989 = vmatpush.msra.mxu0 %v2472
  %2990 = vmatpush.msra.mxu0 %v2470
  %2991 = vmatpush.msra.mxu0 %v2468
  %2992 = vmatpush.msra.mxu0 %v2466
  %2993 = vmatpush.msra.mxu0 %v2464
  %2994 = vmatpush.msra.mxu0 %v2462
  %2995 = vmatpush.msra.mxu0 %v2460
  %2996 = vmatpush.msra.mxu0 %v2458
  %2997 = vmatpush.msra.mxu0 %v2456
  %2998 = vmatpush.msra.mxu0 %v2454
  %2999 = vmatpush.msra.mxu0 %v2452
  %3000 = vmatpush.msra.mxu0 %v2450
  %3001 = vmatpush.msra.mxu0 %v2448
  %3002 = vmatpush.msra.mxu0 %v2446
  %3003 = vmatpush.msra.mxu0 %v2444
  %3004 = vmatmul.f32.gmra.mxu0 %v2302
  %v3005 = vpop.f32.mrf.mxu0
  %v3006 = vadd.f32 %v2971, %v3005
  %3007 = vmatmul.f32.gmra.mxu0 %v2310
  %v3008 = vpop.f32.mrf.mxu0
  %v3009 = vadd.f32 %v2974, %v3008
  %3010 = vmatmul.f32.gmra.mxu0 %v2318
  %v3011 = vpop.f32.mrf.mxu0
  %v3012 = vadd.f32 %v2977, %v3011
  %3013 = vmatmul.f32.gmra.mxu0 %v2326
  %v3014 = vpop.f32.mrf.mxu0
  %v3015 = vadd.f32 %v2980, %v3014
  %3016 = vmatmul.f32.gmra.mxu0 %v2334
  %v3017 = vpop.f32.mrf.mxu0
  %v3018 = vadd.f32 %v2983, %v3017
  %3019 = vmatmul.f32.gmra.mxu0 %v2342
  %v3020 = vpop.f32.mrf.mxu0
  %v3021 = vadd.f32 %v2986, %v3020
  %3022 = vdwg.mxu0
  %3023 = vmatpush.msra.mxu0 %v2506
  %3024 = vmatpush.msra.mxu0 %v2504
  %3025 = vmatpush.msra.mxu0 %v2502
  %3026 = vmatpush.msra.mxu0 %v2500
  %3027 = vmatpush.msra.mxu0 %v2498
  %3028 = vmatpush.msra.mxu0 %v2496
  %3029 = vmatpush.msra.mxu0 %v2494
  %3030 = vmatpush.msra.mxu0 %v2492
  %3031 = vmatpush.msra.mxu0 %v2490
  %3032 = vmatpush.msra.mxu0 %v2488
  %3033 = vmatpush.msra.mxu0 %v2486
  %3034 = vmatpush.msra.mxu0 %v2484
  %3035 = vmatpush.msra.mxu0 %v2482
  %3036 = vmatpush.msra.mxu0 %v2480
  %3037 = vmatpush.msra.mxu0 %v2478
  %3038 = vmatpush.msra.mxu0 %v2476
  %3039 = vmatmul.f32.gmra.mxu0 %v2303
  %v3040 = vpop.f32.mrf.mxu0
  %v3041 = vadd.f32 %v3006, %v3040
  %3042 = vmatmul.f32.gmra.mxu0 %v2311
  %v3043 = vpop.f32.mrf.mxu0
  %v3044 = vadd.f32 %v3009, %v3043
  %3045 = vmatmul.f32.gmra.mxu0 %v2319
  %v3046 = vpop.f32.mrf.mxu0
  %v3047 = vadd.f32 %v3012, %v3046
  %3048 = vmatmul.f32.gmra.mxu0 %v2327
  %v3049 = vpop.f32.mrf.mxu0
  %v3050 = vadd.f32 %v3015, %v3049
  %3051 = vmatmul.f32.gmra.mxu0 %v2335
  %v3052 = vpop.f32.mrf.mxu0
  %v3053 = vadd.f32 %v3018, %v3052
  %3054 = vmatmul.f32.gmra.mxu0 %v2343
  %v3055 = vpop.f32.mrf.mxu0
  %v3056 = vadd.f32 %v3021, %v3055
  %3057 = vdwg.mxu0
  %3058 = vmatpush.msra.mxu0 %v2538
  %3059 = vmatpush.msra.mxu0 %v2536
  %3060 = vmatpush.msra.mxu0 %v2534
  %3061 = vmatpush.msra.mxu0 %v2532
  %3062 = vmatpush.msra.mxu0 %v2530
  %3063 = vmatpush.msra.mxu0 %v2528
  %3064 = vmatpush.msra.mxu0 %v2526
  %3065 = vmatpush.msra.mxu0 %v2524
  %3066 = vmatpush.msra.mxu0 %v2522
  %3067 = vmatpush.msra.mxu0 %v2520
  %3068 = vmatpush.msra.mxu0 %v2518
  %3069 = vmatpush.msra.mxu0 %v2516
  %3070 = vmatpush.msra.mxu0 %v2514
  %3071 = vmatpush.msra.mxu0 %v2512
  %3072 = vmatpush.msra.mxu0 %v2510
  %3073 = vmatpush.msra.mxu0 %v2508
  %3074 = vmatmul.f32.gmra.mxu0 %v2304
  %v3075 = vpop.f32.mrf.mxu0
  %v3076 = vadd.f32 %v3041, %v3075
  %3077 = vmatmul.f32.gmra.mxu0 %v2312
  %v3078 = vpop.f32.mrf.mxu0
  %v3079 = vadd.f32 %v3044, %v3078
  %3080 = vmatmul.f32.gmra.mxu0 %v2320
  %v3081 = vpop.f32.mrf.mxu0
  %v3082 = vadd.f32 %v3047, %v3081
  %3083 = vmatmul.f32.gmra.mxu0 %v2328
  %v3084 = vpop.f32.mrf.mxu0
  %v3085 = vadd.f32 %v3050, %v3084
  %3086 = vmatmul.f32.gmra.mxu0 %v2336
  %v3087 = vpop.f32.mrf.mxu0
  %v3088 = vadd.f32 %v3053, %v3087
  %3089 = vmatmul.f32.gmra.mxu0 %v2344
  %v3090 = vpop.f32.mrf.mxu0
  %v3091 = vadd.f32 %v3056, %v3090
  %3092 = vdwg.mxu0
  %3093 = vmatpush.msra.mxu0 %v2570
  %3094 = vmatpush.msra.mxu0 %v2568
  %3095 = vmatpush.msra.mxu0 %v2566
  %3096 = vmatpush.msra.mxu0 %v2564
  %3097 = vmatpush.msra.mxu0 %v2562
  %3098 = vmatpush.msra.mxu0 %v2560
  %3099 = vmatpush.msra.mxu0 %v2558
  %3100 = vmatpush.msra.mxu0 %v2556
  %3101 = vmatpush.msra.mxu0 %v2554
  %3102 = vmatpush.msra.mxu0 %v2552
  %3103 = vmatpush.msra.mxu0 %v2550
  %3104 = vmatpush.msra.mxu0 %v2548
  %3105 = vmatpush.msra.mxu0 %v2546
  %3106 = vmatpush.msra.mxu0 %v2544
  %3107 = vmatpush.msra.mxu0 %v2542
  %3108 = vmatpush.msra.mxu0 %v2540
  %3109 = vmatmul.f32.gmra.mxu0 %v2305
  %v3110 = vpop.f32.mrf.mxu0
  %v3111 = vadd.f32 %v3076, %v3110
  %3112 = vmatmul.f32.gmra.mxu0 %v2313
  %v3113 = vpop.f32.mrf.mxu0
  %v3114 = vadd.f32 %v3079, %v3113
  %3115 = vmatmul.f32.gmra.mxu0 %v2321
  %v3116 = vpop.f32.mrf.mxu0
  %v3117 = vadd.f32 %v3082, %v3116
  %3118 = vmatmul.f32.gmra.mxu0 %v2329
  %v3119 = vpop.f32.mrf.mxu0
  %v3120 = vadd.f32 %v3085, %v3119
  %3121 = vmatmul.f32.gmra.mxu0 %v2337
  %v3122 = vpop.f32.mrf.mxu0
  %v3123 = vadd.f32 %v3088, %v3122
  %3124 = vmatmul.f32.gmra.mxu0 %v2345
  %v3125 = vpop.f32.mrf.mxu0
  %v3126 = vadd.f32 %v3091, %v3125
  %3127 = vdwg.mxu0
  %3128 = vmatpush.msra.mxu0 %v2602
  %3129 = vmatpush.msra.mxu0 %v2600
  %3130 = vmatpush.msra.mxu0 %v2598
  %3131 = vmatpush.msra.mxu0 %v2596
  %3132 = vmatpush.msra.mxu0 %v2594
  %3133 = vmatpush.msra.mxu0 %v2592
  %3134 = vmatpush.msra.mxu0 %v2590
  %3135 = vmatpush.msra.mxu0 %v2588
  %3136 = vmatpush.msra.mxu0 %v2586
  %3137 = vmatpush.msra.mxu0 %v2584
  %3138 = vmatpush.msra.mxu0 %v2582
  %3139 = vmatpush.msra.mxu0 %v2580
  %3140 = vmatpush.msra.mxu0 %v2578
  %3141 = vmatpush.msra.mxu0 %v2576
  %3142 = vmatpush.msra.mxu0 %v2574
  %3143 = vmatpush.msra.mxu0 %v2572
  %3144 = vmatmul.f32.gmra.mxu0 %v2306
  %v3145 = vpop.f32.mrf.mxu0
  %v3146 = vadd.f32 %v3111, %v3145
  %3147 = vmatmul.f32.gmra.mxu0 %v2314
  %v3148 = vpop.f32.mrf.mxu0
  %v3149 = vadd.f32 %v3114, %v3148
  %3150 = vmatmul.f32.gmra.mxu0 %v2322
  %v3151 = vpop.f32.mrf.mxu0
  %v3152 = vadd.f32 %v3117, %v3151
  %3153 = vmatmul.f32.gmra.mxu0 %v2330
  %v3154 = vpop.f32.mrf.mxu0
  %v3155 = vadd.f32 %v3120, %v3154
  %3156 = vmatmul.f32.gmra.mxu0 %v2338
  %v3157 = vpop.f32.mrf.mxu0
  %v3158 = vadd.f32 %v3123, %v3157
  %3159 = vmatmul.f32.gmra.mxu0 %v2346
  %v3160 = vpop.f32.mrf.mxu0
  %v3161 = vadd.f32 %v3126, %v3160
  %3162 = vdwg.mxu0
  %3163 = vst [vmem:[#allocation3] sm:$0xff] %v2866
  %3164 = vst [vmem:[#allocation3 + $0x8] sm:$0xff] %v3146
  %3165 = vst [vmem:[#allocation3 + $0x10] sm:$0xff] %v2869
  %3166 = vst [vmem:[#allocation3 + $0x18] sm:$0xff] %v3149
  %3167 = vst [vmem:[#allocation3 + $0x20] sm:$0xff] %v2872
  %3168 = vst [vmem:[#allocation3 + $0x28] sm:$0xff] %v3152
  %3169 = vst [vmem:[#allocation3 + $0x30] sm:$0xff] %v2875
  %3170 = vst [vmem:[#allocation3 + $0x38] sm:$0xff] %v3155
  %3171 = vst [vmem:[#allocation3 + $0x40] sm:$0xff] %v2878
  %3172 = vst [vmem:[#allocation3 + $0x48] sm:$0xff] %v3158
  %3173 = vst [vmem:[#allocation3 + $0x50] sm:$0xff] %v2881
  %3174 = vst [vmem:[#allocation3 + $0x58] sm:$0xff] %v3161
  %v3175 = vld [vmem:[#allocation3] sm:$0xff]
  %v3176 = vld [vmem:[#allocation3 + $0x8] sm:$0xff]
  %v3177 = vld [vmem:[#allocation3 + $0x10] sm:$0xff]
  %v3178 = vld [vmem:[#allocation3 + $0x18] sm:$0xff]
  %v3179 = vld [vmem:[#allocation3 + $0x20] sm:$0xff]
  %v3180 = vld [vmem:[#allocation3 + $0x28] sm:$0xff]
  %v3181 = vld [vmem:[#allocation3 + $0x30] sm:$0xff]
  %v3182 = vld [vmem:[#allocation3 + $0x38] sm:$0xff]
  %v3183 = vld [vmem:[#allocation3 + $0x40] sm:$0xff]
  %v3184 = vld [vmem:[#allocation3 + $0x48] sm:$0xff]
  %v3185 = vld [vmem:[#allocation3 + $0x50] sm:$0xff]
  %v3186 = vld [vmem:[#allocation3 + $0x58] sm:$0xff]
  %3187 = vst [vmem:[#allocation4] sm:$0xff] %v3175
  %vm3188 = vcmask 97280
  %3189 = vst.msk [vmem:[#allocation4 + $0x8] sm:$0xff] %vm3188, %v3176
  %3190 = vst [vmem:[#allocation4 + $0x10] sm:$0xff] %v3177
  %3191 = vst.msk [vmem:[#allocation4 + $0x18] sm:$0xff] %vm3188, %v3178
  %3192 = vst [vmem:[#allocation4 + $0x20] sm:$0xff] %v3179
  %3193 = vst.msk [vmem:[#allocation4 + $0x28] sm:$0xff] %vm3188, %v3180
  %3194 = vst [vmem:[#allocation4 + $0x30] sm:$0xff] %v3181
  %3195 = vst.msk [vmem:[#allocation4 + $0x38] sm:$0xff] %vm3188, %v3182
  %3196 = vst [vmem:[#allocation4 + $0x40] sm:$0xff] %v3183
  %3197 = vst.msk [vmem:[#allocation4 + $0x48] sm:$0xff] %vm3188, %v3184
  %3198 = vst [vmem:[#allocation4 + $0x50] sm:$0xff] %v3185
  %3199 = vst.msk [vmem:[#allocation4 + $0x58] sm:$0xff] %vm3188, %v3186
  %v3200 = vld [vmem:[#allocation3] sm:$0xff]
  %v3201 = vld [vmem:[#allocation3 + $0x8] sm:$0xff]
  %v3202 = vld [vmem:[#allocation3 + $0x10] sm:$0xff]
  %v3203 = vld [vmem:[#allocation3 + $0x18] sm:$0xff]
  %v3204 = vld [vmem:[#allocation3 + $0x20] sm:$0xff]
  %v3205 = vld [vmem:[#allocation3 + $0x28] sm:$0xff]
  %v3206 = vld [vmem:[#allocation3 + $0x30] sm:$0xff]
  %v3207 = vld [vmem:[#allocation3 + $0x38] sm:$0xff]
  %v3208 = vld [vmem:[#allocation3 + $0x40] sm:$0xff]
  %v3209 = vld [vmem:[#allocation3 + $0x48] sm:$0xff]
  %v3210 = vld [vmem:[#allocation3 + $0x50] sm:$0xff]
  %v3211 = vld [vmem:[#allocation3 + $0x58] sm:$0xff]
  %3224 = vrot.lane.b32.xlu0 %v3200, 127
  %v3225 = vpop.permute.xlu0 %3224
  %3226 = vrot.lane.b32.xlu0 %v3201, 127
  %v3227 = vpop.permute.xlu0 %3226
  %3228 = vrot.lane.b32.xlu0 %v3202, 127
  %v3229 = vpop.permute.xlu0 %3228
  %3230 = vrot.lane.b32.xlu0 %v3203, 127
  %v3231 = vpop.permute.xlu0 %3230
  %3232 = vrot.lane.b32.xlu0 %v3204, 127
  %v3233 = vpop.permute.xlu0 %3232
  %3234 = vrot.lane.b32.xlu0 %v3205, 127
  %v3235 = vpop.permute.xlu0 %3234
  %3236 = vrot.lane.b32.xlu0 %v3206, 127
  %v3237 = vpop.permute.xlu0 %3236
  %3238 = vrot.lane.b32.xlu0 %v3207, 127
  %v3239 = vpop.permute.xlu0 %3238
  %3240 = vrot.lane.b32.xlu0 %v3208, 127
  %v3241 = vpop.permute.xlu0 %3240
  %3242 = vrot.lane.b32.xlu0 %v3209, 127
  %v3243 = vpop.permute.xlu0 %3242
  %3244 = vrot.lane.b32.xlu0 %v3210, 127
  %v3245 = vpop.permute.xlu0 %3244
  %3246 = vrot.lane.b32.xlu0 %v3211, 127
  %v3247 = vpop.permute.xlu0 %3246
  %v3248 = vsel %vm93, %v3225, %v3227
  %v3249 = vsel %vm93, %v3229, %v3231
  %v3250 = vsel %vm93, %v3233, %v3235
  %v3251 = vsel %vm93, %v3237, %v3239
  %v3252 = vsel %vm93, %v3241, %v3243
  %v3253 = vsel %vm93, %v3245, %v3247
  %3266 = vst [vmem:[#allocation4 + $0x60] sm:$0xff] %v3248
  %3267 = vst.msk [vmem:[#allocation4 + $0x68] sm:$0xff] %vm3188, %v3227
  %3268 = vst [vmem:[#allocation4 + $0x70] sm:$0xff] %v3249
  %3269 = vst.msk [vmem:[#allocation4 + $0x78] sm:$0xff] %vm3188, %v3231
  %3270 = vst [vmem:[#allocation4 + $0x80] sm:$0xff] %v3250
  %3271 = vst.msk [vmem:[#allocation4 + $0x88] sm:$0xff] %vm3188, %v3235
  %3272 = vst [vmem:[#allocation4 + $0x90] sm:$0xff] %v3251
  %3273 = vst.msk [vmem:[#allocation4 + $0x98] sm:$0xff] %vm3188, %v3239
  %3274 = vst [vmem:[#allocation4 + $0xa0] sm:$0xff] %v3252
  %3275 = vst.msk [vmem:[#allocation4 + $0xa8] sm:$0xff] %vm3188, %v3243
  %3276 = vst [vmem:[#allocation4 + $0xb0] sm:$0xff] %v3253
  %3277 = vst.msk [vmem:[#allocation4 + $0xb8] sm:$0xff] %vm3188, %v3247
  %v3278 = vld [vmem:[#allocation3] sm:$0xff]
  %v3279 = vld [vmem:[#allocation3 + $0x8] sm:$0xff]
  %v3280 = vld [vmem:[#allocation3 + $0x10] sm:$0xff]
  %v3281 = vld [vmem:[#allocation3 + $0x18] sm:$0xff]
  %v3282 = vld [vmem:[#allocation3 + $0x20] sm:$0xff]
  %v3283 = vld [vmem:[#allocation3 + $0x28] sm:$0xff]
  %v3284 = vld [vmem:[#allocation3 + $0x30] sm:$0xff]
  %v3285 = vld [vmem:[#allocation3 + $0x38] sm:$0xff]
  %v3286 = vld [vmem:[#allocation3 + $0x40] sm:$0xff]
  %v3287 = vld [vmem:[#allocation3 + $0x48] sm:$0xff]
  %v3288 = vld [vmem:[#allocation3 + $0x50] sm:$0xff]
  %v3289 = vld [vmem:[#allocation3 + $0x58] sm:$0xff]
  %3302 = vrot.lane.b32.xlu0 %v3278, 126
  %v3303 = vpop.permute.xlu0 %3302
  %3304 = vrot.lane.b32.xlu0 %v3279, 126
  %v3305 = vpop.permute.xlu0 %3304
  %3306 = vrot.lane.b32.xlu0 %v3280, 126
  %v3307 = vpop.permute.xlu0 %3306
  %3308 = vrot.lane.b32.xlu0 %v3281, 126
  %v3309 = vpop.permute.xlu0 %3308
  %3310 = vrot.lane.b32.xlu0 %v3282, 126
  %v3311 = vpop.permute.xlu0 %3310
  %3312 = vrot.lane.b32.xlu0 %v3283, 126
  %v3313 = vpop.permute.xlu0 %3312
  %3314 = vrot.lane.b32.xlu0 %v3284, 126
  %v3315 = vpop.permute.xlu0 %3314
  %3316 = vrot.lane.b32.xlu0 %v3285, 126
  %v3317 = vpop.permute.xlu0 %3316
  %3318 = vrot.lane.b32.xlu0 %v3286, 126
  %v3319 = vpop.permute.xlu0 %3318
  %3320 = vrot.lane.b32.xlu0 %v3287, 126
  %v3321 = vpop.permute.xlu0 %3320
  %3322 = vrot.lane.b32.xlu0 %v3288, 126
  %v3323 = vpop.permute.xlu0 %3322
  %3324 = vrot.lane.b32.xlu0 %v3289, 126
  %v3325 = vpop.permute.xlu0 %3324
  %v3326 = vsel %vm154, %v3303, %v3305
  %v3327 = vsel %vm154, %v3307, %v3309
  %v3328 = vsel %vm154, %v3311, %v3313
  %v3329 = vsel %vm154, %v3315, %v3317
  %v3330 = vsel %vm154, %v3319, %v3321
  %v3331 = vsel %vm154, %v3323, %v3325
  %3344 = vst [vmem:[#allocation4 + $0xc0] sm:$0xff] %v3326
  %3345 = vst.msk [vmem:[#allocation4 + $0xc8] sm:$0xff] %vm3188, %v3305
  %3346 = vst [vmem:[#allocation4 + $0xd0] sm:$0xff] %v3327
  %3347 = vst.msk [vmem:[#allocation4 + $0xd8] sm:$0xff] %vm3188, %v3309
  %3348 = vst [vmem:[#allocation4 + $0xe0] sm:$0xff] %v3328
  %3349 = vst.msk [vmem:[#allocation4 + $0xe8] sm:$0xff] %vm3188, %v3313
  %3350 = vst [vmem:[#allocation4 + $0xf0] sm:$0xff] %v3329
  %3351 = vst.msk [vmem:[#allocation4 + $0xf8] sm:$0xff] %vm3188, %v3317
  %3352 = vst [vmem:[#allocation4 + $0x100] sm:$0xff] %v3330
  %3353 = vst.msk [vmem:[#allocation4 + $0x108] sm:$0xff] %vm3188, %v3321
  %3354 = vst [vmem:[#allocation4 + $0x110] sm:$0xff] %v3331
  %3355 = vst.msk [vmem:[#allocation4 + $0x118] sm:$0xff] %vm3188, %v3325
  %v3356 = vld [vmem:[#allocation3] sm:$0xff]
  %v3357 = vld [vmem:[#allocation3 + $0x8] sm:$0xff]
  %v3358 = vld [vmem:[#allocation3 + $0x10] sm:$0xff]
  %v3359 = vld [vmem:[#allocation3 + $0x18] sm:$0xff]
  %v3360 = vld [vmem:[#allocation3 + $0x20] sm:$0xff]
  %v3361 = vld [vmem:[#allocation3 + $0x28] sm:$0xff]
  %v3362 = vld [vmem:[#allocation3 + $0x30] sm:$0xff]
  %v3363 = vld [vmem:[#allocation3 + $0x38] sm:$0xff]
  %v3364 = vld [vmem:[#allocation3 + $0x40] sm:$0xff]
  %v3365 = vld [vmem:[#allocation3 + $0x48] sm:$0xff]
  %v3366 = vld [vmem:[#allocation3 + $0x50] sm:$0xff]
  %v3367 = vld [vmem:[#allocation3 + $0x58] sm:$0xff]
  %3380 = vrot.lane.b32.xlu0 %v3356, 125
  %v3381 = vpop.permute.xlu0 %3380
  %3382 = vrot.lane.b32.xlu0 %v3357, 125
  %v3383 = vpop.permute.xlu0 %3382
  %3384 = vrot.lane.b32.xlu0 %v3358, 125
  %v3385 = vpop.permute.xlu0 %3384
  %3386 = vrot.lane.b32.xlu0 %v3359, 125
  %v3387 = vpop.permute.xlu0 %3386
  %3388 = vrot.lane.b32.xlu0 %v3360, 125
  %v3389 = vpop.permute.xlu0 %3388
  %3390 = vrot.lane.b32.xlu0 %v3361, 125
  %v3391 = vpop.permute.xlu0 %3390
  %3392 = vrot.lane.b32.xlu0 %v3362, 125
  %v3393 = vpop.permute.xlu0 %3392
  %3394 = vrot.lane.b32.xlu0 %v3363, 125
  %v3395 = vpop.permute.xlu0 %3394
  %3396 = vrot.lane.b32.xlu0 %v3364, 125
  %v3397 = vpop.permute.xlu0 %3396
  %3398 = vrot.lane.b32.xlu0 %v3365, 125
  %v3399 = vpop.permute.xlu0 %3398
  %3400 = vrot.lane.b32.xlu0 %v3366, 125
  %v3401 = vpop.permute.xlu0 %3400
  %3402 = vrot.lane.b32.xlu0 %v3367, 125
  %v3403 = vpop.permute.xlu0 %3402
  %v3404 = vsel %vm215, %v3381, %v3383
  %v3405 = vsel %vm215, %v3385, %v3387
  %v3406 = vsel %vm215, %v3389, %v3391
  %v3407 = vsel %vm215, %v3393, %v3395
  %v3408 = vsel %vm215, %v3397, %v3399
  %v3409 = vsel %vm215, %v3401, %v3403
  %3422 = vst [vmem:[#allocation4 + $0x120] sm:$0xff] %v3404
  %3423 = vst.msk [vmem:[#allocation4 + $0x128] sm:$0xff] %vm3188, %v3383
  %3424 = vst [vmem:[#allocation4 + $0x130] sm:$0xff] %v3405
  %3425 = vst.msk [vmem:[#allocation4 + $0x138] sm:$0xff] %vm3188, %v3387
  %3426 = vst [vmem:[#allocation4 + $0x140] sm:$0xff] %v3406
  %3427 = vst.msk [vmem:[#allocation4 + $0x148] sm:$0xff] %vm3188, %v3391
  %3428 = vst [vmem:[#allocation4 + $0x150] sm:$0xff] %v3407
  %3429 = vst.msk [vmem:[#allocation4 + $0x158] sm:$0xff] %vm3188, %v3395
  %3430 = vst [vmem:[#allocation4 + $0x160] sm:$0xff] %v3408
  %3431 = vst.msk [vmem:[#allocation4 + $0x168] sm:$0xff] %vm3188, %v3399
  %3432 = vst [vmem:[#allocation4 + $0x170] sm:$0xff] %v3409
  %3433 = vst.msk [vmem:[#allocation4 + $0x178] sm:$0xff] %vm3188, %v3403
  %v3434 = vld [vmem:[#allocation3] sm:$0xff]
  %v3435 = vld [vmem:[#allocation3 + $0x8] sm:$0xff]
  %v3436 = vld [vmem:[#allocation3 + $0x10] sm:$0xff]
  %v3437 = vld [vmem:[#allocation3 + $0x18] sm:$0xff]
  %v3438 = vld [vmem:[#allocation3 + $0x20] sm:$0xff]
  %v3439 = vld [vmem:[#allocation3 + $0x28] sm:$0xff]
  %v3440 = vld [vmem:[#allocation3 + $0x30] sm:$0xff]
  %v3441 = vld [vmem:[#allocation3 + $0x38] sm:$0xff]
  %v3442 = vld [vmem:[#allocation3 + $0x40] sm:$0xff]
  %v3443 = vld [vmem:[#allocation3 + $0x48] sm:$0xff]
  %v3444 = vld [vmem:[#allocation3 + $0x50] sm:$0xff]
  %v3445 = vld [vmem:[#allocation3 + $0x58] sm:$0xff]
  %3458 = vrot.lane.b32.xlu0 %v3434, 124
  %v3459 = vpop.permute.xlu0 %3458
  %3460 = vrot.lane.b32.xlu0 %v3435, 124
  %v3461 = vpop.permute.xlu0 %3460
  %3462 = vrot.lane.b32.xlu0 %v3436, 124
  %v3463 = vpop.permute.xlu0 %3462
  %3464 = vrot.lane.b32.xlu0 %v3437, 124
  %v3465 = vpop.permute.xlu0 %3464
  %3466 = vrot.lane.b32.xlu0 %v3438, 124
  %v3467 = vpop.permute.xlu0 %3466
  %3468 = vrot.lane.b32.xlu0 %v3439, 124
  %v3469 = vpop.permute.xlu0 %3468
  %3470 = vrot.lane.b32.xlu0 %v3440, 124
  %v3471 = vpop.permute.xlu0 %3470
  %3472 = vrot.lane.b32.xlu0 %v3441, 124
  %v3473 = vpop.permute.xlu0 %3472
  %3474 = vrot.lane.b32.xlu0 %v3442, 124
  %v3475 = vpop.permute.xlu0 %3474
  %3476 = vrot.lane.b32.xlu0 %v3443, 124
  %v3477 = vpop.permute.xlu0 %3476
  %3478 = vrot.lane.b32.xlu0 %v3444, 124
  %v3479 = vpop.permute.xlu0 %3478
  %3480 = vrot.lane.b32.xlu0 %v3445, 124
  %v3481 = vpop.permute.xlu0 %3480
  %v3482 = vsel %vm276, %v3459, %v3461
  %v3483 = vsel %vm276, %v3463, %v3465
  %v3484 = vsel %vm276, %v3467, %v3469
  %v3485 = vsel %vm276, %v3471, %v3473
  %v3486 = vsel %vm276, %v3475, %v3477
  %v3487 = vsel %vm276, %v3479, %v3481
  %3500 = vst [vmem:[#allocation4 + $0x180] sm:$0xff] %v3482
  %3501 = vst.msk [vmem:[#allocation4 + $0x188] sm:$0xff] %vm3188, %v3461
  %3502 = vst [vmem:[#allocation4 + $0x190] sm:$0xff] %v3483
  %3503 = vst.msk [vmem:[#allocation4 + $0x198] sm:$0xff] %vm3188, %v3465
  %3504 = vst [vmem:[#allocation4 + $0x1a0] sm:$0xff] %v3484
  %3505 = vst.msk [vmem:[#allocation4 + $0x1a8] sm:$0xff] %vm3188, %v3469
  %3506 = vst [vmem:[#allocation4 + $0x1b0] sm:$0xff] %v3485
  %3507 = vst.msk [vmem:[#allocation4 + $0x1b8] sm:$0xff] %vm3188, %v3473
  %3508 = vst [vmem:[#allocation4 + $0x1c0] sm:$0xff] %v3486
  %3509 = vst.msk [vmem:[#allocation4 + $0x1c8] sm:$0xff] %vm3188, %v3477
  %3510 = vst [vmem:[#allocation4 + $0x1d0] sm:$0xff] %v3487
  %3511 = vst.msk [vmem:[#allocation4 + $0x1d8] sm:$0xff] %vm3188, %v3481
  %v3512 = vld [vmem:[#allocation3] sm:$0xff]
  %v3513 = vld [vmem:[#allocation3 + $0x8] sm:$0xff]
  %v3514 = vld [vmem:[#allocation3 + $0x10] sm:$0xff]
  %v3515 = vld [vmem:[#allocation3 + $0x18] sm:$0xff]
  %v3516 = vld [vmem:[#allocation3 + $0x20] sm:$0xff]
  %v3517 = vld [vmem:[#allocation3 + $0x28] sm:$0xff]
  %v3518 = vld [vmem:[#allocation3 + $0x30] sm:$0xff]
  %v3519 = vld [vmem:[#allocation3 + $0x38] sm:$0xff]
  %v3520 = vld [vmem:[#allocation3 + $0x40] sm:$0xff]
  %v3521 = vld [vmem:[#allocation3 + $0x48] sm:$0xff]
  %v3522 = vld [vmem:[#allocation3 + $0x50] sm:$0xff]
  %v3523 = vld [vmem:[#allocation3 + $0x58] sm:$0xff]
  %3536 = vrot.lane.b32.xlu0 %v3512, 114
  %v3537 = vpop.permute.xlu0 %3536
  %3538 = vrot.lane.b32.xlu0 %v3513, 114
  %v3539 = vpop.permute.xlu0 %3538
  %3540 = vrot.lane.b32.xlu0 %v3514, 114
  %v3541 = vpop.permute.xlu0 %3540
  %3542 = vrot.lane.b32.xlu0 %v3515, 114
  %v3543 = vpop.permute.xlu0 %3542
  %3544 = vrot.lane.b32.xlu0 %v3516, 114
  %v3545 = vpop.permute.xlu0 %3544
  %3546 = vrot.lane.b32.xlu0 %v3517, 114
  %v3547 = vpop.permute.xlu0 %3546
  %3548 = vrot.lane.b32.xlu0 %v3518, 114
  %v3549 = vpop.permute.xlu0 %3548
  %3550 = vrot.lane.b32.xlu0 %v3519, 114
  %v3551 = vpop.permute.xlu0 %3550
  %3552 = vrot.lane.b32.xlu0 %v3520, 114
  %v3553 = vpop.permute.xlu0 %3552
  %3554 = vrot.lane.b32.xlu0 %v3521, 114
  %v3555 = vpop.permute.xlu0 %3554
  %3556 = vrot.lane.b32.xlu0 %v3522, 114
  %v3557 = vpop.permute.xlu0 %3556
  %3558 = vrot.lane.b32.xlu0 %v3523, 114
  %v3559 = vpop.permute.xlu0 %3558
  %vm3560 = vcmask 932864
  %v3561 = vsel %vm3560, %v3537, %v3539
  %v3562 = vsel %vm3560, %v3541, %v3543
  %v3563 = vsel %vm3560, %v3545, %v3547
  %v3564 = vsel %vm3560, %v3549, %v3551
  %v3565 = vsel %vm3560, %v3553, %v3555
  %v3566 = vsel %vm3560, %v3557, %v3559
  %3579 = vst [vmem:[#allocation4 + $0x1e0] sm:$0xff] %v3561
  %3580 = vst.msk [vmem:[#allocation4 + $0x1e8] sm:$0xff] %vm3188, %v3539
  %3581 = vst [vmem:[#allocation4 + $0x1f0] sm:$0xff] %v3562
  %3582 = vst.msk [vmem:[#allocation4 + $0x1f8] sm:$0xff] %vm3188, %v3543
  %3583 = vst [vmem:[#allocation4 + $0x200] sm:$0xff] %v3563
  %3584 = vst.msk [vmem:[#allocation4 + $0x208] sm:$0xff] %vm3188, %v3547
  %3585 = vst [vmem:[#allocation4 + $0x210] sm:$0xff] %v3564
  %3586 = vst.msk [vmem:[#allocation4 + $0x218] sm:$0xff] %vm3188, %v3551
  %3587 = vst [vmem:[#allocation4 + $0x220] sm:$0xff] %v3565
  %3588 = vst.msk [vmem:[#allocation4 + $0x228] sm:$0xff] %vm3188, %v3555
  %3589 = vst [vmem:[#allocation4 + $0x230] sm:$0xff] %v3566
  %3590 = vst.msk [vmem:[#allocation4 + $0x238] sm:$0xff] %vm3188, %v3559
  %v3591 = vld [vmem:[#allocation3] sm:$0xff]
  %v3592 = vld [vmem:[#allocation3 + $0x8] sm:$0xff]
  %v3593 = vld [vmem:[#allocation3 + $0x10] sm:$0xff]
  %v3594 = vld [vmem:[#allocation3 + $0x18] sm:$0xff]
  %v3595 = vld [vmem:[#allocation3 + $0x20] sm:$0xff]
  %v3596 = vld [vmem:[#allocation3 + $0x28] sm:$0xff]
  %v3597 = vld [vmem:[#allocation3 + $0x30] sm:$0xff]
  %v3598 = vld [vmem:[#allocation3 + $0x38] sm:$0xff]
  %v3599 = vld [vmem:[#allocation3 + $0x40] sm:$0xff]
  %v3600 = vld [vmem:[#allocation3 + $0x48] sm:$0xff]
  %v3601 = vld [vmem:[#allocation3 + $0x50] sm:$0xff]
  %v3602 = vld [vmem:[#allocation3 + $0x58] sm:$0xff]
  %3615 = vrot.lane.b32.xlu0 %v3591, 113
  %v3616 = vpop.permute.xlu0 %3615
  %3617 = vrot.lane.b32.xlu0 %v3592, 113
  %v3618 = vpop.permute.xlu0 %3617
  %3619 = vrot.lane.b32.xlu0 %v3593, 113
  %v3620 = vpop.permute.xlu0 %3619
  %3621 = vrot.lane.b32.xlu0 %v3594, 113
  %v3622 = vpop.permute.xlu0 %3621
  %3623 = vrot.lane.b32.xlu0 %v3595, 113
  %v3624 = vpop.permute.xlu0 %3623
  %3625 = vrot.lane.b32.xlu0 %v3596, 113
  %v3626 = vpop.permute.xlu0 %3625
  %3627 = vrot.lane.b32.xlu0 %v3597, 113
  %v3628 = vpop.permute.xlu0 %3627
  %3629 = vrot.lane.b32.xlu0 %v3598, 113
  %v3630 = vpop.permute.xlu0 %3629
  %3631 = vrot.lane.b32.xlu0 %v3599, 113
  %v3632 = vpop.permute.xlu0 %3631
  %3633 = vrot.lane.b32.xlu0 %v3600, 113
  %v3634 = vpop.permute.xlu0 %3633
  %3635 = vrot.lane.b32.xlu0 %v3601, 113
  %v3636 = vpop.permute.xlu0 %3635
  %3637 = vrot.lane.b32.xlu0 %v3602, 113
  %v3638 = vpop.permute.xlu0 %3637
  %vm3639 = vcmask 924672
  %v3640 = vsel %vm3639, %v3616, %v3618
  %v3641 = vsel %vm3639, %v3620, %v3622
  %v3642 = vsel %vm3639, %v3624, %v3626
  %v3643 = vsel %vm3639, %v3628, %v3630
  %v3644 = vsel %vm3639, %v3632, %v3634
  %v3645 = vsel %vm3639, %v3636, %v3638
  %3658 = vst [vmem:[#allocation4 + $0x240] sm:$0xff] %v3640
  %3659 = vst.msk [vmem:[#allocation4 + $0x248] sm:$0xff] %vm3188, %v3618
  %3660 = vst [vmem:[#allocation4 + $0x250] sm:$0xff] %v3641
  %3661 = vst.msk [vmem:[#allocation4 + $0x258] sm:$0xff] %vm3188, %v3622
  %3662 = vst [vmem:[#allocation4 + $0x260] sm:$0xff] %v3642
  %3663 = vst.msk [vmem:[#allocation4 + $0x268] sm:$0xff] %vm3188, %v3626
  %3664 = vst [vmem:[#allocation4 + $0x270] sm:$0xff] %v3643
  %3665 = vst.msk [vmem:[#allocation4 + $0x278] sm:$0xff] %vm3188, %v3630
  %3666 = vst [vmem:[#allocation4 + $0x280] sm:$0xff] %v3644
  %3667 = vst.msk [vmem:[#allocation4 + $0x288] sm:$0xff] %vm3188, %v3634
  %3668 = vst [vmem:[#allocation4 + $0x290] sm:$0xff] %v3645
  %3669 = vst.msk [vmem:[#allocation4 + $0x298] sm:$0xff] %vm3188, %v3638
  %v3670 = vld [vmem:[#allocation3] sm:$0xff]
  %v3671 = vld [vmem:[#allocation3 + $0x8] sm:$0xff]
  %v3672 = vld [vmem:[#allocation3 + $0x10] sm:$0xff]
  %v3673 = vld [vmem:[#allocation3 + $0x18] sm:$0xff]
  %v3674 = vld [vmem:[#allocation3 + $0x20] sm:$0xff]
  %v3675 = vld [vmem:[#allocation3 + $0x28] sm:$0xff]
  %v3676 = vld [vmem:[#allocation3 + $0x30] sm:$0xff]
  %v3677 = vld [vmem:[#allocation3 + $0x38] sm:$0xff]
  %v3678 = vld [vmem:[#allocation3 + $0x40] sm:$0xff]
  %v3679 = vld [vmem:[#allocation3 + $0x48] sm:$0xff]
  %v3680 = vld [vmem:[#allocation3 + $0x50] sm:$0xff]
  %v3681 = vld [vmem:[#allocation3 + $0x58] sm:$0xff]
  %3694 = vrot.lane.b32.xlu0 %v3670, 112
  %v3695 = vpop.permute.xlu0 %3694
  %3696 = vrot.lane.b32.xlu0 %v3671, 112
  %v3697 = vpop.permute.xlu0 %3696
  %3698 = vrot.lane.b32.xlu0 %v3672, 112
  %v3699 = vpop.permute.xlu0 %3698
  %3700 = vrot.lane.b32.xlu0 %v3673, 112
  %v3701 = vpop.permute.xlu0 %3700
  %3702 = vrot.lane.b32.xlu0 %v3674, 112
  %v3703 = vpop.permute.xlu0 %3702
  %3704 = vrot.lane.b32.xlu0 %v3675, 112
  %v3705 = vpop.permute.xlu0 %3704
  %3706 = vrot.lane.b32.xlu0 %v3676, 112
  %v3707 = vpop.permute.xlu0 %3706
  %3708 = vrot.lane.b32.xlu0 %v3677, 112
  %v3709 = vpop.permute.xlu0 %3708
  %3710 = vrot.lane.b32.xlu0 %v3678, 112
  %v3711 = vpop.permute.xlu0 %3710
  %3712 = vrot.lane.b32.xlu0 %v3679, 112
  %v3713 = vpop.permute.xlu0 %3712
  %3714 = vrot.lane.b32.xlu0 %v3680, 112
  %v3715 = vpop.permute.xlu0 %3714
  %3716 = vrot.lane.b32.xlu0 %v3681, 112
  %v3717 = vpop.permute.xlu0 %3716
  %vm3718 = vcmask 916480
  %v3719 = vsel %vm3718, %v3695, %v3697
  %v3720 = vsel %vm3718, %v3699, %v3701
  %v3721 = vsel %vm3718, %v3703, %v3705
  %v3722 = vsel %vm3718, %v3707, %v3709
  %v3723 = vsel %vm3718, %v3711, %v3713
  %v3724 = vsel %vm3718, %v3715, %v3717
  %3737 = vst [vmem:[#allocation4 + $0x2a0] sm:$0xff] %v3719
  %3738 = vst.msk [vmem:[#allocation4 + $0x2a8] sm:$0xff] %vm3188, %v3697
  %3739 = vst [vmem:[#allocation4 + $0x2b0] sm:$0xff] %v3720
  %3740 = vst.msk [vmem:[#allocation4 + $0x2b8] sm:$0xff] %vm3188, %v3701
  %3741 = vst [vmem:[#allocation4 + $0x2c0] sm:$0xff] %v3721
  %3742 = vst.msk [vmem:[#allocation4 + $0x2c8] sm:$0xff] %vm3188, %v3705
  %3743 = vst [vmem:[#allocation4 + $0x2d0] sm:$0xff] %v3722
  %3744 = vst.msk [vmem:[#allocation4 + $0x2d8] sm:$0xff] %vm3188, %v3709
  %3745 = vst [vmem:[#allocation4 + $0x2e0] sm:$0xff] %v3723
  %3746 = vst.msk [vmem:[#allocation4 + $0x2e8] sm:$0xff] %vm3188, %v3713
  %3747 = vst [vmem:[#allocation4 + $0x2f0] sm:$0xff] %v3724
  %3748 = vst.msk [vmem:[#allocation4 + $0x2f8] sm:$0xff] %vm3188, %v3717
  %v3749 = vld [vmem:[#allocation3] sm:$0xff]
  %v3750 = vld [vmem:[#allocation3 + $0x8] sm:$0xff]
  %v3751 = vld [vmem:[#allocation3 + $0x10] sm:$0xff]
  %v3752 = vld [vmem:[#allocation3 + $0x18] sm:$0xff]
  %v3753 = vld [vmem:[#allocation3 + $0x20] sm:$0xff]
  %v3754 = vld [vmem:[#allocation3 + $0x28] sm:$0xff]
  %v3755 = vld [vmem:[#allocation3 + $0x30] sm:$0xff]
  %v3756 = vld [vmem:[#allocation3 + $0x38] sm:$0xff]
  %v3757 = vld [vmem:[#allocation3 + $0x40] sm:$0xff]
  %v3758 = vld [vmem:[#allocation3 + $0x48] sm:$0xff]
  %v3759 = vld [vmem:[#allocation3 + $0x50] sm:$0xff]
  %v3760 = vld [vmem:[#allocation3 + $0x58] sm:$0xff]
  %3773 = vrot.lane.b32.xlu0 %v3749, 111
  %v3774 = vpop.permute.xlu0 %3773
  %3775 = vrot.lane.b32.xlu0 %v3750, 111
  %v3776 = vpop.permute.xlu0 %3775
  %3777 = vrot.lane.b32.xlu0 %v3751, 111
  %v3778 = vpop.permute.xlu0 %3777
  %3779 = vrot.lane.b32.xlu0 %v3752, 111
  %v3780 = vpop.permute.xlu0 %3779
  %3781 = vrot.lane.b32.xlu0 %v3753, 111
  %v3782 = vpop.permute.xlu0 %3781
  %3783 = vrot.lane.b32.xlu0 %v3754, 111
  %v3784 = vpop.permute.xlu0 %3783
  %3785 = vrot.lane.b32.xlu0 %v3755, 111
  %v3786 = vpop.permute.xlu0 %3785
  %3787 = vrot.lane.b32.xlu0 %v3756, 111
  %v3788 = vpop.permute.xlu0 %3787
  %3789 = vrot.lane.b32.xlu0 %v3757, 111
  %v3790 = vpop.permute.xlu0 %3789
  %3791 = vrot.lane.b32.xlu0 %v3758, 111
  %v3792 = vpop.permute.xlu0 %3791
  %3793 = vrot.lane.b32.xlu0 %v3759, 111
  %v3794 = vpop.permute.xlu0 %3793
  %3795 = vrot.lane.b32.xlu0 %v3760, 111
  %v3796 = vpop.permute.xlu0 %3795
  %vm3797 = vcmask 908288
  %v3798 = vsel %vm3797, %v3774, %v3776
  %v3799 = vsel %vm3797, %v3778, %v3780
  %v3800 = vsel %vm3797, %v3782, %v3784
  %v3801 = vsel %vm3797, %v3786, %v3788
  %v3802 = vsel %vm3797, %v3790, %v3792
  %v3803 = vsel %vm3797, %v3794, %v3796
  %3816 = vst [vmem:[#allocation4 + $0x300] sm:$0xff] %v3798
  %3817 = vst.msk [vmem:[#allocation4 + $0x308] sm:$0xff] %vm3188, %v3776
  %3818 = vst [vmem:[#allocation4 + $0x310] sm:$0xff] %v3799
  %3819 = vst.msk [vmem:[#allocation4 + $0x318] sm:$0xff] %vm3188, %v3780
  %3820 = vst [vmem:[#allocation4 + $0x320] sm:$0xff] %v3800
  %3821 = vst.msk [vmem:[#allocation4 + $0x328] sm:$0xff] %vm3188, %v3784
  %3822 = vst [vmem:[#allocation4 + $0x330] sm:$0xff] %v3801
  %3823 = vst.msk [vmem:[#allocation4 + $0x338] sm:$0xff] %vm3188, %v3788
  %3824 = vst [vmem:[#allocation4 + $0x340] sm:$0xff] %v3802
  %3825 = vst.msk [vmem:[#allocation4 + $0x348] sm:$0xff] %vm3188, %v3792
  %3826 = vst [vmem:[#allocation4 + $0x350] sm:$0xff] %v3803
  %3827 = vst.msk [vmem:[#allocation4 + $0x358] sm:$0xff] %vm3188, %v3796
  %v3828 = vld [vmem:[#allocation3] sm:$0xff]
  %v3829 = vld [vmem:[#allocation3 + $0x8] sm:$0xff]
  %v3830 = vld [vmem:[#allocation3 + $0x10] sm:$0xff]
  %v3831 = vld [vmem:[#allocation3 + $0x18] sm:$0xff]
  %v3832 = vld [vmem:[#allocation3 + $0x20] sm:$0xff]
  %v3833 = vld [vmem:[#allocation3 + $0x28] sm:$0xff]
  %v3834 = vld [vmem:[#allocation3 + $0x30] sm:$0xff]
  %v3835 = vld [vmem:[#allocation3 + $0x38] sm:$0xff]
  %v3836 = vld [vmem:[#allocation3 + $0x40] sm:$0xff]
  %v3837 = vld [vmem:[#allocation3 + $0x48] sm:$0xff]
  %v3838 = vld [vmem:[#allocation3 + $0x50] sm:$0xff]
  %v3839 = vld [vmem:[#allocation3 + $0x58] sm:$0xff]
  %3852 = vrot.lane.b32.xlu0 %v3828, 110
  %v3853 = vpop.permute.xlu0 %3852
  %3854 = vrot.lane.b32.xlu0 %v3829, 110
  %v3855 = vpop.permute.xlu0 %3854
  %3856 = vrot.lane.b32.xlu0 %v3830, 110
  %v3857 = vpop.permute.xlu0 %3856
  %3858 = vrot.lane.b32.xlu0 %v3831, 110
  %v3859 = vpop.permute.xlu0 %3858
  %3860 = vrot.lane.b32.xlu0 %v3832, 110
  %v3861 = vpop.permute.xlu0 %3860
  %3862 = vrot.lane.b32.xlu0 %v3833, 110
  %v3863 = vpop.permute.xlu0 %3862
  %3864 = vrot.lane.b32.xlu0 %v3834, 110
  %v3865 = vpop.permute.xlu0 %3864
  %3866 = vrot.lane.b32.xlu0 %v3835, 110
  %v3867 = vpop.permute.xlu0 %3866
  %3868 = vrot.lane.b32.xlu0 %v3836, 110
  %v3869 = vpop.permute.xlu0 %3868
  %3870 = vrot.lane.b32.xlu0 %v3837, 110
  %v3871 = vpop.permute.xlu0 %3870
  %3872 = vrot.lane.b32.xlu0 %v3838, 110
  %v3873 = vpop.permute.xlu0 %3872
  %3874 = vrot.lane.b32.xlu0 %v3839, 110
  %v3875 = vpop.permute.xlu0 %3874
  %vm3876 = vcmask 900096
  %v3877 = vsel %vm3876, %v3853, %v3855
  %v3878 = vsel %vm3876, %v3857, %v3859
  %v3879 = vsel %vm3876, %v3861, %v3863
  %v3880 = vsel %vm3876, %v3865, %v3867
  %v3881 = vsel %vm3876, %v3869, %v3871
  %v3882 = vsel %vm3876, %v3873, %v3875
  %3895 = vst [vmem:[#allocation4 + $0x360] sm:$0xff] %v3877
  %3896 = vst.msk [vmem:[#allocation4 + $0x368] sm:$0xff] %vm3188, %v3855
  %3897 = vst [vmem:[#allocation4 + $0x370] sm:$0xff] %v3878
  %3898 = vst.msk [vmem:[#allocation4 + $0x378] sm:$0xff] %vm3188, %v3859
  %3899 = vst [vmem:[#allocation4 + $0x380] sm:$0xff] %v3879
  %3900 = vst.msk [vmem:[#allocation4 + $0x388] sm:$0xff] %vm3188, %v3863
  %3901 = vst [vmem:[#allocation4 + $0x390] sm:$0xff] %v3880
  %3902 = vst.msk [vmem:[#allocation4 + $0x398] sm:$0xff] %vm3188, %v3867
  %3903 = vst [vmem:[#allocation4 + $0x3a0] sm:$0xff] %v3881
  %3904 = vst.msk [vmem:[#allocation4 + $0x3a8] sm:$0xff] %vm3188, %v3871
  %3905 = vst [vmem:[#allocation4 + $0x3b0] sm:$0xff] %v3882
  %3906 = vst.msk [vmem:[#allocation4 + $0x3b8] sm:$0xff] %vm3188, %v3875
  %v3907 = vld [vmem:[#allocation3] sm:$0xff]
  %v3908 = vld [vmem:[#allocation3 + $0x8] sm:$0xff]
  %v3909 = vld [vmem:[#allocation3 + $0x10] sm:$0xff]
  %v3910 = vld [vmem:[#allocation3 + $0x18] sm:$0xff]
  %v3911 = vld [vmem:[#allocation3 + $0x20] sm:$0xff]
  %v3912 = vld [vmem:[#allocation3 + $0x28] sm:$0xff]
  %v3913 = vld [vmem:[#allocation3 + $0x30] sm:$0xff]
  %v3914 = vld [vmem:[#allocation3 + $0x38] sm:$0xff]
  %v3915 = vld [vmem:[#allocation3 + $0x40] sm:$0xff]
  %v3916 = vld [vmem:[#allocation3 + $0x48] sm:$0xff]
  %v3917 = vld [vmem:[#allocation3 + $0x50] sm:$0xff]
  %v3918 = vld [vmem:[#allocation3 + $0x58] sm:$0xff]
  %3931 = vrot.lane.b32.xlu0 %v3907, 100
  %v3932 = vpop.permute.xlu0 %3931
  %3933 = vrot.lane.b32.xlu0 %v3908, 100
  %v3934 = vpop.permute.xlu0 %3933
  %3935 = vrot.lane.b32.xlu0 %v3909, 100
  %v3936 = vpop.permute.xlu0 %3935
  %3937 = vrot.lane.b32.xlu0 %v3910, 100
  %v3938 = vpop.permute.xlu0 %3937
  %3939 = vrot.lane.b32.xlu0 %v3911, 100
  %v3940 = vpop.permute.xlu0 %3939
  %3941 = vrot.lane.b32.xlu0 %v3912, 100
  %v3942 = vpop.permute.xlu0 %3941
  %3943 = vrot.lane.b32.xlu0 %v3913, 100
  %v3944 = vpop.permute.xlu0 %3943
  %3945 = vrot.lane.b32.xlu0 %v3914, 100
  %v3946 = vpop.permute.xlu0 %3945
  %3947 = vrot.lane.b32.xlu0 %v3915, 100
  %v3948 = vpop.permute.xlu0 %3947
  %3949 = vrot.lane.b32.xlu0 %v3916, 100
  %v3950 = vpop.permute.xlu0 %3949
  %3951 = vrot.lane.b32.xlu0 %v3917, 100
  %v3952 = vpop.permute.xlu0 %3951
  %3953 = vrot.lane.b32.xlu0 %v3918, 100
  %v3954 = vpop.permute.xlu0 %3953
  %vm3955 = vcmask 818176
  %v3956 = vsel %vm3955, %v3932, %v3934
  %v3957 = vsel %vm3955, %v3936, %v3938
  %v3958 = vsel %vm3955, %v3940, %v3942
  %v3959 = vsel %vm3955, %v3944, %v3946
  %v3960 = vsel %vm3955, %v3948, %v3950
  %v3961 = vsel %vm3955, %v3952, %v3954
  %3974 = vst [vmem:[#allocation4 + $0x3c0] sm:$0xff] %v3956
  %3975 = vst.msk [vmem:[#allocation4 + $0x3c8] sm:$0xff] %vm3188, %v3934
  %3976 = vst [vmem:[#allocation4 + $0x3d0] sm:$0xff] %v3957
  %3977 = vst.msk [vmem:[#allocation4 + $0x3d8] sm:$0xff] %vm3188, %v3938
  %3978 = vst [vmem:[#allocation4 + $0x3e0] sm:$0xff] %v3958
  %3979 = vst.msk [vmem:[#allocation4 + $0x3e8] sm:$0xff] %vm3188, %v3942
  %3980 = vst [vmem:[#allocation4 + $0x3f0] sm:$0xff] %v3959
  %3981 = vst.msk [vmem:[#allocation4 + $0x3f8] sm:$0xff] %vm3188, %v3946
  %3982 = vst [vmem:[#allocation4 + $0x400] sm:$0xff] %v3960
  %3983 = vst.msk [vmem:[#allocation4 + $0x408] sm:$0xff] %vm3188, %v3950
  %3984 = vst [vmem:[#allocation4 + $0x410] sm:$0xff] %v3961
  %3985 = vst.msk [vmem:[#allocation4 + $0x418] sm:$0xff] %vm3188, %v3954
  %v3986 = vld [vmem:[#allocation3] sm:$0xff]
  %v3987 = vld [vmem:[#allocation3 + $0x8] sm:$0xff]
  %v3988 = vld [vmem:[#allocation3 + $0x10] sm:$0xff]
  %v3989 = vld [vmem:[#allocation3 + $0x18] sm:$0xff]
  %v3990 = vld [vmem:[#allocation3 + $0x20] sm:$0xff]
  %v3991 = vld [vmem:[#allocation3 + $0x28] sm:$0xff]
  %v3992 = vld [vmem:[#allocation3 + $0x30] sm:$0xff]
  %v3993 = vld [vmem:[#allocation3 + $0x38] sm:$0xff]
  %v3994 = vld [vmem:[#allocation3 + $0x40] sm:$0xff]
  %v3995 = vld [vmem:[#allocation3 + $0x48] sm:$0xff]
  %v3996 = vld [vmem:[#allocation3 + $0x50] sm:$0xff]
  %v3997 = vld [vmem:[#allocation3 + $0x58] sm:$0xff]
  %4010 = vrot.lane.b32.xlu0 %v3986, 99
  %v4011 = vpop.permute.xlu0 %4010
  %4012 = vrot.lane.b32.xlu0 %v3987, 99
  %v4013 = vpop.permute.xlu0 %4012
  %4014 = vrot.lane.b32.xlu0 %v3988, 99
  %v4015 = vpop.permute.xlu0 %4014
  %4016 = vrot.lane.b32.xlu0 %v3989, 99
  %v4017 = vpop.permute.xlu0 %4016
  %4018 = vrot.lane.b32.xlu0 %v3990, 99
  %v4019 = vpop.permute.xlu0 %4018
  %4020 = vrot.lane.b32.xlu0 %v3991, 99
  %v4021 = vpop.permute.xlu0 %4020
  %4022 = vrot.lane.b32.xlu0 %v3992, 99
  %v4023 = vpop.permute.xlu0 %4022
  %4024 = vrot.lane.b32.xlu0 %v3993, 99
  %v4025 = vpop.permute.xlu0 %4024
  %4026 = vrot.lane.b32.xlu0 %v3994, 99
  %v4027 = vpop.permute.xlu0 %4026
  %4028 = vrot.lane.b32.xlu0 %v3995, 99
  %v4029 = vpop.permute.xlu0 %4028
  %4030 = vrot.lane.b32.xlu0 %v3996, 99
  %v4031 = vpop.permute.xlu0 %4030
  %4032 = vrot.lane.b32.xlu0 %v3997, 99
  %v4033 = vpop.permute.xlu0 %4032
  %vm4034 = vcmask 809984
  %v4035 = vsel %vm4034, %v4011, %v4013
  %v4036 = vsel %vm4034, %v4015, %v4017
  %v4037 = vsel %vm4034, %v4019, %v4021
  %v4038 = vsel %vm4034, %v4023, %v4025
  %v4039 = vsel %vm4034, %v4027, %v4029
  %v4040 = vsel %vm4034, %v4031, %v4033
  %4053 = vst [vmem:[#allocation4 + $0x420] sm:$0xff] %v4035
  %4054 = vst.msk [vmem:[#allocation4 + $0x428] sm:$0xff] %vm3188, %v4013
  %4055 = vst [vmem:[#allocation4 + $0x430] sm:$0xff] %v4036
  %4056 = vst.msk [vmem:[#allocation4 + $0x438] sm:$0xff] %vm3188, %v4017
  %4057 = vst [vmem:[#allocation4 + $0x440] sm:$0xff] %v4037
  %4058 = vst.msk [vmem:[#allocation4 + $0x448] sm:$0xff] %vm3188, %v4021
  %4059 = vst [vmem:[#allocation4 + $0x450] sm:$0xff] %v4038
  %4060 = vst.msk [vmem:[#allocation4 + $0x458] sm:$0xff] %vm3188, %v4025
  %4061 = vst [vmem:[#allocation4 + $0x460] sm:$0xff] %v4039
  %4062 = vst.msk [vmem:[#allocation4 + $0x468] sm:$0xff] %vm3188, %v4029
  %4063 = vst [vmem:[#allocation4 + $0x470] sm:$0xff] %v4040
  %4064 = vst.msk [vmem:[#allocation4 + $0x478] sm:$0xff] %vm3188, %v4033
  %v4065 = vld [vmem:[#allocation3] sm:$0xff]
  %v4066 = vld [vmem:[#allocation3 + $0x8] sm:$0xff]
  %v4067 = vld [vmem:[#allocation3 + $0x10] sm:$0xff]
  %v4068 = vld [vmem:[#allocation3 + $0x18] sm:$0xff]
  %v4069 = vld [vmem:[#allocation3 + $0x20] sm:$0xff]
  %v4070 = vld [vmem:[#allocation3 + $0x28] sm:$0xff]
  %v4071 = vld [vmem:[#allocation3 + $0x30] sm:$0xff]
  %v4072 = vld [vmem:[#allocation3 + $0x38] sm:$0xff]
  %v4073 = vld [vmem:[#allocation3 + $0x40] sm:$0xff]
  %v4074 = vld [vmem:[#allocation3 + $0x48] sm:$0xff]
  %v4075 = vld [vmem:[#allocation3 + $0x50] sm:$0xff]
  %v4076 = vld [vmem:[#allocation3 + $0x58] sm:$0xff]
  %4089 = vrot.lane.b32.xlu0 %v4065, 98
  %v4090 = vpop.permute.xlu0 %4089
  %4091 = vrot.lane.b32.xlu0 %v4066, 98
  %v4092 = vpop.permute.xlu0 %4091
  %4093 = vrot.lane.b32.xlu0 %v4067, 98
  %v4094 = vpop.permute.xlu0 %4093
  %4095 = vrot.lane.b32.xlu0 %v4068, 98
  %v4096 = vpop.permute.xlu0 %4095
  %4097 = vrot.lane.b32.xlu0 %v4069, 98
  %v4098 = vpop.permute.xlu0 %4097
  %4099 = vrot.lane.b32.xlu0 %v4070, 98
  %v4100 = vpop.permute.xlu0 %4099
  %4101 = vrot.lane.b32.xlu0 %v4071, 98
  %v4102 = vpop.permute.xlu0 %4101
  %4103 = vrot.lane.b32.xlu0 %v4072, 98
  %v4104 = vpop.permute.xlu0 %4103
  %4105 = vrot.lane.b32.xlu0 %v4073, 98
  %v4106 = vpop.permute.xlu0 %4105
  %4107 = vrot.lane.b32.xlu0 %v4074, 98
  %v4108 = vpop.permute.xlu0 %4107
  %4109 = vrot.lane.b32.xlu0 %v4075, 98
  %v4110 = vpop.permute.xlu0 %4109
  %4111 = vrot.lane.b32.xlu0 %v4076, 98
  %v4112 = vpop.permute.xlu0 %4111
  %vm4113 = vcmask 801792
  %v4114 = vsel %vm4113, %v4090, %v4092
  %v4115 = vsel %vm4113, %v4094, %v4096
  %v4116 = vsel %vm4113, %v4098, %v4100
  %v4117 = vsel %vm4113, %v4102, %v4104
  %v4118 = vsel %vm4113, %v4106, %v4108
  %v4119 = vsel %vm4113, %v4110, %v4112
  %4132 = vst [vmem:[#allocation4 + $0x480] sm:$0xff] %v4114
  %4133 = vst.msk [vmem:[#allocation4 + $0x488] sm:$0xff] %vm3188, %v4092
  %4134 = vst [vmem:[#allocation4 + $0x490] sm:$0xff] %v4115
  %4135 = vst.msk [vmem:[#allocation4 + $0x498] sm:$0xff] %vm3188, %v4096
  %4136 = vst [vmem:[#allocation4 + $0x4a0] sm:$0xff] %v4116
  %4137 = vst.msk [vmem:[#allocation4 + $0x4a8] sm:$0xff] %vm3188, %v4100
  %4138 = vst [vmem:[#allocation4 + $0x4b0] sm:$0xff] %v4117
  %4139 = vst.msk [vmem:[#allocation4 + $0x4b8] sm:$0xff] %vm3188, %v4104
  %4140 = vst [vmem:[#allocation4 + $0x4c0] sm:$0xff] %v4118
  %4141 = vst.msk [vmem:[#allocation4 + $0x4c8] sm:$0xff] %vm3188, %v4108
  %4142 = vst [vmem:[#allocation4 + $0x4d0] sm:$0xff] %v4119
  %4143 = vst.msk [vmem:[#allocation4 + $0x4d8] sm:$0xff] %vm3188, %v4112
  %v4144 = vld [vmem:[#allocation3] sm:$0xff]
  %v4145 = vld [vmem:[#allocation3 + $0x8] sm:$0xff]
  %v4146 = vld [vmem:[#allocation3 + $0x10] sm:$0xff]
  %v4147 = vld [vmem:[#allocation3 + $0x18] sm:$0xff]
  %v4148 = vld [vmem:[#allocation3 + $0x20] sm:$0xff]
  %v4149 = vld [vmem:[#allocation3 + $0x28] sm:$0xff]
  %v4150 = vld [vmem:[#allocation3 + $0x30] sm:$0xff]
  %v4151 = vld [vmem:[#allocation3 + $0x38] sm:$0xff]
  %v4152 = vld [vmem:[#allocation3 + $0x40] sm:$0xff]
  %v4153 = vld [vmem:[#allocation3 + $0x48] sm:$0xff]
  %v4154 = vld [vmem:[#allocation3 + $0x50] sm:$0xff]
  %v4155 = vld [vmem:[#allocation3 + $0x58] sm:$0xff]
  %4168 = vrot.lane.b32.xlu0 %v4144, 97
  %v4169 = vpop.permute.xlu0 %4168
  %4170 = vrot.lane.b32.xlu0 %v4145, 97
  %v4171 = vpop.permute.xlu0 %4170
  %4172 = vrot.lane.b32.xlu0 %v4146, 97
  %v4173 = vpop.permute.xlu0 %4172
  %4174 = vrot.lane.b32.xlu0 %v4147, 97
  %v4175 = vpop.permute.xlu0 %4174
  %4176 = vrot.lane.b32.xlu0 %v4148, 97
  %v4177 = vpop.permute.xlu0 %4176
  %4178 = vrot.lane.b32.xlu0 %v4149, 97
  %v4179 = vpop.permute.xlu0 %4178
  %4180 = vrot.lane.b32.xlu0 %v4150, 97
  %v4181 = vpop.permute.xlu0 %4180
  %4182 = vrot.lane.b32.xlu0 %v4151, 97
  %v4183 = vpop.permute.xlu0 %4182
  %4184 = vrot.lane.b32.xlu0 %v4152, 97
  %v4185 = vpop.permute.xlu0 %4184
  %4186 = vrot.lane.b32.xlu0 %v4153, 97
  %v4187 = vpop.permute.xlu0 %4186
  %4188 = vrot.lane.b32.xlu0 %v4154, 97
  %v4189 = vpop.permute.xlu0 %4188
  %4190 = vrot.lane.b32.xlu0 %v4155, 97
  %v4191 = vpop.permute.xlu0 %4190
  %vm4192 = vcmask 793600
  %v4193 = vsel %vm4192, %v4169, %v4171
  %v4194 = vsel %vm4192, %v4173, %v4175
  %v4195 = vsel %vm4192, %v4177, %v4179
  %v4196 = vsel %vm4192, %v4181, %v4183
  %v4197 = vsel %vm4192, %v4185, %v4187
  %v4198 = vsel %vm4192, %v4189, %v4191
  %4211 = vst [vmem:[#allocation4 + $0x4e0] sm:$0xff] %v4193
  %4212 = vst.msk [vmem:[#allocation4 + $0x4e8] sm:$0xff] %vm3188, %v4171
  %4213 = vst [vmem:[#allocation4 + $0x4f0] sm:$0xff] %v4194
  %4214 = vst.msk [vmem:[#allocation4 + $0x4f8] sm:$0xff] %vm3188, %v4175
  %4215 = vst [vmem:[#allocation4 + $0x500] sm:$0xff] %v4195
  %4216 = vst.msk [vmem:[#allocation4 + $0x508] sm:$0xff] %vm3188, %v4179
  %4217 = vst [vmem:[#allocation4 + $0x510] sm:$0xff] %v4196
  %4218 = vst.msk [vmem:[#allocation4 + $0x518] sm:$0xff] %vm3188, %v4183
  %4219 = vst [vmem:[#allocation4 + $0x520] sm:$0xff] %v4197
  %4220 = vst.msk [vmem:[#allocation4 + $0x528] sm:$0xff] %vm3188, %v4187
  %4221 = vst [vmem:[#allocation4 + $0x530] sm:$0xff] %v4198
  %4222 = vst.msk [vmem:[#allocation4 + $0x538] sm:$0xff] %vm3188, %v4191
  %v4223 = vld [vmem:[#allocation3] sm:$0xff]
  %v4224 = vld [vmem:[#allocation3 + $0x8] sm:$0xff]
  %v4225 = vld [vmem:[#allocation3 + $0x10] sm:$0xff]
  %v4226 = vld [vmem:[#allocation3 + $0x18] sm:$0xff]
  %v4227 = vld [vmem:[#allocation3 + $0x20] sm:$0xff]
  %v4228 = vld [vmem:[#allocation3 + $0x28] sm:$0xff]
  %v4229 = vld [vmem:[#allocation3 + $0x30] sm:$0xff]
  %v4230 = vld [vmem:[#allocation3 + $0x38] sm:$0xff]
  %v4231 = vld [vmem:[#allocation3 + $0x40] sm:$0xff]
  %v4232 = vld [vmem:[#allocation3 + $0x48] sm:$0xff]
  %v4233 = vld [vmem:[#allocation3 + $0x50] sm:$0xff]
  %v4234 = vld [vmem:[#allocation3 + $0x58] sm:$0xff]
  %4247 = vrot.lane.b32.xlu0 %v4223, 96
  %v4248 = vpop.permute.xlu0 %4247
  %4249 = vrot.lane.b32.xlu0 %v4224, 96
  %v4250 = vpop.permute.xlu0 %4249
  %4251 = vrot.lane.b32.xlu0 %v4225, 96
  %v4252 = vpop.permute.xlu0 %4251
  %4253 = vrot.lane.b32.xlu0 %v4226, 96
  %v4254 = vpop.permute.xlu0 %4253
  %4255 = vrot.lane.b32.xlu0 %v4227, 96
  %v4256 = vpop.permute.xlu0 %4255
  %4257 = vrot.lane.b32.xlu0 %v4228, 96
  %v4258 = vpop.permute.xlu0 %4257
  %4259 = vrot.lane.b32.xlu0 %v4229, 96
  %v4260 = vpop.permute.xlu0 %4259
  %4261 = vrot.lane.b32.xlu0 %v4230, 96
  %v4262 = vpop.permute.xlu0 %4261
  %4263 = vrot.lane.b32.xlu0 %v4231, 96
  %v4264 = vpop.permute.xlu0 %4263
  %4265 = vrot.lane.b32.xlu0 %v4232, 96
  %v4266 = vpop.permute.xlu0 %4265
  %4267 = vrot.lane.b32.xlu0 %v4233, 96
  %v4268 = vpop.permute.xlu0 %4267
  %4269 = vrot.lane.b32.xlu0 %v4234, 96
  %v4270 = vpop.permute.xlu0 %4269
  %v4271 = vsel %vm337, %v4248, %v4250
  %v4272 = vsel %vm337, %v4252, %v4254
  %v4273 = vsel %vm337, %v4256, %v4258
  %v4274 = vsel %vm337, %v4260, %v4262
  %v4275 = vsel %vm337, %v4264, %v4266
  %v4276 = vsel %vm337, %v4268, %v4270
  %4289 = vst [vmem:[#allocation4 + $0x540] sm:$0xff] %v4271
  %4290 = vst.msk [vmem:[#allocation4 + $0x548] sm:$0xff] %vm3188, %v4250
  %4291 = vst [vmem:[#allocation4 + $0x550] sm:$0xff] %v4272
  %4292 = vst.msk [vmem:[#allocation4 + $0x558] sm:$0xff] %vm3188, %v4254
  %4293 = vst [vmem:[#allocation4 + $0x560] sm:$0xff] %v4273
  %4294 = vst.msk [vmem:[#allocation4 + $0x568] sm:$0xff] %vm3188, %v4258
  %4295 = vst [vmem:[#allocation4 + $0x570] sm:$0xff] %v4274
  %4296 = vst.msk [vmem:[#allocation4 + $0x578] sm:$0xff] %vm3188, %v4262
  %4297 = vst [vmem:[#allocation4 + $0x580] sm:$0xff] %v4275
  %4298 = vst.msk [vmem:[#allocation4 + $0x588] sm:$0xff] %vm3188, %v4266
  %4299 = vst [vmem:[#allocation4 + $0x590] sm:$0xff] %v4276
  %4300 = vst.msk [vmem:[#allocation4 + $0x598] sm:$0xff] %vm3188, %v4270
  %v4301 = vld [vmem:[#allocation3] sm:$0xff]
  %v4302 = vld [vmem:[#allocation3 + $0x8] sm:$0xff]
  %v4303 = vld [vmem:[#allocation3 + $0x10] sm:$0xff]
  %v4304 = vld [vmem:[#allocation3 + $0x18] sm:$0xff]
  %v4305 = vld [vmem:[#allocation3 + $0x20] sm:$0xff]
  %v4306 = vld [vmem:[#allocation3 + $0x28] sm:$0xff]
  %v4307 = vld [vmem:[#allocation3 + $0x30] sm:$0xff]
  %v4308 = vld [vmem:[#allocation3 + $0x38] sm:$0xff]
  %v4309 = vld [vmem:[#allocation3 + $0x40] sm:$0xff]
  %v4310 = vld [vmem:[#allocation3 + $0x48] sm:$0xff]
  %v4311 = vld [vmem:[#allocation3 + $0x50] sm:$0xff]
  %v4312 = vld [vmem:[#allocation3 + $0x58] sm:$0xff]
  %4325 = vrot.lane.b32.xlu0 %v4301, 86
  %v4326 = vpop.permute.xlu0 %4325
  %4327 = vrot.lane.b32.xlu0 %v4302, 86
  %v4328 = vpop.permute.xlu0 %4327
  %4329 = vrot.lane.b32.xlu0 %v4303, 86
  %v4330 = vpop.permute.xlu0 %4329
  %4331 = vrot.lane.b32.xlu0 %v4304, 86
  %v4332 = vpop.permute.xlu0 %4331
  %4333 = vrot.lane.b32.xlu0 %v4305, 86
  %v4334 = vpop.permute.xlu0 %4333
  %4335 = vrot.lane.b32.xlu0 %v4306, 86
  %v4336 = vpop.permute.xlu0 %4335
  %4337 = vrot.lane.b32.xlu0 %v4307, 86
  %v4338 = vpop.permute.xlu0 %4337
  %4339 = vrot.lane.b32.xlu0 %v4308, 86
  %v4340 = vpop.permute.xlu0 %4339
  %4341 = vrot.lane.b32.xlu0 %v4309, 86
  %v4342 = vpop.permute.xlu0 %4341
  %4343 = vrot.lane.b32.xlu0 %v4310, 86
  %v4344 = vpop.permute.xlu0 %4343
  %4345 = vrot.lane.b32.xlu0 %v4311, 86
  %v4346 = vpop.permute.xlu0 %4345
  %4347 = vrot.lane.b32.xlu0 %v4312, 86
  %v4348 = vpop.permute.xlu0 %4347
  %vm4349 = vcmask 703488
  %v4350 = vsel %vm4349, %v4326, %v4328
  %v4351 = vsel %vm4349, %v4330, %v4332
  %v4352 = vsel %vm4349, %v4334, %v4336
  %v4353 = vsel %vm4349, %v4338, %v4340
  %v4354 = vsel %vm4349, %v4342, %v4344
  %v4355 = vsel %vm4349, %v4346, %v4348
  %4368 = vst [vmem:[#allocation4 + $0x5a0] sm:$0xff] %v4350
  %4369 = vst.msk [vmem:[#allocation4 + $0x5a8] sm:$0xff] %vm3188, %v4328
  %4370 = vst [vmem:[#allocation4 + $0x5b0] sm:$0xff] %v4351
  %4371 = vst.msk [vmem:[#allocation4 + $0x5b8] sm:$0xff] %vm3188, %v4332
  %4372 = vst [vmem:[#allocation4 + $0x5c0] sm:$0xff] %v4352
  %4373 = vst.msk [vmem:[#allocation4 + $0x5c8] sm:$0xff] %vm3188, %v4336
  %4374 = vst [vmem:[#allocation4 + $0x5d0] sm:$0xff] %v4353
  %4375 = vst.msk [vmem:[#allocation4 + $0x5d8] sm:$0xff] %vm3188, %v4340
  %4376 = vst [vmem:[#allocation4 + $0x5e0] sm:$0xff] %v4354
  %4377 = vst.msk [vmem:[#allocation4 + $0x5e8] sm:$0xff] %vm3188, %v4344
  %4378 = vst [vmem:[#allocation4 + $0x5f0] sm:$0xff] %v4355
  %4379 = vst.msk [vmem:[#allocation4 + $0x5f8] sm:$0xff] %vm3188, %v4348
  %v4380 = vld [vmem:[#allocation3] sm:$0xff]
  %v4381 = vld [vmem:[#allocation3 + $0x8] sm:$0xff]
  %v4382 = vld [vmem:[#allocation3 + $0x10] sm:$0xff]
  %v4383 = vld [vmem:[#allocation3 + $0x18] sm:$0xff]
  %v4384 = vld [vmem:[#allocation3 + $0x20] sm:$0xff]
  %v4385 = vld [vmem:[#allocation3 + $0x28] sm:$0xff]
  %v4386 = vld [vmem:[#allocation3 + $0x30] sm:$0xff]
  %v4387 = vld [vmem:[#allocation3 + $0x38] sm:$0xff]
  %v4388 = vld [vmem:[#allocation3 + $0x40] sm:$0xff]
  %v4389 = vld [vmem:[#allocation3 + $0x48] sm:$0xff]
  %v4390 = vld [vmem:[#allocation3 + $0x50] sm:$0xff]
  %v4391 = vld [vmem:[#allocation3 + $0x58] sm:$0xff]
  %4404 = vrot.lane.b32.xlu0 %v4380, 85
  %v4405 = vpop.permute.xlu0 %4404
  %4406 = vrot.lane.b32.xlu0 %v4381, 85
  %v4407 = vpop.permute.xlu0 %4406
  %4408 = vrot.lane.b32.xlu0 %v4382, 85
  %v4409 = vpop.permute.xlu0 %4408
  %4410 = vrot.lane.b32.xlu0 %v4383, 85
  %v4411 = vpop.permute.xlu0 %4410
  %4412 = vrot.lane.b32.xlu0 %v4384, 85
  %v4413 = vpop.permute.xlu0 %4412
  %4414 = vrot.lane.b32.xlu0 %v4385, 85
  %v4415 = vpop.permute.xlu0 %4414
  %4416 = vrot.lane.b32.xlu0 %v4386, 85
  %v4417 = vpop.permute.xlu0 %4416
  %4418 = vrot.lane.b32.xlu0 %v4387, 85
  %v4419 = vpop.permute.xlu0 %4418
  %4420 = vrot.lane.b32.xlu0 %v4388, 85
  %v4421 = vpop.permute.xlu0 %4420
  %4422 = vrot.lane.b32.xlu0 %v4389, 85
  %v4423 = vpop.permute.xlu0 %4422
  %4424 = vrot.lane.b32.xlu0 %v4390, 85
  %v4425 = vpop.permute.xlu0 %4424
  %4426 = vrot.lane.b32.xlu0 %v4391, 85
  %v4427 = vpop.permute.xlu0 %4426
  %vm4428 = vcmask 695296
  %v4429 = vsel %vm4428, %v4405, %v4407
  %v4430 = vsel %vm4428, %v4409, %v4411
  %v4431 = vsel %vm4428, %v4413, %v4415
  %v4432 = vsel %vm4428, %v4417, %v4419
  %v4433 = vsel %vm4428, %v4421, %v4423
  %v4434 = vsel %vm4428, %v4425, %v4427
  %4447 = vst [vmem:[#allocation4 + $0x600] sm:$0xff] %v4429
  %4448 = vst.msk [vmem:[#allocation4 + $0x608] sm:$0xff] %vm3188, %v4407
  %4449 = vst [vmem:[#allocation4 + $0x610] sm:$0xff] %v4430
  %4450 = vst.msk [vmem:[#allocation4 + $0x618] sm:$0xff] %vm3188, %v4411
  %4451 = vst [vmem:[#allocation4 + $0x620] sm:$0xff] %v4431
  %4452 = vst.msk [vmem:[#allocation4 + $0x628] sm:$0xff] %vm3188, %v4415
  %4453 = vst [vmem:[#allocation4 + $0x630] sm:$0xff] %v4432
  %4454 = vst.msk [vmem:[#allocation4 + $0x638] sm:$0xff] %vm3188, %v4419
  %4455 = vst [vmem:[#allocation4 + $0x640] sm:$0xff] %v4433
  %4456 = vst.msk [vmem:[#allocation4 + $0x648] sm:$0xff] %vm3188, %v4423
  %4457 = vst [vmem:[#allocation4 + $0x650] sm:$0xff] %v4434
  %4458 = vst.msk [vmem:[#allocation4 + $0x658] sm:$0xff] %vm3188, %v4427
  %v4459 = vld [vmem:[#allocation3] sm:$0xff]
  %v4460 = vld [vmem:[#allocation3 + $0x8] sm:$0xff]
  %v4461 = vld [vmem:[#allocation3 + $0x10] sm:$0xff]
  %v4462 = vld [vmem:[#allocation3 + $0x18] sm:$0xff]
  %v4463 = vld [vmem:[#allocation3 + $0x20] sm:$0xff]
  %v4464 = vld [vmem:[#allocation3 + $0x28] sm:$0xff]
  %v4465 = vld [vmem:[#allocation3 + $0x30] sm:$0xff]
  %v4466 = vld [vmem:[#allocation3 + $0x38] sm:$0xff]
  %v4467 = vld [vmem:[#allocation3 + $0x40] sm:$0xff]
  %v4468 = vld [vmem:[#allocation3 + $0x48] sm:$0xff]
  %v4469 = vld [vmem:[#allocation3 + $0x50] sm:$0xff]
  %v4470 = vld [vmem:[#allocation3 + $0x58] sm:$0xff]
  %4483 = vrot.lane.b32.xlu0 %v4459, 84
  %v4484 = vpop.permute.xlu0 %4483
  %4485 = vrot.lane.b32.xlu0 %v4460, 84
  %v4486 = vpop.permute.xlu0 %4485
  %4487 = vrot.lane.b32.xlu0 %v4461, 84
  %v4488 = vpop.permute.xlu0 %4487
  %4489 = vrot.lane.b32.xlu0 %v4462, 84
  %v4490 = vpop.permute.xlu0 %4489
  %4491 = vrot.lane.b32.xlu0 %v4463, 84
  %v4492 = vpop.permute.xlu0 %4491
  %4493 = vrot.lane.b32.xlu0 %v4464, 84
  %v4494 = vpop.permute.xlu0 %4493
  %4495 = vrot.lane.b32.xlu0 %v4465, 84
  %v4496 = vpop.permute.xlu0 %4495
  %4497 = vrot.lane.b32.xlu0 %v4466, 84
  %v4498 = vpop.permute.xlu0 %4497
  %4499 = vrot.lane.b32.xlu0 %v4467, 84
  %v4500 = vpop.permute.xlu0 %4499
  %4501 = vrot.lane.b32.xlu0 %v4468, 84
  %v4502 = vpop.permute.xlu0 %4501
  %4503 = vrot.lane.b32.xlu0 %v4469, 84
  %v4504 = vpop.permute.xlu0 %4503
  %4505 = vrot.lane.b32.xlu0 %v4470, 84
  %v4506 = vpop.permute.xlu0 %4505
  %vm4507 = vcmask 687104
  %v4508 = vsel %vm4507, %v4484, %v4486
  %v4509 = vsel %vm4507, %v4488, %v4490
  %v4510 = vsel %vm4507, %v4492, %v4494
  %v4511 = vsel %vm4507, %v4496, %v4498
  %v4512 = vsel %vm4507, %v4500, %v4502
  %v4513 = vsel %vm4507, %v4504, %v4506
  %4526 = vst [vmem:[#allocation4 + $0x660] sm:$0xff] %v4508
  %4527 = vst.msk [vmem:[#allocation4 + $0x668] sm:$0xff] %vm3188, %v4486
  %4528 = vst [vmem:[#allocation4 + $0x670] sm:$0xff] %v4509
  %4529 = vst.msk [vmem:[#allocation4 + $0x678] sm:$0xff] %vm3188, %v4490
  %4530 = vst [vmem:[#allocation4 + $0x680] sm:$0xff] %v4510
  %4531 = vst.msk [vmem:[#allocation4 + $0x688] sm:$0xff] %vm3188, %v4494
  %4532 = vst [vmem:[#allocation4 + $0x690] sm:$0xff] %v4511
  %4533 = vst.msk [vmem:[#allocation4 + $0x698] sm:$0xff] %vm3188, %v4498
  %4534 = vst [vmem:[#allocation4 + $0x6a0] sm:$0xff] %v4512
  %4535 = vst.msk [vmem:[#allocation4 + $0x6a8] sm:$0xff] %vm3188, %v4502
  %4536 = vst [vmem:[#allocation4 + $0x6b0] sm:$0xff] %v4513
  %4537 = vst.msk [vmem:[#allocation4 + $0x6b8] sm:$0xff] %vm3188, %v4506
  %v4538 = vld [vmem:[#allocation3] sm:$0xff]
  %v4539 = vld [vmem:[#allocation3 + $0x8] sm:$0xff]
  %v4540 = vld [vmem:[#allocation3 + $0x10] sm:$0xff]
  %v4541 = vld [vmem:[#allocation3 + $0x18] sm:$0xff]
  %v4542 = vld [vmem:[#allocation3 + $0x20] sm:$0xff]
  %v4543 = vld [vmem:[#allocation3 + $0x28] sm:$0xff]
  %v4544 = vld [vmem:[#allocation3 + $0x30] sm:$0xff]
  %v4545 = vld [vmem:[#allocation3 + $0x38] sm:$0xff]
  %v4546 = vld [vmem:[#allocation3 + $0x40] sm:$0xff]
  %v4547 = vld [vmem:[#allocation3 + $0x48] sm:$0xff]
  %v4548 = vld [vmem:[#allocation3 + $0x50] sm:$0xff]
  %v4549 = vld [vmem:[#allocation3 + $0x58] sm:$0xff]
  %4562 = vrot.lane.b32.xlu0 %v4538, 83
  %v4563 = vpop.permute.xlu0 %4562
  %4564 = vrot.lane.b32.xlu0 %v4539, 83
  %v4565 = vpop.permute.xlu0 %4564
  %4566 = vrot.lane.b32.xlu0 %v4540, 83
  %v4567 = vpop.permute.xlu0 %4566
  %4568 = vrot.lane.b32.xlu0 %v4541, 83
  %v4569 = vpop.permute.xlu0 %4568
  %4570 = vrot.lane.b32.xlu0 %v4542, 83
  %v4571 = vpop.permute.xlu0 %4570
  %4572 = vrot.lane.b32.xlu0 %v4543, 83
  %v4573 = vpop.permute.xlu0 %4572
  %4574 = vrot.lane.b32.xlu0 %v4544, 83
  %v4575 = vpop.permute.xlu0 %4574
  %4576 = vrot.lane.b32.xlu0 %v4545, 83
  %v4577 = vpop.permute.xlu0 %4576
  %4578 = vrot.lane.b32.xlu0 %v4546, 83
  %v4579 = vpop.permute.xlu0 %4578
  %4580 = vrot.lane.b32.xlu0 %v4547, 83
  %v4581 = vpop.permute.xlu0 %4580
  %4582 = vrot.lane.b32.xlu0 %v4548, 83
  %v4583 = vpop.permute.xlu0 %4582
  %4584 = vrot.lane.b32.xlu0 %v4549, 83
  %v4585 = vpop.permute.xlu0 %4584
  %vm4586 = vcmask 678912
  %v4587 = vsel %vm4586, %v4563, %v4565
  %v4588 = vsel %vm4586, %v4567, %v4569
  %v4589 = vsel %vm4586, %v4571, %v4573
  %v4590 = vsel %vm4586, %v4575, %v4577
  %v4591 = vsel %vm4586, %v4579, %v4581
  %v4592 = vsel %vm4586, %v4583, %v4585
  %4605 = vst [vmem:[#allocation4 + $0x6c0] sm:$0xff] %v4587
  %4606 = vst.msk [vmem:[#allocation4 + $0x6c8] sm:$0xff] %vm3188, %v4565
  %4607 = vst [vmem:[#allocation4 + $0x6d0] sm:$0xff] %v4588
  %4608 = vst.msk [vmem:[#allocation4 + $0x6d8] sm:$0xff] %vm3188, %v4569
  %4609 = vst [vmem:[#allocation4 + $0x6e0] sm:$0xff] %v4589
  %4610 = vst.msk [vmem:[#allocation4 + $0x6e8] sm:$0xff] %vm3188, %v4573
  %4611 = vst [vmem:[#allocation4 + $0x6f0] sm:$0xff] %v4590
  %4612 = vst.msk [vmem:[#allocation4 + $0x6f8] sm:$0xff] %vm3188, %v4577
  %4613 = vst [vmem:[#allocation4 + $0x700] sm:$0xff] %v4591
  %4614 = vst.msk [vmem:[#allocation4 + $0x708] sm:$0xff] %vm3188, %v4581
  %4615 = vst [vmem:[#allocation4 + $0x710] sm:$0xff] %v4592
  %4616 = vst.msk [vmem:[#allocation4 + $0x718] sm:$0xff] %vm3188, %v4585
  %v4617 = vld [vmem:[#allocation3] sm:$0xff]
  %v4618 = vld [vmem:[#allocation3 + $0x8] sm:$0xff]
  %v4619 = vld [vmem:[#allocation3 + $0x10] sm:$0xff]
  %v4620 = vld [vmem:[#allocation3 + $0x18] sm:$0xff]
  %v4621 = vld [vmem:[#allocation3 + $0x20] sm:$0xff]
  %v4622 = vld [vmem:[#allocation3 + $0x28] sm:$0xff]
  %v4623 = vld [vmem:[#allocation3 + $0x30] sm:$0xff]
  %v4624 = vld [vmem:[#allocation3 + $0x38] sm:$0xff]
  %v4625 = vld [vmem:[#allocation3 + $0x40] sm:$0xff]
  %v4626 = vld [vmem:[#allocation3 + $0x48] sm:$0xff]
  %v4627 = vld [vmem:[#allocation3 + $0x50] sm:$0xff]
  %v4628 = vld [vmem:[#allocation3 + $0x58] sm:$0xff]
  %4641 = vrot.lane.b32.xlu0 %v4617, 82
  %v4642 = vpop.permute.xlu0 %4641
  %4643 = vrot.lane.b32.xlu0 %v4618, 82
  %v4644 = vpop.permute.xlu0 %4643
  %4645 = vrot.lane.b32.xlu0 %v4619, 82
  %v4646 = vpop.permute.xlu0 %4645
  %4647 = vrot.lane.b32.xlu0 %v4620, 82
  %v4648 = vpop.permute.xlu0 %4647
  %4649 = vrot.lane.b32.xlu0 %v4621, 82
  %v4650 = vpop.permute.xlu0 %4649
  %4651 = vrot.lane.b32.xlu0 %v4622, 82
  %v4652 = vpop.permute.xlu0 %4651
  %4653 = vrot.lane.b32.xlu0 %v4623, 82
  %v4654 = vpop.permute.xlu0 %4653
  %4655 = vrot.lane.b32.xlu0 %v4624, 82
  %v4656 = vpop.permute.xlu0 %4655
  %4657 = vrot.lane.b32.xlu0 %v4625, 82
  %v4658 = vpop.permute.xlu0 %4657
  %4659 = vrot.lane.b32.xlu0 %v4626, 82
  %v4660 = vpop.permute.xlu0 %4659
  %4661 = vrot.lane.b32.xlu0 %v4627, 82
  %v4662 = vpop.permute.xlu0 %4661
  %4663 = vrot.lane.b32.xlu0 %v4628, 82
  %v4664 = vpop.permute.xlu0 %4663
  %vm4665 = vcmask 670720
  %v4666 = vsel %vm4665, %v4642, %v4644
  %v4667 = vsel %vm4665, %v4646, %v4648
  %v4668 = vsel %vm4665, %v4650, %v4652
  %v4669 = vsel %vm4665, %v4654, %v4656
  %v4670 = vsel %vm4665, %v4658, %v4660
  %v4671 = vsel %vm4665, %v4662, %v4664
  %4684 = vst [vmem:[#allocation4 + $0x720] sm:$0xff] %v4666
  %4685 = vst.msk [vmem:[#allocation4 + $0x728] sm:$0xff] %vm3188, %v4644
  %4686 = vst [vmem:[#allocation4 + $0x730] sm:$0xff] %v4667
  %4687 = vst.msk [vmem:[#allocation4 + $0x738] sm:$0xff] %vm3188, %v4648
  %4688 = vst [vmem:[#allocation4 + $0x740] sm:$0xff] %v4668
  %4689 = vst.msk [vmem:[#allocation4 + $0x748] sm:$0xff] %vm3188, %v4652
  %4690 = vst [vmem:[#allocation4 + $0x750] sm:$0xff] %v4669
  %4691 = vst.msk [vmem:[#allocation4 + $0x758] sm:$0xff] %vm3188, %v4656
  %4692 = vst [vmem:[#allocation4 + $0x760] sm:$0xff] %v4670
  %4693 = vst.msk [vmem:[#allocation4 + $0x768] sm:$0xff] %vm3188, %v4660
  %4694 = vst [vmem:[#allocation4 + $0x770] sm:$0xff] %v4671
  %4695 = vst.msk [vmem:[#allocation4 + $0x778] sm:$0xff] %vm3188, %v4664
  %v4696 = vld [vmem:[#allocation3] sm:$0xff]
  %v4697 = vld [vmem:[#allocation3 + $0x8] sm:$0xff]
  %v4698 = vld [vmem:[#allocation3 + $0x10] sm:$0xff]
  %v4699 = vld [vmem:[#allocation3 + $0x18] sm:$0xff]
  %v4700 = vld [vmem:[#allocation3 + $0x20] sm:$0xff]
  %v4701 = vld [vmem:[#allocation3 + $0x28] sm:$0xff]
  %v4702 = vld [vmem:[#allocation3 + $0x30] sm:$0xff]
  %v4703 = vld [vmem:[#allocation3 + $0x38] sm:$0xff]
  %v4704 = vld [vmem:[#allocation3 + $0x40] sm:$0xff]
  %v4705 = vld [vmem:[#allocation3 + $0x48] sm:$0xff]
  %v4706 = vld [vmem:[#allocation3 + $0x50] sm:$0xff]
  %v4707 = vld [vmem:[#allocation3 + $0x58] sm:$0xff]
  %4720 = vrot.lane.b32.xlu0 %v4696, 72
  %v4721 = vpop.permute.xlu0 %4720
  %4722 = vrot.lane.b32.xlu0 %v4697, 72
  %v4723 = vpop.permute.xlu0 %4722
  %4724 = vrot.lane.b32.xlu0 %v4698, 72
  %v4725 = vpop.permute.xlu0 %4724
  %4726 = vrot.lane.b32.xlu0 %v4699, 72
  %v4727 = vpop.permute.xlu0 %4726
  %4728 = vrot.lane.b32.xlu0 %v4700, 72
  %v4729 = vpop.permute.xlu0 %4728
  %4730 = vrot.lane.b32.xlu0 %v4701, 72
  %v4731 = vpop.permute.xlu0 %4730
  %4732 = vrot.lane.b32.xlu0 %v4702, 72
  %v4733 = vpop.permute.xlu0 %4732
  %4734 = vrot.lane.b32.xlu0 %v4703, 72
  %v4735 = vpop.permute.xlu0 %4734
  %4736 = vrot.lane.b32.xlu0 %v4704, 72
  %v4737 = vpop.permute.xlu0 %4736
  %4738 = vrot.lane.b32.xlu0 %v4705, 72
  %v4739 = vpop.permute.xlu0 %4738
  %4740 = vrot.lane.b32.xlu0 %v4706, 72
  %v4741 = vpop.permute.xlu0 %4740
  %4742 = vrot.lane.b32.xlu0 %v4707, 72
  %v4743 = vpop.permute.xlu0 %4742
  %v4744 = vsel %vm1720, %v4721, %v4723
  %v4745 = vsel %vm1720, %v4725, %v4727
  %v4746 = vsel %vm1720, %v4729, %v4731
  %v4747 = vsel %vm1720, %v4733, %v4735
  %v4748 = vsel %vm1720, %v4737, %v4739
  %v4749 = vsel %vm1720, %v4741, %v4743
  %4762 = vst [vmem:[#allocation4 + $0x780] sm:$0xff] %v4744
  %4763 = vst.msk [vmem:[#allocation4 + $0x788] sm:$0xff] %vm3188, %v4723
  %4764 = vst [vmem:[#allocation4 + $0x790] sm:$0xff] %v4745
  %4765 = vst.msk [vmem:[#allocation4 + $0x798] sm:$0xff] %vm3188, %v4727
  %4766 = vst [vmem:[#allocation4 + $0x7a0] sm:$0xff] %v4746
  %4767 = vst.msk [vmem:[#allocation4 + $0x7a8] sm:$0xff] %vm3188, %v4731
  %4768 = vst [vmem:[#allocation4 + $0x7b0] sm:$0xff] %v4747
  %4769 = vst.msk [vmem:[#allocation4 + $0x7b8] sm:$0xff] %vm3188, %v4735
  %4770 = vst [vmem:[#allocation4 + $0x7c0] sm:$0xff] %v4748
  %4771 = vst.msk [vmem:[#allocation4 + $0x7c8] sm:$0xff] %vm3188, %v4739
  %4772 = vst [vmem:[#allocation4 + $0x7d0] sm:$0xff] %v4749
  %4773 = vst.msk [vmem:[#allocation4 + $0x7d8] sm:$0xff] %vm3188, %v4743
  %v4774 = vld [vmem:[#allocation3] sm:$0xff]
  %v4775 = vld [vmem:[#allocation3 + $0x8] sm:$0xff]
  %v4776 = vld [vmem:[#allocation3 + $0x10] sm:$0xff]
  %v4777 = vld [vmem:[#allocation3 + $0x18] sm:$0xff]
  %v4778 = vld [vmem:[#allocation3 + $0x20] sm:$0xff]
  %v4779 = vld [vmem:[#allocation3 + $0x28] sm:$0xff]
  %v4780 = vld [vmem:[#allocation3 + $0x30] sm:$0xff]
  %v4781 = vld [vmem:[#allocation3 + $0x38] sm:$0xff]
  %v4782 = vld [vmem:[#allocation3 + $0x40] sm:$0xff]
  %v4783 = vld [vmem:[#allocation3 + $0x48] sm:$0xff]
  %v4784 = vld [vmem:[#allocation3 + $0x50] sm:$0xff]
  %v4785 = vld [vmem:[#allocation3 + $0x58] sm:$0xff]
  %4798 = vrot.lane.b32.xlu0 %v4774, 71
  %v4799 = vpop.permute.xlu0 %4798
  %4800 = vrot.lane.b32.xlu0 %v4775, 71
  %v4801 = vpop.permute.xlu0 %4800
  %4802 = vrot.lane.b32.xlu0 %v4776, 71
  %v4803 = vpop.permute.xlu0 %4802
  %4804 = vrot.lane.b32.xlu0 %v4777, 71
  %v4805 = vpop.permute.xlu0 %4804
  %4806 = vrot.lane.b32.xlu0 %v4778, 71
  %v4807 = vpop.permute.xlu0 %4806
  %4808 = vrot.lane.b32.xlu0 %v4779, 71
  %v4809 = vpop.permute.xlu0 %4808
  %4810 = vrot.lane.b32.xlu0 %v4780, 71
  %v4811 = vpop.permute.xlu0 %4810
  %4812 = vrot.lane.b32.xlu0 %v4781, 71
  %v4813 = vpop.permute.xlu0 %4812
  %4814 = vrot.lane.b32.xlu0 %v4782, 71
  %v4815 = vpop.permute.xlu0 %4814
  %4816 = vrot.lane.b32.xlu0 %v4783, 71
  %v4817 = vpop.permute.xlu0 %4816
  %4818 = vrot.lane.b32.xlu0 %v4784, 71
  %v4819 = vpop.permute.xlu0 %4818
  %4820 = vrot.lane.b32.xlu0 %v4785, 71
  %v4821 = vpop.permute.xlu0 %4820
  %vm4822 = vcmask 580608
  %v4823 = vsel %vm4822, %v4799, %v4801
  %v4824 = vsel %vm4822, %v4803, %v4805
  %v4825 = vsel %vm4822, %v4807, %v4809
  %v4826 = vsel %vm4822, %v4811, %v4813
  %v4827 = vsel %vm4822, %v4815, %v4817
  %v4828 = vsel %vm4822, %v4819, %v4821
  %4841 = vst [vmem:[#allocation4 + $0x7e0] sm:$0xff] %v4823
  %4842 = vst.msk [vmem:[#allocation4 + $0x7e8] sm:$0xff] %vm3188, %v4801
  %4843 = vst [vmem:[#allocation4 + $0x7f0] sm:$0xff] %v4824
  %4844 = vst.msk [vmem:[#allocation4 + $0x7f8] sm:$0xff] %vm3188, %v4805
  %4845 = vst [vmem:[#allocation4 + $0x800] sm:$0xff] %v4825
  %4846 = vst.msk [vmem:[#allocation4 + $0x808] sm:$0xff] %vm3188, %v4809
  %4847 = vst [vmem:[#allocation4 + $0x810] sm:$0xff] %v4826
  %4848 = vst.msk [vmem:[#allocation4 + $0x818] sm:$0xff] %vm3188, %v4813
  %4849 = vst [vmem:[#allocation4 + $0x820] sm:$0xff] %v4827
  %4850 = vst.msk [vmem:[#allocation4 + $0x828] sm:$0xff] %vm3188, %v4817
  %4851 = vst [vmem:[#allocation4 + $0x830] sm:$0xff] %v4828
  %4852 = vst.msk [vmem:[#allocation4 + $0x838] sm:$0xff] %vm3188, %v4821
  %v4853 = vld [vmem:[#allocation3] sm:$0xff]
  %v4854 = vld [vmem:[#allocation3 + $0x8] sm:$0xff]
  %v4855 = vld [vmem:[#allocation3 + $0x10] sm:$0xff]
  %v4856 = vld [vmem:[#allocation3 + $0x18] sm:$0xff]
  %v4857 = vld [vmem:[#allocation3 + $0x20] sm:$0xff]
  %v4858 = vld [vmem:[#allocation3 + $0x28] sm:$0xff]
  %v4859 = vld [vmem:[#allocation3 + $0x30] sm:$0xff]
  %v4860 = vld [vmem:[#allocation3 + $0x38] sm:$0xff]
  %v4861 = vld [vmem:[#allocation3 + $0x40] sm:$0xff]
  %v4862 = vld [vmem:[#allocation3 + $0x48] sm:$0xff]
  %v4863 = vld [vmem:[#allocation3 + $0x50] sm:$0xff]
  %v4864 = vld [vmem:[#allocation3 + $0x58] sm:$0xff]
  %4877 = vrot.lane.b32.xlu0 %v4853, 70
  %v4878 = vpop.permute.xlu0 %4877
  %4879 = vrot.lane.b32.xlu0 %v4854, 70
  %v4880 = vpop.permute.xlu0 %4879
  %4881 = vrot.lane.b32.xlu0 %v4855, 70
  %v4882 = vpop.permute.xlu0 %4881
  %4883 = vrot.lane.b32.xlu0 %v4856, 70
  %v4884 = vpop.permute.xlu0 %4883
  %4885 = vrot.lane.b32.xlu0 %v4857, 70
  %v4886 = vpop.permute.xlu0 %4885
  %4887 = vrot.lane.b32.xlu0 %v4858, 70
  %v4888 = vpop.permute.xlu0 %4887
  %4889 = vrot.lane.b32.xlu0 %v4859, 70
  %v4890 = vpop.permute.xlu0 %4889
  %4891 = vrot.lane.b32.xlu0 %v4860, 70
  %v4892 = vpop.permute.xlu0 %4891
  %4893 = vrot.lane.b32.xlu0 %v4861, 70
  %v4894 = vpop.permute.xlu0 %4893
  %4895 = vrot.lane.b32.xlu0 %v4862, 70
  %v4896 = vpop.permute.xlu0 %4895
  %4897 = vrot.lane.b32.xlu0 %v4863, 70
  %v4898 = vpop.permute.xlu0 %4897
  %4899 = vrot.lane.b32.xlu0 %v4864, 70
  %v4900 = vpop.permute.xlu0 %4899
  %vm4901 = vcmask 572416
  %v4902 = vsel %vm4901, %v4878, %v4880
  %v4903 = vsel %vm4901, %v4882, %v4884
  %v4904 = vsel %vm4901, %v4886, %v4888
  %v4905 = vsel %vm4901, %v4890, %v4892
  %v4906 = vsel %vm4901, %v4894, %v4896
  %v4907 = vsel %vm4901, %v4898, %v4900
  %4920 = vst [vmem:[#allocation4 + $0x840] sm:$0xff] %v4902
  %4921 = vst.msk [vmem:[#allocation4 + $0x848] sm:$0xff] %vm3188, %v4880
  %4922 = vst [vmem:[#allocation4 + $0x850] sm:$0xff] %v4903
  %4923 = vst.msk [vmem:[#allocation4 + $0x858] sm:$0xff] %vm3188, %v4884
  %4924 = vst [vmem:[#allocation4 + $0x860] sm:$0xff] %v4904
  %4925 = vst.msk [vmem:[#allocation4 + $0x868] sm:$0xff] %vm3188, %v4888
  %4926 = vst [vmem:[#allocation4 + $0x870] sm:$0xff] %v4905
  %4927 = vst.msk [vmem:[#allocation4 + $0x878] sm:$0xff] %vm3188, %v4892
  %4928 = vst [vmem:[#allocation4 + $0x880] sm:$0xff] %v4906
  %4929 = vst.msk [vmem:[#allocation4 + $0x888] sm:$0xff] %vm3188, %v4896
  %4930 = vst [vmem:[#allocation4 + $0x890] sm:$0xff] %v4907
  %4931 = vst.msk [vmem:[#allocation4 + $0x898] sm:$0xff] %vm3188, %v4900
  %v4932 = vld [vmem:[#allocation3] sm:$0xff]
  %v4933 = vld [vmem:[#allocation3 + $0x8] sm:$0xff]
  %v4934 = vld [vmem:[#allocation3 + $0x10] sm:$0xff]
  %v4935 = vld [vmem:[#allocation3 + $0x18] sm:$0xff]
  %v4936 = vld [vmem:[#allocation3 + $0x20] sm:$0xff]
  %v4937 = vld [vmem:[#allocation3 + $0x28] sm:$0xff]
  %v4938 = vld [vmem:[#allocation3 + $0x30] sm:$0xff]
  %v4939 = vld [vmem:[#allocation3 + $0x38] sm:$0xff]
  %v4940 = vld [vmem:[#allocation3 + $0x40] sm:$0xff]
  %v4941 = vld [vmem:[#allocation3 + $0x48] sm:$0xff]
  %v4942 = vld [vmem:[#allocation3 + $0x50] sm:$0xff]
  %v4943 = vld [vmem:[#allocation3 + $0x58] sm:$0xff]
  %4956 = vrot.lane.b32.xlu0 %v4932, 69
  %v4957 = vpop.permute.xlu0 %4956
  %4958 = vrot.lane.b32.xlu0 %v4933, 69
  %v4959 = vpop.permute.xlu0 %4958
  %4960 = vrot.lane.b32.xlu0 %v4934, 69
  %v4961 = vpop.permute.xlu0 %4960
  %4962 = vrot.lane.b32.xlu0 %v4935, 69
  %v4963 = vpop.permute.xlu0 %4962
  %4964 = vrot.lane.b32.xlu0 %v4936, 69
  %v4965 = vpop.permute.xlu0 %4964
  %4966 = vrot.lane.b32.xlu0 %v4937, 69
  %v4967 = vpop.permute.xlu0 %4966
  %4968 = vrot.lane.b32.xlu0 %v4938, 69
  %v4969 = vpop.permute.xlu0 %4968
  %4970 = vrot.lane.b32.xlu0 %v4939, 69
  %v4971 = vpop.permute.xlu0 %4970
  %4972 = vrot.lane.b32.xlu0 %v4940, 69
  %v4973 = vpop.permute.xlu0 %4972
  %4974 = vrot.lane.b32.xlu0 %v4941, 69
  %v4975 = vpop.permute.xlu0 %4974
  %4976 = vrot.lane.b32.xlu0 %v4942, 69
  %v4977 = vpop.permute.xlu0 %4976
  %4978 = vrot.lane.b32.xlu0 %v4943, 69
  %v4979 = vpop.permute.xlu0 %4978
  %vm4980 = vcmask 564224
  %v4981 = vsel %vm4980, %v4957, %v4959
  %v4982 = vsel %vm4980, %v4961, %v4963
  %v4983 = vsel %vm4980, %v4965, %v4967
  %v4984 = vsel %vm4980, %v4969, %v4971
  %v4985 = vsel %vm4980, %v4973, %v4975
  %v4986 = vsel %vm4980, %v4977, %v4979
  %4999 = vst [vmem:[#allocation4 + $0x8a0] sm:$0xff] %v4981
  %5000 = vst.msk [vmem:[#allocation4 + $0x8a8] sm:$0xff] %vm3188, %v4959
  %5001 = vst [vmem:[#allocation4 + $0x8b0] sm:$0xff] %v4982
  %5002 = vst.msk [vmem:[#allocation4 + $0x8b8] sm:$0xff] %vm3188, %v4963
  %5003 = vst [vmem:[#allocation4 + $0x8c0] sm:$0xff] %v4983
  %5004 = vst.msk [vmem:[#allocation4 + $0x8c8] sm:$0xff] %vm3188, %v4967
  %5005 = vst [vmem:[#allocation4 + $0x8d0] sm:$0xff] %v4984
  %5006 = vst.msk [vmem:[#allocation4 + $0x8d8] sm:$0xff] %vm3188, %v4971
  %5007 = vst [vmem:[#allocation4 + $0x8e0] sm:$0xff] %v4985
  %5008 = vst.msk [vmem:[#allocation4 + $0x8e8] sm:$0xff] %vm3188, %v4975
  %5009 = vst [vmem:[#allocation4 + $0x8f0] sm:$0xff] %v4986
  %5010 = vst.msk [vmem:[#allocation4 + $0x8f8] sm:$0xff] %vm3188, %v4979
  %v5011 = vld [vmem:[#allocation3] sm:$0xff]
  %v5012 = vld [vmem:[#allocation3 + $0x8] sm:$0xff]
  %v5013 = vld [vmem:[#allocation3 + $0x10] sm:$0xff]
  %v5014 = vld [vmem:[#allocation3 + $0x18] sm:$0xff]
  %v5015 = vld [vmem:[#allocation3 + $0x20] sm:$0xff]
  %v5016 = vld [vmem:[#allocation3 + $0x28] sm:$0xff]
  %v5017 = vld [vmem:[#allocation3 + $0x30] sm:$0xff]
  %v5018 = vld [vmem:[#allocation3 + $0x38] sm:$0xff]
  %v5019 = vld [vmem:[#allocation3 + $0x40] sm:$0xff]
  %v5020 = vld [vmem:[#allocation3 + $0x48] sm:$0xff]
  %v5021 = vld [vmem:[#allocation3 + $0x50] sm:$0xff]
  %v5022 = vld [vmem:[#allocation3 + $0x58] sm:$0xff]
  %5035 = vrot.lane.b32.xlu0 %v5011, 68
  %v5036 = vpop.permute.xlu0 %5035
  %5037 = vrot.lane.b32.xlu0 %v5012, 68
  %v5038 = vpop.permute.xlu0 %5037
  %5039 = vrot.lane.b32.xlu0 %v5013, 68
  %v5040 = vpop.permute.xlu0 %5039
  %5041 = vrot.lane.b32.xlu0 %v5014, 68
  %v5042 = vpop.permute.xlu0 %5041
  %5043 = vrot.lane.b32.xlu0 %v5015, 68
  %v5044 = vpop.permute.xlu0 %5043
  %5045 = vrot.lane.b32.xlu0 %v5016, 68
  %v5046 = vpop.permute.xlu0 %5045
  %5047 = vrot.lane.b32.xlu0 %v5017, 68
  %v5048 = vpop.permute.xlu0 %5047
  %5049 = vrot.lane.b32.xlu0 %v5018, 68
  %v5050 = vpop.permute.xlu0 %5049
  %5051 = vrot.lane.b32.xlu0 %v5019, 68
  %v5052 = vpop.permute.xlu0 %5051
  %5053 = vrot.lane.b32.xlu0 %v5020, 68
  %v5054 = vpop.permute.xlu0 %5053
  %5055 = vrot.lane.b32.xlu0 %v5021, 68
  %v5056 = vpop.permute.xlu0 %5055
  %5057 = vrot.lane.b32.xlu0 %v5022, 68
  %v5058 = vpop.permute.xlu0 %5057
  %vm5059 = vcmask 556032
  %v5060 = vsel %vm5059, %v5036, %v5038
  %v5061 = vsel %vm5059, %v5040, %v5042
  %v5062 = vsel %vm5059, %v5044, %v5046
  %v5063 = vsel %vm5059, %v5048, %v5050
  %v5064 = vsel %vm5059, %v5052, %v5054
  %v5065 = vsel %vm5059, %v5056, %v5058
  %5078 = vst [vmem:[#allocation4 + $0x900] sm:$0xff] %v5060
  %5079 = vst.msk [vmem:[#allocation4 + $0x908] sm:$0xff] %vm3188, %v5038
  %5080 = vst [vmem:[#allocation4 + $0x910] sm:$0xff] %v5061
  %5081 = vst.msk [vmem:[#allocation4 + $0x918] sm:$0xff] %vm3188, %v5042
  %5082 = vst [vmem:[#allocation4 + $0x920] sm:$0xff] %v5062
  %5083 = vst.msk [vmem:[#allocation4 + $0x928] sm:$0xff] %vm3188, %v5046
  %5084 = vst [vmem:[#allocation4 + $0x930] sm:$0xff] %v5063
  %5085 = vst.msk [vmem:[#allocation4 + $0x938] sm:$0xff] %vm3188, %v5050
  %5086 = vst [vmem:[#allocation4 + $0x940] sm:$0xff] %v5064
  %5087 = vst.msk [vmem:[#allocation4 + $0x948] sm:$0xff] %vm3188, %v5054
  %5088 = vst [vmem:[#allocation4 + $0x950] sm:$0xff] %v5065
  %5089 = vst.msk [vmem:[#allocation4 + $0x958] sm:$0xff] %vm3188, %v5058
  %v5090 = vld [vmem:[%s3] sm:$0xff]
  %v5091 = vld [vmem:[%s3 + $0x8] sm:$0xff]
  %v5092 = vld [vmem:[%s3 + $0x10] sm:$0xff]
  %v5093 = vld [vmem:[%s3 + $0x18] sm:$0xff]
  %v5094 = vld [vmem:[%s3 + $0x20] sm:$0xff]
  %v5095 = vld [vmem:[%s3 + $0x28] sm:$0xff]
  %v5096 = vld [vmem:[%s3 + $0x30] sm:$0xff]
  %v5097 = vld [vmem:[%s3 + $0x38] sm:$0xff]
  %v5098 = vld [vmem:[%s3 + $0x40] sm:$0xff]
  %v5099 = vld [vmem:[%s3 + $0x48] sm:$0xff]
  %v5100 = vld [vmem:[%s3 + $0x50] sm:$0xff]
  %v5101 = vld [vmem:[%s3 + $0x58] sm:$0xff]
  %v5102 = vld [vmem:[%s3 + $0x60] sm:$0xff]
  %v5103 = vld [vmem:[%s3 + $0x68] sm:$0xff]
  %v5104 = vld [vmem:[%s3 + $0x70] sm:$0xff]
  %v5105 = vld [vmem:[%s3 + $0x78] sm:$0xff]
  %v5106 = vld [vmem:[%s3 + $0x80] sm:$0xff]
  %v5107 = vld [vmem:[%s3 + $0x88] sm:$0xff]
  %v5108 = vld [vmem:[%s3 + $0x90] sm:$0xff]
  %v5109 = vld [vmem:[%s3 + $0x98] sm:$0xff]
  %v5110 = vld [vmem:[%s3 + $0xa0] sm:$0xff]
  %v5111 = vld [vmem:[%s3 + $0xa8] sm:$0xff]
  %v5112 = vld [vmem:[%s3 + $0xb0] sm:$0xff]
  %v5113 = vld [vmem:[%s3 + $0xb8] sm:$0xff]
  %v5114 = vld [vmem:[%s3 + $0xc0] sm:$0xff]
  %v5115 = vld [vmem:[%s3 + $0xc8] sm:$0xff]
  %v5116 = vld [vmem:[%s3 + $0xd0] sm:$0xff]
  %v5117 = vld [vmem:[%s3 + $0xd8] sm:$0xff]
  %v5118 = vld [vmem:[%s3 + $0xe0] sm:$0xff]
  %v5119 = vld [vmem:[%s3 + $0xe8] sm:$0xff]
  %v5120 = vld [vmem:[%s3 + $0xf0] sm:$0xff]
  %v5121 = vld [vmem:[%s3 + $0xf8] sm:$0xff]
  %v5122 = vld [vmem:[%s3 + $0x100] sm:$0xff]
  %v5123 = vld [vmem:[%s3 + $0x108] sm:$0xff]
  %v5124 = vld [vmem:[%s3 + $0x110] sm:$0xff]
  %v5125 = vld [vmem:[%s3 + $0x118] sm:$0xff]
  %v5126 = vld [vmem:[%s3 + $0x120] sm:$0xff]
  %v5127 = vld [vmem:[%s3 + $0x128] sm:$0xff]
  %v5128 = vld [vmem:[%s3 + $0x130] sm:$0xff]
  %v5129 = vld [vmem:[%s3 + $0x138] sm:$0xff]
  %v5130 = vld [vmem:[%s3 + $0x140] sm:$0xff]
  %v5131 = vld [vmem:[%s3 + $0x148] sm:$0xff]
  %v5132 = vld [vmem:[%s3 + $0x150] sm:$0xff]
  %v5133 = vld [vmem:[%s3 + $0x158] sm:$0xff]
  %v5134 = vld [vmem:[%s3 + $0x160] sm:$0xff]
  %v5135 = vld [vmem:[%s3 + $0x168] sm:$0xff]
  %v5136 = vld [vmem:[%s3 + $0x170] sm:$0xff]
  %v5137 = vld [vmem:[%s3 + $0x178] sm:$0xff]
  %v5138 = vld [vmem:[%s3 + $0x180] sm:$0xff]
  %v5139 = vld [vmem:[%s3 + $0x188] sm:$0xff]
  %v5140 = vld [vmem:[%s3 + $0x190] sm:$0xff]
  %v5141 = vld [vmem:[%s3 + $0x198] sm:$0xff]
  %v5142 = vld [vmem:[%s3 + $0x1a0] sm:$0xff]
  %v5143 = vld [vmem:[%s3 + $0x1a8] sm:$0xff]
  %v5144 = vld [vmem:[%s3 + $0x1b0] sm:$0xff]
  %v5145 = vld [vmem:[%s3 + $0x1b8] sm:$0xff]
  %v5146 = vld [vmem:[%s3 + $0x1c0] sm:$0xff]
  %v5147 = vld [vmem:[%s3 + $0x1c8] sm:$0xff]
  %v5148 = vld [vmem:[%s3 + $0x1d0] sm:$0xff]
  %v5149 = vld [vmem:[%s3 + $0x1d8] sm:$0xff]
  %v5150 = vld [vmem:[%s3 + $0x1e0] sm:$0xff]
  %v5151 = vld [vmem:[%s3 + $0x1e8] sm:$0xff]
  %v5152 = vld [vmem:[%s3 + $0x1f0] sm:$0xff]
  %v5153 = vld [vmem:[%s3 + $0x1f8] sm:$0xff]
  %v5154 = vld [vmem:[%s3 + $0x200] sm:$0xff]
  %v5155 = vld [vmem:[%s3 + $0x208] sm:$0xff]
  %v5156 = vld [vmem:[%s3 + $0x210] sm:$0xff]
  %v5157 = vld [vmem:[%s3 + $0x218] sm:$0xff]
  %v5158 = vld [vmem:[%s3 + $0x220] sm:$0xff]
  %v5159 = vld [vmem:[%s3 + $0x228] sm:$0xff]
  %v5160 = vld [vmem:[%s3 + $0x230] sm:$0xff]
  %v5161 = vld [vmem:[%s3 + $0x238] sm:$0xff]
  %v5162 = vld [vmem:[%s3 + $0x240] sm:$0xff]
  %v5163 = vld [vmem:[%s3 + $0x248] sm:$0xff]
  %v5164 = vld [vmem:[%s3 + $0x250] sm:$0xff]
  %v5165 = vld [vmem:[%s3 + $0x258] sm:$0xff]
  %v5166 = vld [vmem:[%s3 + $0x260] sm:$0xff]
  %v5167 = vld [vmem:[%s3 + $0x268] sm:$0xff]
  %v5168 = vld [vmem:[%s3 + $0x270] sm:$0xff]
  %v5169 = vld [vmem:[%s3 + $0x278] sm:$0xff]
  %v5170 = vld [vmem:[%s3 + $0x280] sm:$0xff]
  %v5171 = vld [vmem:[%s3 + $0x288] sm:$0xff]
  %v5172 = vld [vmem:[%s3 + $0x290] sm:$0xff]
  %v5173 = vld [vmem:[%s3 + $0x298] sm:$0xff]
  %v5174 = vld [vmem:[%s3 + $0x2a0] sm:$0xff]
  %v5175 = vld [vmem:[%s3 + $0x2a8] sm:$0xff]
  %v5176 = vld [vmem:[%s3 + $0x2b0] sm:$0xff]
  %v5177 = vld [vmem:[%s3 + $0x2b8] sm:$0xff]
  %v5178 = vld [vmem:[%s3 + $0x2c0] sm:$0xff]
  %v5179 = vld [vmem:[%s3 + $0x2c8] sm:$0xff]
  %v5180 = vld [vmem:[%s3 + $0x2d0] sm:$0xff]
  %v5181 = vld [vmem:[%s3 + $0x2d8] sm:$0xff]
  %v5182 = vld [vmem:[%s3 + $0x2e0] sm:$0xff]
  %v5183 = vld [vmem:[%s3 + $0x2e8] sm:$0xff]
  %v5184 = vld [vmem:[%s3 + $0x2f0] sm:$0xff]
  %v5185 = vld [vmem:[%s3 + $0x2f8] sm:$0xff]
  %v5186 = vld [vmem:[%s3 + $0x300] sm:$0xff]
  %v5187 = vld [vmem:[%s3 + $0x308] sm:$0xff]
  %v5188 = vld [vmem:[%s3 + $0x310] sm:$0xff]
  %v5189 = vld [vmem:[%s3 + $0x318] sm:$0xff]
  %v5190 = vld [vmem:[%s3 + $0x320] sm:$0xff]
  %v5191 = vld [vmem:[%s3 + $0x328] sm:$0xff]
  %v5192 = vld [vmem:[%s3 + $0x330] sm:$0xff]
  %v5193 = vld [vmem:[%s3 + $0x338] sm:$0xff]
  %v5194 = vld [vmem:[%s3 + $0x340] sm:$0xff]
  %v5195 = vld [vmem:[%s3 + $0x348] sm:$0xff]
  %v5196 = vld [vmem:[%s3 + $0x350] sm:$0xff]
  %v5197 = vld [vmem:[%s3 + $0x358] sm:$0xff]
  %v5198 = vld [vmem:[%s3 + $0x360] sm:$0xff]
  %v5199 = vld [vmem:[%s3 + $0x368] sm:$0xff]
  %v5200 = vld [vmem:[%s3 + $0x370] sm:$0xff]
  %v5201 = vld [vmem:[%s3 + $0x378] sm:$0xff]
  %v5202 = vld [vmem:[%s3 + $0x380] sm:$0xff]
  %v5203 = vld [vmem:[%s3 + $0x388] sm:$0xff]
  %v5204 = vld [vmem:[%s3 + $0x390] sm:$0xff]
  %v5205 = vld [vmem:[%s3 + $0x398] sm:$0xff]
  %v5206 = vld [vmem:[%s3 + $0x3a0] sm:$0xff]
  %v5207 = vld [vmem:[%s3 + $0x3a8] sm:$0xff]
  %v5208 = vld [vmem:[%s3 + $0x3b0] sm:$0xff]
  %v5209 = vld [vmem:[%s3 + $0x3b8] sm:$0xff]
  %v5210 = vld [vmem:[%s3 + $0x3c0] sm:$0xff]
  %v5211 = vld [vmem:[%s3 + $0x3c8] sm:$0xff]
  %v5212 = vld [vmem:[%s3 + $0x3d0] sm:$0xff]
  %v5213 = vld [vmem:[%s3 + $0x3d8] sm:$0xff]
  %v5214 = vld [vmem:[%s3 + $0x3e0] sm:$0xff]
  %v5215 = vld [vmem:[%s3 + $0x3e8] sm:$0xff]
  %v5216 = vld [vmem:[%s3 + $0x3f0] sm:$0xff]
  %v5217 = vld [vmem:[%s3 + $0x3f8] sm:$0xff]
  %v5218 = vld [vmem:[%s3 + $0x400] sm:$0xff]
  %v5219 = vld [vmem:[%s3 + $0x408] sm:$0xff]
  %v5220 = vld [vmem:[%s3 + $0x410] sm:$0xff]
  %v5221 = vld [vmem:[%s3 + $0x418] sm:$0xff]
  %v5222 = vld [vmem:[%s3 + $0x420] sm:$0xff]
  %v5223 = vld [vmem:[%s3 + $0x428] sm:$0xff]
  %v5224 = vld [vmem:[%s3 + $0x430] sm:$0xff]
  %v5225 = vld [vmem:[%s3 + $0x438] sm:$0xff]
  %v5226 = vld [vmem:[%s3 + $0x440] sm:$0xff]
  %v5227 = vld [vmem:[%s3 + $0x448] sm:$0xff]
  %v5228 = vld [vmem:[%s3 + $0x450] sm:$0xff]
  %v5229 = vld [vmem:[%s3 + $0x458] sm:$0xff]
  %v5230 = vld [vmem:[%s3 + $0x460] sm:$0xff]
  %v5231 = vld [vmem:[%s3 + $0x468] sm:$0xff]
  %v5232 = vld [vmem:[%s3 + $0x470] sm:$0xff]
  %v5233 = vld [vmem:[%s3 + $0x478] sm:$0xff]
  %v5234 = vld [vmem:[%s3 + $0x480] sm:$0xff]
  %v5235 = vld [vmem:[%s3 + $0x488] sm:$0xff]
  %v5236 = vld [vmem:[%s3 + $0x490] sm:$0xff]
  %v5237 = vld [vmem:[%s3 + $0x498] sm:$0xff]
  %v5238 = vld [vmem:[%s3 + $0x4a0] sm:$0xff]
  %v5239 = vld [vmem:[%s3 + $0x4a8] sm:$0xff]
  %v5240 = vld [vmem:[%s3 + $0x4b0] sm:$0xff]
  %v5241 = vld [vmem:[%s3 + $0x4b8] sm:$0xff]
  %v5242 = vld [vmem:[%s3 + $0x4c0] sm:$0xff]
  %v5243 = vld [vmem:[%s3 + $0x4c8] sm:$0xff]
  %v5244 = vld [vmem:[%s3 + $0x4d0] sm:$0xff]
  %v5245 = vld [vmem:[%s3 + $0x4d8] sm:$0xff]
  %v5246 = vld [vmem:[%s3 + $0x4e0] sm:$0xff]
  %v5247 = vld [vmem:[%s3 + $0x4e8] sm:$0xff]
  %v5248 = vld [vmem:[%s3 + $0x4f0] sm:$0xff]
  %v5249 = vld [vmem:[%s3 + $0x4f8] sm:$0xff]
  %v5250 = vld [vmem:[#allocation4] sm:$0xff]
  %v5251 = vld [vmem:[#allocation4 + $0x8] sm:$0xff]
  %v5252 = vld [vmem:[#allocation4 + $0x10] sm:$0xff]
  %v5253 = vld [vmem:[#allocation4 + $0x18] sm:$0xff]
  %v5254 = vld [vmem:[#allocation4 + $0x20] sm:$0xff]
  %v5255 = vld [vmem:[#allocation4 + $0x28] sm:$0xff]
  %v5256 = vld [vmem:[#allocation4 + $0x30] sm:$0xff]
  %v5257 = vld [vmem:[#allocation4 + $0x38] sm:$0xff]
  %v5258 = vld [vmem:[#allocation4 + $0x40] sm:$0xff]
  %v5259 = vld [vmem:[#allocation4 + $0x48] sm:$0xff]
  %v5260 = vld [vmem:[#allocation4 + $0x50] sm:$0xff]
  %v5261 = vld [vmem:[#allocation4 + $0x58] sm:$0xff]
  %v5262 = vld [vmem:[#allocation4 + $0x60] sm:$0xff]
  %v5263 = vld [vmem:[#allocation4 + $0x68] sm:$0xff]
  %v5264 = vld [vmem:[#allocation4 + $0x70] sm:$0xff]
  %v5265 = vld [vmem:[#allocation4 + $0x78] sm:$0xff]
  %v5266 = vld [vmem:[#allocation4 + $0x80] sm:$0xff]
  %v5267 = vld [vmem:[#allocation4 + $0x88] sm:$0xff]
  %v5268 = vld [vmem:[#allocation4 + $0x90] sm:$0xff]
  %v5269 = vld [vmem:[#allocation4 + $0x98] sm:$0xff]
  %v5270 = vld [vmem:[#allocation4 + $0xa0] sm:$0xff]
  %v5271 = vld [vmem:[#allocation4 + $0xa8] sm:$0xff]
  %v5272 = vld [vmem:[#allocation4 + $0xb0] sm:$0xff]
  %v5273 = vld [vmem:[#allocation4 + $0xb8] sm:$0xff]
  %v5274 = vld [vmem:[#allocation4 + $0xc0] sm:$0xff]
  %v5275 = vld [vmem:[#allocation4 + $0xc8] sm:$0xff]
  %v5276 = vld [vmem:[#allocation4 + $0xd0] sm:$0xff]
  %v5277 = vld [vmem:[#allocation4 + $0xd8] sm:$0xff]
  %v5278 = vld [vmem:[#allocation4 + $0xe0] sm:$0xff]
  %v5279 = vld [vmem:[#allocation4 + $0xe8] sm:$0xff]
  %v5280 = vld [vmem:[#allocation4 + $0xf0] sm:$0xff]
  %v5281 = vld [vmem:[#allocation4 + $0xf8] sm:$0xff]
  %v5282 = vld [vmem:[#allocation4 + $0x100] sm:$0xff]
  %v5283 = vld [vmem:[#allocation4 + $0x108] sm:$0xff]
  %v5284 = vld [vmem:[#allocation4 + $0x110] sm:$0xff]
  %v5285 = vld [vmem:[#allocation4 + $0x118] sm:$0xff]
  %v5286 = vld [vmem:[#allocation4 + $0x120] sm:$0xff]
  %v5287 = vld [vmem:[#allocation4 + $0x128] sm:$0xff]
  %v5288 = vld [vmem:[#allocation4 + $0x130] sm:$0xff]
  %v5289 = vld [vmem:[#allocation4 + $0x138] sm:$0xff]
  %v5290 = vld [vmem:[#allocation4 + $0x140] sm:$0xff]
  %v5291 = vld [vmem:[#allocation4 + $0x148] sm:$0xff]
  %v5292 = vld [vmem:[#allocation4 + $0x150] sm:$0xff]
  %v5293 = vld [vmem:[#allocation4 + $0x158] sm:$0xff]
  %v5294 = vld [vmem:[#allocation4 + $0x160] sm:$0xff]
  %v5295 = vld [vmem:[#allocation4 + $0x168] sm:$0xff]
  %v5296 = vld [vmem:[#allocation4 + $0x170] sm:$0xff]
  %v5297 = vld [vmem:[#allocation4 + $0x178] sm:$0xff]
  %v5298 = vld [vmem:[#allocation4 + $0x180] sm:$0xff]
  %v5299 = vld [vmem:[#allocation4 + $0x188] sm:$0xff]
  %v5300 = vld [vmem:[#allocation4 + $0x190] sm:$0xff]
  %v5301 = vld [vmem:[#allocation4 + $0x198] sm:$0xff]
  %v5302 = vld [vmem:[#allocation4 + $0x1a0] sm:$0xff]
  %v5303 = vld [vmem:[#allocation4 + $0x1a8] sm:$0xff]
  %v5304 = vld [vmem:[#allocation4 + $0x1b0] sm:$0xff]
  %v5305 = vld [vmem:[#allocation4 + $0x1b8] sm:$0xff]
  %v5306 = vld [vmem:[#allocation4 + $0x1c0] sm:$0xff]
  %v5307 = vld [vmem:[#allocation4 + $0x1c8] sm:$0xff]
  %v5308 = vld [vmem:[#allocation4 + $0x1d0] sm:$0xff]
  %v5309 = vld [vmem:[#allocation4 + $0x1d8] sm:$0xff]
  %v5310 = vld [vmem:[#allocation4 + $0x1e0] sm:$0xff]
  %v5311 = vld [vmem:[#allocation4 + $0x1e8] sm:$0xff]
  %v5312 = vld [vmem:[#allocation4 + $0x1f0] sm:$0xff]
  %v5313 = vld [vmem:[#allocation4 + $0x1f8] sm:$0xff]
  %v5314 = vld [vmem:[#allocation4 + $0x200] sm:$0xff]
  %v5315 = vld [vmem:[#allocation4 + $0x208] sm:$0xff]
  %v5316 = vld [vmem:[#allocation4 + $0x210] sm:$0xff]
  %v5317 = vld [vmem:[#allocation4 + $0x218] sm:$0xff]
  %v5318 = vld [vmem:[#allocation4 + $0x220] sm:$0xff]
  %v5319 = vld [vmem:[#allocation4 + $0x228] sm:$0xff]
  %v5320 = vld [vmem:[#allocation4 + $0x230] sm:$0xff]
  %v5321 = vld [vmem:[#allocation4 + $0x238] sm:$0xff]
  %v5322 = vld [vmem:[#allocation4 + $0x240] sm:$0xff]
  %v5323 = vld [vmem:[#allocation4 + $0x248] sm:$0xff]
  %v5324 = vld [vmem:[#allocation4 + $0x250] sm:$0xff]
  %v5325 = vld [vmem:[#allocation4 + $0x258] sm:$0xff]
  %v5326 = vld [vmem:[#allocation4 + $0x260] sm:$0xff]
  %v5327 = vld [vmem:[#allocation4 + $0x268] sm:$0xff]
  %v5328 = vld [vmem:[#allocation4 + $0x270] sm:$0xff]
  %v5329 = vld [vmem:[#allocation4 + $0x278] sm:$0xff]
  %v5330 = vld [vmem:[#allocation4 + $0x280] sm:$0xff]
  %v5331 = vld [vmem:[#allocation4 + $0x288] sm:$0xff]
  %v5332 = vld [vmem:[#allocation4 + $0x290] sm:$0xff]
  %v5333 = vld [vmem:[#allocation4 + $0x298] sm:$0xff]
  %v5334 = vld [vmem:[#allocation4 + $0x2a0] sm:$0xff]
  %v5335 = vld [vmem:[#allocation4 + $0x2a8] sm:$0xff]
  %v5336 = vld [vmem:[#allocation4 + $0x2b0] sm:$0xff]
  %v5337 = vld [vmem:[#allocation4 + $0x2b8] sm:$0xff]
  %v5338 = vld [vmem:[#allocation4 + $0x2c0] sm:$0xff]
  %v5339 = vld [vmem:[#allocation4 + $0x2c8] sm:$0xff]
  %v5340 = vld [vmem:[#allocation4 + $0x2d0] sm:$0xff]
  %v5341 = vld [vmem:[#allocation4 + $0x2d8] sm:$0xff]
  %v5342 = vld [vmem:[#allocation4 + $0x2e0] sm:$0xff]
  %v5343 = vld [vmem:[#allocation4 + $0x2e8] sm:$0xff]
  %v5344 = vld [vmem:[#allocation4 + $0x2f0] sm:$0xff]
  %v5345 = vld [vmem:[#allocation4 + $0x2f8] sm:$0xff]
  %v5346 = vld [vmem:[#allocation4 + $0x300] sm:$0xff]
  %v5347 = vld [vmem:[#allocation4 + $0x308] sm:$0xff]
  %v5348 = vld [vmem:[#allocation4 + $0x310] sm:$0xff]
  %v5349 = vld [vmem:[#allocation4 + $0x318] sm:$0xff]
  %v5350 = vld [vmem:[#allocation4 + $0x320] sm:$0xff]
  %v5351 = vld [vmem:[#allocation4 + $0x328] sm:$0xff]
  %v5352 = vld [vmem:[#allocation4 + $0x330] sm:$0xff]
  %v5353 = vld [vmem:[#allocation4 + $0x338] sm:$0xff]
  %v5354 = vld [vmem:[#allocation4 + $0x340] sm:$0xff]
  %v5355 = vld [vmem:[#allocation4 + $0x348] sm:$0xff]
  %v5356 = vld [vmem:[#allocation4 + $0x350] sm:$0xff]
  %v5357 = vld [vmem:[#allocation4 + $0x358] sm:$0xff]
  %v5358 = vld [vmem:[#allocation4 + $0x360] sm:$0xff]
  %v5359 = vld [vmem:[#allocation4 + $0x368] sm:$0xff]
  %v5360 = vld [vmem:[#allocation4 + $0x370] sm:$0xff]
  %v5361 = vld [vmem:[#allocation4 + $0x378] sm:$0xff]
  %v5362 = vld [vmem:[#allocation4 + $0x380] sm:$0xff]
  %v5363 = vld [vmem:[#allocation4 + $0x388] sm:$0xff]
  %v5364 = vld [vmem:[#allocation4 + $0x390] sm:$0xff]
  %v5365 = vld [vmem:[#allocation4 + $0x398] sm:$0xff]
  %v5366 = vld [vmem:[#allocation4 + $0x3a0] sm:$0xff]
  %v5367 = vld [vmem:[#allocation4 + $0x3a8] sm:$0xff]
  %v5368 = vld [vmem:[#allocation4 + $0x3b0] sm:$0xff]
  %v5369 = vld [vmem:[#allocation4 + $0x3b8] sm:$0xff]
  %v5370 = vld [vmem:[#allocation4 + $0x3c0] sm:$0xff]
  %v5371 = vld [vmem:[#allocation4 + $0x3c8] sm:$0xff]
  %v5372 = vld [vmem:[#allocation4 + $0x3d0] sm:$0xff]
  %v5373 = vld [vmem:[#allocation4 + $0x3d8] sm:$0xff]
  %v5374 = vld [vmem:[#allocation4 + $0x3e0] sm:$0xff]
  %v5375 = vld [vmem:[#allocation4 + $0x3e8] sm:$0xff]
  %v5376 = vld [vmem:[#allocation4 + $0x3f0] sm:$0xff]
  %v5377 = vld [vmem:[#allocation4 + $0x3f8] sm:$0xff]
  %v5378 = vld [vmem:[#allocation4 + $0x400] sm:$0xff]
  %v5379 = vld [vmem:[#allocation4 + $0x408] sm:$0xff]
  %v5380 = vld [vmem:[#allocation4 + $0x410] sm:$0xff]
  %v5381 = vld [vmem:[#allocation4 + $0x418] sm:$0xff]
  %v5382 = vld [vmem:[#allocation4 + $0x420] sm:$0xff]
  %v5383 = vld [vmem:[#allocation4 + $0x428] sm:$0xff]
  %v5384 = vld [vmem:[#allocation4 + $0x430] sm:$0xff]
  %v5385 = vld [vmem:[#allocation4 + $0x438] sm:$0xff]
  %v5386 = vld [vmem:[#allocation4 + $0x440] sm:$0xff]
  %v5387 = vld [vmem:[#allocation4 + $0x448] sm:$0xff]
  %v5388 = vld [vmem:[#allocation4 + $0x450] sm:$0xff]
  %v5389 = vld [vmem:[#allocation4 + $0x458] sm:$0xff]
  %v5390 = vld [vmem:[#allocation4 + $0x460] sm:$0xff]
  %v5391 = vld [vmem:[#allocation4 + $0x468] sm:$0xff]
  %v5392 = vld [vmem:[#allocation4 + $0x470] sm:$0xff]
  %v5393 = vld [vmem:[#allocation4 + $0x478] sm:$0xff]
  %v5394 = vld [vmem:[#allocation4 + $0x480] sm:$0xff]
  %v5395 = vld [vmem:[#allocation4 + $0x488] sm:$0xff]
  %v5396 = vld [vmem:[#allocation4 + $0x490] sm:$0xff]
  %v5397 = vld [vmem:[#allocation4 + $0x498] sm:$0xff]
  %v5398 = vld [vmem:[#allocation4 + $0x4a0] sm:$0xff]
  %v5399 = vld [vmem:[#allocation4 + $0x4a8] sm:$0xff]
  %v5400 = vld [vmem:[#allocation4 + $0x4b0] sm:$0xff]
  %v5401 = vld [vmem:[#allocation4 + $0x4b8] sm:$0xff]
  %v5402 = vld [vmem:[#allocation4 + $0x4c0] sm:$0xff]
  %v5403 = vld [vmem:[#allocation4 + $0x4c8] sm:$0xff]
  %v5404 = vld [vmem:[#allocation4 + $0x4d0] sm:$0xff]
  %v5405 = vld [vmem:[#allocation4 + $0x4d8] sm:$0xff]
  %v5406 = vld [vmem:[#allocation4 + $0x4e0] sm:$0xff]
  %v5407 = vld [vmem:[#allocation4 + $0x4e8] sm:$0xff]
  %v5408 = vld [vmem:[#allocation4 + $0x4f0] sm:$0xff]
  %v5409 = vld [vmem:[#allocation4 + $0x4f8] sm:$0xff]
  %v5410 = vld [vmem:[#allocation4 + $0x500] sm:$0xff]
  %v5411 = vld [vmem:[#allocation4 + $0x508] sm:$0xff]
  %v5412 = vld [vmem:[#allocation4 + $0x510] sm:$0xff]
  %v5413 = vld [vmem:[#allocation4 + $0x518] sm:$0xff]
  %v5414 = vld [vmem:[#allocation4 + $0x520] sm:$0xff]
  %v5415 = vld [vmem:[#allocation4 + $0x528] sm:$0xff]
  %v5416 = vld [vmem:[#allocation4 + $0x530] sm:$0xff]
  %v5417 = vld [vmem:[#allocation4 + $0x538] sm:$0xff]
  %v5418 = vld [vmem:[#allocation4 + $0x540] sm:$0xff]
  %v5419 = vld [vmem:[#allocation4 + $0x548] sm:$0xff]
  %v5420 = vld [vmem:[#allocation4 + $0x550] sm:$0xff]
  %v5421 = vld [vmem:[#allocation4 + $0x558] sm:$0xff]
  %v5422 = vld [vmem:[#allocation4 + $0x560] sm:$0xff]
  %v5423 = vld [vmem:[#allocation4 + $0x568] sm:$0xff]
  %v5424 = vld [vmem:[#allocation4 + $0x570] sm:$0xff]
  %v5425 = vld [vmem:[#allocation4 + $0x578] sm:$0xff]
  %v5426 = vld [vmem:[#allocation4 + $0x580] sm:$0xff]
  %v5427 = vld [vmem:[#allocation4 + $0x588] sm:$0xff]
  %v5428 = vld [vmem:[#allocation4 + $0x590] sm:$0xff]
  %v5429 = vld [vmem:[#allocation4 + $0x598] sm:$0xff]
  %v5430 = vld [vmem:[#allocation4 + $0x5a0] sm:$0xff]
  %v5431 = vld [vmem:[#allocation4 + $0x5a8] sm:$0xff]
  %v5432 = vld [vmem:[#allocation4 + $0x5b0] sm:$0xff]
  %v5433 = vld [vmem:[#allocation4 + $0x5b8] sm:$0xff]
  %v5434 = vld [vmem:[#allocation4 + $0x5c0] sm:$0xff]
  %v5435 = vld [vmem:[#allocation4 + $0x5c8] sm:$0xff]
  %v5436 = vld [vmem:[#allocation4 + $0x5d0] sm:$0xff]
  %v5437 = vld [vmem:[#allocation4 + $0x5d8] sm:$0xff]
  %v5438 = vld [vmem:[#allocation4 + $0x5e0] sm:$0xff]
  %v5439 = vld [vmem:[#allocation4 + $0x5e8] sm:$0xff]
  %v5440 = vld [vmem:[#allocation4 + $0x5f0] sm:$0xff]
  %v5441 = vld [vmem:[#allocation4 + $0x5f8] sm:$0xff]
  %v5442 = vld [vmem:[#allocation4 + $0x600] sm:$0xff]
  %v5443 = vld [vmem:[#allocation4 + $0x608] sm:$0xff]
  %v5444 = vld [vmem:[#allocation4 + $0x610] sm:$0xff]
  %v5445 = vld [vmem:[#allocation4 + $0x618] sm:$0xff]
  %v5446 = vld [vmem:[#allocation4 + $0x620] sm:$0xff]
  %v5447 = vld [vmem:[#allocation4 + $0x628] sm:$0xff]
  %v5448 = vld [vmem:[#allocation4 + $0x630] sm:$0xff]
  %v5449 = vld [vmem:[#allocation4 + $0x638] sm:$0xff]
  %v5450 = vld [vmem:[#allocation4 + $0x640] sm:$0xff]
  %v5451 = vld [vmem:[#allocation4 + $0x648] sm:$0xff]
  %v5452 = vld [vmem:[#allocation4 + $0x650] sm:$0xff]
  %v5453 = vld [vmem:[#allocation4 + $0x658] sm:$0xff]
  %v5454 = vld [vmem:[#allocation4 + $0x660] sm:$0xff]
  %v5455 = vld [vmem:[#allocation4 + $0x668] sm:$0xff]
  %v5456 = vld [vmem:[#allocation4 + $0x670] sm:$0xff]
  %v5457 = vld [vmem:[#allocation4 + $0x678] sm:$0xff]
  %v5458 = vld [vmem:[#allocation4 + $0x680] sm:$0xff]
  %v5459 = vld [vmem:[#allocation4 + $0x688] sm:$0xff]
  %v5460 = vld [vmem:[#allocation4 + $0x690] sm:$0xff]
  %v5461 = vld [vmem:[#allocation4 + $0x698] sm:$0xff]
  %v5462 = vld [vmem:[#allocation4 + $0x6a0] sm:$0xff]
  %v5463 = vld [vmem:[#allocation4 + $0x6a8] sm:$0xff]
  %v5464 = vld [vmem:[#allocation4 + $0x6b0] sm:$0xff]
  %v5465 = vld [vmem:[#allocation4 + $0x6b8] sm:$0xff]
  %v5466 = vld [vmem:[#allocation4 + $0x6c0] sm:$0xff]
  %v5467 = vld [vmem:[#allocation4 + $0x6c8] sm:$0xff]
  %v5468 = vld [vmem:[#allocation4 + $0x6d0] sm:$0xff]
  %v5469 = vld [vmem:[#allocation4 + $0x6d8] sm:$0xff]
  %v5470 = vld [vmem:[#allocation4 + $0x6e0] sm:$0xff]
  %v5471 = vld [vmem:[#allocation4 + $0x6e8] sm:$0xff]
  %v5472 = vld [vmem:[#allocation4 + $0x6f0] sm:$0xff]
  %v5473 = vld [vmem:[#allocation4 + $0x6f8] sm:$0xff]
  %v5474 = vld [vmem:[#allocation4 + $0x700] sm:$0xff]
  %v5475 = vld [vmem:[#allocation4 + $0x708] sm:$0xff]
  %v5476 = vld [vmem:[#allocation4 + $0x710] sm:$0xff]
  %v5477 = vld [vmem:[#allocation4 + $0x718] sm:$0xff]
  %v5478 = vld [vmem:[#allocation4 + $0x720] sm:$0xff]
  %v5479 = vld [vmem:[#allocation4 + $0x728] sm:$0xff]
  %v5480 = vld [vmem:[#allocation4 + $0x730] sm:$0xff]
  %v5481 = vld [vmem:[#allocation4 + $0x738] sm:$0xff]
  %v5482 = vld [vmem:[#allocation4 + $0x740] sm:$0xff]
  %v5483 = vld [vmem:[#allocation4 + $0x748] sm:$0xff]
  %v5484 = vld [vmem:[#allocation4 + $0x750] sm:$0xff]
  %v5485 = vld [vmem:[#allocation4 + $0x758] sm:$0xff]
  %v5486 = vld [vmem:[#allocation4 + $0x760] sm:$0xff]
  %v5487 = vld [vmem:[#allocation4 + $0x768] sm:$0xff]
  %v5488 = vld [vmem:[#allocation4 + $0x770] sm:$0xff]
  %v5489 = vld [vmem:[#allocation4 + $0x778] sm:$0xff]
  %v5490 = vld [vmem:[#allocation4 + $0x780] sm:$0xff]
  %v5491 = vld [vmem:[#allocation4 + $0x788] sm:$0xff]
  %v5492 = vld [vmem:[#allocation4 + $0x790] sm:$0xff]
  %v5493 = vld [vmem:[#allocation4 + $0x798] sm:$0xff]
  %v5494 = vld [vmem:[#allocation4 + $0x7a0] sm:$0xff]
  %v5495 = vld [vmem:[#allocation4 + $0x7a8] sm:$0xff]
  %v5496 = vld [vmem:[#allocation4 + $0x7b0] sm:$0xff]
  %v5497 = vld [vmem:[#allocation4 + $0x7b8] sm:$0xff]
  %v5498 = vld [vmem:[#allocation4 + $0x7c0] sm:$0xff]
  %v5499 = vld [vmem:[#allocation4 + $0x7c8] sm:$0xff]
  %v5500 = vld [vmem:[#allocation4 + $0x7d0] sm:$0xff]
  %v5501 = vld [vmem:[#allocation4 + $0x7d8] sm:$0xff]
  %v5502 = vld [vmem:[#allocation4 + $0x7e0] sm:$0xff]
  %v5503 = vld [vmem:[#allocation4 + $0x7e8] sm:$0xff]
  %v5504 = vld [vmem:[#allocation4 + $0x7f0] sm:$0xff]
  %v5505 = vld [vmem:[#allocation4 + $0x7f8] sm:$0xff]
  %v5506 = vld [vmem:[#allocation4 + $0x800] sm:$0xff]
  %v5507 = vld [vmem:[#allocation4 + $0x808] sm:$0xff]
  %v5508 = vld [vmem:[#allocation4 + $0x810] sm:$0xff]
  %v5509 = vld [vmem:[#allocation4 + $0x818] sm:$0xff]
  %v5510 = vld [vmem:[#allocation4 + $0x820] sm:$0xff]
  %v5511 = vld [vmem:[#allocation4 + $0x828] sm:$0xff]
  %v5512 = vld [vmem:[#allocation4 + $0x830] sm:$0xff]
  %v5513 = vld [vmem:[#allocation4 + $0x838] sm:$0xff]
  %v5514 = vld [vmem:[#allocation4 + $0x840] sm:$0xff]
  %v5515 = vld [vmem:[#allocation4 + $0x848] sm:$0xff]
  %v5516 = vld [vmem:[#allocation4 + $0x850] sm:$0xff]
  %v5517 = vld [vmem:[#allocation4 + $0x858] sm:$0xff]
  %v5518 = vld [vmem:[#allocation4 + $0x860] sm:$0xff]
  %v5519 = vld [vmem:[#allocation4 + $0x868] sm:$0xff]
  %v5520 = vld [vmem:[#allocation4 + $0x870] sm:$0xff]
  %v5521 = vld [vmem:[#allocation4 + $0x878] sm:$0xff]
  %v5522 = vld [vmem:[#allocation4 + $0x880] sm:$0xff]
  %v5523 = vld [vmem:[#allocation4 + $0x888] sm:$0xff]
  %v5524 = vld [vmem:[#allocation4 + $0x890] sm:$0xff]
  %v5525 = vld [vmem:[#allocation4 + $0x898] sm:$0xff]
  %v5526 = vld [vmem:[#allocation4 + $0x8a0] sm:$0xff]
  %v5527 = vld [vmem:[#allocation4 + $0x8a8] sm:$0xff]
  %v5528 = vld [vmem:[#allocation4 + $0x8b0] sm:$0xff]
  %v5529 = vld [vmem:[#allocation4 + $0x8b8] sm:$0xff]
  %v5530 = vld [vmem:[#allocation4 + $0x8c0] sm:$0xff]
  %v5531 = vld [vmem:[#allocation4 + $0x8c8] sm:$0xff]
  %v5532 = vld [vmem:[#allocation4 + $0x8d0] sm:$0xff]
  %v5533 = vld [vmem:[#allocation4 + $0x8d8] sm:$0xff]
  %v5534 = vld [vmem:[#allocation4 + $0x8e0] sm:$0xff]
  %v5535 = vld [vmem:[#allocation4 + $0x8e8] sm:$0xff]
  %v5536 = vld [vmem:[#allocation4 + $0x8f0] sm:$0xff]
  %v5537 = vld [vmem:[#allocation4 + $0x8f8] sm:$0xff]
  %v5538 = vld [vmem:[#allocation4 + $0x900] sm:$0xff]
  %v5539 = vld [vmem:[#allocation4 + $0x908] sm:$0xff]
  %v5540 = vld [vmem:[#allocation4 + $0x910] sm:$0xff]
  %v5541 = vld [vmem:[#allocation4 + $0x918] sm:$0xff]
  %v5542 = vld [vmem:[#allocation4 + $0x920] sm:$0xff]
  %v5543 = vld [vmem:[#allocation4 + $0x928] sm:$0xff]
  %v5544 = vld [vmem:[#allocation4 + $0x930] sm:$0xff]
  %v5545 = vld [vmem:[#allocation4 + $0x938] sm:$0xff]
  %v5546 = vld [vmem:[#allocation4 + $0x940] sm:$0xff]
  %v5547 = vld [vmem:[#allocation4 + $0x948] sm:$0xff]
  %v5548 = vld [vmem:[#allocation4 + $0x950] sm:$0xff]
  %v5549 = vld [vmem:[#allocation4 + $0x958] sm:$0xff]
  %v5550 = vld [vmem:[%s4] sm:$0xff]
  %v5551 = vld [vmem:[%s4 + $0x8] sm:$0xff]
  %v5552 = vld [vmem:[%s4 + $0x10] sm:$0xff]
  %v5553 = vld [vmem:[%s4 + $0x18] sm:$0xff]
  %v5554 = vld [vmem:[%s4 + $0x20] sm:$0xff]
  %v5555 = vld [vmem:[%s4 + $0x28] sm:$0xff]
  %v5556 = vld [vmem:[%s4 + $0x30] sm:$0xff]
  %v5557 = vld [vmem:[%s4 + $0x38] sm:$0xff]
  %v5558 = vld [vmem:[%s4 + $0x40] sm:$0xff]
  %v5559 = vld [vmem:[%s4 + $0x48] sm:$0xff]
  %v5560 = vld [vmem:[%s4 + $0x50] sm:$0xff]
  %v5561 = vld [vmem:[%s4 + $0x58] sm:$0xff]
  %v5562 = vld [vmem:[%s4 + $0x60] sm:$0xff]
  %v5563 = vld [vmem:[%s4 + $0x68] sm:$0xff]
  %v5564 = vld [vmem:[%s4 + $0x70] sm:$0xff]
  %v5565 = vld [vmem:[%s4 + $0x78] sm:$0xff]
  %5567 = vset.pattern.permute.xlu0 0
  %5568 = vperm.xlu0 %5567, %v5550
  %v5569 = vpop.permute.xlu0 %5568
  %5572 = vset.pattern.permute.xlu0 0
  %5573 = vperm.xlu0 %5572, %v5551
  %v5574 = vpop.permute.xlu0 %5573
  %5577 = vset.pattern.permute.xlu0 0
  %5578 = vperm.xlu0 %5577, %v5552
  %v5579 = vpop.permute.xlu0 %5578
  %5582 = vset.pattern.permute.xlu0 0
  %5583 = vperm.xlu0 %5582, %v5553
  %v5584 = vpop.permute.xlu0 %5583
  %5587 = vset.pattern.permute.xlu0 0
  %5588 = vperm.xlu0 %5587, %v5554
  %v5589 = vpop.permute.xlu0 %5588
  %5592 = vset.pattern.permute.xlu0 0
  %5593 = vperm.xlu0 %5592, %v5555
  %v5594 = vpop.permute.xlu0 %5593
  %5597 = vset.pattern.permute.xlu0 0
  %5598 = vperm.xlu0 %5597, %v5556
  %v5599 = vpop.permute.xlu0 %5598
  %5602 = vset.pattern.permute.xlu0 0
  %5603 = vperm.xlu0 %5602, %v5557
  %v5604 = vpop.permute.xlu0 %5603
  %5607 = vset.pattern.permute.xlu0 0
  %5608 = vperm.xlu0 %5607, %v5558
  %v5609 = vpop.permute.xlu0 %5608
  %5612 = vset.pattern.permute.xlu0 0
  %5613 = vperm.xlu0 %5612, %v5559
  %v5614 = vpop.permute.xlu0 %5613
  %5617 = vset.pattern.permute.xlu0 0
  %5618 = vperm.xlu0 %5617, %v5560
  %v5619 = vpop.permute.xlu0 %5618
  %5622 = vset.pattern.permute.xlu0 0
  %5623 = vperm.xlu0 %5622, %v5561
  %v5624 = vpop.permute.xlu0 %5623
  %5627 = vset.pattern.permute.xlu0 0
  %5628 = vperm.xlu0 %5627, %v5562
  %v5629 = vpop.permute.xlu0 %5628
  %5632 = vset.pattern.permute.xlu0 0
  %5633 = vperm.xlu0 %5632, %v5563
  %v5634 = vpop.permute.xlu0 %5633
  %5637 = vset.pattern.permute.xlu0 0
  %5638 = vperm.xlu0 %5637, %v5564
  %v5639 = vpop.permute.xlu0 %5638
  %5642 = vset.pattern.permute.xlu0 0
  %5643 = vperm.xlu0 %5642, %v5565
  %v5644 = vpop.permute.xlu0 %5643
  %vm5646 = vcmask 392192
  %v5648 = vsel %vm5646, %v5099, 0
  %v5651 = vsel %vm5646, %v5109, 0
  %v5654 = vsel %vm5646, %v5119, 0
  %v5657 = vsel %vm5646, %v5129, 0
  %v5660 = vsel %vm5646, %v5139, 0
  %v5663 = vsel %vm5646, %v5149, 0
  %v5666 = vsel %vm5646, %v5159, 0
  %v5669 = vsel %vm5646, %v5169, 0
  %v5672 = vsel %vm5646, %v5179, 0
  %v5675 = vsel %vm5646, %v5189, 0
  %v5678 = vsel %vm5646, %v5199, 0
  %v5681 = vsel %vm5646, %v5209, 0
  %v5684 = vsel %vm5646, %v5219, 0
  %v5687 = vsel %vm5646, %v5229, 0
  %v5690 = vsel %vm5646, %v5239, 0
  %v5693 = vsel %vm5646, %v5249, 0
  %5695 = vmatpush.msra.mxu0 %v5280
  %5696 = vmatpush.msra.mxu0 %v5278
  %5697 = vmatpush.msra.mxu0 %v5276
  %5698 = vmatpush.msra.mxu0 %v5274
  %5699 = vmatpush.msra.mxu0 %v5272
  %5700 = vmatpush.msra.mxu0 %v5270
  %5701 = vmatpush.msra.mxu0 %v5268
  %5702 = vmatpush.msra.mxu0 %v5266
  %5703 = vmatpush.msra.mxu0 %v5264
  %5704 = vmatpush.msra.mxu0 %v5262
  %5705 = vmatpush.msra.mxu0 %v5260
  %5706 = vmatpush.msra.mxu0 %v5258
  %5707 = vmatpush.msra.mxu0 %v5256
  %5708 = vmatpush.msra.mxu0 %v5254
  %5709 = vmatpush.msra.mxu0 %v5252
  %5710 = vmatpush.msra.mxu0 %v5250
  %5711 = vmatmul.f32.gmra.mxu0 %v5090
  %v5712 = vpop.f32.mrf.mxu0
  %v5713 = vadd.f32 %v5569, %v5712
  %5714 = vmatmul.f32.gmra.mxu0 %v5100
  %v5715 = vpop.f32.mrf.mxu0
  %v5716 = vadd.f32 %v5574, %v5715
  %5717 = vmatmul.f32.gmra.mxu0 %v5110
  %v5718 = vpop.f32.mrf.mxu0
  %v5719 = vadd.f32 %v5579, %v5718
  %5720 = vmatmul.f32.gmra.mxu0 %v5120
  %v5721 = vpop.f32.mrf.mxu0
  %v5722 = vadd.f32 %v5584, %v5721
  %5723 = vmatmul.f32.gmra.mxu0 %v5130
  %v5724 = vpop.f32.mrf.mxu0
  %v5725 = vadd.f32 %v5589, %v5724
  %5726 = vmatmul.f32.gmra.mxu0 %v5140
  %v5727 = vpop.f32.mrf.mxu0
  %v5728 = vadd.f32 %v5594, %v5727
  %5729 = vmatmul.f32.gmra.mxu0 %v5150
  %v5730 = vpop.f32.mrf.mxu0
  %v5731 = vadd.f32 %v5599, %v5730
  %5732 = vmatmul.f32.gmra.mxu0 %v5160
  %v5733 = vpop.f32.mrf.mxu0
  %v5734 = vadd.f32 %v5604, %v5733
  %5735 = vmatmul.f32.gmra.mxu0 %v5170
  %v5736 = vpop.f32.mrf.mxu0
  %v5737 = vadd.f32 %v5609, %v5736
  %5738 = vmatmul.f32.gmra.mxu0 %v5180
  %v5739 = vpop.f32.mrf.mxu0
  %v5740 = vadd.f32 %v5614, %v5739
  %5741 = vmatmul.f32.gmra.mxu0 %v5190
  %v5742 = vpop.f32.mrf.mxu0
  %v5743 = vadd.f32 %v5619, %v5742
  %5744 = vmatmul.f32.gmra.mxu0 %v5200
  %v5745 = vpop.f32.mrf.mxu0
  %v5746 = vadd.f32 %v5624, %v5745
  %5747 = vmatmul.f32.gmra.mxu0 %v5210
  %v5748 = vpop.f32.mrf.mxu0
  %v5749 = vadd.f32 %v5629, %v5748
  %5750 = vmatmul.f32.gmra.mxu0 %v5220
  %v5751 = vpop.f32.mrf.mxu0
  %v5752 = vadd.f32 %v5634, %v5751
  %5753 = vmatmul.f32.gmra.mxu0 %v5230
  %v5754 = vpop.f32.mrf.mxu0
  %v5755 = vadd.f32 %v5639, %v5754
  %5756 = vmatmul.f32.gmra.mxu0 %v5240
  %v5757 = vpop.f32.mrf.mxu0
  %v5758 = vadd.f32 %v5644, %v5757
  %5759 = vdwg.mxu0
  %5760 = vmatpush.msra.mxu0 %v5312
  %5761 = vmatpush.msra.mxu0 %v5310
  %5762 = vmatpush.msra.mxu0 %v5308
  %5763 = vmatpush.msra.mxu0 %v5306
  %5764 = vmatpush.msra.mxu0 %v5304
  %5765 = vmatpush.msra.mxu0 %v5302
  %5766 = vmatpush.msra.mxu0 %v5300
  %5767 = vmatpush.msra.mxu0 %v5298
  %5768 = vmatpush.msra.mxu0 %v5296
  %5769 = vmatpush.msra.mxu0 %v5294
  %5770 = vmatpush.msra.mxu0 %v5292
  %5771 = vmatpush.msra.mxu0 %v5290
  %5772 = vmatpush.msra.mxu0 %v5288
  %5773 = vmatpush.msra.mxu0 %v5286
  %5774 = vmatpush.msra.mxu0 %v5284
  %5775 = vmatpush.msra.mxu0 %v5282
  %5776 = vmatmul.f32.gmra.mxu0 %v5091
  %v5777 = vpop.f32.mrf.mxu0
  %v5778 = vadd.f32 %v5713, %v5777
  %5779 = vmatmul.f32.gmra.mxu0 %v5101
  %v5780 = vpop.f32.mrf.mxu0
  %v5781 = vadd.f32 %v5716, %v5780
  %5782 = vmatmul.f32.gmra.mxu0 %v5111
  %v5783 = vpop.f32.mrf.mxu0
  %v5784 = vadd.f32 %v5719, %v5783
  %5785 = vmatmul.f32.gmra.mxu0 %v5121
  %v5786 = vpop.f32.mrf.mxu0
  %v5787 = vadd.f32 %v5722, %v5786
  %5788 = vmatmul.f32.gmra.mxu0 %v5131
  %v5789 = vpop.f32.mrf.mxu0
  %v5790 = vadd.f32 %v5725, %v5789
  %5791 = vmatmul.f32.gmra.mxu0 %v5141
  %v5792 = vpop.f32.mrf.mxu0
  %v5793 = vadd.f32 %v5728, %v5792
  %5794 = vmatmul.f32.gmra.mxu0 %v5151
  %v5795 = vpop.f32.mrf.mxu0
  %v5796 = vadd.f32 %v5731, %v5795
  %5797 = vmatmul.f32.gmra.mxu0 %v5161
  %v5798 = vpop.f32.mrf.mxu0
  %v5799 = vadd.f32 %v5734, %v5798
  %5800 = vmatmul.f32.gmra.mxu0 %v5171
  %v5801 = vpop.f32.mrf.mxu0
  %v5802 = vadd.f32 %v5737, %v5801
  %5803 = vmatmul.f32.gmra.mxu0 %v5181
  %v5804 = vpop.f32.mrf.mxu0
  %v5805 = vadd.f32 %v5740, %v5804
  %5806 = vmatmul.f32.gmra.mxu0 %v5191
  %v5807 = vpop.f32.mrf.mxu0
  %v5808 = vadd.f32 %v5743, %v5807
  %5809 = vmatmul.f32.gmra.mxu0 %v5201
  %v5810 = vpop.f32.mrf.mxu0
  %v5811 = vadd.f32 %v5746, %v5810
  %5812 = vmatmul.f32.gmra.mxu0 %v5211
  %v5813 = vpop.f32.mrf.mxu0
  %v5814 = vadd.f32 %v5749, %v5813
  %5815 = vmatmul.f32.gmra.mxu0 %v5221
  %v5816 = vpop.f32.mrf.mxu0
  %v5817 = vadd.f32 %v5752, %v5816
  %5818 = vmatmul.f32.gmra.mxu0 %v5231
  %v5819 = vpop.f32.mrf.mxu0
  %v5820 = vadd.f32 %v5755, %v5819
  %5821 = vmatmul.f32.gmra.mxu0 %v5241
  %v5822 = vpop.f32.mrf.mxu0
  %v5823 = vadd.f32 %v5758, %v5822
  %5824 = vdwg.mxu0
  %5825 = vmatpush.msra.mxu0 %v5344
  %5826 = vmatpush.msra.mxu0 %v5342
  %5827 = vmatpush.msra.mxu0 %v5340
  %5828 = vmatpush.msra.mxu0 %v5338
  %5829 = vmatpush.msra.mxu0 %v5336
  %5830 = vmatpush.msra.mxu0 %v5334
  %5831 = vmatpush.msra.mxu0 %v5332
  %5832 = vmatpush.msra.mxu0 %v5330
  %5833 = vmatpush.msra.mxu0 %v5328
  %5834 = vmatpush.msra.mxu0 %v5326
  %5835 = vmatpush.msra.mxu0 %v5324
  %5836 = vmatpush.msra.mxu0 %v5322
  %5837 = vmatpush.msra.mxu0 %v5320
  %5838 = vmatpush.msra.mxu0 %v5318
  %5839 = vmatpush.msra.mxu0 %v5316
  %5840 = vmatpush.msra.mxu0 %v5314
  %5841 = vmatmul.f32.gmra.mxu0 %v5092
  %v5842 = vpop.f32.mrf.mxu0
  %v5843 = vadd.f32 %v5778, %v5842
  %5844 = vmatmul.f32.gmra.mxu0 %v5102
  %v5845 = vpop.f32.mrf.mxu0
  %v5846 = vadd.f32 %v5781, %v5845
  %5847 = vmatmul.f32.gmra.mxu0 %v5112
  %v5848 = vpop.f32.mrf.mxu0
  %v5849 = vadd.f32 %v5784, %v5848
  %5850 = vmatmul.f32.gmra.mxu0 %v5122
  %v5851 = vpop.f32.mrf.mxu0
  %v5852 = vadd.f32 %v5787, %v5851
  %5853 = vmatmul.f32.gmra.mxu0 %v5132
  %v5854 = vpop.f32.mrf.mxu0
  %v5855 = vadd.f32 %v5790, %v5854
  %5856 = vmatmul.f32.gmra.mxu0 %v5142
  %v5857 = vpop.f32.mrf.mxu0
  %v5858 = vadd.f32 %v5793, %v5857
  %5859 = vmatmul.f32.gmra.mxu0 %v5152
  %v5860 = vpop.f32.mrf.mxu0
  %v5861 = vadd.f32 %v5796, %v5860
  %5862 = vmatmul.f32.gmra.mxu0 %v5162
  %v5863 = vpop.f32.mrf.mxu0
  %v5864 = vadd.f32 %v5799, %v5863
  %5865 = vmatmul.f32.gmra.mxu0 %v5172
  %v5866 = vpop.f32.mrf.mxu0
  %v5867 = vadd.f32 %v5802, %v5866
  %5868 = vmatmul.f32.gmra.mxu0 %v5182
  %v5869 = vpop.f32.mrf.mxu0
  %v5870 = vadd.f32 %v5805, %v5869
  %5871 = vmatmul.f32.gmra.mxu0 %v5192
  %v5872 = vpop.f32.mrf.mxu0
  %v5873 = vadd.f32 %v5808, %v5872
  %5874 = vmatmul.f32.gmra.mxu0 %v5202
  %v5875 = vpop.f32.mrf.mxu0
  %v5876 = vadd.f32 %v5811, %v5875
  %5877 = vmatmul.f32.gmra.mxu0 %v5212
  %v5878 = vpop.f32.mrf.mxu0
  %v5879 = vadd.f32 %v5814, %v5878
  %5880 = vmatmul.f32.gmra.mxu0 %v5222
  %v5881 = vpop.f32.mrf.mxu0
  %v5882 = vadd.f32 %v5817, %v5881
  %5883 = vmatmul.f32.gmra.mxu0 %v5232
  %v5884 = vpop.f32.mrf.mxu0
  %v5885 = vadd.f32 %v5820, %v5884
  %5886 = vmatmul.f32.gmra.mxu0 %v5242
  %v5887 = vpop.f32.mrf.mxu0
  %v5888 = vadd.f32 %v5823, %v5887
  %5889 = vdwg.mxu0
  %5890 = vmatpush.msra.mxu0 %v5376
  %5891 = vmatpush.msra.mxu0 %v5374
  %5892 = vmatpush.msra.mxu0 %v5372
  %5893 = vmatpush.msra.mxu0 %v5370
  %5894 = vmatpush.msra.mxu0 %v5368
  %5895 = vmatpush.msra.mxu0 %v5366
  %5896 = vmatpush.msra.mxu0 %v5364
  %5897 = vmatpush.msra.mxu0 %v5362
  %5898 = vmatpush.msra.mxu0 %v5360
  %5899 = vmatpush.msra.mxu0 %v5358
  %5900 = vmatpush.msra.mxu0 %v5356
  %5901 = vmatpush.msra.mxu0 %v5354
  %5902 = vmatpush.msra.mxu0 %v5352
  %5903 = vmatpush.msra.mxu0 %v5350
  %5904 = vmatpush.msra.mxu0 %v5348
  %5905 = vmatpush.msra.mxu0 %v5346
  %5906 = vmatmul.f32.gmra.mxu0 %v5093
  %v5907 = vpop.f32.mrf.mxu0
  %v5908 = vadd.f32 %v5843, %v5907
  %5909 = vmatmul.f32.gmra.mxu0 %v5103
  %v5910 = vpop.f32.mrf.mxu0
  %v5911 = vadd.f32 %v5846, %v5910
  %5912 = vmatmul.f32.gmra.mxu0 %v5113
  %v5913 = vpop.f32.mrf.mxu0
  %v5914 = vadd.f32 %v5849, %v5913
  %5915 = vmatmul.f32.gmra.mxu0 %v5123
  %v5916 = vpop.f32.mrf.mxu0
  %v5917 = vadd.f32 %v5852, %v5916
  %5918 = vmatmul.f32.gmra.mxu0 %v5133
  %v5919 = vpop.f32.mrf.mxu0
  %v5920 = vadd.f32 %v5855, %v5919
  %5921 = vmatmul.f32.gmra.mxu0 %v5143
  %v5922 = vpop.f32.mrf.mxu0
  %v5923 = vadd.f32 %v5858, %v5922
  %5924 = vmatmul.f32.gmra.mxu0 %v5153
  %v5925 = vpop.f32.mrf.mxu0
  %v5926 = vadd.f32 %v5861, %v5925
  %5927 = vmatmul.f32.gmra.mxu0 %v5163
  %v5928 = vpop.f32.mrf.mxu0
  %v5929 = vadd.f32 %v5864, %v5928
  %5930 = vmatmul.f32.gmra.mxu0 %v5173
  %v5931 = vpop.f32.mrf.mxu0
  %v5932 = vadd.f32 %v5867, %v5931
  %5933 = vmatmul.f32.gmra.mxu0 %v5183
  %v5934 = vpop.f32.mrf.mxu0
  %v5935 = vadd.f32 %v5870, %v5934
  %5936 = vmatmul.f32.gmra.mxu0 %v5193
  %v5937 = vpop.f32.mrf.mxu0
  %v5938 = vadd.f32 %v5873, %v5937
  %5939 = vmatmul.f32.gmra.mxu0 %v5203
  %v5940 = vpop.f32.mrf.mxu0
  %v5941 = vadd.f32 %v5876, %v5940
  %5942 = vmatmul.f32.gmra.mxu0 %v5213
  %v5943 = vpop.f32.mrf.mxu0
  %v5944 = vadd.f32 %v5879, %v5943
  %5945 = vmatmul.f32.gmra.mxu0 %v5223
  %v5946 = vpop.f32.mrf.mxu0
  %v5947 = vadd.f32 %v5882, %v5946
  %5948 = vmatmul.f32.gmra.mxu0 %v5233
  %v5949 = vpop.f32.mrf.mxu0
  %v5950 = vadd.f32 %v5885, %v5949
  %5951 = vmatmul.f32.gmra.mxu0 %v5243
  %v5952 = vpop.f32.mrf.mxu0
  %v5953 = vadd.f32 %v5888, %v5952
  %5954 = vdwg.mxu0
  %5955 = vmatpush.msra.mxu0 %v5408
  %5956 = vmatpush.msra.mxu0 %v5406
  %5957 = vmatpush.msra.mxu0 %v5404
  %5958 = vmatpush.msra.mxu0 %v5402
  %5959 = vmatpush.msra.mxu0 %v5400
  %5960 = vmatpush.msra.mxu0 %v5398
  %5961 = vmatpush.msra.mxu0 %v5396
  %5962 = vmatpush.msra.mxu0 %v5394
  %5963 = vmatpush.msra.mxu0 %v5392
  %5964 = vmatpush.msra.mxu0 %v5390
  %5965 = vmatpush.msra.mxu0 %v5388
  %5966 = vmatpush.msra.mxu0 %v5386
  %5967 = vmatpush.msra.mxu0 %v5384
  %5968 = vmatpush.msra.mxu0 %v5382
  %5969 = vmatpush.msra.mxu0 %v5380
  %5970 = vmatpush.msra.mxu0 %v5378
  %5971 = vmatmul.f32.gmra.mxu0 %v5094
  %v5972 = vpop.f32.mrf.mxu0
  %v5973 = vadd.f32 %v5908, %v5972
  %5974 = vmatmul.f32.gmra.mxu0 %v5104
  %v5975 = vpop.f32.mrf.mxu0
  %v5976 = vadd.f32 %v5911, %v5975
  %5977 = vmatmul.f32.gmra.mxu0 %v5114
  %v5978 = vpop.f32.mrf.mxu0
  %v5979 = vadd.f32 %v5914, %v5978
  %5980 = vmatmul.f32.gmra.mxu0 %v5124
  %v5981 = vpop.f32.mrf.mxu0
  %v5982 = vadd.f32 %v5917, %v5981
  %5983 = vmatmul.f32.gmra.mxu0 %v5134
  %v5984 = vpop.f32.mrf.mxu0
  %v5985 = vadd.f32 %v5920, %v5984
  %5986 = vmatmul.f32.gmra.mxu0 %v5144
  %v5987 = vpop.f32.mrf.mxu0
  %v5988 = vadd.f32 %v5923, %v5987
  %5989 = vmatmul.f32.gmra.mxu0 %v5154
  %v5990 = vpop.f32.mrf.mxu0
  %v5991 = vadd.f32 %v5926, %v5990
  %5992 = vmatmul.f32.gmra.mxu0 %v5164
  %v5993 = vpop.f32.mrf.mxu0
  %v5994 = vadd.f32 %v5929, %v5993
  %5995 = vmatmul.f32.gmra.mxu0 %v5174
  %v5996 = vpop.f32.mrf.mxu0
  %v5997 = vadd.f32 %v5932, %v5996
  %5998 = vmatmul.f32.gmra.mxu0 %v5184
  %v5999 = vpop.f32.mrf.mxu0
  %v6000 = vadd.f32 %v5935, %v5999
  %6001 = vmatmul.f32.gmra.mxu0 %v5194
  %v6002 = vpop.f32.mrf.mxu0
  %v6003 = vadd.f32 %v5938, %v6002
  %6004 = vmatmul.f32.gmra.mxu0 %v5204
  %v6005 = vpop.f32.mrf.mxu0
  %v6006 = vadd.f32 %v5941, %v6005
  %6007 = vmatmul.f32.gmra.mxu0 %v5214
  %v6008 = vpop.f32.mrf.mxu0
  %v6009 = vadd.f32 %v5944, %v6008
  %6010 = vmatmul.f32.gmra.mxu0 %v5224
  %v6011 = vpop.f32.mrf.mxu0
  %v6012 = vadd.f32 %v5947, %v6011
  %6013 = vmatmul.f32.gmra.mxu0 %v5234
  %v6014 = vpop.f32.mrf.mxu0
  %v6015 = vadd.f32 %v5950, %v6014
  %6016 = vmatmul.f32.gmra.mxu0 %v5244
  %v6017 = vpop.f32.mrf.mxu0
  %v6018 = vadd.f32 %v5953, %v6017
  %6019 = vdwg.mxu0
  %6020 = vmatpush.msra.mxu0 %v5440
  %6021 = vmatpush.msra.mxu0 %v5438
  %6022 = vmatpush.msra.mxu0 %v5436
  %6023 = vmatpush.msra.mxu0 %v5434
  %6024 = vmatpush.msra.mxu0 %v5432
  %6025 = vmatpush.msra.mxu0 %v5430
  %6026 = vmatpush.msra.mxu0 %v5428
  %6027 = vmatpush.msra.mxu0 %v5426
  %6028 = vmatpush.msra.mxu0 %v5424
  %6029 = vmatpush.msra.mxu0 %v5422
  %6030 = vmatpush.msra.mxu0 %v5420
  %6031 = vmatpush.msra.mxu0 %v5418
  %6032 = vmatpush.msra.mxu0 %v5416
  %6033 = vmatpush.msra.mxu0 %v5414
  %6034 = vmatpush.msra.mxu0 %v5412
  %6035 = vmatpush.msra.mxu0 %v5410
  %6036 = vmatmul.f32.gmra.mxu0 %v5095
  %v6037 = vpop.f32.mrf.mxu0
  %v6038 = vadd.f32 %v5973, %v6037
  %6039 = vmatmul.f32.gmra.mxu0 %v5105
  %v6040 = vpop.f32.mrf.mxu0
  %v6041 = vadd.f32 %v5976, %v6040
  %6042 = vmatmul.f32.gmra.mxu0 %v5115
  %v6043 = vpop.f32.mrf.mxu0
  %v6044 = vadd.f32 %v5979, %v6043
  %6045 = vmatmul.f32.gmra.mxu0 %v5125
  %v6046 = vpop.f32.mrf.mxu0
  %v6047 = vadd.f32 %v5982, %v6046
  %6048 = vmatmul.f32.gmra.mxu0 %v5135
  %v6049 = vpop.f32.mrf.mxu0
  %v6050 = vadd.f32 %v5985, %v6049
  %6051 = vmatmul.f32.gmra.mxu0 %v5145
  %v6052 = vpop.f32.mrf.mxu0
  %v6053 = vadd.f32 %v5988, %v6052
  %6054 = vmatmul.f32.gmra.mxu0 %v5155
  %v6055 = vpop.f32.mrf.mxu0
  %v6056 = vadd.f32 %v5991, %v6055
  %6057 = vmatmul.f32.gmra.mxu0 %v5165
  %v6058 = vpop.f32.mrf.mxu0
  %v6059 = vadd.f32 %v5994, %v6058
  %6060 = vmatmul.f32.gmra.mxu0 %v5175
  %v6061 = vpop.f32.mrf.mxu0
  %v6062 = vadd.f32 %v5997, %v6061
  %6063 = vmatmul.f32.gmra.mxu0 %v5185
  %v6064 = vpop.f32.mrf.mxu0
  %v6065 = vadd.f32 %v6000, %v6064
  %6066 = vmatmul.f32.gmra.mxu0 %v5195
  %v6067 = vpop.f32.mrf.mxu0
  %v6068 = vadd.f32 %v6003, %v6067
  %6069 = vmatmul.f32.gmra.mxu0 %v5205
  %v6070 = vpop.f32.mrf.mxu0
  %v6071 = vadd.f32 %v6006, %v6070
  %6072 = vmatmul.f32.gmra.mxu0 %v5215
  %v6073 = vpop.f32.mrf.mxu0
  %v6074 = vadd.f32 %v6009, %v6073
  %6075 = vmatmul.f32.gmra.mxu0 %v5225
  %v6076 = vpop.f32.mrf.mxu0
  %v6077 = vadd.f32 %v6012, %v6076
  %6078 = vmatmul.f32.gmra.mxu0 %v5235
  %v6079 = vpop.f32.mrf.mxu0
  %v6080 = vadd.f32 %v6015, %v6079
  %6081 = vmatmul.f32.gmra.mxu0 %v5245
  %v6082 = vpop.f32.mrf.mxu0
  %v6083 = vadd.f32 %v6018, %v6082
  %6084 = vdwg.mxu0
  %6085 = vmatpush.msra.mxu0 %v5472
  %6086 = vmatpush.msra.mxu0 %v5470
  %6087 = vmatpush.msra.mxu0 %v5468
  %6088 = vmatpush.msra.mxu0 %v5466
  %6089 = vmatpush.msra.mxu0 %v5464
  %6090 = vmatpush.msra.mxu0 %v5462
  %6091 = vmatpush.msra.mxu0 %v5460
  %6092 = vmatpush.msra.mxu0 %v5458
  %6093 = vmatpush.msra.mxu0 %v5456
  %6094 = vmatpush.msra.mxu0 %v5454
  %6095 = vmatpush.msra.mxu0 %v5452
  %6096 = vmatpush.msra.mxu0 %v5450
  %6097 = vmatpush.msra.mxu0 %v5448
  %6098 = vmatpush.msra.mxu0 %v5446
  %6099 = vmatpush.msra.mxu0 %v5444
  %6100 = vmatpush.msra.mxu0 %v5442
  %6101 = vmatmul.f32.gmra.mxu0 %v5096
  %v6102 = vpop.f32.mrf.mxu0
  %v6103 = vadd.f32 %v6038, %v6102
  %6104 = vmatmul.f32.gmra.mxu0 %v5106
  %v6105 = vpop.f32.mrf.mxu0
  %v6106 = vadd.f32 %v6041, %v6105
  %6107 = vmatmul.f32.gmra.mxu0 %v5116
  %v6108 = vpop.f32.mrf.mxu0
  %v6109 = vadd.f32 %v6044, %v6108
  %6110 = vmatmul.f32.gmra.mxu0 %v5126
  %v6111 = vpop.f32.mrf.mxu0
  %v6112 = vadd.f32 %v6047, %v6111
  %6113 = vmatmul.f32.gmra.mxu0 %v5136
  %v6114 = vpop.f32.mrf.mxu0
  %v6115 = vadd.f32 %v6050, %v6114
  %6116 = vmatmul.f32.gmra.mxu0 %v5146
  %v6117 = vpop.f32.mrf.mxu0
  %v6118 = vadd.f32 %v6053, %v6117
  %6119 = vmatmul.f32.gmra.mxu0 %v5156
  %v6120 = vpop.f32.mrf.mxu0
  %v6121 = vadd.f32 %v6056, %v6120
  %6122 = vmatmul.f32.gmra.mxu0 %v5166
  %v6123 = vpop.f32.mrf.mxu0
  %v6124 = vadd.f32 %v6059, %v6123
  %6125 = vmatmul.f32.gmra.mxu0 %v5176
  %v6126 = vpop.f32.mrf.mxu0
  %v6127 = vadd.f32 %v6062, %v6126
  %6128 = vmatmul.f32.gmra.mxu0 %v5186
  %v6129 = vpop.f32.mrf.mxu0
  %v6130 = vadd.f32 %v6065, %v6129
  %6131 = vmatmul.f32.gmra.mxu0 %v5196
  %v6132 = vpop.f32.mrf.mxu0
  %v6133 = vadd.f32 %v6068, %v6132
  %6134 = vmatmul.f32.gmra.mxu0 %v5206
  %v6135 = vpop.f32.mrf.mxu0
  %v6136 = vadd.f32 %v6071, %v6135
  %6137 = vmatmul.f32.gmra.mxu0 %v5216
  %v6138 = vpop.f32.mrf.mxu0
  %v6139 = vadd.f32 %v6074, %v6138
  %6140 = vmatmul.f32.gmra.mxu0 %v5226
  %v6141 = vpop.f32.mrf.mxu0
  %v6142 = vadd.f32 %v6077, %v6141
  %6143 = vmatmul.f32.gmra.mxu0 %v5236
  %v6144 = vpop.f32.mrf.mxu0
  %v6145 = vadd.f32 %v6080, %v6144
  %6146 = vmatmul.f32.gmra.mxu0 %v5246
  %v6147 = vpop.f32.mrf.mxu0
  %v6148 = vadd.f32 %v6083, %v6147
  %6149 = vdwg.mxu0
  %6150 = vmatpush.msra.mxu0 %v5504
  %6151 = vmatpush.msra.mxu0 %v5502
  %6152 = vmatpush.msra.mxu0 %v5500
  %6153 = vmatpush.msra.mxu0 %v5498
  %6154 = vmatpush.msra.mxu0 %v5496
  %6155 = vmatpush.msra.mxu0 %v5494
  %6156 = vmatpush.msra.mxu0 %v5492
  %6157 = vmatpush.msra.mxu0 %v5490
  %6158 = vmatpush.msra.mxu0 %v5488
  %6159 = vmatpush.msra.mxu0 %v5486
  %6160 = vmatpush.msra.mxu0 %v5484
  %6161 = vmatpush.msra.mxu0 %v5482
  %6162 = vmatpush.msra.mxu0 %v5480
  %6163 = vmatpush.msra.mxu0 %v5478
  %6164 = vmatpush.msra.mxu0 %v5476
  %6165 = vmatpush.msra.mxu0 %v5474
  %6166 = vmatmul.f32.gmra.mxu0 %v5097
  %v6167 = vpop.f32.mrf.mxu0
  %v6168 = vadd.f32 %v6103, %v6167
  %6169 = vmatmul.f32.gmra.mxu0 %v5107
  %v6170 = vpop.f32.mrf.mxu0
  %v6171 = vadd.f32 %v6106, %v6170
  %6172 = vmatmul.f32.gmra.mxu0 %v5117
  %v6173 = vpop.f32.mrf.mxu0
  %v6174 = vadd.f32 %v6109, %v6173
  %6175 = vmatmul.f32.gmra.mxu0 %v5127
  %v6176 = vpop.f32.mrf.mxu0
  %v6177 = vadd.f32 %v6112, %v6176
  %6178 = vmatmul.f32.gmra.mxu0 %v5137
  %v6179 = vpop.f32.mrf.mxu0
  %v6180 = vadd.f32 %v6115, %v6179
  %6181 = vmatmul.f32.gmra.mxu0 %v5147
  %v6182 = vpop.f32.mrf.mxu0
  %v6183 = vadd.f32 %v6118, %v6182
  %6184 = vmatmul.f32.gmra.mxu0 %v5157
  %v6185 = vpop.f32.mrf.mxu0
  %v6186 = vadd.f32 %v6121, %v6185
  %6187 = vmatmul.f32.gmra.mxu0 %v5167
  %v6188 = vpop.f32.mrf.mxu0
  %v6189 = vadd.f32 %v6124, %v6188
  %6190 = vmatmul.f32.gmra.mxu0 %v5177
  %v6191 = vpop.f32.mrf.mxu0
  %v6192 = vadd.f32 %v6127, %v6191
  %6193 = vmatmul.f32.gmra.mxu0 %v5187
  %v6194 = vpop.f32.mrf.mxu0
  %v6195 = vadd.f32 %v6130, %v6194
  %6196 = vmatmul.f32.gmra.mxu0 %v5197
  %v6197 = vpop.f32.mrf.mxu0
  %v6198 = vadd.f32 %v6133, %v6197
  %6199 = vmatmul.f32.gmra.mxu0 %v5207
  %v6200 = vpop.f32.mrf.mxu0
  %v6201 = vadd.f32 %v6136, %v6200
  %6202 = vmatmul.f32.gmra.mxu0 %v5217
  %v6203 = vpop.f32.mrf.mxu0
  %v6204 = vadd.f32 %v6139, %v6203
  %6205 = vmatmul.f32.gmra.mxu0 %v5227
  %v6206 = vpop.f32.mrf.mxu0
  %v6207 = vadd.f32 %v6142, %v6206
  %6208 = vmatmul.f32.gmra.mxu0 %v5237
  %v6209 = vpop.f32.mrf.mxu0
  %v6210 = vadd.f32 %v6145, %v6209
  %6211 = vmatmul.f32.gmra.mxu0 %v5247
  %v6212 = vpop.f32.mrf.mxu0
  %v6213 = vadd.f32 %v6148, %v6212
  %6214 = vdwg.mxu0
  %6215 = vmatpush.msra.mxu0 %v5536
  %6216 = vmatpush.msra.mxu0 %v5534
  %6217 = vmatpush.msra.mxu0 %v5532
  %6218 = vmatpush.msra.mxu0 %v5530
  %6219 = vmatpush.msra.mxu0 %v5528
  %6220 = vmatpush.msra.mxu0 %v5526
  %6221 = vmatpush.msra.mxu0 %v5524
  %6222 = vmatpush.msra.mxu0 %v5522
  %6223 = vmatpush.msra.mxu0 %v5520
  %6224 = vmatpush.msra.mxu0 %v5518
  %6225 = vmatpush.msra.mxu0 %v5516
  %6226 = vmatpush.msra.mxu0 %v5514
  %6227 = vmatpush.msra.mxu0 %v5512
  %6228 = vmatpush.msra.mxu0 %v5510
  %6229 = vmatpush.msra.mxu0 %v5508
  %6230 = vmatpush.msra.mxu0 %v5506
  %6231 = vmatmul.f32.gmra.mxu0 %v5098
  %v6232 = vpop.f32.mrf.mxu0
  %v6233 = vadd.f32 %v6168, %v6232
  %6234 = vmatmul.f32.gmra.mxu0 %v5108
  %v6235 = vpop.f32.mrf.mxu0
  %v6236 = vadd.f32 %v6171, %v6235
  %6237 = vmatmul.f32.gmra.mxu0 %v5118
  %v6238 = vpop.f32.mrf.mxu0
  %v6239 = vadd.f32 %v6174, %v6238
  %6240 = vmatmul.f32.gmra.mxu0 %v5128
  %v6241 = vpop.f32.mrf.mxu0
  %v6242 = vadd.f32 %v6177, %v6241
  %6243 = vmatmul.f32.gmra.mxu0 %v5138
  %v6244 = vpop.f32.mrf.mxu0
  %v6245 = vadd.f32 %v6180, %v6244
  %6246 = vmatmul.f32.gmra.mxu0 %v5148
  %v6247 = vpop.f32.mrf.mxu0
  %v6248 = vadd.f32 %v6183, %v6247
  %6249 = vmatmul.f32.gmra.mxu0 %v5158
  %v6250 = vpop.f32.mrf.mxu0
  %v6251 = vadd.f32 %v6186, %v6250
  %6252 = vmatmul.f32.gmra.mxu0 %v5168
  %v6253 = vpop.f32.mrf.mxu0
  %v6254 = vadd.f32 %v6189, %v6253
  %6255 = vmatmul.f32.gmra.mxu0 %v5178
  %v6256 = vpop.f32.mrf.mxu0
  %v6257 = vadd.f32 %v6192, %v6256
  %6258 = vmatmul.f32.gmra.mxu0 %v5188
  %v6259 = vpop.f32.mrf.mxu0
  %v6260 = vadd.f32 %v6195, %v6259
  %6261 = vmatmul.f32.gmra.mxu0 %v5198
  %v6262 = vpop.f32.mrf.mxu0
  %v6263 = vadd.f32 %v6198, %v6262
  %6264 = vmatmul.f32.gmra.mxu0 %v5208
  %v6265 = vpop.f32.mrf.mxu0
  %v6266 = vadd.f32 %v6201, %v6265
  %6267 = vmatmul.f32.gmra.mxu0 %v5218
  %v6268 = vpop.f32.mrf.mxu0
  %v6269 = vadd.f32 %v6204, %v6268
  %6270 = vmatmul.f32.gmra.mxu0 %v5228
  %v6271 = vpop.f32.mrf.mxu0
  %v6272 = vadd.f32 %v6207, %v6271
  %6273 = vmatmul.f32.gmra.mxu0 %v5238
  %v6274 = vpop.f32.mrf.mxu0
  %v6275 = vadd.f32 %v6210, %v6274
  %6276 = vmatmul.f32.gmra.mxu0 %v5248
  %v6277 = vpop.f32.mrf.mxu0
  %v6278 = vadd.f32 %v6213, %v6277
  %6279 = vdwg.mxu0
  %6280 = vmatpush.msra.mxu0 0.0
  %6281 = vmatpush.msra.mxu0 0.0
  %6282 = vmatpush.msra.mxu0 0.0
  %6283 = vmatpush.msra.mxu0 0.0
  %6284 = vmatpush.msra.mxu0 0.0
  %6285 = vmatpush.msra.mxu0 0.0
  %6286 = vmatpush.msra.mxu0 0.0
  %6287 = vmatpush.msra.mxu0 0.0
  %6288 = vmatpush.msra.mxu0 0.0
  %6289 = vmatpush.msra.mxu0 0.0
  %6290 = vmatpush.msra.mxu0 %v5548
  %6291 = vmatpush.msra.mxu0 %v5546
  %6292 = vmatpush.msra.mxu0 %v5544
  %6293 = vmatpush.msra.mxu0 %v5542
  %6294 = vmatpush.msra.mxu0 %v5540
  %6295 = vmatpush.msra.mxu0 %v5538
  %6296 = vmatmul.f32.gmra.mxu0 %v5648
  %v6297 = vpop.f32.mrf.mxu0
  %v6298 = vadd.f32 %v6233, %v6297
  %6299 = vmatmul.f32.gmra.mxu0 %v5651
  %v6300 = vpop.f32.mrf.mxu0
  %v6301 = vadd.f32 %v6236, %v6300
  %6302 = vmatmul.f32.gmra.mxu0 %v5654
  %v6303 = vpop.f32.mrf.mxu0
  %v6304 = vadd.f32 %v6239, %v6303
  %6305 = vmatmul.f32.gmra.mxu0 %v5657
  %v6306 = vpop.f32.mrf.mxu0
  %v6307 = vadd.f32 %v6242, %v6306
  %6308 = vmatmul.f32.gmra.mxu0 %v5660
  %v6309 = vpop.f32.mrf.mxu0
  %v6310 = vadd.f32 %v6245, %v6309
  %6311 = vmatmul.f32.gmra.mxu0 %v5663
  %v6312 = vpop.f32.mrf.mxu0
  %v6313 = vadd.f32 %v6248, %v6312
  %6314 = vmatmul.f32.gmra.mxu0 %v5666
  %v6315 = vpop.f32.mrf.mxu0
  %v6316 = vadd.f32 %v6251, %v6315
  %6317 = vmatmul.f32.gmra.mxu0 %v5669
  %v6318 = vpop.f32.mrf.mxu0
  %v6319 = vadd.f32 %v6254, %v6318
  %6320 = vmatmul.f32.gmra.mxu0 %v5672
  %v6321 = vpop.f32.mrf.mxu0
  %v6322 = vadd.f32 %v6257, %v6321
  %6323 = vmatmul.f32.gmra.mxu0 %v5675
  %v6324 = vpop.f32.mrf.mxu0
  %v6325 = vadd.f32 %v6260, %v6324
  %6326 = vmatmul.f32.gmra.mxu0 %v5678
  %v6327 = vpop.f32.mrf.mxu0
  %v6328 = vadd.f32 %v6263, %v6327
  %6329 = vmatmul.f32.gmra.mxu0 %v5681
  %v6330 = vpop.f32.mrf.mxu0
  %v6331 = vadd.f32 %v6266, %v6330
  %6332 = vmatmul.f32.gmra.mxu0 %v5684
  %v6333 = vpop.f32.mrf.mxu0
  %v6334 = vadd.f32 %v6269, %v6333
  %6335 = vmatmul.f32.gmra.mxu0 %v5687
  %v6336 = vpop.f32.mrf.mxu0
  %v6337 = vadd.f32 %v6272, %v6336
  %6338 = vmatmul.f32.gmra.mxu0 %v5690
  %v6339 = vpop.f32.mrf.mxu0
  %v6340 = vadd.f32 %v6275, %v6339
  %6341 = vmatmul.f32.gmra.mxu0 %v5693
  %v6342 = vpop.f32.mrf.mxu0
  %v6343 = vadd.f32 %v6278, %v6342
  %6344 = vdwg.mxu0
  %6345 = vmatpush.msra.mxu0 %v5281
  %6346 = vmatpush.msra.mxu0 %v5279
  %6347 = vmatpush.msra.mxu0 %v5277
  %6348 = vmatpush.msra.mxu0 %v5275
  %6349 = vmatpush.msra.mxu0 %v5273
  %6350 = vmatpush.msra.mxu0 %v5271
  %6351 = vmatpush.msra.mxu0 %v5269
  %6352 = vmatpush.msra.mxu0 %v5267
  %6353 = vmatpush.msra.mxu0 %v5265
  %6354 = vmatpush.msra.mxu0 %v5263
  %6355 = vmatpush.msra.mxu0 %v5261
  %6356 = vmatpush.msra.mxu0 %v5259
  %6357 = vmatpush.msra.mxu0 %v5257
  %6358 = vmatpush.msra.mxu0 %v5255
  %6359 = vmatpush.msra.mxu0 %v5253
  %6360 = vmatpush.msra.mxu0 %v5251
  %6361 = vmatmul.f32.gmra.mxu0 %v5090
  %v6362 = vpop.f32.mrf.mxu0
  %v6363 = vadd.f32 %v5569, %v6362
  %6364 = vmatmul.f32.gmra.mxu0 %v5100
  %v6365 = vpop.f32.mrf.mxu0
  %v6366 = vadd.f32 %v5574, %v6365
  %6367 = vmatmul.f32.gmra.mxu0 %v5110
  %v6368 = vpop.f32.mrf.mxu0
  %v6369 = vadd.f32 %v5579, %v6368
  %6370 = vmatmul.f32.gmra.mxu0 %v5120
  %v6371 = vpop.f32.mrf.mxu0
  %v6372 = vadd.f32 %v5584, %v6371
  %6373 = vmatmul.f32.gmra.mxu0 %v5130
  %v6374 = vpop.f32.mrf.mxu0
  %v6375 = vadd.f32 %v5589, %v6374
  %6376 = vmatmul.f32.gmra.mxu0 %v5140
  %v6377 = vpop.f32.mrf.mxu0
  %v6378 = vadd.f32 %v5594, %v6377
  %6379 = vmatmul.f32.gmra.mxu0 %v5150
  %v6380 = vpop.f32.mrf.mxu0
  %v6381 = vadd.f32 %v5599, %v6380
  %6382 = vmatmul.f32.gmra.mxu0 %v5160
  %v6383 = vpop.f32.mrf.mxu0
  %v6384 = vadd.f32 %v5604, %v6383
  %6385 = vmatmul.f32.gmra.mxu0 %v5170
  %v6386 = vpop.f32.mrf.mxu0
  %v6387 = vadd.f32 %v5609, %v6386
  %6388 = vmatmul.f32.gmra.mxu0 %v5180
  %v6389 = vpop.f32.mrf.mxu0
  %v6390 = vadd.f32 %v5614, %v6389
  %6391 = vmatmul.f32.gmra.mxu0 %v5190
  %v6392 = vpop.f32.mrf.mxu0
  %v6393 = vadd.f32 %v5619, %v6392
  %6394 = vmatmul.f32.gmra.mxu0 %v5200
  %v6395 = vpop.f32.mrf.mxu0
  %v6396 = vadd.f32 %v5624, %v6395
  %6397 = vmatmul.f32.gmra.mxu0 %v5210
  %v6398 = vpop.f32.mrf.mxu0
  %v6399 = vadd.f32 %v5629, %v6398
  %6400 = vmatmul.f32.gmra.mxu0 %v5220
  %v6401 = vpop.f32.mrf.mxu0
  %v6402 = vadd.f32 %v5634, %v6401
  %6403 = vmatmul.f32.gmra.mxu0 %v5230
  %v6404 = vpop.f32.mrf.mxu0
  %v6405 = vadd.f32 %v5639, %v6404
  %6406 = vmatmul.f32.gmra.mxu0 %v5240
  %v6407 = vpop.f32.mrf.mxu0
  %v6408 = vadd.f32 %v5644, %v6407
  %6409 = vdwg.mxu0
  %6410 = vmatpush.msra.mxu0 %v5313
  %6411 = vmatpush.msra.mxu0 %v5311
  %6412 = vmatpush.msra.mxu0 %v5309
  %6413 = vmatpush.msra.mxu0 %v5307
  %6414 = vmatpush.msra.mxu0 %v5305
  %6415 = vmatpush.msra.mxu0 %v5303
  %6416 = vmatpush.msra.mxu0 %v5301
  %6417 = vmatpush.msra.mxu0 %v5299
  %6418 = vmatpush.msra.mxu0 %v5297
  %6419 = vmatpush.msra.mxu0 %v5295
  %6420 = vmatpush.msra.mxu0 %v5293
  %6421 = vmatpush.msra.mxu0 %v5291
  %6422 = vmatpush.msra.mxu0 %v5289
  %6423 = vmatpush.msra.mxu0 %v5287
  %6424 = vmatpush.msra.mxu0 %v5285
  %6425 = vmatpush.msra.mxu0 %v5283
  %6426 = vmatmul.f32.gmra.mxu0 %v5091
  %v6427 = vpop.f32.mrf.mxu0
  %v6428 = vadd.f32 %v6363, %v6427
  %6429 = vmatmul.f32.gmra.mxu0 %v5101
  %v6430 = vpop.f32.mrf.mxu0
  %v6431 = vadd.f32 %v6366, %v6430
  %6432 = vmatmul.f32.gmra.mxu0 %v5111
  %v6433 = vpop.f32.mrf.mxu0
  %v6434 = vadd.f32 %v6369, %v6433
  %6435 = vmatmul.f32.gmra.mxu0 %v5121
  %v6436 = vpop.f32.mrf.mxu0
  %v6437 = vadd.f32 %v6372, %v6436
  %6438 = vmatmul.f32.gmra.mxu0 %v5131
  %v6439 = vpop.f32.mrf.mxu0
  %v6440 = vadd.f32 %v6375, %v6439
  %6441 = vmatmul.f32.gmra.mxu0 %v5141
  %v6442 = vpop.f32.mrf.mxu0
  %v6443 = vadd.f32 %v6378, %v6442
  %6444 = vmatmul.f32.gmra.mxu0 %v5151
  %v6445 = vpop.f32.mrf.mxu0
  %v6446 = vadd.f32 %v6381, %v6445
  %6447 = vmatmul.f32.gmra.mxu0 %v5161
  %v6448 = vpop.f32.mrf.mxu0
  %v6449 = vadd.f32 %v6384, %v6448
  %6450 = vmatmul.f32.gmra.mxu0 %v5171
  %v6451 = vpop.f32.mrf.mxu0
  %v6452 = vadd.f32 %v6387, %v6451
  %6453 = vmatmul.f32.gmra.mxu0 %v5181
  %v6454 = vpop.f32.mrf.mxu0
  %v6455 = vadd.f32 %v6390, %v6454
  %6456 = vmatmul.f32.gmra.mxu0 %v5191
  %v6457 = vpop.f32.mrf.mxu0
  %v6458 = vadd.f32 %v6393, %v6457
  %6459 = vmatmul.f32.gmra.mxu0 %v5201
  %v6460 = vpop.f32.mrf.mxu0
  %v6461 = vadd.f32 %v6396, %v6460
  %6462 = vmatmul.f32.gmra.mxu0 %v5211
  %v6463 = vpop.f32.mrf.mxu0
  %v6464 = vadd.f32 %v6399, %v6463
  %6465 = vmatmul.f32.gmra.mxu0 %v5221
  %v6466 = vpop.f32.mrf.mxu0
  %v6467 = vadd.f32 %v6402, %v6466
  %6468 = vmatmul.f32.gmra.mxu0 %v5231
  %v6469 = vpop.f32.mrf.mxu0
  %v6470 = vadd.f32 %v6405, %v6469
  %6471 = vmatmul.f32.gmra.mxu0 %v5241
  %v6472 = vpop.f32.mrf.mxu0
  %v6473 = vadd.f32 %v6408, %v6472
  %6474 = vdwg.mxu0
  %6475 = vmatpush.msra.mxu0 %v5345
  %6476 = vmatpush.msra.mxu0 %v5343
  %6477 = vmatpush.msra.mxu0 %v5341
  %6478 = vmatpush.msra.mxu0 %v5339
  %6479 = vmatpush.msra.mxu0 %v5337
  %6480 = vmatpush.msra.mxu0 %v5335
  %6481 = vmatpush.msra.mxu0 %v5333
  %6482 = vmatpush.msra.mxu0 %v5331
  %6483 = vmatpush.msra.mxu0 %v5329
  %6484 = vmatpush.msra.mxu0 %v5327
  %6485 = vmatpush.msra.mxu0 %v5325
  %6486 = vmatpush.msra.mxu0 %v5323
  %6487 = vmatpush.msra.mxu0 %v5321
  %6488 = vmatpush.msra.mxu0 %v5319
  %6489 = vmatpush.msra.mxu0 %v5317
  %6490 = vmatpush.msra.mxu0 %v5315
  %6491 = vmatmul.f32.gmra.mxu0 %v5092
  %v6492 = vpop.f32.mrf.mxu0
  %v6493 = vadd.f32 %v6428, %v6492
  %6494 = vmatmul.f32.gmra.mxu0 %v5102
  %v6495 = vpop.f32.mrf.mxu0
  %v6496 = vadd.f32 %v6431, %v6495
  %6497 = vmatmul.f32.gmra.mxu0 %v5112
  %v6498 = vpop.f32.mrf.mxu0
  %v6499 = vadd.f32 %v6434, %v6498
  %6500 = vmatmul.f32.gmra.mxu0 %v5122
  %v6501 = vpop.f32.mrf.mxu0
  %v6502 = vadd.f32 %v6437, %v6501
  %6503 = vmatmul.f32.gmra.mxu0 %v5132
  %v6504 = vpop.f32.mrf.mxu0
  %v6505 = vadd.f32 %v6440, %v6504
  %6506 = vmatmul.f32.gmra.mxu0 %v5142
  %v6507 = vpop.f32.mrf.mxu0
  %v6508 = vadd.f32 %v6443, %v6507
  %6509 = vmatmul.f32.gmra.mxu0 %v5152
  %v6510 = vpop.f32.mrf.mxu0
  %v6511 = vadd.f32 %v6446, %v6510
  %6512 = vmatmul.f32.gmra.mxu0 %v5162
  %v6513 = vpop.f32.mrf.mxu0
  %v6514 = vadd.f32 %v6449, %v6513
  %6515 = vmatmul.f32.gmra.mxu0 %v5172
  %v6516 = vpop.f32.mrf.mxu0
  %v6517 = vadd.f32 %v6452, %v6516
  %6518 = vmatmul.f32.gmra.mxu0 %v5182
  %v6519 = vpop.f32.mrf.mxu0
  %v6520 = vadd.f32 %v6455, %v6519
  %6521 = vmatmul.f32.gmra.mxu0 %v5192
  %v6522 = vpop.f32.mrf.mxu0
  %v6523 = vadd.f32 %v6458, %v6522
  %6524 = vmatmul.f32.gmra.mxu0 %v5202
  %v6525 = vpop.f32.mrf.mxu0
  %v6526 = vadd.f32 %v6461, %v6525
  %6527 = vmatmul.f32.gmra.mxu0 %v5212
  %v6528 = vpop.f32.mrf.mxu0
  %v6529 = vadd.f32 %v6464, %v6528
  %6530 = vmatmul.f32.gmra.mxu0 %v5222
  %v6531 = vpop.f32.mrf.mxu0
  %v6532 = vadd.f32 %v6467, %v6531
  %6533 = vmatmul.f32.gmra.mxu0 %v5232
  %v6534 = vpop.f32.mrf.mxu0
  %v6535 = vadd.f32 %v6470, %v6534
  %6536 = vmatmul.f32.gmra.mxu0 %v5242
  %v6537 = vpop.f32.mrf.mxu0
  %v6538 = vadd.f32 %v6473, %v6537
  %6539 = vdwg.mxu0
  %6540 = vmatpush.msra.mxu0 %v5377
  %6541 = vmatpush.msra.mxu0 %v5375
  %6542 = vmatpush.msra.mxu0 %v5373
  %6543 = vmatpush.msra.mxu0 %v5371
  %6544 = vmatpush.msra.mxu0 %v5369
  %6545 = vmatpush.msra.mxu0 %v5367
  %6546 = vmatpush.msra.mxu0 %v5365
  %6547 = vmatpush.msra.mxu0 %v5363
  %6548 = vmatpush.msra.mxu0 %v5361
  %6549 = vmatpush.msra.mxu0 %v5359
  %6550 = vmatpush.msra.mxu0 %v5357
  %6551 = vmatpush.msra.mxu0 %v5355
  %6552 = vmatpush.msra.mxu0 %v5353
  %6553 = vmatpush.msra.mxu0 %v5351
  %6554 = vmatpush.msra.mxu0 %v5349
  %6555 = vmatpush.msra.mxu0 %v5347
  %6556 = vmatmul.f32.gmra.mxu0 %v5093
  %v6557 = vpop.f32.mrf.mxu0
  %v6558 = vadd.f32 %v6493, %v6557
  %6559 = vmatmul.f32.gmra.mxu0 %v5103
  %v6560 = vpop.f32.mrf.mxu0
  %v6561 = vadd.f32 %v6496, %v6560
  %6562 = vmatmul.f32.gmra.mxu0 %v5113
  %v6563 = vpop.f32.mrf.mxu0
  %v6564 = vadd.f32 %v6499, %v6563
  %6565 = vmatmul.f32.gmra.mxu0 %v5123
  %v6566 = vpop.f32.mrf.mxu0
  %v6567 = vadd.f32 %v6502, %v6566
  %6568 = vmatmul.f32.gmra.mxu0 %v5133
  %v6569 = vpop.f32.mrf.mxu0
  %v6570 = vadd.f32 %v6505, %v6569
  %6571 = vmatmul.f32.gmra.mxu0 %v5143
  %v6572 = vpop.f32.mrf.mxu0
  %v6573 = vadd.f32 %v6508, %v6572
  %6574 = vmatmul.f32.gmra.mxu0 %v5153
  %v6575 = vpop.f32.mrf.mxu0
  %v6576 = vadd.f32 %v6511, %v6575
  %6577 = vmatmul.f32.gmra.mxu0 %v5163
  %v6578 = vpop.f32.mrf.mxu0
  %v6579 = vadd.f32 %v6514, %v6578
  %6580 = vmatmul.f32.gmra.mxu0 %v5173
  %v6581 = vpop.f32.mrf.mxu0
  %v6582 = vadd.f32 %v6517, %v6581
  %6583 = vmatmul.f32.gmra.mxu0 %v5183
  %v6584 = vpop.f32.mrf.mxu0
  %v6585 = vadd.f32 %v6520, %v6584
  %6586 = vmatmul.f32.gmra.mxu0 %v5193
  %v6587 = vpop.f32.mrf.mxu0
  %v6588 = vadd.f32 %v6523, %v6587
  %6589 = vmatmul.f32.gmra.mxu0 %v5203
  %v6590 = vpop.f32.mrf.mxu0
  %v6591 = vadd.f32 %v6526, %v6590
  %6592 = vmatmul.f32.gmra.mxu0 %v5213
  %v6593 = vpop.f32.mrf.mxu0
  %v6594 = vadd.f32 %v6529, %v6593
  %6595 = vmatmul.f32.gmra.mxu0 %v5223
  %v6596 = vpop.f32.mrf.mxu0
  %v6597 = vadd.f32 %v6532, %v6596
  %6598 = vmatmul.f32.gmra.mxu0 %v5233
  %v6599 = vpop.f32.mrf.mxu0
  %v6600 = vadd.f32 %v6535, %v6599
  %6601 = vmatmul.f32.gmra.mxu0 %v5243
  %v6602 = vpop.f32.mrf.mxu0
  %v6603 = vadd.f32 %v6538, %v6602
  %6604 = vdwg.mxu0
  %6605 = vmatpush.msra.mxu0 %v5409
  %6606 = vmatpush.msra.mxu0 %v5407
  %6607 = vmatpush.msra.mxu0 %v5405
  %6608 = vmatpush.msra.mxu0 %v5403
  %6609 = vmatpush.msra.mxu0 %v5401
  %6610 = vmatpush.msra.mxu0 %v5399
  %6611 = vmatpush.msra.mxu0 %v5397
  %6612 = vmatpush.msra.mxu0 %v5395
  %6613 = vmatpush.msra.mxu0 %v5393
  %6614 = vmatpush.msra.mxu0 %v5391
  %6615 = vmatpush.msra.mxu0 %v5389
  %6616 = vmatpush.msra.mxu0 %v5387
  %6617 = vmatpush.msra.mxu0 %v5385
  %6618 = vmatpush.msra.mxu0 %v5383
  %6619 = vmatpush.msra.mxu0 %v5381
  %6620 = vmatpush.msra.mxu0 %v5379
  %6621 = vmatmul.f32.gmra.mxu0 %v5094
  %v6622 = vpop.f32.mrf.mxu0
  %v6623 = vadd.f32 %v6558, %v6622
  %6624 = vmatmul.f32.gmra.mxu0 %v5104
  %v6625 = vpop.f32.mrf.mxu0
  %v6626 = vadd.f32 %v6561, %v6625
  %6627 = vmatmul.f32.gmra.mxu0 %v5114
  %v6628 = vpop.f32.mrf.mxu0
  %v6629 = vadd.f32 %v6564, %v6628
  %6630 = vmatmul.f32.gmra.mxu0 %v5124
  %v6631 = vpop.f32.mrf.mxu0
  %v6632 = vadd.f32 %v6567, %v6631
  %6633 = vmatmul.f32.gmra.mxu0 %v5134
  %v6634 = vpop.f32.mrf.mxu0
  %v6635 = vadd.f32 %v6570, %v6634
  %6636 = vmatmul.f32.gmra.mxu0 %v5144
  %v6637 = vpop.f32.mrf.mxu0
  %v6638 = vadd.f32 %v6573, %v6637
  %6639 = vmatmul.f32.gmra.mxu0 %v5154
  %v6640 = vpop.f32.mrf.mxu0
  %v6641 = vadd.f32 %v6576, %v6640
  %6642 = vmatmul.f32.gmra.mxu0 %v5164
  %v6643 = vpop.f32.mrf.mxu0
  %v6644 = vadd.f32 %v6579, %v6643
  %6645 = vmatmul.f32.gmra.mxu0 %v5174
  %v6646 = vpop.f32.mrf.mxu0
  %v6647 = vadd.f32 %v6582, %v6646
  %6648 = vmatmul.f32.gmra.mxu0 %v5184
  %v6649 = vpop.f32.mrf.mxu0
  %v6650 = vadd.f32 %v6585, %v6649
  %6651 = vmatmul.f32.gmra.mxu0 %v5194
  %v6652 = vpop.f32.mrf.mxu0
  %v6653 = vadd.f32 %v6588, %v6652
  %6654 = vmatmul.f32.gmra.mxu0 %v5204
  %v6655 = vpop.f32.mrf.mxu0
  %v6656 = vadd.f32 %v6591, %v6655
  %6657 = vmatmul.f32.gmra.mxu0 %v5214
  %v6658 = vpop.f32.mrf.mxu0
  %v6659 = vadd.f32 %v6594, %v6658
  %6660 = vmatmul.f32.gmra.mxu0 %v5224
  %v6661 = vpop.f32.mrf.mxu0
  %v6662 = vadd.f32 %v6597, %v6661
  %6663 = vmatmul.f32.gmra.mxu0 %v5234
  %v6664 = vpop.f32.mrf.mxu0
  %v6665 = vadd.f32 %v6600, %v6664
  %6666 = vmatmul.f32.gmra.mxu0 %v5244
  %v6667 = vpop.f32.mrf.mxu0
  %v6668 = vadd.f32 %v6603, %v6667
  %6669 = vdwg.mxu0
  %6670 = vmatpush.msra.mxu0 %v5441
  %6671 = vmatpush.msra.mxu0 %v5439
  %6672 = vmatpush.msra.mxu0 %v5437
  %6673 = vmatpush.msra.mxu0 %v5435
  %6674 = vmatpush.msra.mxu0 %v5433
  %6675 = vmatpush.msra.mxu0 %v5431
  %6676 = vmatpush.msra.mxu0 %v5429
  %6677 = vmatpush.msra.mxu0 %v5427
  %6678 = vmatpush.msra.mxu0 %v5425
  %6679 = vmatpush.msra.mxu0 %v5423
  %6680 = vmatpush.msra.mxu0 %v5421
  %6681 = vmatpush.msra.mxu0 %v5419
  %6682 = vmatpush.msra.mxu0 %v5417
  %6683 = vmatpush.msra.mxu0 %v5415
  %6684 = vmatpush.msra.mxu0 %v5413
  %6685 = vmatpush.msra.mxu0 %v5411
  %6686 = vmatmul.f32.gmra.mxu0 %v5095
  %v6687 = vpop.f32.mrf.mxu0
  %v6688 = vadd.f32 %v6623, %v6687
  %6689 = vmatmul.f32.gmra.mxu0 %v5105
  %v6690 = vpop.f32.mrf.mxu0
  %v6691 = vadd.f32 %v6626, %v6690
  %6692 = vmatmul.f32.gmra.mxu0 %v5115
  %v6693 = vpop.f32.mrf.mxu0
  %v6694 = vadd.f32 %v6629, %v6693
  %6695 = vmatmul.f32.gmra.mxu0 %v5125
  %v6696 = vpop.f32.mrf.mxu0
  %v6697 = vadd.f32 %v6632, %v6696
  %6698 = vmatmul.f32.gmra.mxu0 %v5135
  %v6699 = vpop.f32.mrf.mxu0
  %v6700 = vadd.f32 %v6635, %v6699
  %6701 = vmatmul.f32.gmra.mxu0 %v5145
  %v6702 = vpop.f32.mrf.mxu0
  %v6703 = vadd.f32 %v6638, %v6702
  %6704 = vmatmul.f32.gmra.mxu0 %v5155
  %v6705 = vpop.f32.mrf.mxu0
  %v6706 = vadd.f32 %v6641, %v6705
  %6707 = vmatmul.f32.gmra.mxu0 %v5165
  %v6708 = vpop.f32.mrf.mxu0
  %v6709 = vadd.f32 %v6644, %v6708
  %6710 = vmatmul.f32.gmra.mxu0 %v5175
  %v6711 = vpop.f32.mrf.mxu0
  %v6712 = vadd.f32 %v6647, %v6711
  %6713 = vmatmul.f32.gmra.mxu0 %v5185
  %v6714 = vpop.f32.mrf.mxu0
  %v6715 = vadd.f32 %v6650, %v6714
  %6716 = vmatmul.f32.gmra.mxu0 %v5195
  %v6717 = vpop.f32.mrf.mxu0
  %v6718 = vadd.f32 %v6653, %v6717
  %6719 = vmatmul.f32.gmra.mxu0 %v5205
  %v6720 = vpop.f32.mrf.mxu0
  %v6721 = vadd.f32 %v6656, %v6720
  %6722 = vmatmul.f32.gmra.mxu0 %v5215
  %v6723 = vpop.f32.mrf.mxu0
  %v6724 = vadd.f32 %v6659, %v6723
  %6725 = vmatmul.f32.gmra.mxu0 %v5225
  %v6726 = vpop.f32.mrf.mxu0
  %v6727 = vadd.f32 %v6662, %v6726
  %6728 = vmatmul.f32.gmra.mxu0 %v5235
  %v6729 = vpop.f32.mrf.mxu0
  %v6730 = vadd.f32 %v6665, %v6729
  %6731 = vmatmul.f32.gmra.mxu0 %v5245
  %v6732 = vpop.f32.mrf.mxu0
  %v6733 = vadd.f32 %v6668, %v6732
  %6734 = vdwg.mxu0
  %6735 = vmatpush.msra.mxu0 %v5473
  %6736 = vmatpush.msra.mxu0 %v5471
  %6737 = vmatpush.msra.mxu0 %v5469
  %6738 = vmatpush.msra.mxu0 %v5467
  %6739 = vmatpush.msra.mxu0 %v5465
  %6740 = vmatpush.msra.mxu0 %v5463
  %6741 = vmatpush.msra.mxu0 %v5461
  %6742 = vmatpush.msra.mxu0 %v5459
  %6743 = vmatpush.msra.mxu0 %v5457
  %6744 = vmatpush.msra.mxu0 %v5455
  %6745 = vmatpush.msra.mxu0 %v5453
  %6746 = vmatpush.msra.mxu0 %v5451
  %6747 = vmatpush.msra.mxu0 %v5449
  %6748 = vmatpush.msra.mxu0 %v5447
  %6749 = vmatpush.msra.mxu0 %v5445
  %6750 = vmatpush.msra.mxu0 %v5443
  %6751 = vmatmul.f32.gmra.mxu0 %v5096
  %v6752 = vpop.f32.mrf.mxu0
  %v6753 = vadd.f32 %v6688, %v6752
  %6754 = vmatmul.f32.gmra.mxu0 %v5106
  %v6755 = vpop.f32.mrf.mxu0
  %v6756 = vadd.f32 %v6691, %v6755
  %6757 = vmatmul.f32.gmra.mxu0 %v5116
  %v6758 = vpop.f32.mrf.mxu0
  %v6759 = vadd.f32 %v6694, %v6758
  %6760 = vmatmul.f32.gmra.mxu0 %v5126
  %v6761 = vpop.f32.mrf.mxu0
  %v6762 = vadd.f32 %v6697, %v6761
  %6763 = vmatmul.f32.gmra.mxu0 %v5136
  %v6764 = vpop.f32.mrf.mxu0
  %v6765 = vadd.f32 %v6700, %v6764
  %6766 = vmatmul.f32.gmra.mxu0 %v5146
  %v6767 = vpop.f32.mrf.mxu0
  %v6768 = vadd.f32 %v6703, %v6767
  %6769 = vmatmul.f32.gmra.mxu0 %v5156
  %v6770 = vpop.f32.mrf.mxu0
  %v6771 = vadd.f32 %v6706, %v6770
  %6772 = vmatmul.f32.gmra.mxu0 %v5166
  %v6773 = vpop.f32.mrf.mxu0
  %v6774 = vadd.f32 %v6709, %v6773
  %6775 = vmatmul.f32.gmra.mxu0 %v5176
  %v6776 = vpop.f32.mrf.mxu0
  %v6777 = vadd.f32 %v6712, %v6776
  %6778 = vmatmul.f32.gmra.mxu0 %v5186
  %v6779 = vpop.f32.mrf.mxu0
  %v6780 = vadd.f32 %v6715, %v6779
  %6781 = vmatmul.f32.gmra.mxu0 %v5196
  %v6782 = vpop.f32.mrf.mxu0
  %v6783 = vadd.f32 %v6718, %v6782
  %6784 = vmatmul.f32.gmra.mxu0 %v5206
  %v6785 = vpop.f32.mrf.mxu0
  %v6786 = vadd.f32 %v6721, %v6785
  %6787 = vmatmul.f32.gmra.mxu0 %v5216
  %v6788 = vpop.f32.mrf.mxu0
  %v6789 = vadd.f32 %v6724, %v6788
  %6790 = vmatmul.f32.gmra.mxu0 %v5226
  %v6791 = vpop.f32.mrf.mxu0
  %v6792 = vadd.f32 %v6727, %v6791
  %6793 = vmatmul.f32.gmra.mxu0 %v5236
  %v6794 = vpop.f32.mrf.mxu0
  %v6795 = vadd.f32 %v6730, %v6794
  %6796 = vmatmul.f32.gmra.mxu0 %v5246
  %v6797 = vpop.f32.mrf.mxu0
  %v6798 = vadd.f32 %v6733, %v6797
  %6799 = vdwg.mxu0
  %6800 = vmatpush.msra.mxu0 %v5505
  %6801 = vmatpush.msra.mxu0 %v5503
  %6802 = vmatpush.msra.mxu0 %v5501
  %6803 = vmatpush.msra.mxu0 %v5499
  %6804 = vmatpush.msra.mxu0 %v5497
  %6805 = vmatpush.msra.mxu0 %v5495
  %6806 = vmatpush.msra.mxu0 %v5493
  %6807 = vmatpush.msra.mxu0 %v5491
  %6808 = vmatpush.msra.mxu0 %v5489
  %6809 = vmatpush.msra.mxu0 %v5487
  %6810 = vmatpush.msra.mxu0 %v5485
  %6811 = vmatpush.msra.mxu0 %v5483
  %6812 = vmatpush.msra.mxu0 %v5481
  %6813 = vmatpush.msra.mxu0 %v5479
  %6814 = vmatpush.msra.mxu0 %v5477
  %6815 = vmatpush.msra.mxu0 %v5475
  %6816 = vmatmul.f32.gmra.mxu0 %v5097
  %v6817 = vpop.f32.mrf.mxu0
  %v6818 = vadd.f32 %v6753, %v6817
  %6819 = vmatmul.f32.gmra.mxu0 %v5107
  %v6820 = vpop.f32.mrf.mxu0
  %v6821 = vadd.f32 %v6756, %v6820
  %6822 = vmatmul.f32.gmra.mxu0 %v5117
  %v6823 = vpop.f32.mrf.mxu0
  %v6824 = vadd.f32 %v6759, %v6823
  %6825 = vmatmul.f32.gmra.mxu0 %v5127
  %v6826 = vpop.f32.mrf.mxu0
  %v6827 = vadd.f32 %v6762, %v6826
  %6828 = vmatmul.f32.gmra.mxu0 %v5137
  %v6829 = vpop.f32.mrf.mxu0
  %v6830 = vadd.f32 %v6765, %v6829
  %6831 = vmatmul.f32.gmra.mxu0 %v5147
  %v6832 = vpop.f32.mrf.mxu0
  %v6833 = vadd.f32 %v6768, %v6832
  %6834 = vmatmul.f32.gmra.mxu0 %v5157
  %v6835 = vpop.f32.mrf.mxu0
  %v6836 = vadd.f32 %v6771, %v6835
  %6837 = vmatmul.f32.gmra.mxu0 %v5167
  %v6838 = vpop.f32.mrf.mxu0
  %v6839 = vadd.f32 %v6774, %v6838
  %6840 = vmatmul.f32.gmra.mxu0 %v5177
  %v6841 = vpop.f32.mrf.mxu0
  %v6842 = vadd.f32 %v6777, %v6841
  %6843 = vmatmul.f32.gmra.mxu0 %v5187
  %v6844 = vpop.f32.mrf.mxu0
  %v6845 = vadd.f32 %v6780, %v6844
  %6846 = vmatmul.f32.gmra.mxu0 %v5197
  %v6847 = vpop.f32.mrf.mxu0
  %v6848 = vadd.f32 %v6783, %v6847
  %6849 = vmatmul.f32.gmra.mxu0 %v5207
  %v6850 = vpop.f32.mrf.mxu0
  %v6851 = vadd.f32 %v6786, %v6850
  %6852 = vmatmul.f32.gmra.mxu0 %v5217
  %v6853 = vpop.f32.mrf.mxu0
  %v6854 = vadd.f32 %v6789, %v6853
  %6855 = vmatmul.f32.gmra.mxu0 %v5227
  %v6856 = vpop.f32.mrf.mxu0
  %v6857 = vadd.f32 %v6792, %v6856
  %6858 = vmatmul.f32.gmra.mxu0 %v5237
  %v6859 = vpop.f32.mrf.mxu0
  %v6860 = vadd.f32 %v6795, %v6859
  %6861 = vmatmul.f32.gmra.mxu0 %v5247
  %v6862 = vpop.f32.mrf.mxu0
  %v6863 = vadd.f32 %v6798, %v6862
  %6864 = vdwg.mxu0
  %6865 = vmatpush.msra.mxu0 %v5537
  %6866 = vmatpush.msra.mxu0 %v5535
  %6867 = vmatpush.msra.mxu0 %v5533
  %6868 = vmatpush.msra.mxu0 %v5531
  %6869 = vmatpush.msra.mxu0 %v5529
  %6870 = vmatpush.msra.mxu0 %v5527
  %6871 = vmatpush.msra.mxu0 %v5525
  %6872 = vmatpush.msra.mxu0 %v5523
  %6873 = vmatpush.msra.mxu0 %v5521
  %6874 = vmatpush.msra.mxu0 %v5519
  %6875 = vmatpush.msra.mxu0 %v5517
  %6876 = vmatpush.msra.mxu0 %v5515
  %6877 = vmatpush.msra.mxu0 %v5513
  %6878 = vmatpush.msra.mxu0 %v5511
  %6879 = vmatpush.msra.mxu0 %v5509
  %6880 = vmatpush.msra.mxu0 %v5507
  %6881 = vmatmul.f32.gmra.mxu0 %v5098
  %v6882 = vpop.f32.mrf.mxu0
  %v6883 = vadd.f32 %v6818, %v6882
  %6884 = vmatmul.f32.gmra.mxu0 %v5108
  %v6885 = vpop.f32.mrf.mxu0
  %v6886 = vadd.f32 %v6821, %v6885
  %6887 = vmatmul.f32.gmra.mxu0 %v5118
  %v6888 = vpop.f32.mrf.mxu0
  %v6889 = vadd.f32 %v6824, %v6888
  %6890 = vmatmul.f32.gmra.mxu0 %v5128
  %v6891 = vpop.f32.mrf.mxu0
  %v6892 = vadd.f32 %v6827, %v6891
  %6893 = vmatmul.f32.gmra.mxu0 %v5138
  %v6894 = vpop.f32.mrf.mxu0
  %v6895 = vadd.f32 %v6830, %v6894
  %6896 = vmatmul.f32.gmra.mxu0 %v5148
  %v6897 = vpop.f32.mrf.mxu0
  %v6898 = vadd.f32 %v6833, %v6897
  %6899 = vmatmul.f32.gmra.mxu0 %v5158
  %v6900 = vpop.f32.mrf.mxu0
  %v6901 = vadd.f32 %v6836, %v6900
  %6902 = vmatmul.f32.gmra.mxu0 %v5168
  %v6903 = vpop.f32.mrf.mxu0
  %v6904 = vadd.f32 %v6839, %v6903
  %6905 = vmatmul.f32.gmra.mxu0 %v5178
  %v6906 = vpop.f32.mrf.mxu0
  %v6907 = vadd.f32 %v6842, %v6906
  %6908 = vmatmul.f32.gmra.mxu0 %v5188
  %v6909 = vpop.f32.mrf.mxu0
  %v6910 = vadd.f32 %v6845, %v6909
  %6911 = vmatmul.f32.gmra.mxu0 %v5198
  %v6912 = vpop.f32.mrf.mxu0
  %v6913 = vadd.f32 %v6848, %v6912
  %6914 = vmatmul.f32.gmra.mxu0 %v5208
  %v6915 = vpop.f32.mrf.mxu0
  %v6916 = vadd.f32 %v6851, %v6915
  %6917 = vmatmul.f32.gmra.mxu0 %v5218
  %v6918 = vpop.f32.mrf.mxu0
  %v6919 = vadd.f32 %v6854, %v6918
  %6920 = vmatmul.f32.gmra.mxu0 %v5228
  %v6921 = vpop.f32.mrf.mxu0
  %v6922 = vadd.f32 %v6857, %v6921
  %6923 = vmatmul.f32.gmra.mxu0 %v5238
  %v6924 = vpop.f32.mrf.mxu0
  %v6925 = vadd.f32 %v6860, %v6924
  %6926 = vmatmul.f32.gmra.mxu0 %v5248
  %v6927 = vpop.f32.mrf.mxu0
  %v6928 = vadd.f32 %v6863, %v6927
  %6929 = vdwg.mxu0
  %6930 = vmatpush.msra.mxu0 0.0
  %6931 = vmatpush.msra.mxu0 0.0
  %6932 = vmatpush.msra.mxu0 0.0
  %6933 = vmatpush.msra.mxu0 0.0
  %6934 = vmatpush.msra.mxu0 0.0
  %6935 = vmatpush.msra.mxu0 0.0
  %6936 = vmatpush.msra.mxu0 0.0
  %6937 = vmatpush.msra.mxu0 0.0
  %6938 = vmatpush.msra.mxu0 0.0
  %6939 = vmatpush.msra.mxu0 0.0
  %6940 = vmatpush.msra.mxu0 %v5549
  %6941 = vmatpush.msra.mxu0 %v5547
  %6942 = vmatpush.msra.mxu0 %v5545
  %6943 = vmatpush.msra.mxu0 %v5543
  %6944 = vmatpush.msra.mxu0 %v5541
  %6945 = vmatpush.msra.mxu0 %v5539
  %6946 = vmatmul.f32.gmra.mxu0 %v5648
  %v6947 = vpop.f32.mrf.mxu0
  %v6948 = vadd.f32 %v6883, %v6947
  %6949 = vmatmul.f32.gmra.mxu0 %v5651
  %v6950 = vpop.f32.mrf.mxu0
  %v6951 = vadd.f32 %v6886, %v6950
  %6952 = vmatmul.f32.gmra.mxu0 %v5654
  %v6953 = vpop.f32.mrf.mxu0
  %v6954 = vadd.f32 %v6889, %v6953
  %6955 = vmatmul.f32.gmra.mxu0 %v5657
  %v6956 = vpop.f32.mrf.mxu0
  %v6957 = vadd.f32 %v6892, %v6956
  %6958 = vmatmul.f32.gmra.mxu0 %v5660
  %v6959 = vpop.f32.mrf.mxu0
  %v6960 = vadd.f32 %v6895, %v6959
  %6961 = vmatmul.f32.gmra.mxu0 %v5663
  %v6962 = vpop.f32.mrf.mxu0
  %v6963 = vadd.f32 %v6898, %v6962
  %6964 = vmatmul.f32.gmra.mxu0 %v5666
  %v6965 = vpop.f32.mrf.mxu0
  %v6966 = vadd.f32 %v6901, %v6965
  %6967 = vmatmul.f32.gmra.mxu0 %v5669
  %v6968 = vpop.f32.mrf.mxu0
  %v6969 = vadd.f32 %v6904, %v6968
  %6970 = vmatmul.f32.gmra.mxu0 %v5672
  %v6971 = vpop.f32.mrf.mxu0
  %v6972 = vadd.f32 %v6907, %v6971
  %6973 = vmatmul.f32.gmra.mxu0 %v5675
  %v6974 = vpop.f32.mrf.mxu0
  %v6975 = vadd.f32 %v6910, %v6974
  %6976 = vmatmul.f32.gmra.mxu0 %v5678
  %v6977 = vpop.f32.mrf.mxu0
  %v6978 = vadd.f32 %v6913, %v6977
  %6979 = vmatmul.f32.gmra.mxu0 %v5681
  %v6980 = vpop.f32.mrf.mxu0
  %v6981 = vadd.f32 %v6916, %v6980
  %6982 = vmatmul.f32.gmra.mxu0 %v5684
  %v6983 = vpop.f32.mrf.mxu0
  %v6984 = vadd.f32 %v6919, %v6983
  %6985 = vmatmul.f32.gmra.mxu0 %v5687
  %v6986 = vpop.f32.mrf.mxu0
  %v6987 = vadd.f32 %v6922, %v6986
  %6988 = vmatmul.f32.gmra.mxu0 %v5690
  %v6989 = vpop.f32.mrf.mxu0
  %v6990 = vadd.f32 %v6925, %v6989
  %6991 = vmatmul.f32.gmra.mxu0 %v5693
  %v6992 = vpop.f32.mrf.mxu0
  %v6993 = vadd.f32 %v6928, %v6992
  %6994 = vdwg.mxu0
  %v6995 = vmax.f32 %v6298, 0.0
  %v6996 = vmax.f32 %v6948, 0.0
  %v6997 = vmax.f32 %v6301, 0.0
  %v6998 = vmax.f32 %v6951, 0.0
  %v6999 = vmax.f32 %v6304, 0.0
  %v7000 = vmax.f32 %v6954, 0.0
  %v7001 = vmax.f32 %v6307, 0.0
  %v7002 = vmax.f32 %v6957, 0.0
  %v7003 = vmax.f32 %v6310, 0.0
  %v7004 = vmax.f32 %v6960, 0.0
  %v7005 = vmax.f32 %v6313, 0.0
  %v7006 = vmax.f32 %v6963, 0.0
  %v7007 = vmax.f32 %v6316, 0.0
  %v7008 = vmax.f32 %v6966, 0.0
  %v7009 = vmax.f32 %v6319, 0.0
  %v7010 = vmax.f32 %v6969, 0.0
  %v7011 = vmax.f32 %v6322, 0.0
  %v7012 = vmax.f32 %v6972, 0.0
  %v7013 = vmax.f32 %v6325, 0.0
  %v7014 = vmax.f32 %v6975, 0.0
  %v7015 = vmax.f32 %v6328, 0.0
  %v7016 = vmax.f32 %v6978, 0.0
  %v7017 = vmax.f32 %v6331, 0.0
  %v7018 = vmax.f32 %v6981, 0.0
  %v7019 = vmax.f32 %v6334, 0.0
  %v7020 = vmax.f32 %v6984, 0.0
  %v7021 = vmax.f32 %v6337, 0.0
  %v7022 = vmax.f32 %v6987, 0.0
  %v7023 = vmax.f32 %v6340, 0.0
  %v7024 = vmax.f32 %v6990, 0.0
  %v7025 = vmax.f32 %v6343, 0.0
  %v7026 = vmax.f32 %v6993, 0.0
  %7027 = vst [vmem:[#allocation5] sm:$0xff] %v6995
  %7028 = vst.msk [vmem:[#allocation5 + $0x8] sm:$0xff] %vm3188, %v6996
  %7031 = vrot.lane.b32.xlu0 %v6997, 12
  %v7032 = vpop.permute.xlu0 %7031
  %7033 = vrot.lane.b32.xlu0 %v6998, 12
  %v7034 = vpop.permute.xlu0 %7033
  %v7035 = vsel %vm3188, %v7032, %v7034
  %vm7038 = vcmask 1047648
  %7039 = vst.msk [vmem:[#allocation5 + $0x8] sm:$0xff] %vm7038, %v7032
  %vm7040 = vcmask 195584
  %7041 = vst.msk [vmem:[#allocation5 + $0x10] sm:$0xff] %vm7040, %v7035
  %7044 = vrot.lane.b32.xlu0 %v6999, 24
  %v7045 = vpop.permute.xlu0 %7044
  %7046 = vrot.lane.b32.xlu0 %v7000, 24
  %v7047 = vpop.permute.xlu0 %7046
  %v7048 = vsel %vm7040, %v7045, %v7047
  %vm7051 = vcmask 1047744
  %7052 = vst.msk [vmem:[#allocation5 + $0x10] sm:$0xff] %vm7051, %v7045
  %vm7053 = vcmask 293888
  %7054 = vst.msk [vmem:[#allocation5 + $0x18] sm:$0xff] %vm7053, %v7048
  %7057 = vrot.lane.b32.xlu0 %v7001, 36
  %v7058 = vpop.permute.xlu0 %7057
  %7059 = vrot.lane.b32.xlu0 %v7002, 36
  %v7060 = vpop.permute.xlu0 %7059
  %v7061 = vsel %vm7053, %v7058, %v7060
  %vm7064 = vcmask 1047840
  %7065 = vst.msk [vmem:[#allocation5 + $0x18] sm:$0xff] %vm7064, %v7058
  %7066 = vst.msk [vmem:[#allocation5 + $0x20] sm:$0xff] %vm5646, %v7061
  %7069 = vrot.lane.b32.xlu0 %v7003, 48
  %v7070 = vpop.permute.xlu0 %7069
  %7071 = vrot.lane.b32.xlu0 %v7004, 48
  %v7072 = vpop.permute.xlu0 %7071
  %v7073 = vsel %vm5646, %v7070, %v7072
  %vm7076 = vcmask 1047936
  %7077 = vst.msk [vmem:[#allocation5 + $0x20] sm:$0xff] %vm7076, %v7070
  %7078 = vst.msk [vmem:[#allocation5 + $0x28] sm:$0xff] %vm886, %v7073
  %7081 = vrot.lane.b32.xlu0 %v7005, 60
  %v7082 = vpop.permute.xlu0 %7081
  %7083 = vrot.lane.b32.xlu0 %v7006, 60
  %v7084 = vpop.permute.xlu0 %7083
  %v7085 = vsel %vm886, %v7082, %v7084
  %vm7088 = vcmask 1048032
  %7089 = vst.msk [vmem:[#allocation5 + $0x28] sm:$0xff] %vm7088, %v7082
  %7090 = vst.msk [vmem:[#allocation5 + $0x30] sm:$0xff] %vm1720, %v7085
  %7093 = vrot.lane.b32.xlu0 %v7007, 72
  %v7094 = vpop.permute.xlu0 %7093
  %7095 = vrot.lane.b32.xlu0 %v7008, 72
  %v7096 = vpop.permute.xlu0 %7095
  %v7097 = vsel %vm1720, %v7094, %v7096
  %vm7100 = vcmask 1048128
  %7101 = vst.msk [vmem:[#allocation5 + $0x30] sm:$0xff] %vm7100, %v7094
  %7102 = vst.msk [vmem:[#allocation5 + $0x38] sm:$0xff] %vm4507, %v7097
  %7105 = vrot.lane.b32.xlu0 %v7009, 84
  %v7106 = vpop.permute.xlu0 %7105
  %7107 = vrot.lane.b32.xlu0 %v7010, 84
  %v7108 = vpop.permute.xlu0 %7107
  %v7109 = vsel %vm4507, %v7106, %v7108
  %vm7112 = vcmask 1048224
  %7113 = vst.msk [vmem:[#allocation5 + $0x38] sm:$0xff] %vm7112, %v7106
  %7114 = vst.msk [vmem:[#allocation5 + $0x40] sm:$0xff] %vm337, %v7109
  %7117 = vrot.lane.b32.xlu0 %v7011, 96
  %v7118 = vpop.permute.xlu0 %7117
  %7119 = vrot.lane.b32.xlu0 %v7012, 96
  %v7120 = vpop.permute.xlu0 %7119
  %v7121 = vsel %vm337, %v7118, %v7120
  %vm7124 = vcmask 1048320
  %7125 = vst.msk [vmem:[#allocation5 + $0x40] sm:$0xff] %vm7124, %v7118
  %vm7126 = vcmask 883712
  %7127 = vst.msk [vmem:[#allocation5 + $0x48] sm:$0xff] %vm7126, %v7121
  %7130 = vrot.lane.b32.xlu0 %v7013, 108
  %v7131 = vpop.permute.xlu0 %7130
  %7132 = vrot.lane.b32.xlu0 %v7014, 108
  %v7133 = vpop.permute.xlu0 %7132
  %v7134 = vsel %vm7126, %v7131, %v7133
  %vm7137 = vcmask 1048416
  %7138 = vst.msk [vmem:[#allocation5 + $0x48] sm:$0xff] %vm7137, %v7131
  %vm7139 = vcmask 982016
  %7140 = vst.msk [vmem:[#allocation5 + $0x50] sm:$0xff] %vm7139, %v7134
  %7143 = vrot.lane.b32.xlu0 %v7015, 120
  %v7144 = vpop.permute.xlu0 %7143
  %7145 = vrot.lane.b32.xlu0 %v7016, 120
  %v7146 = vpop.permute.xlu0 %7145
  %v7147 = vsel %vm7139, %v7144, %v7146
  %vm7151 = vcmask 1048512
  %7152 = vst.msk [vmem:[#allocation5 + $0x50] sm:$0xff] %vm7151, %v7144
  %7153 = vst [vmem:[#allocation5 + $0x58] sm:$0xff] %v7147
  %vm7154 = vcmask 31744
  %7155 = vst.msk [vmem:[#allocation5 + $0x60] sm:$0xff] %vm7154, %v7146
  %7158 = vrot.lane.b32.xlu0 %v7017, 4
  %v7159 = vpop.permute.xlu0 %7158
  %7160 = vrot.lane.b32.xlu0 %v7018, 4
  %v7161 = vpop.permute.xlu0 %7160
  %v7162 = vsel %vm7154, %v7159, %v7161
  %vm7165 = vcmask 1047584
  %7166 = vst.msk [vmem:[#allocation5 + $0x60] sm:$0xff] %vm7165, %v7159
  %vm7167 = vcmask 130048
  %7168 = vst.msk [vmem:[#allocation5 + $0x68] sm:$0xff] %vm7167, %v7162
  %7171 = vrot.lane.b32.xlu0 %v7019, 16
  %v7172 = vpop.permute.xlu0 %7171
  %7173 = vrot.lane.b32.xlu0 %v7020, 16
  %v7174 = vpop.permute.xlu0 %7173
  %v7175 = vsel %vm7167, %v7172, %v7174
  %vm7178 = vcmask 1047680
  %7179 = vst.msk [vmem:[#allocation5 + $0x68] sm:$0xff] %vm7178, %v7172
  %7180 = vst.msk [vmem:[#allocation5 + $0x70] sm:$0xff] %vm1191, %v7175
  %7183 = vrot.lane.b32.xlu0 %v7021, 28
  %v7184 = vpop.permute.xlu0 %7183
  %7185 = vrot.lane.b32.xlu0 %v7022, 28
  %v7186 = vpop.permute.xlu0 %7185
  %v7187 = vsel %vm1191, %v7184, %v7186
  %vm7190 = vcmask 1047776
  %7191 = vst.msk [vmem:[#allocation5 + $0x70] sm:$0xff] %vm7190, %v7184
  %vm7192 = vcmask 326656
  %7193 = vst.msk [vmem:[#allocation5 + $0x78] sm:$0xff] %vm7192, %v7187
  %7196 = vrot.lane.b32.xlu0 %v7023, 40
  %v7197 = vpop.permute.xlu0 %7196
  %7198 = vrot.lane.b32.xlu0 %v7024, 40
  %v7199 = vpop.permute.xlu0 %7198
  %v7200 = vsel %vm7192, %v7197, %v7199
  %vm7203 = vcmask 1047872
  %7204 = vst.msk [vmem:[#allocation5 + $0x78] sm:$0xff] %vm7203, %v7197
  %vm7205 = vcmask 424960
  %7206 = vst.msk [vmem:[#allocation5 + $0x80] sm:$0xff] %vm7205, %v7200
  %7209 = vrot.lane.b32.xlu0 %v7025, 52
  %v7210 = vpop.permute.xlu0 %7209
  %7211 = vrot.lane.b32.xlu0 %v7026, 52
  %v7212 = vpop.permute.xlu0 %7211
  %v7213 = vsel %vm7205, %v7210, %v7212
  %vm7216 = vcmask 1047968
  %7217 = vst.msk [vmem:[#allocation5 + $0x80] sm:$0xff] %vm7216, %v7210
  %7218 = vst.msk [vmem:[#allocation5 + $0x88] sm:$0xff] %vm642, %v7213
  %v7219 = vld [vmem:[#allocation5] sm:$0xff]
  %v7220 = vld [vmem:[#allocation5 + $0x8] sm:$0xff]
  %v7221 = vld [vmem:[#allocation5 + $0x10] sm:$0xff]
  %v7222 = vld [vmem:[#allocation5 + $0x18] sm:$0xff]
  %v7223 = vld [vmem:[#allocation5 + $0x20] sm:$0xff]
  %v7224 = vld [vmem:[#allocation5 + $0x28] sm:$0xff]
  %v7225 = vld [vmem:[#allocation5 + $0x30] sm:$0xff]
  %v7226 = vld [vmem:[#allocation5 + $0x38] sm:$0xff]
  %v7227 = vld [vmem:[#allocation5 + $0x40] sm:$0xff]
  %v7228 = vld [vmem:[#allocation5 + $0x48] sm:$0xff]
  %v7229 = vld [vmem:[#allocation5 + $0x50] sm:$0xff]
  %v7230 = vld [vmem:[#allocation5 + $0x58] sm:$0xff]
  %v7231 = vld [vmem:[#allocation5 + $0x60] sm:$0xff]
  %v7232 = vld [vmem:[#allocation5 + $0x68] sm:$0xff]
  %v7233 = vld [vmem:[#allocation5 + $0x70] sm:$0xff]
  %v7234 = vld [vmem:[#allocation5 + $0x78] sm:$0xff]
  %v7235 = vld [vmem:[#allocation5 + $0x80] sm:$0xff]
  %v7236 = vld [vmem:[#allocation5 + $0x88] sm:$0xff]
  %v7237 = vld [vmem:[%s6] sm:$0xff]
  %v7238 = vld [vmem:[%s6 + $0x8] sm:$0xff]
  %v7239 = vld [vmem:[%s6 + $0x10] sm:$0xff]
  %v7240 = vld [vmem:[%s6 + $0x18] sm:$0xff]
  %v7241 = vld [vmem:[%s6 + $0x20] sm:$0xff]
  %v7242 = vld [vmem:[%s6 + $0x28] sm:$0xff]
  %v7243 = vld [vmem:[%s6 + $0x30] sm:$0xff]
  %v7244 = vld [vmem:[%s6 + $0x38] sm:$0xff]
  %v7245 = vld [vmem:[%s6 + $0x40] sm:$0xff]
  %v7246 = vld [vmem:[%s6 + $0x48] sm:$0xff]
  %v7247 = vld [vmem:[%s6 + $0x50] sm:$0xff]
  %v7248 = vld [vmem:[%s6 + $0x58] sm:$0xff]
  %v7249 = vld [vmem:[%s6 + $0x60] sm:$0xff]
  %v7250 = vld [vmem:[%s6 + $0x68] sm:$0xff]
  %v7251 = vld [vmem:[%s6 + $0x70] sm:$0xff]
  %v7252 = vld [vmem:[%s6 + $0x78] sm:$0xff]
  %v7253 = vld [vmem:[%s6 + $0x80] sm:$0xff]
  %v7254 = vld [vmem:[%s6 + $0x88] sm:$0xff]
  %v7255 = vld [vmem:[%s6 + $0x90] sm:$0xff]
  %v7256 = vld [vmem:[%s6 + $0x98] sm:$0xff]
  %v7257 = vld [vmem:[%s6 + $0xa0] sm:$0xff]
  %v7258 = vld [vmem:[%s6 + $0xa8] sm:$0xff]
  %v7259 = vld [vmem:[%s6 + $0xb0] sm:$0xff]
  %v7260 = vld [vmem:[%s6 + $0xb8] sm:$0xff]
  %v7261 = vld [vmem:[%s6 + $0xc0] sm:$0xff]
  %v7262 = vld [vmem:[%s6 + $0xc8] sm:$0xff]
  %v7263 = vld [vmem:[%s6 + $0xd0] sm:$0xff]
  %v7264 = vld [vmem:[%s6 + $0xd8] sm:$0xff]
  %v7265 = vld [vmem:[%s6 + $0xe0] sm:$0xff]
  %v7266 = vld [vmem:[%s6 + $0xe8] sm:$0xff]
  %v7267 = vld [vmem:[%s6 + $0xf0] sm:$0xff]
  %v7268 = vld [vmem:[%s6 + $0xf8] sm:$0xff]
  %v7269 = vld [vmem:[%s6 + $0x100] sm:$0xff]
  %v7270 = vld [vmem:[%s6 + $0x108] sm:$0xff]
  %v7271 = vld [vmem:[%s6 + $0x110] sm:$0xff]
  %v7272 = vld [vmem:[%s6 + $0x118] sm:$0xff]
  %v7273 = vld [vmem:[%s6 + $0x120] sm:$0xff]
  %v7274 = vld [vmem:[%s6 + $0x128] sm:$0xff]
  %v7275 = vld [vmem:[%s6 + $0x130] sm:$0xff]
  %v7276 = vld [vmem:[%s6 + $0x138] sm:$0xff]
  %v7277 = vld [vmem:[%s6 + $0x140] sm:$0xff]
  %v7278 = vld [vmem:[%s6 + $0x148] sm:$0xff]
  %v7279 = vld [vmem:[%s6 + $0x150] sm:$0xff]
  %v7280 = vld [vmem:[%s6 + $0x158] sm:$0xff]
  %v7281 = vld [vmem:[%s6 + $0x160] sm:$0xff]
  %v7282 = vld [vmem:[%s6 + $0x168] sm:$0xff]
  %v7283 = vld [vmem:[%s6 + $0x170] sm:$0xff]
  %v7284 = vld [vmem:[%s6 + $0x178] sm:$0xff]
  %v7285 = vld [vmem:[%s6 + $0x180] sm:$0xff]
  %v7286 = vld [vmem:[%s6 + $0x188] sm:$0xff]
  %v7287 = vld [vmem:[%s6 + $0x190] sm:$0xff]
  %v7288 = vld [vmem:[%s6 + $0x198] sm:$0xff]
  %v7289 = vld [vmem:[%s6 + $0x1a0] sm:$0xff]
  %v7290 = vld [vmem:[%s6 + $0x1a8] sm:$0xff]
  %v7291 = vld [vmem:[%s6 + $0x1b0] sm:$0xff]
  %v7292 = vld [vmem:[%s6 + $0x1b8] sm:$0xff]
  %v7293 = vld [vmem:[%s6 + $0x1c0] sm:$0xff]
  %v7294 = vld [vmem:[%s6 + $0x1c8] sm:$0xff]
  %v7295 = vld [vmem:[%s6 + $0x1d0] sm:$0xff]
  %v7296 = vld [vmem:[%s6 + $0x1d8] sm:$0xff]
  %v7297 = vld [vmem:[%s6 + $0x1e0] sm:$0xff]
  %v7298 = vld [vmem:[%s6 + $0x1e8] sm:$0xff]
  %v7299 = vld [vmem:[%s6 + $0x1f0] sm:$0xff]
  %v7300 = vld [vmem:[%s6 + $0x1f8] sm:$0xff]
  %v7301 = vld [vmem:[%s6 + $0x200] sm:$0xff]
  %v7302 = vld [vmem:[%s6 + $0x208] sm:$0xff]
  %v7303 = vld [vmem:[%s6 + $0x210] sm:$0xff]
  %v7304 = vld [vmem:[%s6 + $0x218] sm:$0xff]
  %v7305 = vld [vmem:[%s6 + $0x220] sm:$0xff]
  %v7306 = vld [vmem:[%s6 + $0x228] sm:$0xff]
  %v7307 = vld [vmem:[%s6 + $0x230] sm:$0xff]
  %v7308 = vld [vmem:[%s6 + $0x238] sm:$0xff]
  %v7309 = vld [vmem:[%s6 + $0x240] sm:$0xff]
  %v7310 = vld [vmem:[%s6 + $0x248] sm:$0xff]
  %v7311 = vld [vmem:[%s6 + $0x250] sm:$0xff]
  %v7312 = vld [vmem:[%s6 + $0x258] sm:$0xff]
  %v7313 = vld [vmem:[%s6 + $0x260] sm:$0xff]
  %v7314 = vld [vmem:[%s6 + $0x268] sm:$0xff]
  %v7315 = vld [vmem:[%s6 + $0x270] sm:$0xff]
  %v7316 = vld [vmem:[%s6 + $0x278] sm:$0xff]
  %v7317 = vld [vmem:[%s6 + $0x280] sm:$0xff]
  %v7318 = vld [vmem:[%s6 + $0x288] sm:$0xff]
  %v7319 = vld [vmem:[%s6 + $0x290] sm:$0xff]
  %v7320 = vld [vmem:[%s6 + $0x298] sm:$0xff]
  %v7321 = vld [vmem:[%s6 + $0x2a0] sm:$0xff]
  %v7322 = vld [vmem:[%s6 + $0x2a8] sm:$0xff]
  %v7323 = vld [vmem:[%s6 + $0x2b0] sm:$0xff]
  %v7324 = vld [vmem:[%s6 + $0x2b8] sm:$0xff]
  %v7325 = vld [vmem:[%s6 + $0x2c0] sm:$0xff]
  %v7326 = vld [vmem:[%s6 + $0x2c8] sm:$0xff]
  %v7327 = vld [vmem:[%s6 + $0x2d0] sm:$0xff]
  %v7328 = vld [vmem:[%s6 + $0x2d8] sm:$0xff]
  %v7329 = vld [vmem:[%s6 + $0x2e0] sm:$0xff]
  %v7330 = vld [vmem:[%s6 + $0x2e8] sm:$0xff]
  %v7331 = vld [vmem:[%s6 + $0x2f0] sm:$0xff]
  %v7332 = vld [vmem:[%s6 + $0x2f8] sm:$0xff]
  %v7333 = vld [vmem:[%s6 + $0x300] sm:$0xff]
  %v7334 = vld [vmem:[%s6 + $0x308] sm:$0xff]
  %v7335 = vld [vmem:[%s6 + $0x310] sm:$0xff]
  %v7336 = vld [vmem:[%s6 + $0x318] sm:$0xff]
  %v7337 = vld [vmem:[%s6 + $0x320] sm:$0xff]
  %v7338 = vld [vmem:[%s6 + $0x328] sm:$0xff]
  %v7339 = vld [vmem:[%s6 + $0x330] sm:$0xff]
  %v7340 = vld [vmem:[%s6 + $0x338] sm:$0xff]
  %v7341 = vld [vmem:[%s6 + $0x340] sm:$0xff]
  %v7342 = vld [vmem:[%s6 + $0x348] sm:$0xff]
  %v7343 = vld [vmem:[%s6 + $0x350] sm:$0xff]
  %v7344 = vld [vmem:[%s6 + $0x358] sm:$0xff]
  %v7345 = vld [vmem:[%s6 + $0x360] sm:$0xff]
  %v7346 = vld [vmem:[%s6 + $0x368] sm:$0xff]
  %v7347 = vld [vmem:[%s6 + $0x370] sm:$0xff]
  %v7348 = vld [vmem:[%s6 + $0x378] sm:$0xff]
  %v7349 = vld [vmem:[%s6 + $0x380] sm:$0xff]
  %v7350 = vld [vmem:[%s6 + $0x388] sm:$0xff]
  %v7351 = vld [vmem:[%s6 + $0x390] sm:$0xff]
  %v7352 = vld [vmem:[%s6 + $0x398] sm:$0xff]
  %v7353 = vld [vmem:[%s6 + $0x3a0] sm:$0xff]
  %v7354 = vld [vmem:[%s6 + $0x3a8] sm:$0xff]
  %v7355 = vld [vmem:[%s6 + $0x3b0] sm:$0xff]
  %v7356 = vld [vmem:[%s6 + $0x3b8] sm:$0xff]
  %v7357 = vld [vmem:[%s6 + $0x3c0] sm:$0xff]
  %v7358 = vld [vmem:[%s6 + $0x3c8] sm:$0xff]
  %v7359 = vld [vmem:[%s6 + $0x3d0] sm:$0xff]
  %v7360 = vld [vmem:[%s6 + $0x3d8] sm:$0xff]
  %v7361 = vld [vmem:[%s6 + $0x3e0] sm:$0xff]
  %v7362 = vld [vmem:[%s6 + $0x3e8] sm:$0xff]
  %v7363 = vld [vmem:[%s6 + $0x3f0] sm:$0xff]
  %v7364 = vld [vmem:[%s6 + $0x3f8] sm:$0xff]
  %v7365 = vld [vmem:[%s6 + $0x400] sm:$0xff]
  %v7366 = vld [vmem:[%s6 + $0x408] sm:$0xff]
  %v7367 = vld [vmem:[%s6 + $0x410] sm:$0xff]
  %v7368 = vld [vmem:[%s6 + $0x418] sm:$0xff]
  %v7369 = vld [vmem:[%s6 + $0x420] sm:$0xff]
  %v7370 = vld [vmem:[%s6 + $0x428] sm:$0xff]
  %v7371 = vld [vmem:[%s6 + $0x430] sm:$0xff]
  %v7372 = vld [vmem:[%s6 + $0x438] sm:$0xff]
  %v7373 = vld [vmem:[%s6 + $0x440] sm:$0xff]
  %v7374 = vld [vmem:[%s6 + $0x448] sm:$0xff]
  %v7375 = vld [vmem:[%s6 + $0x450] sm:$0xff]
  %v7376 = vld [vmem:[%s6 + $0x458] sm:$0xff]
  %v7377 = vld [vmem:[%s6 + $0x460] sm:$0xff]
  %v7378 = vld [vmem:[%s6 + $0x468] sm:$0xff]
  %v7379 = vld [vmem:[%s6 + $0x470] sm:$0xff]
  %v7380 = vld [vmem:[%s6 + $0x478] sm:$0xff]
  %v7381 = vld [vmem:[%s6 + $0x480] sm:$0xff]
  %v7382 = vld [vmem:[%s6 + $0x488] sm:$0xff]
  %v7383 = vld [vmem:[%s6 + $0x490] sm:$0xff]
  %v7384 = vld [vmem:[%s6 + $0x498] sm:$0xff]
  %v7385 = vld [vmem:[%s6 + $0x4a0] sm:$0xff]
  %v7386 = vld [vmem:[%s6 + $0x4a8] sm:$0xff]
  %v7387 = vld [vmem:[%s6 + $0x4b0] sm:$0xff]
  %v7388 = vld [vmem:[%s6 + $0x4b8] sm:$0xff]
  %v7389 = vld [vmem:[%s6 + $0x4c0] sm:$0xff]
  %v7390 = vld [vmem:[%s6 + $0x4c8] sm:$0xff]
  %v7391 = vld [vmem:[%s6 + $0x4d0] sm:$0xff]
  %v7392 = vld [vmem:[%s6 + $0x4d8] sm:$0xff]
  %v7393 = vld [vmem:[%s6 + $0x4e0] sm:$0xff]
  %v7394 = vld [vmem:[%s6 + $0x4e8] sm:$0xff]
  %v7395 = vld [vmem:[%s6 + $0x4f0] sm:$0xff]
  %v7396 = vld [vmem:[%s6 + $0x4f8] sm:$0xff]
  %v7397 = vld [vmem:[%s6 + $0x500] sm:$0xff]
  %v7398 = vld [vmem:[%s6 + $0x508] sm:$0xff]
  %v7399 = vld [vmem:[%s6 + $0x510] sm:$0xff]
  %v7400 = vld [vmem:[%s6 + $0x518] sm:$0xff]
  %v7401 = vld [vmem:[%s6 + $0x520] sm:$0xff]
  %v7402 = vld [vmem:[%s6 + $0x528] sm:$0xff]
  %v7403 = vld [vmem:[%s6 + $0x530] sm:$0xff]
  %v7404 = vld [vmem:[%s6 + $0x538] sm:$0xff]
  %v7405 = vld [vmem:[%s6 + $0x540] sm:$0xff]
  %v7406 = vld [vmem:[%s6 + $0x548] sm:$0xff]
  %v7407 = vld [vmem:[%s6 + $0x550] sm:$0xff]
  %v7408 = vld [vmem:[%s6 + $0x558] sm:$0xff]
  %v7409 = vld [vmem:[%s6 + $0x560] sm:$0xff]
  %v7410 = vld [vmem:[%s6 + $0x568] sm:$0xff]
  %v7411 = vld [vmem:[%s6 + $0x570] sm:$0xff]
  %v7412 = vld [vmem:[%s6 + $0x578] sm:$0xff]
  %v7413 = vld [vmem:[%s6 + $0x580] sm:$0xff]
  %v7414 = vld [vmem:[%s6 + $0x588] sm:$0xff]
  %v7415 = vld [vmem:[%s6 + $0x590] sm:$0xff]
  %v7416 = vld [vmem:[%s6 + $0x598] sm:$0xff]
  %v7417 = vld [vmem:[%s6 + $0x5a0] sm:$0xff]
  %v7418 = vld [vmem:[%s6 + $0x5a8] sm:$0xff]
  %v7419 = vld [vmem:[%s6 + $0x5b0] sm:$0xff]
  %v7420 = vld [vmem:[%s6 + $0x5b8] sm:$0xff]
  %v7421 = vld [vmem:[%s6 + $0x5c0] sm:$0xff]
  %v7422 = vld [vmem:[%s6 + $0x5c8] sm:$0xff]
  %v7423 = vld [vmem:[%s6 + $0x5d0] sm:$0xff]
  %v7424 = vld [vmem:[%s6 + $0x5d8] sm:$0xff]
  %v7425 = vld [vmem:[%s6 + $0x5e0] sm:$0xff]
  %v7426 = vld [vmem:[%s6 + $0x5e8] sm:$0xff]
  %v7427 = vld [vmem:[%s6 + $0x5f0] sm:$0xff]
  %v7428 = vld [vmem:[%s6 + $0x5f8] sm:$0xff]
  %v7429 = vld [vmem:[%s6 + $0x600] sm:$0xff]
  %v7430 = vld [vmem:[%s6 + $0x608] sm:$0xff]
  %v7431 = vld [vmem:[%s6 + $0x610] sm:$0xff]
  %v7432 = vld [vmem:[%s6 + $0x618] sm:$0xff]
  %v7433 = vld [vmem:[%s6 + $0x620] sm:$0xff]
  %v7434 = vld [vmem:[%s6 + $0x628] sm:$0xff]
  %v7435 = vld [vmem:[%s6 + $0x630] sm:$0xff]
  %v7436 = vld [vmem:[%s6 + $0x638] sm:$0xff]
  %v7437 = vld [vmem:[%s6 + $0x640] sm:$0xff]
  %v7438 = vld [vmem:[%s6 + $0x648] sm:$0xff]
  %v7439 = vld [vmem:[%s6 + $0x650] sm:$0xff]
  %v7440 = vld [vmem:[%s6 + $0x658] sm:$0xff]
  %v7441 = vld [vmem:[%s6 + $0x660] sm:$0xff]
  %v7442 = vld [vmem:[%s6 + $0x668] sm:$0xff]
  %v7443 = vld [vmem:[%s6 + $0x670] sm:$0xff]
  %v7444 = vld [vmem:[%s6 + $0x678] sm:$0xff]
  %v7445 = vld [vmem:[%s6 + $0x680] sm:$0xff]
  %v7446 = vld [vmem:[%s6 + $0x688] sm:$0xff]
  %v7447 = vld [vmem:[%s6 + $0x690] sm:$0xff]
  %v7448 = vld [vmem:[%s6 + $0x698] sm:$0xff]
  %v7449 = vld [vmem:[%s6 + $0x6a0] sm:$0xff]
  %v7450 = vld [vmem:[%s6 + $0x6a8] sm:$0xff]
  %v7451 = vld [vmem:[%s6 + $0x6b0] sm:$0xff]
  %v7452 = vld [vmem:[%s6 + $0x6b8] sm:$0xff]
  %v7453 = vld [vmem:[%s6 + $0x6c0] sm:$0xff]
  %v7454 = vld [vmem:[%s6 + $0x6c8] sm:$0xff]
  %v7455 = vld [vmem:[%s6 + $0x6d0] sm:$0xff]
  %v7456 = vld [vmem:[%s6 + $0x6d8] sm:$0xff]
  %v7457 = vld [vmem:[%s6 + $0x6e0] sm:$0xff]
  %v7458 = vld [vmem:[%s6 + $0x6e8] sm:$0xff]
  %v7459 = vld [vmem:[%s6 + $0x6f0] sm:$0xff]
  %v7460 = vld [vmem:[%s6 + $0x6f8] sm:$0xff]
  %v7461 = vld [vmem:[%s6 + $0x700] sm:$0xff]
  %v7462 = vld [vmem:[%s6 + $0x708] sm:$0xff]
  %v7463 = vld [vmem:[%s6 + $0x710] sm:$0xff]
  %v7464 = vld [vmem:[%s6 + $0x718] sm:$0xff]
  %v7465 = vld [vmem:[%s6 + $0x720] sm:$0xff]
  %v7466 = vld [vmem:[%s6 + $0x728] sm:$0xff]
  %v7467 = vld [vmem:[%s6 + $0x730] sm:$0xff]
  %v7468 = vld [vmem:[%s6 + $0x738] sm:$0xff]
  %v7469 = vld [vmem:[%s6 + $0x740] sm:$0xff]
  %v7470 = vld [vmem:[%s6 + $0x748] sm:$0xff]
  %v7471 = vld [vmem:[%s6 + $0x750] sm:$0xff]
  %v7472 = vld [vmem:[%s6 + $0x758] sm:$0xff]
  %v7473 = vld [vmem:[%s6 + $0x760] sm:$0xff]
  %v7474 = vld [vmem:[%s6 + $0x768] sm:$0xff]
  %v7475 = vld [vmem:[%s6 + $0x770] sm:$0xff]
  %v7476 = vld [vmem:[%s6 + $0x778] sm:$0xff]
  %v7477 = vld [vmem:[%s6 + $0x780] sm:$0xff]
  %v7478 = vld [vmem:[%s6 + $0x788] sm:$0xff]
  %v7479 = vld [vmem:[%s6 + $0x790] sm:$0xff]
  %v7480 = vld [vmem:[%s6 + $0x798] sm:$0xff]
  %v7481 = vld [vmem:[%s6 + $0x7a0] sm:$0xff]
  %v7482 = vld [vmem:[%s6 + $0x7a8] sm:$0xff]
  %v7483 = vld [vmem:[%s6 + $0x7b0] sm:$0xff]
  %v7484 = vld [vmem:[%s6 + $0x7b8] sm:$0xff]
  %v7485 = vld [vmem:[%s6 + $0x7c0] sm:$0xff]
  %v7486 = vld [vmem:[%s6 + $0x7c8] sm:$0xff]
  %v7487 = vld [vmem:[%s6 + $0x7d0] sm:$0xff]
  %v7488 = vld [vmem:[%s6 + $0x7d8] sm:$0xff]
  %v7489 = vld [vmem:[%s6 + $0x7e0] sm:$0xff]
  %v7490 = vld [vmem:[%s6 + $0x7e8] sm:$0xff]
  %v7491 = vld [vmem:[%s6 + $0x7f0] sm:$0xff]
  %v7492 = vld [vmem:[%s6 + $0x7f8] sm:$0xff]
  %v7493 = vld [vmem:[%s6 + $0x800] sm:$0xff]
  %v7494 = vld [vmem:[%s6 + $0x808] sm:$0xff]
  %v7495 = vld [vmem:[%s6 + $0x810] sm:$0xff]
  %v7496 = vld [vmem:[%s6 + $0x818] sm:$0xff]
  %v7497 = vld [vmem:[%s6 + $0x820] sm:$0xff]
  %v7498 = vld [vmem:[%s6 + $0x828] sm:$0xff]
  %v7499 = vld [vmem:[%s6 + $0x830] sm:$0xff]
  %v7500 = vld [vmem:[%s6 + $0x838] sm:$0xff]
  %v7501 = vld [vmem:[%s6 + $0x840] sm:$0xff]
  %v7502 = vld [vmem:[%s6 + $0x848] sm:$0xff]
  %v7503 = vld [vmem:[%s6 + $0x850] sm:$0xff]
  %v7504 = vld [vmem:[%s6 + $0x858] sm:$0xff]
  %v7505 = vld [vmem:[%s6 + $0x860] sm:$0xff]
  %v7506 = vld [vmem:[%s6 + $0x868] sm:$0xff]
  %v7507 = vld [vmem:[%s6 + $0x870] sm:$0xff]
  %v7508 = vld [vmem:[%s6 + $0x878] sm:$0xff]
  %v7509 = vld [vmem:[%s6 + $0x880] sm:$0xff]
  %v7510 = vld [vmem:[%s6 + $0x888] sm:$0xff]
  %v7511 = vld [vmem:[%s6 + $0x890] sm:$0xff]
  %v7512 = vld [vmem:[%s6 + $0x898] sm:$0xff]
  %v7513 = vld [vmem:[%s6 + $0x8a0] sm:$0xff]
  %v7514 = vld [vmem:[%s6 + $0x8a8] sm:$0xff]
  %v7515 = vld [vmem:[%s6 + $0x8b0] sm:$0xff]
  %v7516 = vld [vmem:[%s6 + $0x8b8] sm:$0xff]
  %v7517 = vld [vmem:[%s7] sm:$0x1]
  %v7519 = vperm.slane %v7517, 0
  %v7522 = vsel %vm642, %v7236, 0
  %7524 = vmatpush.msra.mxu0 %v7252
  %7525 = vmatpush.msra.mxu0 %v7251
  %7526 = vmatpush.msra.mxu0 %v7250
  %7527 = vmatpush.msra.mxu0 %v7249
  %7528 = vmatpush.msra.mxu0 %v7248
  %7529 = vmatpush.msra.mxu0 %v7247
  %7530 = vmatpush.msra.mxu0 %v7246
  %7531 = vmatpush.msra.mxu0 %v7245
  %7532 = vmatpush.msra.mxu0 %v7244
  %7533 = vmatpush.msra.mxu0 %v7243
  %7534 = vmatpush.msra.mxu0 %v7242
  %7535 = vmatpush.msra.mxu0 %v7241
  %7536 = vmatpush.msra.mxu0 %v7240
  %7537 = vmatpush.msra.mxu0 %v7239
  %7538 = vmatpush.msra.mxu0 %v7238
  %7539 = vmatpush.msra.mxu0 %v7237
  %7540 = vmatmul.f32.gmra.mxu0 %v7219
  %v7541 = vpop.f32.mrf.mxu0
  %v7542 = vadd.f32 %v7519, %v7541
  %7543 = vdwg.mxu0
  %7544 = vmatpush.msra.mxu0 %v7268
  %7545 = vmatpush.msra.mxu0 %v7267
  %7546 = vmatpush.msra.mxu0 %v7266
  %7547 = vmatpush.msra.mxu0 %v7265
  %7548 = vmatpush.msra.mxu0 %v7264
  %7549 = vmatpush.msra.mxu0 %v7263
  %7550 = vmatpush.msra.mxu0 %v7262
  %7551 = vmatpush.msra.mxu0 %v7261
  %7552 = vmatpush.msra.mxu0 %v7260
  %7553 = vmatpush.msra.mxu0 %v7259
  %7554 = vmatpush.msra.mxu0 %v7258
  %7555 = vmatpush.msra.mxu0 %v7257
  %7556 = vmatpush.msra.mxu0 %v7256
  %7557 = vmatpush.msra.mxu0 %v7255
  %7558 = vmatpush.msra.mxu0 %v7254
  %7559 = vmatpush.msra.mxu0 %v7253
  %7560 = vmatmul.f32.gmra.mxu0 %v7220
  %v7561 = vpop.f32.mrf.mxu0
  %v7562 = vadd.f32 %v7542, %v7561
  %7563 = vdwg.mxu0
  %7564 = vmatpush.msra.mxu0 %v7284
  %7565 = vmatpush.msra.mxu0 %v7283
  %7566 = vmatpush.msra.mxu0 %v7282
  %7567 = vmatpush.msra.mxu0 %v7281
  %7568 = vmatpush.msra.mxu0 %v7280
  %7569 = vmatpush.msra.mxu0 %v7279
  %7570 = vmatpush.msra.mxu0 %v7278
  %7571 = vmatpush.msra.mxu0 %v7277
  %7572 = vmatpush.msra.mxu0 %v7276
  %7573 = vmatpush.msra.mxu0 %v7275
  %7574 = vmatpush.msra.mxu0 %v7274
  %7575 = vmatpush.msra.mxu0 %v7273
  %7576 = vmatpush.msra.mxu0 %v7272
  %7577 = vmatpush.msra.mxu0 %v7271
  %7578 = vmatpush.msra.mxu0 %v7270
  %7579 = vmatpush.msra.mxu0 %v7269
  %7580 = vmatmul.f32.gmra.mxu0 %v7221
  %v7581 = vpop.f32.mrf.mxu0
  %v7582 = vadd.f32 %v7562, %v7581
  %7583 = vdwg.mxu0
  %7584 = vmatpush.msra.mxu0 %v7300
  %7585 = vmatpush.msra.mxu0 %v7299
  %7586 = vmatpush.msra.mxu0 %v7298
  %7587 = vmatpush.msra.mxu0 %v7297
  %7588 = vmatpush.msra.mxu0 %v7296
  %7589 = vmatpush.msra.mxu0 %v7295
  %7590 = vmatpush.msra.mxu0 %v7294
  %7591 = vmatpush.msra.mxu0 %v7293
  %7592 = vmatpush.msra.mxu0 %v7292
  %7593 = vmatpush.msra.mxu0 %v7291
  %7594 = vmatpush.msra.mxu0 %v7290
  %7595 = vmatpush.msra.mxu0 %v7289
  %7596 = vmatpush.msra.mxu0 %v7288
  %7597 = vmatpush.msra.mxu0 %v7287
  %7598 = vmatpush.msra.mxu0 %v7286
  %7599 = vmatpush.msra.mxu0 %v7285
  %7600 = vmatmul.f32.gmra.mxu0 %v7222
  %v7601 = vpop.f32.mrf.mxu0
  %v7602 = vadd.f32 %v7582, %v7601
  %7603 = vdwg.mxu0
  %7604 = vmatpush.msra.mxu0 %v7316
  %7605 = vmatpush.msra.mxu0 %v7315
  %7606 = vmatpush.msra.mxu0 %v7314
  %7607 = vmatpush.msra.mxu0 %v7313
  %7608 = vmatpush.msra.mxu0 %v7312
  %7609 = vmatpush.msra.mxu0 %v7311
  %7610 = vmatpush.msra.mxu0 %v7310
  %7611 = vmatpush.msra.mxu0 %v7309
  %7612 = vmatpush.msra.mxu0 %v7308
  %7613 = vmatpush.msra.mxu0 %v7307
  %7614 = vmatpush.msra.mxu0 %v7306
  %7615 = vmatpush.msra.mxu0 %v7305
  %7616 = vmatpush.msra.mxu0 %v7304
  %7617 = vmatpush.msra.mxu0 %v7303
  %7618 = vmatpush.msra.mxu0 %v7302
  %7619 = vmatpush.msra.mxu0 %v7301
  %7620 = vmatmul.f32.gmra.mxu0 %v7223
  %v7621 = vpop.f32.mrf.mxu0
  %v7622 = vadd.f32 %v7602, %v7621
  %7623 = vdwg.mxu0
  %7624 = vmatpush.msra.mxu0 %v7332
  %7625 = vmatpush.msra.mxu0 %v7331
  %7626 = vmatpush.msra.mxu0 %v7330
  %7627 = vmatpush.msra.mxu0 %v7329
  %7628 = vmatpush.msra.mxu0 %v7328
  %7629 = vmatpush.msra.mxu0 %v7327
  %7630 = vmatpush.msra.mxu0 %v7326
  %7631 = vmatpush.msra.mxu0 %v7325
  %7632 = vmatpush.msra.mxu0 %v7324
  %7633 = vmatpush.msra.mxu0 %v7323
  %7634 = vmatpush.msra.mxu0 %v7322
  %7635 = vmatpush.msra.mxu0 %v7321
  %7636 = vmatpush.msra.mxu0 %v7320
  %7637 = vmatpush.msra.mxu0 %v7319
  %7638 = vmatpush.msra.mxu0 %v7318
  %7639 = vmatpush.msra.mxu0 %v7317
  %7640 = vmatmul.f32.gmra.mxu0 %v7224
  %v7641 = vpop.f32.mrf.mxu0
  %v7642 = vadd.f32 %v7622, %v7641
  %7643 = vdwg.mxu0
  %7644 = vmatpush.msra.mxu0 %v7348
  %7645 = vmatpush.msra.mxu0 %v7347
  %7646 = vmatpush.msra.mxu0 %v7346
  %7647 = vmatpush.msra.mxu0 %v7345
  %7648 = vmatpush.msra.mxu0 %v7344
  %7649 = vmatpush.msra.mxu0 %v7343
  %7650 = vmatpush.msra.mxu0 %v7342
  %7651 = vmatpush.msra.mxu0 %v7341
  %7652 = vmatpush.msra.mxu0 %v7340
  %7653 = vmatpush.msra.mxu0 %v7339
  %7654 = vmatpush.msra.mxu0 %v7338
  %7655 = vmatpush.msra.mxu0 %v7337
  %7656 = vmatpush.msra.mxu0 %v7336
  %7657 = vmatpush.msra.mxu0 %v7335
  %7658 = vmatpush.msra.mxu0 %v7334
  %7659 = vmatpush.msra.mxu0 %v7333
  %7660 = vmatmul.f32.gmra.mxu0 %v7225
  %v7661 = vpop.f32.mrf.mxu0
  %v7662 = vadd.f32 %v7642, %v7661
  %7663 = vdwg.mxu0
  %7664 = vmatpush.msra.mxu0 %v7364
  %7665 = vmatpush.msra.mxu0 %v7363
  %7666 = vmatpush.msra.mxu0 %v7362
  %7667 = vmatpush.msra.mxu0 %v7361
  %7668 = vmatpush.msra.mxu0 %v7360
  %7669 = vmatpush.msra.mxu0 %v7359
  %7670 = vmatpush.msra.mxu0 %v7358
  %7671 = vmatpush.msra.mxu0 %v7357
  %7672 = vmatpush.msra.mxu0 %v7356
  %7673 = vmatpush.msra.mxu0 %v7355
  %7674 = vmatpush.msra.mxu0 %v7354
  %7675 = vmatpush.msra.mxu0 %v7353
  %7676 = vmatpush.msra.mxu0 %v7352
  %7677 = vmatpush.msra.mxu0 %v7351
  %7678 = vmatpush.msra.mxu0 %v7350
  %7679 = vmatpush.msra.mxu0 %v7349
  %7680 = vmatmul.f32.gmra.mxu0 %v7226
  %v7681 = vpop.f32.mrf.mxu0
  %v7682 = vadd.f32 %v7662, %v7681
  %7683 = vdwg.mxu0
  %7684 = vmatpush.msra.mxu0 %v7380
  %7685 = vmatpush.msra.mxu0 %v7379
  %7686 = vmatpush.msra.mxu0 %v7378
  %7687 = vmatpush.msra.mxu0 %v7377
  %7688 = vmatpush.msra.mxu0 %v7376
  %7689 = vmatpush.msra.mxu0 %v7375
  %7690 = vmatpush.msra.mxu0 %v7374
  %7691 = vmatpush.msra.mxu0 %v7373
  %7692 = vmatpush.msra.mxu0 %v7372
  %7693 = vmatpush.msra.mxu0 %v7371
  %7694 = vmatpush.msra.mxu0 %v7370
  %7695 = vmatpush.msra.mxu0 %v7369
  %7696 = vmatpush.msra.mxu0 %v7368
  %7697 = vmatpush.msra.mxu0 %v7367
  %7698 = vmatpush.msra.mxu0 %v7366
  %7699 = vmatpush.msra.mxu0 %v7365
  %7700 = vmatmul.f32.gmra.mxu0 %v7227
  %v7701 = vpop.f32.mrf.mxu0
  %v7702 = vadd.f32 %v7682, %v7701
  %7703 = vdwg.mxu0
  %7704 = vmatpush.msra.mxu0 %v7396
  %7705 = vmatpush.msra.mxu0 %v7395
  %7706 = vmatpush.msra.mxu0 %v7394
  %7707 = vmatpush.msra.mxu0 %v7393
  %7708 = vmatpush.msra.mxu0 %v7392
  %7709 = vmatpush.msra.mxu0 %v7391
  %7710 = vmatpush.msra.mxu0 %v7390
  %7711 = vmatpush.msra.mxu0 %v7389
  %7712 = vmatpush.msra.mxu0 %v7388
  %7713 = vmatpush.msra.mxu0 %v7387
  %7714 = vmatpush.msra.mxu0 %v7386
  %7715 = vmatpush.msra.mxu0 %v7385
  %7716 = vmatpush.msra.mxu0 %v7384
  %7717 = vmatpush.msra.mxu0 %v7383
  %7718 = vmatpush.msra.mxu0 %v7382
  %7719 = vmatpush.msra.mxu0 %v7381
  %7720 = vmatmul.f32.gmra.mxu0 %v7228
  %v7721 = vpop.f32.mrf.mxu0
  %v7722 = vadd.f32 %v7702, %v7721
  %7723 = vdwg.mxu0
  %7724 = vmatpush.msra.mxu0 %v7412
  %7725 = vmatpush.msra.mxu0 %v7411
  %7726 = vmatpush.msra.mxu0 %v7410
  %7727 = vmatpush.msra.mxu0 %v7409
  %7728 = vmatpush.msra.mxu0 %v7408
  %7729 = vmatpush.msra.mxu0 %v7407
  %7730 = vmatpush.msra.mxu0 %v7406
  %7731 = vmatpush.msra.mxu0 %v7405
  %7732 = vmatpush.msra.mxu0 %v7404
  %7733 = vmatpush.msra.mxu0 %v7403
  %7734 = vmatpush.msra.mxu0 %v7402
  %7735 = vmatpush.msra.mxu0 %v7401
  %7736 = vmatpush.msra.mxu0 %v7400
  %7737 = vmatpush.msra.mxu0 %v7399
  %7738 = vmatpush.msra.mxu0 %v7398
  %7739 = vmatpush.msra.mxu0 %v7397
  %7740 = vmatmul.f32.gmra.mxu0 %v7229
  %v7741 = vpop.f32.mrf.mxu0
  %v7742 = vadd.f32 %v7722, %v7741
  %7743 = vdwg.mxu0
  %7744 = vmatpush.msra.mxu0 %v7428
  %7745 = vmatpush.msra.mxu0 %v7427
  %7746 = vmatpush.msra.mxu0 %v7426
  %7747 = vmatpush.msra.mxu0 %v7425
  %7748 = vmatpush.msra.mxu0 %v7424
  %7749 = vmatpush.msra.mxu0 %v7423
  %7750 = vmatpush.msra.mxu0 %v7422
  %7751 = vmatpush.msra.mxu0 %v7421
  %7752 = vmatpush.msra.mxu0 %v7420
  %7753 = vmatpush.msra.mxu0 %v7419
  %7754 = vmatpush.msra.mxu0 %v7418
  %7755 = vmatpush.msra.mxu0 %v7417
  %7756 = vmatpush.msra.mxu0 %v7416
  %7757 = vmatpush.msra.mxu0 %v7415
  %7758 = vmatpush.msra.mxu0 %v7414
  %7759 = vmatpush.msra.mxu0 %v7413
  %7760 = vmatmul.f32.gmra.mxu0 %v7230
  %v7761 = vpop.f32.mrf.mxu0
  %v7762 = vadd.f32 %v7742, %v7761
  %7763 = vdwg.mxu0
  %7764 = vmatpush.msra.mxu0 %v7444
  %7765 = vmatpush.msra.mxu0 %v7443
  %7766 = vmatpush.msra.mxu0 %v7442
  %7767 = vmatpush.msra.mxu0 %v7441
  %7768 = vmatpush.msra.mxu0 %v7440
  %7769 = vmatpush.msra.mxu0 %v7439
  %7770 = vmatpush.msra.mxu0 %v7438
  %7771 = vmatpush.msra.mxu0 %v7437
  %7772 = vmatpush.msra.mxu0 %v7436
  %7773 = vmatpush.msra.mxu0 %v7435
  %7774 = vmatpush.msra.mxu0 %v7434
  %7775 = vmatpush.msra.mxu0 %v7433
  %7776 = vmatpush.msra.mxu0 %v7432
  %7777 = vmatpush.msra.mxu0 %v7431
  %7778 = vmatpush.msra.mxu0 %v7430
  %7779 = vmatpush.msra.mxu0 %v7429
  %7780 = vmatmul.f32.gmra.mxu0 %v7231
  %v7781 = vpop.f32.mrf.mxu0
  %v7782 = vadd.f32 %v7762, %v7781
  %7783 = vdwg.mxu0
  %7784 = vmatpush.msra.mxu0 %v7460
  %7785 = vmatpush.msra.mxu0 %v7459
  %7786 = vmatpush.msra.mxu0 %v7458
  %7787 = vmatpush.msra.mxu0 %v7457
  %7788 = vmatpush.msra.mxu0 %v7456
  %7789 = vmatpush.msra.mxu0 %v7455
  %7790 = vmatpush.msra.mxu0 %v7454
  %7791 = vmatpush.msra.mxu0 %v7453
  %7792 = vmatpush.msra.mxu0 %v7452
  %7793 = vmatpush.msra.mxu0 %v7451
  %7794 = vmatpush.msra.mxu0 %v7450
  %7795 = vmatpush.msra.mxu0 %v7449
  %7796 = vmatpush.msra.mxu0 %v7448
  %7797 = vmatpush.msra.mxu0 %v7447
  %7798 = vmatpush.msra.mxu0 %v7446
  %7799 = vmatpush.msra.mxu0 %v7445
  %7800 = vmatmul.f32.gmra.mxu0 %v7232
  %v7801 = vpop.f32.mrf.mxu0
  %v7802 = vadd.f32 %v7782, %v7801
  %7803 = vdwg.mxu0
  %7804 = vmatpush.msra.mxu0 %v7476
  %7805 = vmatpush.msra.mxu0 %v7475
  %7806 = vmatpush.msra.mxu0 %v7474
  %7807 = vmatpush.msra.mxu0 %v7473
  %7808 = vmatpush.msra.mxu0 %v7472
  %7809 = vmatpush.msra.mxu0 %v7471
  %7810 = vmatpush.msra.mxu0 %v7470
  %7811 = vmatpush.msra.mxu0 %v7469
  %7812 = vmatpush.msra.mxu0 %v7468
  %7813 = vmatpush.msra.mxu0 %v7467
  %7814 = vmatpush.msra.mxu0 %v7466
  %7815 = vmatpush.msra.mxu0 %v7465
  %7816 = vmatpush.msra.mxu0 %v7464
  %7817 = vmatpush.msra.mxu0 %v7463
  %7818 = vmatpush.msra.mxu0 %v7462
  %7819 = vmatpush.msra.mxu0 %v7461
  %7820 = vmatmul.f32.gmra.mxu0 %v7233
  %v7821 = vpop.f32.mrf.mxu0
  %v7822 = vadd.f32 %v7802, %v7821
  %7823 = vdwg.mxu0
  %7824 = vmatpush.msra.mxu0 %v7492
  %7825 = vmatpush.msra.mxu0 %v7491
  %7826 = vmatpush.msra.mxu0 %v7490
  %7827 = vmatpush.msra.mxu0 %v7489
  %7828 = vmatpush.msra.mxu0 %v7488
  %7829 = vmatpush.msra.mxu0 %v7487
  %7830 = vmatpush.msra.mxu0 %v7486
  %7831 = vmatpush.msra.mxu0 %v7485
  %7832 = vmatpush.msra.mxu0 %v7484
  %7833 = vmatpush.msra.mxu0 %v7483
  %7834 = vmatpush.msra.mxu0 %v7482
  %7835 = vmatpush.msra.mxu0 %v7481
  %7836 = vmatpush.msra.mxu0 %v7480
  %7837 = vmatpush.msra.mxu0 %v7479
  %7838 = vmatpush.msra.mxu0 %v7478
  %7839 = vmatpush.msra.mxu0 %v7477
  %7840 = vmatmul.f32.gmra.mxu0 %v7234
  %v7841 = vpop.f32.mrf.mxu0
  %v7842 = vadd.f32 %v7822, %v7841
  %7843 = vdwg.mxu0
  %7844 = vmatpush.msra.mxu0 %v7508
  %7845 = vmatpush.msra.mxu0 %v7507
  %7846 = vmatpush.msra.mxu0 %v7506
  %7847 = vmatpush.msra.mxu0 %v7505
  %7848 = vmatpush.msra.mxu0 %v7504
  %7849 = vmatpush.msra.mxu0 %v7503
  %7850 = vmatpush.msra.mxu0 %v7502
  %7851 = vmatpush.msra.mxu0 %v7501
  %7852 = vmatpush.msra.mxu0 %v7500
  %7853 = vmatpush.msra.mxu0 %v7499
  %7854 = vmatpush.msra.mxu0 %v7498
  %7855 = vmatpush.msra.mxu0 %v7497
  %7856 = vmatpush.msra.mxu0 %v7496
  %7857 = vmatpush.msra.mxu0 %v7495
  %7858 = vmatpush.msra.mxu0 %v7494
  %7859 = vmatpush.msra.mxu0 %v7493
  %7860 = vmatmul.f32.gmra.mxu0 %v7235
  %v7861 = vpop.f32.mrf.mxu0
  %v7862 = vadd.f32 %v7842, %v7861
  %7863 = vdwg.mxu0
  %7864 = vmatpush.msra.mxu0 0.0
  %7865 = vmatpush.msra.mxu0 0.0
  %7866 = vmatpush.msra.mxu0 0.0
  %7867 = vmatpush.msra.mxu0 0.0
  %7868 = vmatpush.msra.mxu0 0.0
  %7869 = vmatpush.msra.mxu0 0.0
  %7870 = vmatpush.msra.mxu0 0.0
  %7871 = vmatpush.msra.mxu0 0.0
  %7872 = vmatpush.msra.mxu0 %v7516
  %7873 = vmatpush.msra.mxu0 %v7515
  %7874 = vmatpush.msra.mxu0 %v7514
  %7875 = vmatpush.msra.mxu0 %v7513
  %7876 = vmatpush.msra.mxu0 %v7512
  %7877 = vmatpush.msra.mxu0 %v7511
  %7878 = vmatpush.msra.mxu0 %v7510
  %7879 = vmatpush.msra.mxu0 %v7509
  %7880 = vmatmul.f32.gmra.mxu0 %v7522
  %v7881 = vpop.f32.mrf.mxu0
  %v7882 = vadd.f32 %v7862, %v7881
  %7883 = vdwg.mxu0
  %v7884 = vmax.f32 %v7882, 0.0
  %v7885 = vld [vmem:[%s8] sm:$0xff]
  %v7886 = vld [vmem:[%s8 + $0x8] sm:$0xff]
  %v7887 = vld [vmem:[%s8 + $0x10] sm:$0xff]
  %v7888 = vld [vmem:[%s8 + $0x18] sm:$0xff]
  %v7889 = vld [vmem:[%s8 + $0x20] sm:$0xff]
  %v7890 = vld [vmem:[%s8 + $0x28] sm:$0xff]
  %v7891 = vld [vmem:[%s8 + $0x30] sm:$0xff]
  %v7892 = vld [vmem:[%s8 + $0x38] sm:$0xff]
  %v7893 = vld [vmem:[%s8 + $0x40] sm:$0xff]
  %v7894 = vld [vmem:[%s8 + $0x48] sm:$0xff]
  %v7895 = vld [vmem:[%s8 + $0x50] sm:$0xff]
  %v7896 = vld [vmem:[%s8 + $0x58] sm:$0xff]
  %v7897 = vld [vmem:[%s8 + $0x60] sm:$0xff]
  %v7898 = vld [vmem:[%s8 + $0x68] sm:$0xff]
  %v7899 = vld [vmem:[%s8 + $0x70] sm:$0xff]
  %v7900 = vld [vmem:[%s9] sm:$0x1]
  %v7902 = vperm.slane %v7900, 0
  %v7905 = vsel %vm7139, %v7884, 0
  %7907 = vmatpush.msra.mxu0 0.0
  %7908 = vmatpush.msra.mxu0 %v7899
  %7909 = vmatpush.msra.mxu0 %v7898
  %7910 = vmatpush.msra.mxu0 %v7897
  %7911 = vmatpush.msra.mxu0 %v7896
  %7912 = vmatpush.msra.mxu0 %v7895
  %7913 = vmatpush.msra.mxu0 %v7894
  %7914 = vmatpush.msra.mxu0 %v7893
  %7915 = vmatpush.msra.mxu0 %v7892
  %7916 = vmatpush.msra.mxu0 %v7891
  %7917 = vmatpush.msra.mxu0 %v7890
  %7918 = vmatpush.msra.mxu0 %v7889
  %7919 = vmatpush.msra.mxu0 %v7888
  %7920 = vmatpush.msra.mxu0 %v7887
  %7921 = vmatpush.msra.mxu0 %v7886
  %7922 = vmatpush.msra.mxu0 %v7885
  %7923 = vmatmul.f32.gmra.mxu0 %v7905
  %v7924 = vpop.f32.mrf.mxu0
  %v7925 = vadd.f32 %v7902, %v7924
  %7926 = vdwg.mxu0
  %v7927 = vmax.f32 %v7925, 0.0
  %v7928 = vld [vmem:[%s10] sm:$0xff]
  %v7929 = vld [vmem:[%s10 + $0x8] sm:$0xff]
  %v7930 = vld [vmem:[%s10 + $0x10] sm:$0xff]
  %v7931 = vld [vmem:[%s10 + $0x18] sm:$0xff]
  %v7932 = vld [vmem:[%s10 + $0x20] sm:$0xff]
  %v7933 = vld [vmem:[%s10 + $0x28] sm:$0xff]
  %v7934 = vld [vmem:[%s10 + $0x30] sm:$0xff]
  %v7935 = vld [vmem:[%s10 + $0x38] sm:$0xff]
  %v7936 = vld [vmem:[%s10 + $0x40] sm:$0xff]
  %v7937 = vld [vmem:[%s10 + $0x48] sm:$0xff]
  %v7938 = vld [vmem:[%s10 + $0x50] sm:$0xf]
  %v7939 = vld [vmem:[%s11] sm:$0x1]
  %v7941 = vperm.slane %v7939, 0
  %v7944 = vsel %vm4507, %v7927, 0
  %vm7946 = vcmask 1043456
  %v7948 = vsel %vm7946, %v7938, 0
  %7950 = vmatpush.msra.mxu0 0.0
  %7951 = vmatpush.msra.mxu0 0.0
  %7952 = vmatpush.msra.mxu0 0.0
  %7953 = vmatpush.msra.mxu0 0.0
  %7954 = vmatpush.msra.mxu0 0.0
  %7955 = vmatpush.msra.mxu0 %v7948
  %7956 = vmatpush.msra.mxu0 %v7937
  %7957 = vmatpush.msra.mxu0 %v7936
  %7958 = vmatpush.msra.mxu0 %v7935
  %7959 = vmatpush.msra.mxu0 %v7934
  %7960 = vmatpush.msra.mxu0 %v7933
  %7961 = vmatpush.msra.mxu0 %v7932
  %7962 = vmatpush.msra.mxu0 %v7931
  %7963 = vmatpush.msra.mxu0 %v7930
  %7964 = vmatpush.msra.mxu0 %v7929
  %7965 = vmatpush.msra.mxu0 %v7928
  %7966 = vmatmul.f32.gmra.mxu0 %v7944
  %v7967 = vpop.f32.mrf.mxu0
  %v7968 = vadd.f32 %v7941, %v7967
  %7969 = vdwg.mxu0
  %7970 = vst [vmem:[%s12] sm:$0xff] %v7968
  // Predicated region
  $region50: #{lenet5_forward.1} parent=0 // pred_check
    _
  $region51: #{lenet5_forward.1} parent=0 // pred_check_branch
    %7972 = sbr.rel (0) target = $region53
  $region52: #{lenet5_forward.1} parent=0 // pred_region
    _
  $region53: #{lenet5_forward.1} parent=0 // pred_fallthru
    _
  // Predicated region
  $region54: #{lenet5_forward.1} parent=0 // pred_check
    _
  $region55: #{lenet5_forward.1} parent=0 // pred_check_branch
    %7974 = sbr.rel (0) target = $region57
  $region56: #{lenet5_forward.1} parent=0 // pred_region
    _
  $region57: #{lenet5_forward.1} parent=0 // pred_fallthru
    _

</llo_original>
